<compile_context>
chip_gen: v7x
topology: tpu7x:2x2x1
jax: 0.10.0
libtpu: 0.0.40
codegen_flags: <defaults>
</compile_context>

<pallas_src>
import functools

import numpy as np
import jax
import jax.numpy as jnp
from jax.experimental import pallas as pl
from jax.experimental.pallas import tpu as pltpu


def _prelu(y, a):
    return jnp.where(y >= 0, y, a * y)


# ---------------------------------------------------------------------------
# In-kernel helpers
# ---------------------------------------------------------------------------
def _patches3x3(x):
    """x: (H, W, C) value -> (H*W, 9*C) 3x3/pad-1 patches (tap order ky,kx,C)."""
    H, W, C = x.shape
    zr = jnp.zeros((1, W, C), x.dtype)
    xp = jnp.concatenate([zr, x, zr], axis=0)            # (H+2, W, C)
    zc = jnp.zeros((H + 2, 1, C), x.dtype)
    xp = jnp.concatenate([zc, xp, zc], axis=1)           # (H+2, W+2, C)
    cols = [xp[ky:ky + H, kx:kx + W, :].reshape(H * W, C)
            for ky in range(3) for kx in range(3)]
    return jnp.concatenate(cols, axis=-1)                # (H*W, 9*C)


# ---------------------------------------------------------------------------
# Kernel 1: conv2..conv6 + up_conv1 (sub-pixel deconv), one LR image per step.
# ---------------------------------------------------------------------------
def _lr_kernel(pat2_ref, w2_ref, b2_ref, w346_ref, b3_ref, w4b_ref, b4_ref,
               w5_ref, b5_ref, w6b_ref, b6_ref, wd_ref, bd_ref,
               alpha_ref, o_ref):
    # PReLU slopes from SMEM (read once, up front).
    a2 = alpha_ref[0]; a3 = alpha_ref[1]; a4 = alpha_ref[2]
    a5 = alpha_ref[3]; a6 = alpha_ref[4]; au = alpha_ref[5]

    F = w2_ref.shape[1]
    H = o_ref.shape[1]; s = o_ref.shape[2]; W = o_ref.shape[3]; L = o_ref.shape[4]

    # conv2 (3x3): patches were prepared in the wrapper (tiny, Cin=4).
    p2 = pat2_ref[0]                                               # (H*W, 9*Cin)
    x2 = _prelu(jnp.dot(p2, w2_ref[...], preferred_element_type=jnp.float32)
                + b2_ref[...], a2)
    x2b = x2.astype(jnp.bfloat16)

    # conv3 / conv4(first half) / conv6(first half) share LHS x2 -> one matmul.
    t = jnp.dot(x2b, w346_ref[...], preferred_element_type=jnp.float32)
    x3 = _prelu(t[:, :F] + b3_ref[...], a3)
    x4 = _prelu(t[:, F:2 * F]
                + jnp.dot(x3.astype(jnp.bfloat16), w4b_ref[...],
                          preferred_element_type=jnp.float32)
                + b4_ref[...], a4)

    # conv5 (3x3) on x4, patches built in-kernel.
    p5 = _patches3x3(x4.astype(jnp.bfloat16).reshape(H, W, F))
    x5 = _prelu(jnp.dot(p5, w5_ref[...], preferred_element_type=jnp.float32)
                + b5_ref[...], a5)
    x6 = _prelu(t[:, 2 * F:3 * F]
                + jnp.dot(x5.astype(jnp.bfloat16), w6b_ref[...],
                          preferred_element_type=jnp.float32)
                + b6_ref[...], a6)

    # up_conv1 as sub-pixel 3x3 conv: (H*W, s*s*F) phase output, lane-dense.
    pu = _patches3x3(x6.astype(jnp.bfloat16).reshape(H, W, F))
    y = _prelu(jnp.dot(pu, wd_ref[...], preferred_element_type=jnp.float32)
               + bd_ref[...], au)                                  # (H*W, s*s*F)
    yb = y.astype(jnp.bfloat16)

    # Depth-to-space folded into the store: out[n, by, dy, bx, dx*F+f].
    for dy in range(s):
        o_ref[0, :, dy, :, :] = yb[:, dy * L:(dy + 1) * L].reshape(H, W, L)


# ---------------------------------------------------------------------------
# Kernel 2: conv7 (3x3) + conv8 (1x1) on the HR map, 128-lane pixel groups.
# ---------------------------------------------------------------------------
def _hr_kernel(h0_ref, w7_ref, b7_ref, w8_ref, b8_ref, alpha_ref,
               o_ref, h0p_ref, *, pix_c):
    a7 = alpha_ref[0]
    a8 = alpha_ref[1]
    j = pl.program_id(1)

    HRp2, Wg, L = h0p_ref.shape          # (HR+2, groups per row, s*F)
    HR = HRp2 - 2
    RT = o_ref.shape[1]                  # HR rows per grid step
    C = pix_c                            # channels per pixel (F)

    # Fill the row-padded HR map into persistent VMEM scratch once per image.
    @pl.when(j == 0)
    def _():
        z = jnp.zeros((Wg, L), h0p_ref.dtype)
        h0p_ref[0] = z
        h0p_ref[HR + 1] = z
        h0p_ref[1:HR + 1] = h0_ref[0]

    base = j * RT
    acc = jnp.zeros((RT * Wg, L), jnp.float32)
    for ky in range(3):
        rows = h0p_ref[pl.ds(base + ky, RT)]                       # (RT, Wg, L)
        zg = jnp.zeros((RT, 1, C), rows.dtype)
        # kx = 0: previous HR pixel (last pixel of the left group).
        left = jnp.concatenate([zg, rows[:, :Wg - 1, L - C:]], axis=1)
        slab0 = jnp.concatenate([left, rows[:, :, :L - C]], axis=-1)
        # kx = 2: next HR pixel (first pixel of the right group).
        right = jnp.concatenate([rows[:, 1:, :C], zg], axis=1)
        slab2 = jnp.concatenate([rows[:, :, C:], right], axis=-1)
        pat = jnp.concatenate([slab0, rows, slab2], axis=-1)       # (RT, Wg, 3L)
        pat = pat.reshape(RT * Wg, 3 * L)
        wk = w7_ref[ky * 3 * L:(ky + 1) * 3 * L, :]                # (3L, L)
        acc = acc + jnp.dot(pat, wk, preferred_element_type=jnp.float32)

    h1 = _prelu(acc + b7_ref[...], a7)
    h2 = _prelu(jnp.dot(h1.astype(jnp.bfloat16), w8_ref[...],
                        preferred_element_type=jnp.float32)
                + b8_ref[...], a8)
    o_ref[0] = h2.reshape(RT, Wg, L)                               # lane-dense f32


# ---------------------------------------------------------------------------
# Wrapper-side glue
# ---------------------------------------------------------------------------
def _im2col3_batched(x):
    """x: (N,H,W,C) -> (N, H*W, 9*C); only used for the tiny network input."""
    N, H, W, C = x.shape
    xp = jnp.pad(x, ((0, 0), (1, 1), (1, 1), (0, 0)))
    cols = [xp[:, ky:ky + H, kx:kx + W, :] for ky in range(3) for kx in range(3)]
    patches = jnp.stack(cols, axis=3)                              # (N,H,W,9,C)
    return patches.reshape(N, H * W, 9 * C)


def _const_specs(arrays):
    specs = []
    for a in arrays:
        specs.append(pl.BlockSpec(a.shape, lambda *g, _nd=a.ndim: (0,) * _nd))
    return specs


def _build_subpixel_deconv_weight(w_hwio, K, s, p):
    """ConvTranspose2d(K,s,p) == stride-1 3x3/pad-1 conv with s*s*Cout output
    channels + depth-to-space.  Returns (9*Cin, s*s*Cout) f32."""
    assert K - 2 * p == s, "sub-pixel decomposition assumes OH == s*H"
    T = -(-K // s)
    pad_c = T - 1
    Kc = pad_c + (s - 1 + p) // s + 1
    assert (Kc, pad_c) == (3, 1), "patch glue is specialized to 3x3 / pad 1"
    w = np.asarray(w_hwio, np.float32)                 # (K, K, Cin, Cout)
    Cin, Cout = w.shape[2], w.shape[3]
    W3 = np.zeros((Kc, Kc, Cin, s, s, Cout), np.float32)
    for dy in range(s):
        ry, my = (dy + p) % s, (dy + p) // s
        for dx in range(s):
            rx, mx = (dx + p) % s, (dx + p) // s
            for ty in range(T):
                ky = s * ty + ry
                if ky >= K:
                    continue
                for tx in range(T):
                    kx = s * tx + rx
                    if kx >= K:
                        continue
                    W3[pad_c + my - ty, pad_c + mx - tx, :, dy, dx, :] = w[ky, kx]
    return W3.reshape(Kc * Kc * Cin, s * s * Cout)


def simple_lr2hr_forward(x_nhwc, p, scale=4):
    N, H, W, _ = x_nhwc.shape
    F = p["b2"].shape[1]
    s = scale
    L = s * F                                   # 128-lane HR pixel-group width
    xb = x_nhwc.astype(jnp.bfloat16)

    pat2 = _im2col3_batched(xb)                 # (N, H*W, 9*Cin) -- tiny

    # ---- Kernel 1: whole LR trunk + sub-pixel deconv, one image per step ----
    lr_consts = [p["w2"], p["b2"], p["w346"], p["b3"], p["w4b"], p["b4"],
                 p["w5"], p["b5"], p["w6b"], p["b6"], p["wd"], p["bd"]]
    h0_phase = pl.pallas_call(
        _lr_kernel,
        out_shape=jax.ShapeDtypeStruct((N, H, s, W, L), jnp.bfloat16),
        grid=(N,),
        in_specs=([pl.BlockSpec((1, H * W, pat2.shape[-1]), lambda n: (n, 0, 0))]
                  + _const_specs(lr_consts)
                  + [pl.BlockSpec(memory_space=pltpu.MemorySpace.SMEM)]),
        out_specs=pl.BlockSpec((1, H, s, W, L), lambda n: (n, 0, 0, 0, 0)),
        compiler_params=pltpu.CompilerParams(dimension_semantics=("parallel",)),
    )(pat2, *lr_consts, p["alpha_lr"])

    # Free (metadata-only) reshape: HR rows with 4-pixel lane groups.
    HR = H * s
    h0 = h0_phase.reshape(N, HR, W, L)

    # ---- Kernel 2: conv7 + conv8 on HR, 4 row-chunks per image ----
    RT = 16
    hr_consts = [p["w7w"], p["b7w"], p["w8w"], p["b8w"]]
    h2 = pl.pallas_call(
        functools.partial(_hr_kernel, pix_c=F),
        out_shape=jax.ShapeDtypeStruct((N, HR, W, L), jnp.float32),
        grid=(N, HR // RT),
        in_specs=([pl.BlockSpec((1, HR, W, L), lambda n, j: (n, 0, 0, 0))]
                  + _const_specs(hr_consts)
                  + [pl.BlockSpec(memory_space=pltpu.MemorySpace.SMEM)]),
        out_specs=pl.BlockSpec((1, RT, W, L), lambda n, j: (n, j, 0, 0)),
        scratch_shapes=[pltpu.VMEM((HR + 2, W, L), jnp.bfloat16)],
        compiler_params=pltpu.CompilerParams(
            dimension_semantics=("parallel", "arbitrary")),
    )(h0, *hr_consts, p["alpha_hr"])

    return h2.reshape(N, HR, W * s, F)          # (N, 64, 64, 32) NHWC, free view


# ---------------------------------------------------------------------------
# Parameters: deterministic synthetic init + matmul-ready packing.
# ---------------------------------------------------------------------------
def init_raw_params(key, in_filter, F, ksize):
    keys = jax.random.split(key, 16)

    def u(k, shape, fan_in):
        sc = 1.0 / float(fan_in) ** 0.5
        return jax.random.uniform(k, shape, jnp.float32, -sc, sc)

    return {
        "conv2_w": u(keys[0], (3, 3, in_filter, F), 9 * in_filter),
        "conv2_b": u(keys[1], (F,), 9 * in_filter),
        "conv3_w": u(keys[2], (1, 1, F, F), F),
        "conv3_b": u(keys[3], (F,), F),
        "conv4_w": u(keys[4], (1, 1, 2 * F, F), 2 * F),
        "conv4_b": u(keys[5], (F,), 2 * F),
        "conv5_w": u(keys[6], (3, 3, F, F), 9 * F),
        "conv5_b": u(keys[7], (F,), 9 * F),
        "conv6_w": u(keys[8], (1, 1, 2 * F, F), 2 * F),
        "conv6_b": u(keys[9], (F,), 2 * F),
        "up1_w":  u(keys[10], (ksize, ksize, F, F), F * ksize * ksize),
        "up1_b":  u(keys[11], (F,), F * ksize * ksize),
        "conv7_w": u(keys[12], (3, 3, F, F), 9 * F),
        "conv7_b": u(keys[13], (F,), 9 * F),
        "conv8_w": u(keys[14], (1, 1, F, F), F),
        "conv8_b": u(keys[15], (F,), F),
        "a2": 0.25, "a3": 0.25, "a4": 0.25, "a5": 0.25, "a6": 0.25,
        "a_up": 0.25, "a7": 0.25, "a8": 0.25,
    }


def prepare_params(raw, ksize, stride, padding, F):
    assert (ksize, stride, padding) == (8, 4, 2), "specialized to k=8,s=4,p=2"
    bf = lambda a: jnp.asarray(np.asarray(a, np.float32), jnp.bfloat16)
    frow = lambda b: jnp.asarray(np.asarray(b, np.float32).reshape(1, -1),
                                 jnp.float32)

    w3 = np.asarray(raw["conv3_w"], np.float32).reshape(F, F)
    w4 = np.asarray(raw["conv4_w"], np.float32).reshape(2 * F, F)
    w6 = np.asarray(raw["conv6_w"], np.float32).reshape(2 * F, F)
    w346 = np.concatenate([w3, w4[:F], w6[:F]], axis=1)          # (F, 3F)

    wd = _build_subpixel_deconv_weight(raw["up1_w"], ksize, stride, padding)
    bd = np.tile(np.asarray(raw["up1_b"], np.float32), stride * stride)

    # conv7/conv8 in the 128-lane pixel-group layout (block-diagonal per pixel).
    G = stride
    L = G * F
    w7 = np.asarray(raw["conv7_w"], np.float32)                  # (3,3,F,F)
    w7w = np.zeros((9 * L, L), np.float32)
    for ky in range(3):
        for kx in range(3):
            r0 = (ky * 3 + kx) * L
            for g in range(G):
                w7w[r0 + g * F:r0 + (g + 1) * F, g * F:(g + 1) * F] = w7[ky, kx]
    b7w = np.tile(np.asarray(raw["conv7_b"], np.float32), G)
    w8 = np.asarray(raw["conv8_w"], np.float32).reshape(F, F)
    w8w = np.zeros((L, L), np.float32)
    for g in range(G):
        w8w[g * F:(g + 1) * F, g * F:(g + 1) * F] = w8
    b8w = np.tile(np.asarray(raw["conv8_b"], np.float32), G)

    return {
        "w2": bf(np.asarray(raw["conv2_w"], np.float32).reshape(-1, F)),
        "b2": frow(raw["conv2_b"]),
        "w346": bf(w346), "b3": frow(raw["conv3_b"]),
        "w4b": bf(w4[F:]), "b4": frow(raw["conv4_b"]),
        "w5": bf(np.asarray(raw["conv5_w"], np.float32).reshape(-1, F)),
        "b5": frow(raw["conv5_b"]),
        "w6b": bf(w6[F:]), "b6": frow(raw["conv6_b"]),
        "wd": bf(wd), "bd": frow(bd),
        "w7w": bf(w7w), "b7w": frow(b7w),
        "w8w": bf(w8w), "b8w": frow(b8w),
        "alpha_lr": jnp.array([raw["a2"], raw["a3"], raw["a4"],
                               raw["a5"], raw["a6"], raw["a_up"]], jnp.float32),
        "alpha_hr": jnp.array([raw["a7"], raw["a8"]], jnp.float32),
    }


# ---------------------------------------------------------------------------
# float64 numpy reference of the PyTorch forward (for numerics validation).
# ---------------------------------------------------------------------------
def _ref_forward(x_nhwc, raw, K, s, p):
    g = {k: (np.asarray(v, np.float64) if hasattr(v, "shape") else float(v))
         for k, v in raw.items()}
    x = np.asarray(x_nhwc, np.float64)
    F = g["conv2_b"].shape[0]

    def prelu(v, a):
        return np.where(v >= 0, v, a * v)

    def conv3x3(v, w, b):
        N, H, W, _ = v.shape
        vp = np.pad(v, ((0, 0), (1, 1), (1, 1), (0, 0)))
        out = np.broadcast_to(b, (N, H, W, w.shape[3])).copy()
        for ky in range(3):
            for kx in range(3):
                out = out + vp[:, ky:ky + H, kx:kx + W, :] @ w[ky, kx]
        return out

    def conv1x1(v, w, b):
        return v @ w + b

    def deconv(v, w, b, K, s, p):
        N, H, W, _ = v.shape
        Co = w.shape[3]
        OH = (H - 1) * s - 2 * p + K
        OW = (W - 1) * s - 2 * p + K
        out = np.broadcast_to(b, (N, OH, OW, Co)).copy()
        for ky in range(K):
            for kx in range(K):
                contrib = v @ w[ky, kx]
                for i in range(H):
                    y = i * s - p + ky
                    if y < 0 or y >= OH:
                        continue
                    for jj in range(W):
                        xo = jj * s - p + kx
                        if 0 <= xo < OW:
                            out[:, y, xo, :] += contrib[:, i, jj, :]
        return out

    x2 = prelu(conv3x3(x, g["conv2_w"], g["conv2_b"]), g["a2"])
    x3 = prelu(conv1x1(x2, g["conv3_w"].reshape(F, F), g["conv3_b"]), g["a3"])
    x4 = prelu(conv1x1(np.concatenate([x2, x3], -1),
                       g["conv4_w"].reshape(2 * F, F), g["conv4_b"]), g["a4"])
    x5 = prelu(conv3x3(x4, g["conv5_w"], g["conv5_b"]), g["a5"])
    x6 = prelu(conv1x1(np.concatenate([x2, x5], -1),
                       g["conv6_w"].reshape(2 * F, F), g["conv6_b"]), g["a6"])
    h0 = prelu(deconv(x6, g["up1_w"], g["up1_b"], K, s, p), g["a_up"])
    h1 = prelu(conv3x3(h0, g["conv7_w"], g["conv7_b"]), g["a7"])
    h2 = prelu(conv1x1(h1, g["conv8_w"].reshape(F, F), g["conv8_b"]), g["a8"])
    return h2


if __name__ == "__main__":
    key = jax.random.PRNGKey(0)
    kx_, kp_ = jax.random.split(key)

    # SimpleLR2HR(in_filter=4, num_filter=32, kernel_size=8, stride=4, padding=2)
    N, Cin, H, W = 2, 4, 16, 16
    F = 32
    KSIZE, STRIDE, PAD = 8, 4, 2

    x_nchw = jax.random.normal(kx_, (N, Cin, H, W), jnp.float32)  # PyTorch layout
    x_nhwc = jnp.transpose(x_nchw, (0, 2, 3, 1))                  # kernel layout

    raw = init_raw_params(kp_, Cin, F, KSIZE)
    params = prepare_params(raw, KSIZE, STRIDE, PAD, F)

    fwd = jax.jit(functools.partial(simple_lr2hr_forward, scale=STRIDE))
    out = jax.block_until_ready(fwd(x_nhwc, params))

    assert out.shape == (N, H * STRIDE, W * STRIDE, F), out.shape
    out_np = np.asarray(out, np.float64)
    assert np.all(np.isfinite(out_np))

    ref = _ref_forward(x_nhwc, raw, KSIZE, STRIDE, PAD)
    err = float(np.max(np.abs(out_np - ref)))
    scale_ = float(np.max(np.abs(ref)))
    assert err <= 0.10 * scale_ + 1e-2, (err, scale_)

    print("KERNEL_OK")
</pallas_src>

<mosaic_0001>
module attributes {stable_mosaic.version = 11 : i64} {
  func.func @_lr_kernel(%arg0: i32, %arg1: memref<1x256x36xbf16, #tpu.memory_space<vmem>>, %arg2: memref<36x32xbf16, #tpu.memory_space<vmem>>, %arg3: memref<1x32xf32, #tpu.memory_space<vmem>>, %arg4: memref<32x96xbf16, #tpu.memory_space<vmem>>, %arg5: memref<1x32xf32, #tpu.memory_space<vmem>>, %arg6: memref<32x32xbf16, #tpu.memory_space<vmem>>, %arg7: memref<1x32xf32, #tpu.memory_space<vmem>>, %arg8: memref<288x32xbf16, #tpu.memory_space<vmem>>, %arg9: memref<1x32xf32, #tpu.memory_space<vmem>>, %arg10: memref<32x32xbf16, #tpu.memory_space<vmem>>, %arg11: memref<1x32xf32, #tpu.memory_space<vmem>>, %arg12: memref<288x512xbf16, #tpu.memory_space<vmem>>, %arg13: memref<1x512xf32, #tpu.memory_space<vmem>>, %arg14: memref<6xf32, #tpu.memory_space<smem>>, %arg15: memref<1x16x4x16x128xbf16, #tpu.memory_space<vmem>>) attributes {dimension_semantics = [#tpu.dimension_semantics<parallel>], iteration_bounds = array<i64: 2>, scalar_prefetch = 0 : i64, scratch_operands = 0 : i64, tpu.core_type = #tpu.core_type<tc>, window_params = [{transform_indices = @transform_0, window_bounds = array<i64: 1, 256, 36>}, {pipeline_mode = #tpu.pipeline_mode<synchronous>, transform_indices = @transform_1, window_bounds = array<i64: 36, 32>}, {pipeline_mode = #tpu.pipeline_mode<synchronous>, transform_indices = @transform_2, window_bounds = array<i64: 1, 32>}, {pipeline_mode = #tpu.pipeline_mode<synchronous>, transform_indices = @transform_3, window_bounds = array<i64: 32, 96>}, {pipeline_mode = #tpu.pipeline_mode<synchronous>, transform_indices = @transform_4, window_bounds = array<i64: 1, 32>}, {pipeline_mode = #tpu.pipeline_mode<synchronous>, transform_indices = @transform_5, window_bounds = array<i64: 32, 32>}, {pipeline_mode = #tpu.pipeline_mode<synchronous>, transform_indices = @transform_6, window_bounds = array<i64: 1, 32>}, {pipeline_mode = #tpu.pipeline_mode<synchronous>, transform_indices = @transform_7, window_bounds = array<i64: 288, 32>}, {pipeline_mode = #tpu.pipeline_mode<synchronous>, transform_indices = @transform_8, window_bounds = array<i64: 1, 32>}, {pipeline_mode = #tpu.pipeline_mode<synchronous>, transform_indices = @transform_9, window_bounds = array<i64: 32, 32>}, {pipeline_mode = #tpu.pipeline_mode<synchronous>, transform_indices = @transform_10, window_bounds = array<i64: 1, 32>}, {pipeline_mode = #tpu.pipeline_mode<synchronous>, transform_indices = @transform_11, window_bounds = array<i64: 288, 512>}, {pipeline_mode = #tpu.pipeline_mode<synchronous>, transform_indices = @transform_12, window_bounds = array<i64: 1, 512>}, {transform_indices = @transform_13, window_bounds = array<i64: 6>}, {transform_indices = @transform_14, window_bounds = array<i64: 1, 16, 4, 16, 128>}]} {
    %c0 = arith.constant 0 : index
    %0 = memref.load %arg14[%c0] : memref<6xf32, #tpu.memory_space<smem>>
    %c1 = arith.constant 1 : index
    %1 = memref.load %arg14[%c1] : memref<6xf32, #tpu.memory_space<smem>>
    %c2 = arith.constant 2 : index
    %2 = memref.load %arg14[%c2] : memref<6xf32, #tpu.memory_space<smem>>
    %c3 = arith.constant 3 : index
    %3 = memref.load %arg14[%c3] : memref<6xf32, #tpu.memory_space<smem>>
    %c4 = arith.constant 4 : index
    %4 = memref.load %arg14[%c4] : memref<6xf32, #tpu.memory_space<smem>>
    %c5 = arith.constant 5 : index
    %5 = memref.load %arg14[%c5] : memref<6xf32, #tpu.memory_space<smem>>
    %c0_0 = arith.constant 0 : index
    %c0_1 = arith.constant 0 : index
    %c0_2 = arith.constant 0 : index
    %6 = vector.load %arg1[%c0_0, %c0_1, %c0_2] : memref<1x256x36xbf16, #tpu.memory_space<vmem>>, vector<1x256x36xbf16>
    %7 = vector.shape_cast %6 : vector<1x256x36xbf16> to vector<256x36xbf16>
    %c0_3 = arith.constant 0 : index
    %c0_4 = arith.constant 0 : index
    %8 = vector.load %arg2[%c0_3, %c0_4] : memref<36x32xbf16, #tpu.memory_space<vmem>>, vector<36x32xbf16>
    %cst = arith.constant dense<0.000000e+00> : vector<256x32xf32>
    %9 = tpu.matmul %7, %8, %cst {dimension_numbers = #tpu.dot_dimension_numbers<[1], [0], [0], [1], [0, 0, 1, 1], [], []>} : vector<256x36xbf16>, vector<36x32xbf16>, vector<256x32xf32> -> vector<256x32xf32>
    %c0_5 = arith.constant 0 : index
    %c0_6 = arith.constant 0 : index
    %10 = vector.load %arg3[%c0_5, %c0_6] : memref<1x32xf32, #tpu.memory_space<vmem>>, vector<1x32xf32>
    %11 = vector.broadcast %10 : vector<1x32xf32> to vector<256x32xf32>
    %12 = arith.addf %9, %11 : vector<256x32xf32>
    %cst_7 = arith.constant 0.000000e+00 : f32
    %13 = vector.broadcast %cst_7 : f32 to vector<256x32xf32>
    %14 = arith.cmpf oge, %12, %13 : vector<256x32xf32>
    %15 = vector.broadcast %0 : f32 to vector<256x32xf32>
    %16 = arith.mulf %15, %12 : vector<256x32xf32>
    %17 = arith.select %14, %12, %16 : vector<256x32xi1>, vector<256x32xf32>
    %18 = arith.truncf %17 : vector<256x32xf32> to vector<256x32xbf16>
    %c0_8 = arith.constant 0 : index
    %c0_9 = arith.constant 0 : index
    %19 = vector.load %arg4[%c0_8, %c0_9] : memref<32x96xbf16, #tpu.memory_space<vmem>>, vector<32x96xbf16>
    %cst_10 = arith.constant dense<0.000000e+00> : vector<256x96xf32>
    %20 = tpu.matmul %18, %19, %cst_10 {dimension_numbers = #tpu.dot_dimension_numbers<[1], [0], [0], [1], [0, 0, 1, 1], [], []>} : vector<256x32xbf16>, vector<32x96xbf16>, vector<256x96xf32> -> vector<256x96xf32>
    %21 = vector.extract_strided_slice %20 {offsets = [0, 0], sizes = [256, 32], strides = [1, 1]} : vector<256x96xf32> to vector<256x32xf32>
    %c0_11 = arith.constant 0 : index
    %c0_12 = arith.constant 0 : index
    %22 = vector.load %arg5[%c0_11, %c0_12] : memref<1x32xf32, #tpu.memory_space<vmem>>, vector<1x32xf32>
    %23 = vector.broadcast %22 : vector<1x32xf32> to vector<256x32xf32>
    %24 = arith.addf %21, %23 : vector<256x32xf32>
    %cst_13 = arith.constant 0.000000e+00 : f32
    %25 = vector.broadcast %cst_13 : f32 to vector<256x32xf32>
    %26 = arith.cmpf oge, %24, %25 : vector<256x32xf32>
    %27 = vector.broadcast %1 : f32 to vector<256x32xf32>
    %28 = arith.mulf %27, %24 : vector<256x32xf32>
    %29 = arith.select %26, %24, %28 : vector<256x32xi1>, vector<256x32xf32>
    %30 = vector.extract_strided_slice %20 {offsets = [0, 32], sizes = [256, 32], strides = [1, 1]} : vector<256x96xf32> to vector<256x32xf32>
    %31 = arith.truncf %29 : vector<256x32xf32> to vector<256x32xbf16>
    %c0_14 = arith.constant 0 : index
    %c0_15 = arith.constant 0 : index
    %32 = vector.load %arg6[%c0_14, %c0_15] : memref<32x32xbf16, #tpu.memory_space<vmem>>, vector<32x32xbf16>
    %cst_16 = arith.constant dense<0.000000e+00> : vector<256x32xf32>
    %33 = tpu.matmul %31, %32, %cst_16 {dimension_numbers = #tpu.dot_dimension_numbers<[1], [0], [0], [1], [0, 0, 1, 1], [], []>} : vector<256x32xbf16>, vector<32x32xbf16>, vector<256x32xf32> -> vector<256x32xf32>
    %34 = arith.addf %30, %33 : vector<256x32xf32>
    %c0_17 = arith.constant 0 : index
    %c0_18 = arith.constant 0 : index
    %35 = vector.load %arg7[%c0_17, %c0_18] : memref<1x32xf32, #tpu.memory_space<vmem>>, vector<1x32xf32>
    %36 = vector.broadcast %35 : vector<1x32xf32> to vector<256x32xf32>
    %37 = arith.addf %34, %36 : vector<256x32xf32>
    %cst_19 = arith.constant 0.000000e+00 : f32
    %38 = vector.broadcast %cst_19 : f32 to vector<256x32xf32>
    %39 = arith.cmpf oge, %37, %38 : vector<256x32xf32>
    %40 = vector.broadcast %2 : f32 to vector<256x32xf32>
    %41 = arith.mulf %40, %37 : vector<256x32xf32>
    %42 = arith.select %39, %37, %41 : vector<256x32xi1>, vector<256x32xf32>
    %43 = arith.truncf %42 : vector<256x32xf32> to vector<256x32xbf16>
    %44 = vector.shape_cast %43 : vector<256x32xbf16> to vector<16x16x32xbf16>
    %cst_20 = arith.constant 0.000000e+00 : bf16
    %45 = vector.broadcast %cst_20 : bf16 to vector<1x16x32xbf16>
    %46 = tpu.concatenate %45, %44, %45 in 0 : vector<1x16x32xbf16>, vector<16x16x32xbf16>, vector<1x16x32xbf16> -> vector<18x16x32xbf16>
    %cst_21 = arith.constant 0.000000e+00 : bf16
    %47 = vector.broadcast %cst_21 : bf16 to vector<18x1x32xbf16>
    %48 = tpu.concatenate %47, %46, %47 in 1 : vector<18x1x32xbf16>, vector<18x16x32xbf16>, vector<18x1x32xbf16> -> vector<18x18x32xbf16>
    %49 = vector.extract_strided_slice %48 {offsets = [0, 0, 0], sizes = [16, 16, 32], strides = [1, 1, 1]} : vector<18x18x32xbf16> to vector<16x16x32xbf16>
    %50 = vector.shape_cast %49 : vector<16x16x32xbf16> to vector<256x32xbf16>
    %51 = vector.extract_strided_slice %48 {offsets = [0, 1, 0], sizes = [16, 16, 32], strides = [1, 1, 1]} : vector<18x18x32xbf16> to vector<16x16x32xbf16>
    %52 = vector.shape_cast %51 : vector<16x16x32xbf16> to vector<256x32xbf16>
    %53 = vector.extract_strided_slice %48 {offsets = [0, 2, 0], sizes = [16, 16, 32], strides = [1, 1, 1]} : vector<18x18x32xbf16> to vector<16x16x32xbf16>
    %54 = vector.shape_cast %53 : vector<16x16x32xbf16> to vector<256x32xbf16>
    %55 = vector.extract_strided_slice %48 {offsets = [1, 0, 0], sizes = [16, 16, 32], strides = [1, 1, 1]} : vector<18x18x32xbf16> to vector<16x16x32xbf16>
    %56 = vector.shape_cast %55 : vector<16x16x32xbf16> to vector<256x32xbf16>
    %57 = vector.extract_strided_slice %48 {offsets = [1, 1, 0], sizes = [16, 16, 32], strides = [1, 1, 1]} : vector<18x18x32xbf16> to vector<16x16x32xbf16>
    %58 = vector.shape_cast %57 : vector<16x16x32xbf16> to vector<256x32xbf16>
    %59 = vector.extract_strided_slice %48 {offsets = [1, 2, 0], sizes = [16, 16, 32], strides = [1, 1, 1]} : vector<18x18x32xbf16> to vector<16x16x32xbf16>
    %60 = vector.shape_cast %59 : vector<16x16x32xbf16> to vector<256x32xbf16>
    %61 = vector.extract_strided_slice %48 {offsets = [2, 0, 0], sizes = [16, 16, 32], strides = [1, 1, 1]} : vector<18x18x32xbf16> to vector<16x16x32xbf16>
    %62 = vector.shape_cast %61 : vector<16x16x32xbf16> to vector<256x32xbf16>
    %63 = vector.extract_strided_slice %48 {offsets = [2, 1, 0], sizes = [16, 16, 32], strides = [1, 1, 1]} : vector<18x18x32xbf16> to vector<16x16x32xbf16>
    %64 = vector.shape_cast %63 : vector<16x16x32xbf16> to vector<256x32xbf16>
    %65 = vector.extract_strided_slice %48 {offsets = [2, 2, 0], sizes = [16, 16, 32], strides = [1, 1, 1]} : vector<18x18x32xbf16> to vector<16x16x32xbf16>
    %66 = vector.shape_cast %65 : vector<16x16x32xbf16> to vector<256x32xbf16>
    %67 = tpu.concatenate %50, %52, %54, %56, %58, %60, %62, %64, %66 in 1 : vector<256x32xbf16>, vector<256x32xbf16>, vector<256x32xbf16>, vector<256x32xbf16>, vector<256x32xbf16>, vector<256x32xbf16>, vector<256x32xbf16>, vector<256x32xbf16>, vector<256x32xbf16> -> vector<256x288xbf16>
    %c0_22 = arith.constant 0 : index
    %c0_23 = arith.constant 0 : index
    %68 = vector.load %arg8[%c0_22, %c0_23] : memref<288x32xbf16, #tpu.memory_space<vmem>>, vector<288x32xbf16>
    %cst_24 = arith.constant dense<0.000000e+00> : vector<256x32xf32>
    %69 = tpu.matmul %67, %68, %cst_24 {dimension_numbers = #tpu.dot_dimension_numbers<[1], [0], [0], [1], [0, 0, 1, 1], [], []>} : vector<256x288xbf16>, vector<288x32xbf16>, vector<256x32xf32> -> vector<256x32xf32>
    %c0_25 = arith.constant 0 : index
    %c0_26 = arith.constant 0 : index
    %70 = vector.load %arg9[%c0_25, %c0_26] : memref<1x32xf32, #tpu.memory_space<vmem>>, vector<1x32xf32>
    %71 = vector.broadcast %70 : vector<1x32xf32> to vector<256x32xf32>
    %72 = arith.addf %69, %71 : vector<256x32xf32>
    %cst_27 = arith.constant 0.000000e+00 : f32
    %73 = vector.broadcast %cst_27 : f32 to vector<256x32xf32>
    %74 = arith.cmpf oge, %72, %73 : vector<256x32xf32>
    %75 = vector.broadcast %3 : f32 to vector<256x32xf32>
    %76 = arith.mulf %75, %72 : vector<256x32xf32>
    %77 = arith.select %74, %72, %76 : vector<256x32xi1>, vector<256x32xf32>
    %78 = vector.extract_strided_slice %20 {offsets = [0, 64], sizes = [256, 32], strides = [1, 1]} : vector<256x96xf32> to vector<256x32xf32>
    %79 = arith.truncf %77 : vector<256x32xf32> to vector<256x32xbf16>
    %c0_28 = arith.constant 0 : index
    %c0_29 = arith.constant 0 : index
    %80 = vector.load %arg10[%c0_28, %c0_29] : memref<32x32xbf16, #tpu.memory_space<vmem>>, vector<32x32xbf16>
    %cst_30 = arith.constant dense<0.000000e+00> : vector<256x32xf32>
    %81 = tpu.matmul %79, %80, %cst_30 {dimension_numbers = #tpu.dot_dimension_numbers<[1], [0], [0], [1], [0, 0, 1, 1], [], []>} : vector<256x32xbf16>, vector<32x32xbf16>, vector<256x32xf32> -> vector<256x32xf32>
    %82 = arith.addf %78, %81 : vector<256x32xf32>
    %c0_31 = arith.constant 0 : index
    %c0_32 = arith.constant 0 : index
    %83 = vector.load %arg11[%c0_31, %c0_32] : memref<1x32xf32, #tpu.memory_space<vmem>>, vector<1x32xf32>
    %84 = vector.broadcast %83 : vector<1x32xf32> to vector<256x32xf32>
    %85 = arith.addf %82, %84 : vector<256x32xf32>
    %cst_33 = arith.constant 0.000000e+00 : f32
    %86 = vector.broadcast %cst_33 : f32 to vector<256x32xf32>
    %87 = arith.cmpf oge, %85, %86 : vector<256x32xf32>
    %88 = vector.broadcast %4 : f32 to vector<256x32xf32>
    %89 = arith.mulf %88, %85 : vector<256x32xf32>
    %90 = arith.select %87, %85, %89 : vector<256x32xi1>, vector<256x32xf32>
    %91 = arith.truncf %90 : vector<256x32xf32> to vector<256x32xbf16>
    %92 = vector.shape_cast %91 : vector<256x32xbf16> to vector<16x16x32xbf16>
    %cst_34 = arith.constant 0.000000e+00 : bf16
    %93 = vector.broadcast %cst_34 : bf16 to vector<1x16x32xbf16>
    %94 = tpu.concatenate %93, %92, %93 in 0 : vector<1x16x32xbf16>, vector<16x16x32xbf16>, vector<1x16x32xbf16> -> vector<18x16x32xbf16>
    %cst_35 = arith.constant 0.000000e+00 : bf16
    %95 = vector.broadcast %cst_35 : bf16 to vector<18x1x32xbf16>
    %96 = tpu.concatenate %95, %94, %95 in 1 : vector<18x1x32xbf16>, vector<18x16x32xbf16>, vector<18x1x32xbf16> -> vector<18x18x32xbf16>
    %97 = vector.extract_strided_slice %96 {offsets = [0, 0, 0], sizes = [16, 16, 32], strides = [1, 1, 1]} : vector<18x18x32xbf16> to vector<16x16x32xbf16>
    %98 = vector.shape_cast %97 : vector<16x16x32xbf16> to vector<256x32xbf16>
    %99 = vector.extract_strided_slice %96 {offsets = [0, 1, 0], sizes = [16, 16, 32], strides = [1, 1, 1]} : vector<18x18x32xbf16> to vector<16x16x32xbf16>
    %100 = vector.shape_cast %99 : vector<16x16x32xbf16> to vector<256x32xbf16>
    %101 = vector.extract_strided_slice %96 {offsets = [0, 2, 0], sizes = [16, 16, 32], strides = [1, 1, 1]} : vector<18x18x32xbf16> to vector<16x16x32xbf16>
    %102 = vector.shape_cast %101 : vector<16x16x32xbf16> to vector<256x32xbf16>
    %103 = vector.extract_strided_slice %96 {offsets = [1, 0, 0], sizes = [16, 16, 32], strides = [1, 1, 1]} : vector<18x18x32xbf16> to vector<16x16x32xbf16>
    %104 = vector.shape_cast %103 : vector<16x16x32xbf16> to vector<256x32xbf16>
    %105 = vector.extract_strided_slice %96 {offsets = [1, 1, 0], sizes = [16, 16, 32], strides = [1, 1, 1]} : vector<18x18x32xbf16> to vector<16x16x32xbf16>
    %106 = vector.shape_cast %105 : vector<16x16x32xbf16> to vector<256x32xbf16>
    %107 = vector.extract_strided_slice %96 {offsets = [1, 2, 0], sizes = [16, 16, 32], strides = [1, 1, 1]} : vector<18x18x32xbf16> to vector<16x16x32xbf16>
    %108 = vector.shape_cast %107 : vector<16x16x32xbf16> to vector<256x32xbf16>
    %109 = vector.extract_strided_slice %96 {offsets = [2, 0, 0], sizes = [16, 16, 32], strides = [1, 1, 1]} : vector<18x18x32xbf16> to vector<16x16x32xbf16>
    %110 = vector.shape_cast %109 : vector<16x16x32xbf16> to vector<256x32xbf16>
    %111 = vector.extract_strided_slice %96 {offsets = [2, 1, 0], sizes = [16, 16, 32], strides = [1, 1, 1]} : vector<18x18x32xbf16> to vector<16x16x32xbf16>
    %112 = vector.shape_cast %111 : vector<16x16x32xbf16> to vector<256x32xbf16>
    %113 = vector.extract_strided_slice %96 {offsets = [2, 2, 0], sizes = [16, 16, 32], strides = [1, 1, 1]} : vector<18x18x32xbf16> to vector<16x16x32xbf16>
    %114 = vector.shape_cast %113 : vector<16x16x32xbf16> to vector<256x32xbf16>
    %115 = tpu.concatenate %98, %100, %102, %104, %106, %108, %110, %112, %114 in 1 : vector<256x32xbf16>, vector<256x32xbf16>, vector<256x32xbf16>, vector<256x32xbf16>, vector<256x32xbf16>, vector<256x32xbf16>, vector<256x32xbf16>, vector<256x32xbf16>, vector<256x32xbf16> -> vector<256x288xbf16>
    %c0_36 = arith.constant 0 : index
    %c0_37 = arith.constant 0 : index
    %116 = vector.load %arg12[%c0_36, %c0_37] : memref<288x512xbf16, #tpu.memory_space<vmem>>, vector<288x512xbf16>
    %cst_38 = arith.constant dense<0.000000e+00> : vector<256x512xf32>
    %117 = tpu.matmul %115, %116, %cst_38 {dimension_numbers = #tpu.dot_dimension_numbers<[1], [0], [0], [1], [0, 0, 1, 1], [], []>} : vector<256x288xbf16>, vector<288x512xbf16>, vector<256x512xf32> -> vector<256x512xf32>
    %c0_39 = arith.constant 0 : index
    %c0_40 = arith.constant 0 : index
    %118 = vector.load %arg13[%c0_39, %c0_40] : memref<1x512xf32, #tpu.memory_space<vmem>>, vector<1x512xf32>
    %119 = vector.broadcast %118 : vector<1x512xf32> to vector<256x512xf32>
    %120 = arith.addf %117, %119 : vector<256x512xf32>
    %cst_41 = arith.constant 0.000000e+00 : f32
    %121 = vector.broadcast %cst_41 : f32 to vector<256x512xf32>
    %122 = arith.cmpf oge, %120, %121 : vector<256x512xf32>
    %123 = vector.broadcast %5 : f32 to vector<256x512xf32>
    %124 = arith.mulf %123, %120 : vector<256x512xf32>
    %125 = arith.select %122, %120, %124 : vector<256x512xi1>, vector<256x512xf32>
    %126 = arith.truncf %125 : vector<256x512xf32> to vector<256x512xbf16>
    %127 = vector.extract_strided_slice %126 {offsets = [0, 0], sizes = [256, 128], strides = [1, 1]} : vector<256x512xbf16> to vector<256x128xbf16>
    %128 = vector.shape_cast %127 : vector<256x128xbf16> to vector<16x16x128xbf16>
    %c0_42 = arith.constant 0 : index
    %c0_43 = arith.constant 0 : index
    %c0_44 = arith.constant 0 : index
    %c0_45 = arith.constant 0 : index
    %c0_46 = arith.constant 0 : index
    %129 = vector.load %arg15[%c0_42, %c0_43, %c0_44, %c0_45, %c0_46] : memref<1x16x4x16x128xbf16, #tpu.memory_space<vmem>>, vector<1x16x1x16x128xbf16>
    %130 = vector.shape_cast %129 : vector<1x16x1x16x128xbf16> to vector<16x16x128xbf16>
    %131 = vector.shape_cast %128 : vector<16x16x128xbf16> to vector<1x16x1x16x128xbf16>
    tpu.vector_store %arg15[%c0_42, %c0_43, %c0_44, %c0_45, %c0_46], %131 {strides = array<i32>} : memref<1x16x4x16x128xbf16, #tpu.memory_space<vmem>>, vector<1x16x1x16x128xbf16>,
    %132 = vector.extract_strided_slice %126 {offsets = [0, 128], sizes = [256, 128], strides = [1, 1]} : vector<256x512xbf16> to vector<256x128xbf16>
    %133 = vector.shape_cast %132 : vector<256x128xbf16> to vector<16x16x128xbf16>
    %c0_47 = arith.constant 0 : index
    %c0_48 = arith.constant 0 : index
    %c1_49 = arith.constant 1 : index
    %c0_50 = arith.constant 0 : index
    %c0_51 = arith.constant 0 : index
    %134 = vector.load %arg15[%c0_47, %c0_48, %c1_49, %c0_50, %c0_51] : memref<1x16x4x16x128xbf16, #tpu.memory_space<vmem>>, vector<1x16x1x16x128xbf16>
    %135 = vector.shape_cast %134 : vector<1x16x1x16x128xbf16> to vector<16x16x128xbf16>
    %136 = vector.shape_cast %133 : vector<16x16x128xbf16> to vector<1x16x1x16x128xbf16>
    tpu.vector_store %arg15[%c0_47, %c0_48, %c1_49, %c0_50, %c0_51], %136 {strides = array<i32>} : memref<1x16x4x16x128xbf16, #tpu.memory_space<vmem>>, vector<1x16x1x16x128xbf16>,
    %137 = vector.extract_strided_slice %126 {offsets = [0, 256], sizes = [256, 128], strides = [1, 1]} : vector<256x512xbf16> to vector<256x128xbf16>
    %138 = vector.shape_cast %137 : vector<256x128xbf16> to vector<16x16x128xbf16>
    %c0_52 = arith.constant 0 : index
    %c0_53 = arith.constant 0 : index
    %c2_54 = arith.constant 2 : index
    %c0_55 = arith.constant 0 : index
    %c0_56 = arith.constant 0 : index
    %139 = vector.load %arg15[%c0_52, %c0_53, %c2_54, %c0_55, %c0_56] : memref<1x16x4x16x128xbf16, #tpu.memory_space<vmem>>, vector<1x16x1x16x128xbf16>
    %140 = vector.shape_cast %139 : vector<1x16x1x16x128xbf16> to vector<16x16x128xbf16>
    %141 = vector.shape_cast %138 : vector<16x16x128xbf16> to vector<1x16x1x16x128xbf16>
    tpu.vector_store %arg15[%c0_52, %c0_53, %c2_54, %c0_55, %c0_56], %141 {strides = array<i32>} : memref<1x16x4x16x128xbf16, #tpu.memory_space<vmem>>, vector<1x16x1x16x128xbf16>,
    %142 = vector.extract_strided_slice %126 {offsets = [0, 384], sizes = [256, 128], strides = [1, 1]} : vector<256x512xbf16> to vector<256x128xbf16>
    %143 = vector.shape_cast %142 : vector<256x128xbf16> to vector<16x16x128xbf16>
    %c0_57 = arith.constant 0 : index
    %c0_58 = arith.constant 0 : index
    %c3_59 = arith.constant 3 : index
    %c0_60 = arith.constant 0 : index
    %c0_61 = arith.constant 0 : index
    %144 = vector.load %arg15[%c0_57, %c0_58, %c3_59, %c0_60, %c0_61] : memref<1x16x4x16x128xbf16, #tpu.memory_space<vmem>>, vector<1x16x1x16x128xbf16>
    %145 = vector.shape_cast %144 : vector<1x16x1x16x128xbf16> to vector<16x16x128xbf16>
    %146 = vector.shape_cast %143 : vector<16x16x128xbf16> to vector<1x16x1x16x128xbf16>
    tpu.vector_store %arg15[%c0_57, %c0_58, %c3_59, %c0_60, %c0_61], %146 {strides = array<i32>} : memref<1x16x4x16x128xbf16, #tpu.memory_space<vmem>>, vector<1x16x1x16x128xbf16>,
    return
  }
  func.func @transform_0(%arg0: i32) -> (i32, i32, i32) {
    %c0_i32 = arith.constant 0 : i32
    %c0_i32_0 = arith.constant 0 : i32
    %c0_i32_1 = arith.constant 0 : i32
    return %arg0, %c0_i32, %c0_i32_0 : i32, i32, i32
  }
  func.func @transform_1(%arg0: i32) -> (i32, i32) {
    %c0_i32 = arith.constant 0 : i32
    %c0_i32_0 = arith.constant 0 : i32
    %c0_i32_1 = arith.constant 0 : i32
    return %c0_i32, %c0_i32_0 : i32, i32
  }
  func.func @transform_2(%arg0: i32) -> (i32, i32) {
    %c0_i32 = arith.constant 0 : i32
    %c0_i32_0 = arith.constant 0 : i32
    %c0_i32_1 = arith.constant 0 : i32
    return %c0_i32, %c0_i32_0 : i32, i32
  }
  func.func @transform_3(%arg0: i32) -> (i32, i32) {
    %c0_i32 = arith.constant 0 : i32
    %c0_i32_0 = arith.constant 0 : i32
    %c0_i32_1 = arith.constant 0 : i32
    return %c0_i32, %c0_i32_0 : i32, i32
  }
  func.func @transform_4(%arg0: i32) -> (i32, i32) {
    %c0_i32 = arith.constant 0 : i32
    %c0_i32_0 = arith.constant 0 : i32
    %c0_i32_1 = arith.constant 0 : i32
    return %c0_i32, %c0_i32_0 : i32, i32
  }
  func.func @transform_5(%arg0: i32) -> (i32, i32) {
    %c0_i32 = arith.constant 0 : i32
    %c0_i32_0 = arith.constant 0 : i32
    %c0_i32_1 = arith.constant 0 : i32
    return %c0_i32, %c0_i32_0 : i32, i32
  }
  func.func @transform_6(%arg0: i32) -> (i32, i32) {
    %c0_i32 = arith.constant 0 : i32
    %c0_i32_0 = arith.constant 0 : i32
    %c0_i32_1 = arith.constant 0 : i32
    return %c0_i32, %c0_i32_0 : i32, i32
  }
  func.func @transform_7(%arg0: i32) -> (i32, i32) {
    %c0_i32 = arith.constant 0 : i32
    %c0_i32_0 = arith.constant 0 : i32
    %c0_i32_1 = arith.constant 0 : i32
    return %c0_i32, %c0_i32_0 : i32, i32
  }
  func.func @transform_8(%arg0: i32) -> (i32, i32) {
    %c0_i32 = arith.constant 0 : i32
    %c0_i32_0 = arith.constant 0 : i32
    %c0_i32_1 = arith.constant 0 : i32
    return %c0_i32, %c0_i32_0 : i32, i32
  }
  func.func @transform_9(%arg0: i32) -> (i32, i32) {
    %c0_i32 = arith.constant 0 : i32
    %c0_i32_0 = arith.constant 0 : i32
    %c0_i32_1 = arith.constant 0 : i32
    return %c0_i32, %c0_i32_0 : i32, i32
  }
  func.func @transform_10(%arg0: i32) -> (i32, i32) {
    %c0_i32 = arith.constant 0 : i32
    %c0_i32_0 = arith.constant 0 : i32
    %c0_i32_1 = arith.constant 0 : i32
    return %c0_i32, %c0_i32_0 : i32, i32
  }
  func.func @transform_11(%arg0: i32) -> (i32, i32) {
    %c0_i32 = arith.constant 0 : i32
    %c0_i32_0 = arith.constant 0 : i32
    %c0_i32_1 = arith.constant 0 : i32
    return %c0_i32, %c0_i32_0 : i32, i32
  }
  func.func @transform_12(%arg0: i32) -> (i32, i32) {
    %c0_i32 = arith.constant 0 : i32
    %c0_i32_0 = arith.constant 0 : i32
    %c0_i32_1 = arith.constant 0 : i32
    return %c0_i32, %c0_i32_0 : i32, i32
  }
  func.func @transform_13(%arg0: i32) -> i32 {
    %c0_i32 = arith.constant 0 : i32
    %c0_i32_0 = arith.constant 0 : i32
    return %c0_i32 : i32
  }
  func.func @transform_14(%arg0: i32) -> (i32, i32, i32, i32, i32) {
    %c0_i32 = arith.constant 0 : i32
    %c0_i32_0 = arith.constant 0 : i32
    %c0_i32_1 = arith.constant 0 : i32
    %c0_i32_2 = arith.constant 0 : i32
    %c0_i32_3 = arith.constant 0 : i32
    return %arg0, %c0_i32, %c0_i32_0, %c0_i32_1, %c0_i32_2 : i32, i32, i32, i32, i32
  }
}

module attributes {stable_mosaic.version = 11 : i64} {
  func.func @_hr_kernel(%arg0: i32, %arg1: i32, %arg2: memref<1x64x16x128xbf16, #tpu.memory_space<vmem>>, %arg3: memref<1152x128xbf16, #tpu.memory_space<vmem>>, %arg4: memref<1x128xf32, #tpu.memory_space<vmem>>, %arg5: memref<128x128xbf16, #tpu.memory_space<vmem>>, %arg6: memref<1x128xf32, #tpu.memory_space<vmem>>, %arg7: memref<2xf32, #tpu.memory_space<smem>>, %arg8: memref<1x16x16x128xf32, #tpu.memory_space<vmem>>, %arg9: memref<66x16x128xbf16, #tpu.memory_space<vmem>>) attributes {dimension_semantics = [#tpu.dimension_semantics<parallel>, #tpu.dimension_semantics<arbitrary>], iteration_bounds = array<i64: 2, 4>, scalar_prefetch = 0 : i64, scratch_operands = 1 : i64, tpu.core_type = #tpu.core_type<tc>, window_params = [{transform_indices = @transform_0, window_bounds = array<i64: 1, 64, 16, 128>}, {pipeline_mode = #tpu.pipeline_mode<synchronous>, transform_indices = @transform_1, window_bounds = array<i64: 1152, 128>}, {pipeline_mode = #tpu.pipeline_mode<synchronous>, transform_indices = @transform_2, window_bounds = array<i64: 1, 128>}, {pipeline_mode = #tpu.pipeline_mode<synchronous>, transform_indices = @transform_3, window_bounds = array<i64: 128, 128>}, {pipeline_mode = #tpu.pipeline_mode<synchronous>, transform_indices = @transform_4, window_bounds = array<i64: 1, 128>}, {transform_indices = @transform_5, window_bounds = array<i64: 2>}, {transform_indices = @transform_6, window_bounds = array<i64: 1, 16, 16, 128>}]} {
    %c0 = arith.constant 0 : index
    %0 = memref.load %arg7[%c0] : memref<2xf32, #tpu.memory_space<smem>>
    %c1 = arith.constant 1 : index
    %1 = memref.load %arg7[%c1] : memref<2xf32, #tpu.memory_space<smem>>
    %c0_i32 = arith.constant 0 : i32
    %2 = arith.cmpi eq, %arg1, %c0_i32 : i32
    %3 = arith.extui %2 : i1 to i32
    %c0_i32_0 = arith.constant 0 : i32
    %4 = arith.cmpi ne, %3, %c0_i32_0 : i32
    scf.if %4 {
      %cst_31 = arith.constant 0.000000e+00 : bf16
      %81 = vector.broadcast %cst_31 : bf16 to vector<16x128xbf16>
      %c0_32 = arith.constant 0 : index
      %c0_33 = arith.constant 0 : index
      %c0_34 = arith.constant 0 : index
      %82 = vector.load %arg9[%c0_32, %c0_33, %c0_34] : memref<66x16x128xbf16, #tpu.memory_space<vmem>>, vector<1x16x128xbf16>
      %83 = vector.shape_cast %82 : vector<1x16x128xbf16> to vector<16x128xbf16>
      %84 = vector.shape_cast %81 : vector<16x128xbf16> to vector<1x16x128xbf16>
      tpu.vector_store %arg9[%c0_32, %c0_33, %c0_34], %84 {strides = array<i32>} : memref<66x16x128xbf16, #tpu.memory_space<vmem>>, vector<1x16x128xbf16>,
      %c65 = arith.constant 65 : index
      %c0_35 = arith.constant 0 : index
      %c0_36 = arith.constant 0 : index
      %85 = vector.load %arg9[%c65, %c0_35, %c0_36] : memref<66x16x128xbf16, #tpu.memory_space<vmem>>, vector<1x16x128xbf16>
      %86 = vector.shape_cast %85 : vector<1x16x128xbf16> to vector<16x128xbf16>
      %87 = vector.shape_cast %81 : vector<16x128xbf16> to vector<1x16x128xbf16>
      tpu.vector_store %arg9[%c65, %c0_35, %c0_36], %87 {strides = array<i32>} : memref<66x16x128xbf16, #tpu.memory_space<vmem>>, vector<1x16x128xbf16>,
      %c0_37 = arith.constant 0 : index
      %c0_38 = arith.constant 0 : index
      %c0_39 = arith.constant 0 : index
      %c0_40 = arith.constant 0 : index
      %88 = vector.load %arg2[%c0_37, %c0_38, %c0_39, %c0_40] : memref<1x64x16x128xbf16, #tpu.memory_space<vmem>>, vector<1x64x16x128xbf16>
      %89 = vector.shape_cast %88 : vector<1x64x16x128xbf16> to vector<64x16x128xbf16>
      %c1_41 = arith.constant 1 : index
      %c0_42 = arith.constant 0 : index
      %c0_43 = arith.constant 0 : index
      %90 = vector.load %arg9[%c1_41, %c0_42, %c0_43] : memref<66x16x128xbf16, #tpu.memory_space<vmem>>, vector<64x16x128xbf16>
      tpu.vector_store %arg9[%c1_41, %c0_42, %c0_43], %89 {strides = array<i32>} : memref<66x16x128xbf16, #tpu.memory_space<vmem>>, vector<64x16x128xbf16>,
    } else {
    }
    %c16_i32 = arith.constant 16 : i32
    %5 = arith.muli %arg1, %c16_i32 : i32
    %cst = arith.constant 0.000000e+00 : f32
    %6 = vector.broadcast %cst : f32 to vector<256x128xf32>
    %c0_i32_1 = arith.constant 0 : i32
    %7 = arith.addi %5, %c0_i32_1 : i32
    %8 = arith.index_cast %7 : i32 to index
    %c0_2 = arith.constant 0 : index
    %c0_3 = arith.constant 0 : index
    %9 = vector.load %arg9[%8, %c0_2, %c0_3] : memref<66x16x128xbf16, #tpu.memory_space<vmem>>, vector<16x16x128xbf16>
    %cst_4 = arith.constant 0.000000e+00 : bf16
    %10 = vector.broadcast %cst_4 : bf16 to vector<16x1x32xbf16>
    %11 = vector.extract_strided_slice %9 {offsets = [0, 0, 96], sizes = [16, 15, 32], strides = [1, 1, 1]} : vector<16x16x128xbf16> to vector<16x15x32xbf16>
    %12 = tpu.concatenate %10, %11 in 1 : vector<16x1x32xbf16>, vector<16x15x32xbf16> -> vector<16x16x32xbf16>
    %13 = vector.extract_strided_slice %9 {offsets = [0, 0, 0], sizes = [16, 16, 96], strides = [1, 1, 1]} : vector<16x16x128xbf16> to vector<16x16x96xbf16>
    %14 = tpu.concatenate %12, %13 in 2 : vector<16x16x32xbf16>, vector<16x16x96xbf16> -> vector<16x16x128xbf16>
    %15 = vector.extract_strided_slice %9 {offsets = [0, 1, 0], sizes = [16, 15, 32], strides = [1, 1, 1]} : vector<16x16x128xbf16> to vector<16x15x32xbf16>
    %16 = tpu.concatenate %15, %10 in 1 : vector<16x15x32xbf16>, vector<16x1x32xbf16> -> vector<16x16x32xbf16>
    %17 = vector.extract_strided_slice %9 {offsets = [0, 0, 32], sizes = [16, 16, 96], strides = [1, 1, 1]} : vector<16x16x128xbf16> to vector<16x16x96xbf16>
    %18 = tpu.concatenate %17, %16 in 2 : vector<16x16x96xbf16>, vector<16x16x32xbf16> -> vector<16x16x128xbf16>
    %19 = tpu.concatenate %14, %9, %18 in 2 : vector<16x16x128xbf16>, vector<16x16x128xbf16>, vector<16x16x128xbf16> -> vector<16x16x384xbf16>
    %20 = vector.shape_cast %19 : vector<16x16x384xbf16> to vector<256x384xbf16>
    %c0_5 = arith.constant 0 : index
    %c0_6 = arith.constant 0 : index
    %21 = vector.load %arg3[%c0_5, %c0_6] : memref<1152x128xbf16, #tpu.memory_space<vmem>>, vector<384x128xbf16>
    %cst_7 = arith.constant dense<0.000000e+00> : vector<256x128xf32>
    %22 = tpu.matmul %20, %21, %cst_7 {dimension_numbers = #tpu.dot_dimension_numbers<[1], [0], [0], [1], [0, 0, 1, 1], [], []>} : vector<256x384xbf16>, vector<384x128xbf16>, vector<256x128xf32> -> vector<256x128xf32>
    %23 = arith.addf %6, %22 : vector<256x128xf32>
    %c1_i32 = arith.constant 1 : i32
    %24 = arith.addi %5, %c1_i32 : i32
    %25 = arith.index_cast %24 : i32 to index
    %c0_8 = arith.constant 0 : index
    %c0_9 = arith.constant 0 : index
    %26 = vector.load %arg9[%25, %c0_8, %c0_9] : memref<66x16x128xbf16, #tpu.memory_space<vmem>>, vector<16x16x128xbf16>
    %cst_10 = arith.constant 0.000000e+00 : bf16
    %27 = vector.broadcast %cst_10 : bf16 to vector<16x1x32xbf16>
    %28 = vector.extract_strided_slice %26 {offsets = [0, 0, 96], sizes = [16, 15, 32], strides = [1, 1, 1]} : vector<16x16x128xbf16> to vector<16x15x32xbf16>
    %29 = tpu.concatenate %27, %28 in 1 : vector<16x1x32xbf16>, vector<16x15x32xbf16> -> vector<16x16x32xbf16>
    %30 = vector.extract_strided_slice %26 {offsets = [0, 0, 0], sizes = [16, 16, 96], strides = [1, 1, 1]} : vector<16x16x128xbf16> to vector<16x16x96xbf16>
    %31 = tpu.concatenate %29, %30 in 2 : vector<16x16x32xbf16>, vector<16x16x96xbf16> -> vector<16x16x128xbf16>
    %32 = vector.extract_strided_slice %26 {offsets = [0, 1, 0], sizes = [16, 15, 32], strides = [1, 1, 1]} : vector<16x16x128xbf16> to vector<16x15x32xbf16>
    %33 = tpu.concatenate %32, %27 in 1 : vector<16x15x32xbf16>, vector<16x1x32xbf16> -> vector<16x16x32xbf16>
    %34 = vector.extract_strided_slice %26 {offsets = [0, 0, 32], sizes = [16, 16, 96], strides = [1, 1, 1]} : vector<16x16x128xbf16> to vector<16x16x96xbf16>
    %35 = tpu.concatenate %34, %33 in 2 : vector<16x16x96xbf16>, vector<16x16x32xbf16> -> vector<16x16x128xbf16>
    %36 = tpu.concatenate %31, %26, %35 in 2 : vector<16x16x128xbf16>, vector<16x16x128xbf16>, vector<16x16x128xbf16> -> vector<16x16x384xbf16>
    %37 = vector.shape_cast %36 : vector<16x16x384xbf16> to vector<256x384xbf16>
    %c384 = arith.constant 384 : index
    %c0_11 = arith.constant 0 : index
    %38 = vector.load %arg3[%c384, %c0_11] : memref<1152x128xbf16, #tpu.memory_space<vmem>>, vector<384x128xbf16>
    %cst_12 = arith.constant dense<0.000000e+00> : vector<256x128xf32>
    %39 = tpu.matmul %37, %38, %cst_12 {dimension_numbers = #tpu.dot_dimension_numbers<[1], [0], [0], [1], [0, 0, 1, 1], [], []>} : vector<256x384xbf16>, vector<384x128xbf16>, vector<256x128xf32> -> vector<256x128xf32>
    %40 = arith.addf %23, %39 : vector<256x128xf32>
    %c2_i32 = arith.constant 2 : i32
    %41 = arith.addi %5, %c2_i32 : i32
    %42 = arith.index_cast %41 : i32 to index
    %c0_13 = arith.constant 0 : index
    %c0_14 = arith.constant 0 : index
    %43 = vector.load %arg9[%42, %c0_13, %c0_14] : memref<66x16x128xbf16, #tpu.memory_space<vmem>>, vector<16x16x128xbf16>
    %cst_15 = arith.constant 0.000000e+00 : bf16
    %44 = vector.broadcast %cst_15 : bf16 to vector<16x1x32xbf16>
    %45 = vector.extract_strided_slice %43 {offsets = [0, 0, 96], sizes = [16, 15, 32], strides = [1, 1, 1]} : vector<16x16x128xbf16> to vector<16x15x32xbf16>
    %46 = tpu.concatenate %44, %45 in 1 : vector<16x1x32xbf16>, vector<16x15x32xbf16> -> vector<16x16x32xbf16>
    %47 = vector.extract_strided_slice %43 {offsets = [0, 0, 0], sizes = [16, 16, 96], strides = [1, 1, 1]} : vector<16x16x128xbf16> to vector<16x16x96xbf16>
    %48 = tpu.concatenate %46, %47 in 2 : vector<16x16x32xbf16>, vector<16x16x96xbf16> -> vector<16x16x128xbf16>
    %49 = vector.extract_strided_slice %43 {offsets = [0, 1, 0], sizes = [16, 15, 32], strides = [1, 1, 1]} : vector<16x16x128xbf16> to vector<16x15x32xbf16>
    %50 = tpu.concatenate %49, %44 in 1 : vector<16x15x32xbf16>, vector<16x1x32xbf16> -> vector<16x16x32xbf16>
    %51 = vector.extract_strided_slice %43 {offsets = [0, 0, 32], sizes = [16, 16, 96], strides = [1, 1, 1]} : vector<16x16x128xbf16> to vector<16x16x96xbf16>
    %52 = tpu.concatenate %51, %50 in 2 : vector<16x16x96xbf16>, vector<16x16x32xbf16> -> vector<16x16x128xbf16>
    %53 = tpu.concatenate %48, %43, %52 in 2 : vector<16x16x128xbf16>, vector<16x16x128xbf16>, vector<16x16x128xbf16> -> vector<16x16x384xbf16>
    %54 = vector.shape_cast %53 : vector<16x16x384xbf16> to vector<256x384xbf16>
    %c768 = arith.constant 768 : index
    %c0_16 = arith.constant 0 : index
    %55 = vector.load %arg3[%c768, %c0_16] : memref<1152x128xbf16, #tpu.memory_space<vmem>>, vector<384x128xbf16>
    %cst_17 = arith.constant dense<0.000000e+00> : vector<256x128xf32>
    %56 = tpu.matmul %54, %55, %cst_17 {dimension_numbers = #tpu.dot_dimension_numbers<[1], [0], [0], [1], [0, 0, 1, 1], [], []>} : vector<256x384xbf16>, vector<384x128xbf16>, vector<256x128xf32> -> vector<256x128xf32>
    %57 = arith.addf %40, %56 : vector<256x128xf32>
    %c0_18 = arith.constant 0 : index
    %c0_19 = arith.constant 0 : index
    %58 = vector.load %arg4[%c0_18, %c0_19] : memref<1x128xf32, #tpu.memory_space<vmem>>, vector<1x128xf32>
    %59 = vector.broadcast %58 : vector<1x128xf32> to vector<256x128xf32>
    %60 = arith.addf %57, %59 : vector<256x128xf32>
    %cst_20 = arith.constant 0.000000e+00 : f32
    %61 = vector.broadcast %cst_20 : f32 to vector<256x128xf32>
    %62 = arith.cmpf oge, %60, %61 : vector<256x128xf32>
    %63 = vector.broadcast %0 : f32 to vector<256x128xf32>
    %64 = arith.mulf %63, %60 : vector<256x128xf32>
    %65 = arith.select %62, %60, %64 : vector<256x128xi1>, vector<256x128xf32>
    %66 = arith.truncf %65 : vector<256x128xf32> to vector<256x128xbf16>
    %c0_21 = arith.constant 0 : index
    %c0_22 = arith.constant 0 : index
    %67 = vector.load %arg5[%c0_21, %c0_22] : memref<128x128xbf16, #tpu.memory_space<vmem>>, vector<128x128xbf16>
    %cst_23 = arith.constant dense<0.000000e+00> : vector<256x128xf32>
    %68 = tpu.matmul %66, %67, %cst_23 {dimension_numbers = #tpu.dot_dimension_numbers<[1], [0], [0], [1], [0, 0, 1, 1], [], []>} : vector<256x128xbf16>, vector<128x128xbf16>, vector<256x128xf32> -> vector<256x128xf32>
    %c0_24 = arith.constant 0 : index
    %c0_25 = arith.constant 0 : index
    %69 = vector.load %arg6[%c0_24, %c0_25] : memref<1x128xf32, #tpu.memory_space<vmem>>, vector<1x128xf32>
    %70 = vector.broadcast %69 : vector<1x128xf32> to vector<256x128xf32>
    %71 = arith.addf %68, %70 : vector<256x128xf32>
    %cst_26 = arith.constant 0.000000e+00 : f32
    %72 = vector.broadcast %cst_26 : f32 to vector<256x128xf32>
    %73 = arith.cmpf oge, %71, %72 : vector<256x128xf32>
    %74 = vector.broadcast %1 : f32 to vector<256x128xf32>
    %75 = arith.mulf %74, %71 : vector<256x128xf32>
    %76 = arith.select %73, %71, %75 : vector<256x128xi1>, vector<256x128xf32>
    %77 = vector.shape_cast %76 : vector<256x128xf32> to vector<16x16x128xf32>
    %c0_27 = arith.constant 0 : index
    %c0_28 = arith.constant 0 : index
    %c0_29 = arith.constant 0 : index
    %c0_30 = arith.constant 0 : index
    %78 = vector.load %arg8[%c0_27, %c0_28, %c0_29, %c0_30] : memref<1x16x16x128xf32, #tpu.memory_space<vmem>>, vector<1x16x16x128xf32>
    %79 = vector.shape_cast %78 : vector<1x16x16x128xf32> to vector<16x16x128xf32>
    %80 = vector.shape_cast %77 : vector<16x16x128xf32> to vector<1x16x16x128xf32>
    tpu.vector_store %arg8[%c0_27, %c0_28, %c0_29, %c0_30], %80 {strides = array<i32>} : memref<1x16x16x128xf32, #tpu.memory_space<vmem>>, vector<1x16x16x128xf32>,
    return
  }
  func.func @transform_0(%arg0: i32, %arg1: i32) -> (i32, i32, i32, i32) {
    %c0_i32 = arith.constant 0 : i32
    %c0_i32_0 = arith.constant 0 : i32
    %c0_i32_1 = arith.constant 0 : i32
    %c0_i32_2 = arith.constant 0 : i32
    return %arg0, %c0_i32, %c0_i32_0, %c0_i32_1 : i32, i32, i32, i32
  }
  func.func @transform_1(%arg0: i32, %arg1: i32) -> (i32, i32) {
    %c0_i32 = arith.constant 0 : i32
    %c0_i32_0 = arith.constant 0 : i32
    %c0_i32_1 = arith.constant 0 : i32
    return %c0_i32, %c0_i32_0 : i32, i32
  }
  func.func @transform_2(%arg0: i32, %arg1: i32) -> (i32, i32) {
    %c0_i32 = arith.constant 0 : i32
    %c0_i32_0 = arith.constant 0 : i32
    %c0_i32_1 = arith.constant 0 : i32
    return %c0_i32, %c0_i32_0 : i32, i32
  }
  func.func @transform_3(%arg0: i32, %arg1: i32) -> (i32, i32) {
    %c0_i32 = arith.constant 0 : i32
    %c0_i32_0 = arith.constant 0 : i32
    %c0_i32_1 = arith.constant 0 : i32
    return %c0_i32, %c0_i32_0 : i32, i32
  }
  func.func @transform_4(%arg0: i32, %arg1: i32) -> (i32, i32) {
    %c0_i32 = arith.constant 0 : i32
    %c0_i32_0 = arith.constant 0 : i32
    %c0_i32_1 = arith.constant 0 : i32
    return %c0_i32, %c0_i32_0 : i32, i32
  }
  func.func @transform_5(%arg0: i32, %arg1: i32) -> i32 {
    %c0_i32 = arith.constant 0 : i32
    %c0_i32_0 = arith.constant 0 : i32
    return %c0_i32 : i32
  }
  func.func @transform_6(%arg0: i32, %arg1: i32) -> (i32, i32, i32, i32) {
    %c0_i32 = arith.constant 0 : i32
    %c0_i32_0 = arith.constant 0 : i32
    %c0_i32_1 = arith.constant 0 : i32
    return %arg0, %arg1, %c0_i32, %c0_i32_0 : i32, i32, i32, i32
  }
}

</mosaic_0001>

<llo_original>
// kernel: simple_lr2hr_forward.3
$region0: #{simple_lr2hr_forward.3}
  #allocation0 [shape = 'u32[]', space=smem, size = 0x4, offset = 0x4, fixed_abs, tag = 'smem constant byte address 0x4 - core index']
  #allocation1 [shape = 'u32[144,128]{1,0:T(1,128)}', space=vmem, size = 0x12000, scoped, tag = 'internal scratch']
  #allocation2 [shape = 'bf16[66,16,128]{2,1,0:T(16,128)(2,1)}', space=vmem, size = 0x42000, scoped, tag = 'scratch operand']
  %s0 = inlined_call_operand.vmem [shape: bf16[2,64,16,128], index: 0, kind: input, shape index: {}]
  %s1 = inlined_call_operand.vmem [shape: bf16[1152,128], index: 1, kind: input, shape index: {}]
  %s2 = inlined_call_operand.vmem [shape: f32[1,128], index: 2, kind: input, shape index: {}]
  %s3 = inlined_call_operand.vmem [shape: bf16[128,128], index: 3, kind: input, shape index: {}]
  %s4 = inlined_call_operand.vmem [shape: f32[1,128], index: 4, kind: input, shape index: {}]
  %s5 = inlined_call_operand.vmem [shape: f32[2], index: 5, kind: input, shape index: {}]
  %s6 = inlined_call_operand.vmem [shape: f32[2,64,16,128], index: 6, kind: output, shape index: {}]
  %s7 = sld [smem:[#allocation0]]
  $region65: #{simple_lr2hr_forward.3} parent=0
    _
  %s9 = ssub.s32 1, %s7
  %s10 = scalar_select 0, %s9, %s7
  $region1: #{simple_lr2hr_forward.3} parent=0
    #allocation3 [shape = 'u8[512]{0}', space=smem, size = 0x200, scoped, tag = 'input window, operand 5, single buffered']
    #allocation4 [shape = 's32[2]{0}', space=sflag, size = 0x8, scoped, tag = 'scoped memory for simple_lr2hr_forward.3']
    %11 = vsyncpa [#allocation4], 0
    loop: start=0, step=1, limit=10
    $region2: #{simple_lr2hr_forward.3} parent=1 // loop_pre_header
      _
    $region3: #{simple_lr2hr_forward.3} parent=1 // loop_header
      %s13 = sphi 0, %s17
      %p14 = scmp.ge.s32.totalorder %s13, 10
      %s20 = sphi 0, %s32
      %s21 = sphi 0, %s28
      %s22 = sphi 0, %s20
      %s23 = sphi 0, %s21
      %s24 = sphi 0, %s22
      %s25 = sphi 0, %s23
      %s35 = sphi 0, %s37
      %s38 = sphi 0, %s35
      %s39 = sphi 0, %s38
      %s55 = sphi 0, %s39
      %s59 = sphi 0, %s59
      %s61 = sphi 0, %s59
      %s62 = sphi 0, %s61
      %s76 = sphi 0, %s62
      %s80 = sphi 0, %s80
      %s82 = sphi 0, %s80
      %s83 = sphi 0, %s82
      %s97 = sphi 0, %s83
      %s101 = sphi 0, %s101
      %s103 = sphi 0, %s101
      %s104 = sphi 0, %s103
      %s118 = sphi 0, %s104
      %s122 = sphi 0, %s122
      %s124 = sphi 0, %s122
      %s125 = sphi 0, %s124
      %s139 = sphi 0, %s125
      %s143 = sphi 0, %s143
      %s145 = sphi 0, %s143
      %s146 = sphi 0, %s145
      %s160 = sphi 0, %s146
      %s168 = sphi 0, %s170
      %s171 = sphi 0, %s168
      %s172 = sphi 0, %s171
      %s188 = sphi 0, %s172
    $region4: #{simple_lr2hr_forward.3} parent=1 // loop_header_branch
      %16 = sbr.rel (%p14) target = $region8
    $region5: #{simple_lr2hr_forward.3} parent=1 // loop_body
      %s18 = ssub.s32 %s13, 1
      %s19 = ssub.s32 %s13, 2
      %s26 = sadd.s32 1, %s21
      %p27 = scmp.ge.s32.totalorder %s26, 4
      %s28 = scalar_select %p27, 0, %s26
      %s29 = sadd.s32 1, %s20
      %s30 = scalar_select %p27, %s29, %s20
      %p31 = scmp.ge.s32.totalorder %s30, 2
      %s32 = scalar_select %p31, 0, %s30
      %s33 = ssub.s32 %s20, %s32
      %p34 = scmp.eq.s32.totalorder %s33, 0
      %s36 = sadd.s32 %s35, 1
      %s37 = scalar_select %p34, %s35, %s36
      %p40 = pneg %p34
      %p41 = scmp.eq.s32.totalorder %s13, 7
      %p42 = por %p40, %p41
      %p43 = scmp.ne.s32.totalorder %s35, %s38
      %p44 = scmp.eq.s32.totalorder %s13, 0
      %p45 = por %p43, %p44
      %p46 = scmp.ne.s32.totalorder %s35, %s38
      %p47 = scmp.eq.s32.totalorder %s18, 7
      %p48 = por %p46, %p47
      %p49 = scmp.ne.s32.totalorder %s38, %s39
      %p50 = scmp.eq.s32.totalorder %s18, 0
      %p51 = por %p49, %p50
      %p52 = scmp.ne.s32.totalorder %s38, %s39
      %p53 = scmp.eq.s32.totalorder %s19, 7
      %p54 = por %p52, %p53
      %p56 = scmp.ne.s32.totalorder %s39, %s55
      %p57 = scmp.eq.s32.totalorder %s19, 0
      %p58 = por %p56, %p57
      %s60 = sadd.s32 %s59, 1
      %p63 = scmp.eq.s32.totalorder %s13, 7
      %p64 = scmp.ne.s32.totalorder %s59, %s61
      %p65 = scmp.eq.s32.totalorder %s13, 0
      %p66 = por %p64, %p65
      %p67 = scmp.ne.s32.totalorder %s59, %s61
      %p68 = scmp.eq.s32.totalorder %s18, 7
      %p69 = por %p67, %p68
      %p70 = scmp.ne.s32.totalorder %s61, %s62
      %p71 = scmp.eq.s32.totalorder %s18, 0
      %p72 = por %p70, %p71
      %p73 = scmp.ne.s32.totalorder %s61, %s62
      %p74 = scmp.eq.s32.totalorder %s19, 7
      %p75 = por %p73, %p74
      %p77 = scmp.ne.s32.totalorder %s62, %s76
      %p78 = scmp.eq.s32.totalorder %s19, 0
      %p79 = por %p77, %p78
      %s81 = sadd.s32 %s80, 1
      %p84 = scmp.eq.s32.totalorder %s13, 7
      %p85 = scmp.ne.s32.totalorder %s80, %s82
      %p86 = scmp.eq.s32.totalorder %s13, 0
      %p87 = por %p85, %p86
      %p88 = scmp.ne.s32.totalorder %s80, %s82
      %p89 = scmp.eq.s32.totalorder %s18, 7
      %p90 = por %p88, %p89
      %p91 = scmp.ne.s32.totalorder %s82, %s83
      %p92 = scmp.eq.s32.totalorder %s18, 0
      %p93 = por %p91, %p92
      %p94 = scmp.ne.s32.totalorder %s82, %s83
      %p95 = scmp.eq.s32.totalorder %s19, 7
      %p96 = por %p94, %p95
      %p98 = scmp.ne.s32.totalorder %s83, %s97
      %p99 = scmp.eq.s32.totalorder %s19, 0
      %p100 = por %p98, %p99
      %s102 = sadd.s32 %s101, 1
      %p105 = scmp.eq.s32.totalorder %s13, 7
      %p106 = scmp.ne.s32.totalorder %s101, %s103
      %p107 = scmp.eq.s32.totalorder %s13, 0
      %p108 = por %p106, %p107
      %p109 = scmp.ne.s32.totalorder %s101, %s103
      %p110 = scmp.eq.s32.totalorder %s18, 7
      %p111 = por %p109, %p110
      %p112 = scmp.ne.s32.totalorder %s103, %s104
      %p113 = scmp.eq.s32.totalorder %s18, 0
      %p114 = por %p112, %p113
      %p115 = scmp.ne.s32.totalorder %s103, %s104
      %p116 = scmp.eq.s32.totalorder %s19, 7
      %p117 = por %p115, %p116
      %p119 = scmp.ne.s32.totalorder %s104, %s118
      %p120 = scmp.eq.s32.totalorder %s19, 0
      %p121 = por %p119, %p120
      %s123 = sadd.s32 %s122, 1
      %p126 = scmp.eq.s32.totalorder %s13, 7
      %p127 = scmp.ne.s32.totalorder %s122, %s124
      %p128 = scmp.eq.s32.totalorder %s13, 0
      %p129 = por %p127, %p128
      %p130 = scmp.ne.s32.totalorder %s122, %s124
      %p131 = scmp.eq.s32.totalorder %s18, 7
      %p132 = por %p130, %p131
      %p133 = scmp.ne.s32.totalorder %s124, %s125
      %p134 = scmp.eq.s32.totalorder %s18, 0
      %p135 = por %p133, %p134
      %p136 = scmp.ne.s32.totalorder %s124, %s125
      %p137 = scmp.eq.s32.totalorder %s19, 7
      %p138 = por %p136, %p137
      %p140 = scmp.ne.s32.totalorder %s125, %s139
      %p141 = scmp.eq.s32.totalorder %s19, 0
      %p142 = por %p140, %p141
      %s144 = sadd.s32 %s143, 1
      %p147 = scmp.eq.s32.totalorder %s13, 7
      %p148 = scmp.ne.s32.totalorder %s143, %s145
      %p149 = scmp.eq.s32.totalorder %s13, 0
      %p150 = por %p148, %p149
      %p151 = scmp.ne.s32.totalorder %s143, %s145
      %p152 = scmp.eq.s32.totalorder %s18, 7
      %p153 = por %p151, %p152
      %p154 = scmp.ne.s32.totalorder %s145, %s146
      %p155 = scmp.eq.s32.totalorder %s18, 0
      %p156 = por %p154, %p155
      %p157 = scmp.ne.s32.totalorder %s145, %s146
      %p158 = scmp.eq.s32.totalorder %s19, 7
      %p159 = por %p157, %p158
      %p161 = scmp.ne.s32.totalorder %s146, %s160
      %p162 = scmp.eq.s32.totalorder %s19, 0
      %p163 = por %p161, %p162
      %s164 = ssub.s32 %s20, %s32
      %s165 = ssub.s32 %s21, %s28
      %s166 = sor.u32 %s164, %s165
      %p167 = scmp.eq.s32.totalorder %s166, 0
      %s169 = sadd.s32 %s168, 1
      %s170 = scalar_select %p167, %s168, %s169
      %p173 = pneg %p167
      %p174 = scmp.eq.s32.totalorder %s13, 7
      %p175 = por %p173, %p174
      %p176 = scmp.ne.s32.totalorder %s168, %s171
      %p177 = scmp.eq.s32.totalorder %s13, 0
      %p178 = por %p176, %p177
      %p179 = scmp.ne.s32.totalorder %s168, %s171
      %p180 = scmp.eq.s32.totalorder %s18, 7
      %p181 = por %p179, %p180
      %p182 = scmp.ne.s32.totalorder %s171, %s172
      %p183 = scmp.eq.s32.totalorder %s18, 0
      %p184 = por %p182, %p183
      %p185 = scmp.ne.s32.totalorder %s171, %s172
      %p186 = scmp.eq.s32.totalorder %s19, 7
      %p187 = por %p185, %p186
      %p189 = scmp.ne.s32.totalorder %s172, %s188
      %p190 = scmp.eq.s32.totalorder %s19, 0
      %p191 = por %p189, %p190
      %p192 = scmp.le.s32.totalorder 1, %s13
      %p193 = scmp.lt.s32.totalorder %s13, 9
      %p194 = pnand %p192, %p193
      %p195 = pneg %p194
      // Predicated region
      $region9: #{simple_lr2hr_forward.3} parent=5 // pred_check
        _
      $region10: #{simple_lr2hr_forward.3} parent=5 // pred_check_branch
        %197 = sbr.rel (%p194) target = $region12
      $region11: #{simple_lr2hr_forward.3} parent=5 // pred_region
        %s198 = ssub.s32 %s13, 1
        // Predicated region
        $region13: #{simple_lr2hr_forward.3} parent=11 // pred_check
          %p199 = pneg %p72
        $region14: #{simple_lr2hr_forward.3} parent=11 // pred_check_branch
          %201 = sbr.rel (%p199) target = $region16
        $region15: #{simple_lr2hr_forward.3} parent=11 // pred_region
          _
        $region16: #{simple_lr2hr_forward.3} parent=11 // pred_fallthru
          _
        // Predicated region
        $region17: #{simple_lr2hr_forward.3} parent=11 // pred_check
          %p202 = pneg %p93
        $region18: #{simple_lr2hr_forward.3} parent=11 // pred_check_branch
          %204 = sbr.rel (%p202) target = $region20
        $region19: #{simple_lr2hr_forward.3} parent=11 // pred_region
          _
        $region20: #{simple_lr2hr_forward.3} parent=11 // pred_fallthru
          _
        // Predicated region
        $region21: #{simple_lr2hr_forward.3} parent=11 // pred_check
          %p205 = pneg %p114
        $region22: #{simple_lr2hr_forward.3} parent=11 // pred_check_branch
          %207 = sbr.rel (%p205) target = $region24
        $region23: #{simple_lr2hr_forward.3} parent=11 // pred_region
          _
        $region24: #{simple_lr2hr_forward.3} parent=11 // pred_fallthru
          _
        // Predicated region
        $region25: #{simple_lr2hr_forward.3} parent=11 // pred_check
          %p208 = pneg %p135
        $region26: #{simple_lr2hr_forward.3} parent=11 // pred_check_branch
          %210 = sbr.rel (%p208) target = $region28
        $region27: #{simple_lr2hr_forward.3} parent=11 // pred_region
          _
        $region28: #{simple_lr2hr_forward.3} parent=11 // pred_fallthru
          _
        // Predicated region
        $region29: #{simple_lr2hr_forward.3} parent=11 // pred_check
          %p211 = pneg %p156
        $region30: #{simple_lr2hr_forward.3} parent=11 // pred_check_branch
          %213 = sbr.rel (%p211) target = $region32
        $region31: #{simple_lr2hr_forward.3} parent=11 // pred_region
          %s215 = ssub.s32 16, 16
          %216 = vsyncadd [#allocation4], %s215
          %s218 = sshll.u32 %s5, 4
          %s219 = int_to_ptr.vmem [resolvable:$true] %s218
          %221 = dma.vmem_to_smem %s219, 16, [#allocation3], [#allocation4]
        $region32: #{simple_lr2hr_forward.3} parent=11 // pred_fallthru
          _
      $region12: #{simple_lr2hr_forward.3} parent=5 // pred_fallthru
        _
      %p222 = scmp.lt.s32.totalorder %s13, 8
      // Predicated region
      $region33: #{simple_lr2hr_forward.3} parent=5 // pred_check
        %p223 = pneg %p222
      $region34: #{simple_lr2hr_forward.3} parent=5 // pred_check_branch
        %225 = sbr.rel (%p223) target = $region36
      $region35: #{simple_lr2hr_forward.3} parent=5 // pred_region
        // Predicated region
        $region37: #{simple_lr2hr_forward.3} parent=35 // pred_check
          %p226 = pneg %p45
        $region38: #{simple_lr2hr_forward.3} parent=35 // pred_check_branch
          %228 = sbr.rel (%p226) target = $region40
        $region39: #{simple_lr2hr_forward.3} parent=35 // pred_region
          %p229 = scmp.lt.s32.totalorder %s20, 1
          %s230 = scalar_select %p229, %s20, 1
          %s231 = smul.addr %s230, 128
          %s232 = smul.addr %s231, 4
          %s233 = scalar_lea.vmem %s0, %s232
        $region40: #{simple_lr2hr_forward.3} parent=35 // pred_fallthru
          _
      $region36: #{simple_lr2hr_forward.3} parent=5 // pred_fallthru
        _
      %p234 = scmp.le.s32.totalorder 1, %s13
      %p235 = scmp.lt.s32.totalorder %s13, 9
      %p236 = pnand %p234, %p235
      %p237 = pneg %p236
      // Predicated region
      $region41: #{simple_lr2hr_forward.3} parent=5 // pred_check
        _
      $region42: #{simple_lr2hr_forward.3} parent=5 // pred_check_branch
        %239 = sbr.rel (%p236) target = $region44
      $region43: #{simple_lr2hr_forward.3} parent=5 // pred_region
        %s240 = ssub.s32 %s13, 1
        // Predicated region
        $region45: #{simple_lr2hr_forward.3} parent=43 // pred_check
          %p241 = pneg %p156
        $region46: #{simple_lr2hr_forward.3} parent=43 // pred_check_branch
          %243 = sbr.rel (%p241) target = $region48
        $region47: #{simple_lr2hr_forward.3} parent=43 // pred_region
          %244 = dma.done [#allocation4], 16
        $region48: #{simple_lr2hr_forward.3} parent=43 // pred_fallthru
          _
        %245 = sfence
        %p246 = scmp.lt.s32.totalorder %s22, 1
        %s247 = scalar_select %p246, %s22, 1
        %s248 = smul.addr %s247, 128
        %s249 = smul.addr %s248, 4
        %s250 = scalar_lea.vmem %s0, %s249
        %p251 = pneg %p51
        %p252 = pneg %p48
        %p253 = pneg %p72
        %p254 = pneg %p69
        %p255 = pneg %p93
        %p256 = pneg %p90
        %p257 = pneg %p114
        %p258 = pneg %p111
        %p259 = pneg %p135
        %p260 = pneg %p132
        %p261 = pneg %p156
        %p262 = pneg %p153
        %p263 = pneg %p184
        %p264 = pneg %p181
        %s265 = smul.u32 16, %s23
        %p266 = scmp.lt.s32.totalorder %s22, 1
        %s267 = scalar_select %p266, %s22, 1
        %p268 = scmp.lt.s32.totalorder %s265, 63
        %s269 = scalar_select %p268, %s265, 63
        %s270 = smul.addr %s269, 2
        %s271 = smul.addr %s267, 128
        %s272 = sadd.s32 %s270, %s271
        %s273 = smul.addr %s272, 8
        %s274 = scalar_lea.vmem %s6, %s273
        %p275 = scmp.lt.s32.totalorder %s22, 1
        %s276 = scalar_select %p275, %s22, 1
        %s277 = smul.addr %s276, 128
        %s278 = smul.addr %s277, 4
        %s279 = scalar_lea.vmem %s0, %s278
        %s280 = smul.u32 16, %s23
        %p281 = scmp.lt.s32.totalorder %s22, 1
        %s282 = scalar_select %p281, %s22, 1
        %p283 = scmp.lt.s32.totalorder %s280, 63
        %s284 = scalar_select %p283, %s280, 63
        %s285 = smul.addr %s284, 2
        %s286 = smul.addr %s282, 128
        %s287 = sadd.s32 %s285, %s286
        %s288 = smul.addr %s287, 8
        %s289 = scalar_lea.vmem %s6, %s288
        %s290 = smul.u32 16, %s23
        %s292 = sld [smem:[#allocation3]]
        %s293 = sld [smem:[#allocation3 + $0x1]]
        %p294 = scmp.eq.s32.totalorder %s23, 0
        // Predicated region
        $region49: #{simple_lr2hr_forward.3} parent=43 // pred_check
          %p295 = pneg %p294
        $region50: #{simple_lr2hr_forward.3} parent=43 // pred_check_branch
          %297 = sbr.rel (%p295) target = $region52
        $region51: #{simple_lr2hr_forward.3} parent=43 // pred_region
          %298 = vst [vmem:[#allocation2] sm:$0xff] 0
          %s299 = scalar_lea.vmem [#allocation2], 520
          %300 = vst [vmem:[%s299] sm:$0xff] 0
          %v301 = vld [vmem:[%s279] sm:$0xf]
          %v302 = vld [vmem:[%s279 + $0x4] sm:$0xf]
          %v303 = vld [vmem:[%s279 + $0x8] sm:$0xf]
          %v304 = vld [vmem:[%s279 + $0xc] sm:$0xf]
          %v305 = vld [vmem:[%s279 + $0x10] sm:$0xf]
          %v306 = vld [vmem:[%s279 + $0x14] sm:$0xf]
          %v307 = vld [vmem:[%s279 + $0x18] sm:$0xf]
          %v308 = vld [vmem:[%s279 + $0x1c] sm:$0xf]
          %v309 = vld [vmem:[%s279 + $0x20] sm:$0xf]
          %v310 = vld [vmem:[%s279 + $0x24] sm:$0xf]
          %v311 = vld [vmem:[%s279 + $0x28] sm:$0xf]
          %v312 = vld [vmem:[%s279 + $0x2c] sm:$0xf]
          %v313 = vld [vmem:[%s279 + $0x30] sm:$0xf]
          %v314 = vld [vmem:[%s279 + $0x34] sm:$0xf]
          %v315 = vld [vmem:[%s279 + $0x38] sm:$0xf]
          %v316 = vld [vmem:[%s279 + $0x3c] sm:$0xf]
          %v317 = vld [vmem:[%s279 + $0x40] sm:$0xf]
          %v318 = vld [vmem:[%s279 + $0x44] sm:$0xf]
          %v319 = vld [vmem:[%s279 + $0x48] sm:$0xf]
          %v320 = vld [vmem:[%s279 + $0x4c] sm:$0xf]
          %v321 = vld [vmem:[%s279 + $0x50] sm:$0xf]
          %v322 = vld [vmem:[%s279 + $0x54] sm:$0xf]
          %v323 = vld [vmem:[%s279 + $0x58] sm:$0xf]
          %v324 = vld [vmem:[%s279 + $0x5c] sm:$0xf]
          %v325 = vld [vmem:[%s279 + $0x60] sm:$0xf]
          %v326 = vld [vmem:[%s279 + $0x64] sm:$0xf]
          %v327 = vld [vmem:[%s279 + $0x68] sm:$0xf]
          %v328 = vld [vmem:[%s279 + $0x6c] sm:$0xf]
          %v329 = vld [vmem:[%s279 + $0x70] sm:$0xf]
          %v330 = vld [vmem:[%s279 + $0x74] sm:$0xf]
          %v331 = vld [vmem:[%s279 + $0x78] sm:$0xf]
          %v332 = vld [vmem:[%s279 + $0x7c] sm:$0xf]
          %v333 = vld [vmem:[%s279 + $0x80] sm:$0xf]
          %v334 = vld [vmem:[%s279 + $0x84] sm:$0xf]
          %v335 = vld [vmem:[%s279 + $0x88] sm:$0xf]
          %v336 = vld [vmem:[%s279 + $0x8c] sm:$0xf]
          %v337 = vld [vmem:[%s279 + $0x90] sm:$0xf]
          %v338 = vld [vmem:[%s279 + $0x94] sm:$0xf]
          %v339 = vld [vmem:[%s279 + $0x98] sm:$0xf]
          %v340 = vld [vmem:[%s279 + $0x9c] sm:$0xf]
          %v341 = vld [vmem:[%s279 + $0xa0] sm:$0xf]
          %v342 = vld [vmem:[%s279 + $0xa4] sm:$0xf]
          %v343 = vld [vmem:[%s279 + $0xa8] sm:$0xf]
          %v344 = vld [vmem:[%s279 + $0xac] sm:$0xf]
          %v345 = vld [vmem:[%s279 + $0xb0] sm:$0xf]
          %v346 = vld [vmem:[%s279 + $0xb4] sm:$0xf]
          %v347 = vld [vmem:[%s279 + $0xb8] sm:$0xf]
          %v348 = vld [vmem:[%s279 + $0xbc] sm:$0xf]
          %v349 = vld [vmem:[%s279 + $0xc0] sm:$0xf]
          %v350 = vld [vmem:[%s279 + $0xc4] sm:$0xf]
          %v351 = vld [vmem:[%s279 + $0xc8] sm:$0xf]
          %v352 = vld [vmem:[%s279 + $0xcc] sm:$0xf]
          %v353 = vld [vmem:[%s279 + $0xd0] sm:$0xf]
          %v354 = vld [vmem:[%s279 + $0xd4] sm:$0xf]
          %v355 = vld [vmem:[%s279 + $0xd8] sm:$0xf]
          %v356 = vld [vmem:[%s279 + $0xdc] sm:$0xf]
          %v357 = vld [vmem:[%s279 + $0xe0] sm:$0xf]
          %v358 = vld [vmem:[%s279 + $0xe4] sm:$0xf]
          %v359 = vld [vmem:[%s279 + $0xe8] sm:$0xf]
          %v360 = vld [vmem:[%s279 + $0xec] sm:$0xf]
          %v361 = vld [vmem:[%s279 + $0xf0] sm:$0xf]
          %v362 = vld [vmem:[%s279 + $0xf4] sm:$0xf]
          %v363 = vld [vmem:[%s279 + $0xf8] sm:$0xf]
          %v364 = vld [vmem:[%s279 + $0xfc] sm:$0xf]
          %v365 = vld [vmem:[%s279 + $0x100] sm:$0xf]
          %v366 = vld [vmem:[%s279 + $0x104] sm:$0xf]
          %v367 = vld [vmem:[%s279 + $0x108] sm:$0xf]
          %v368 = vld [vmem:[%s279 + $0x10c] sm:$0xf]
          %v369 = vld [vmem:[%s279 + $0x110] sm:$0xf]
          %v370 = vld [vmem:[%s279 + $0x114] sm:$0xf]
          %v371 = vld [vmem:[%s279 + $0x118] sm:$0xf]
          %v372 = vld [vmem:[%s279 + $0x11c] sm:$0xf]
          %v373 = vld [vmem:[%s279 + $0x120] sm:$0xf]
          %v374 = vld [vmem:[%s279 + $0x124] sm:$0xf]
          %v375 = vld [vmem:[%s279 + $0x128] sm:$0xf]
          %v376 = vld [vmem:[%s279 + $0x12c] sm:$0xf]
          %v377 = vld [vmem:[%s279 + $0x130] sm:$0xf]
          %v378 = vld [vmem:[%s279 + $0x134] sm:$0xf]
          %v379 = vld [vmem:[%s279 + $0x138] sm:$0xf]
          %v380 = vld [vmem:[%s279 + $0x13c] sm:$0xf]
          %v381 = vld [vmem:[%s279 + $0x140] sm:$0xf]
          %v382 = vld [vmem:[%s279 + $0x144] sm:$0xf]
          %v383 = vld [vmem:[%s279 + $0x148] sm:$0xf]
          %v384 = vld [vmem:[%s279 + $0x14c] sm:$0xf]
          %v385 = vld [vmem:[%s279 + $0x150] sm:$0xf]
          %v386 = vld [vmem:[%s279 + $0x154] sm:$0xf]
          %v387 = vld [vmem:[%s279 + $0x158] sm:$0xf]
          %v388 = vld [vmem:[%s279 + $0x15c] sm:$0xf]
          %v389 = vld [vmem:[%s279 + $0x160] sm:$0xf]
          %v390 = vld [vmem:[%s279 + $0x164] sm:$0xf]
          %v391 = vld [vmem:[%s279 + $0x168] sm:$0xf]
          %v392 = vld [vmem:[%s279 + $0x16c] sm:$0xf]
          %v393 = vld [vmem:[%s279 + $0x170] sm:$0xf]
          %v394 = vld [vmem:[%s279 + $0x174] sm:$0xf]
          %v395 = vld [vmem:[%s279 + $0x178] sm:$0xf]
          %v396 = vld [vmem:[%s279 + $0x17c] sm:$0xf]
          %v397 = vld [vmem:[%s279 + $0x180] sm:$0xf]
          %v398 = vld [vmem:[%s279 + $0x184] sm:$0xf]
          %v399 = vld [vmem:[%s279 + $0x188] sm:$0xf]
          %v400 = vld [vmem:[%s279 + $0x18c] sm:$0xf]
          %v401 = vld [vmem:[%s279 + $0x190] sm:$0xf]
          %v402 = vld [vmem:[%s279 + $0x194] sm:$0xf]
          %v403 = vld [vmem:[%s279 + $0x198] sm:$0xf]
          %v404 = vld [vmem:[%s279 + $0x19c] sm:$0xf]
          %v405 = vld [vmem:[%s279 + $0x1a0] sm:$0xf]
          %v406 = vld [vmem:[%s279 + $0x1a4] sm:$0xf]
          %v407 = vld [vmem:[%s279 + $0x1a8] sm:$0xf]
          %v408 = vld [vmem:[%s279 + $0x1ac] sm:$0xf]
          %v409 = vld [vmem:[%s279 + $0x1b0] sm:$0xf]
          %v410 = vld [vmem:[%s279 + $0x1b4] sm:$0xf]
          %v411 = vld [vmem:[%s279 + $0x1b8] sm:$0xf]
          %v412 = vld [vmem:[%s279 + $0x1bc] sm:$0xf]
          %v413 = vld [vmem:[%s279 + $0x1c0] sm:$0xf]
          %v414 = vld [vmem:[%s279 + $0x1c4] sm:$0xf]
          %v415 = vld [vmem:[%s279 + $0x1c8] sm:$0xf]
          %v416 = vld [vmem:[%s279 + $0x1cc] sm:$0xf]
          %v417 = vld [vmem:[%s279 + $0x1d0] sm:$0xf]
          %v418 = vld [vmem:[%s279 + $0x1d4] sm:$0xf]
          %v419 = vld [vmem:[%s279 + $0x1d8] sm:$0xf]
          %v420 = vld [vmem:[%s279 + $0x1dc] sm:$0xf]
          %v421 = vld [vmem:[%s279 + $0x1e0] sm:$0xf]
          %v422 = vld [vmem:[%s279 + $0x1e4] sm:$0xf]
          %v423 = vld [vmem:[%s279 + $0x1e8] sm:$0xf]
          %v424 = vld [vmem:[%s279 + $0x1ec] sm:$0xf]
          %v425 = vld [vmem:[%s279 + $0x1f0] sm:$0xf]
          %v426 = vld [vmem:[%s279 + $0x1f4] sm:$0xf]
          %v427 = vld [vmem:[%s279 + $0x1f8] sm:$0xf]
          %v428 = vld [vmem:[%s279 + $0x1fc] sm:$0xf]
          %v557 = vunpack.c.l.b16 %v301
          %v558 = vunpack.c.l.b16 %v302
          %v559 = vunpack.c.l.b16 %v303
          %v560 = vunpack.c.l.b16 %v304
          %v561 = vunpack.c.l.b16 %v305
          %v562 = vunpack.c.l.b16 %v306
          %v563 = vunpack.c.l.b16 %v307
          %v564 = vunpack.c.l.b16 %v308
          %v565 = vunpack.c.l.b16 %v309
          %v566 = vunpack.c.l.b16 %v310
          %v567 = vunpack.c.l.b16 %v311
          %v568 = vunpack.c.l.b16 %v312
          %v569 = vunpack.c.l.b16 %v313
          %v570 = vunpack.c.l.b16 %v314
          %v571 = vunpack.c.l.b16 %v315
          %v572 = vunpack.c.l.b16 %v316
          %v573 = vunpack.c.l.b16 %v317
          %v574 = vunpack.c.l.b16 %v318
          %v575 = vunpack.c.l.b16 %v319
          %v576 = vunpack.c.l.b16 %v320
          %v577 = vunpack.c.l.b16 %v321
          %v578 = vunpack.c.l.b16 %v322
          %v579 = vunpack.c.l.b16 %v323
          %v580 = vunpack.c.l.b16 %v324
          %v581 = vunpack.c.l.b16 %v325
          %v582 = vunpack.c.l.b16 %v326
          %v583 = vunpack.c.l.b16 %v327
          %v584 = vunpack.c.l.b16 %v328
          %v585 = vunpack.c.l.b16 %v329
          %v586 = vunpack.c.l.b16 %v330
          %v587 = vunpack.c.l.b16 %v331
          %v588 = vunpack.c.l.b16 %v332
          %v589 = vunpack.c.l.b16 %v333
          %v590 = vunpack.c.l.b16 %v334
          %v591 = vunpack.c.l.b16 %v335
          %v592 = vunpack.c.l.b16 %v336
          %v593 = vunpack.c.l.b16 %v337
          %v594 = vunpack.c.l.b16 %v338
          %v595 = vunpack.c.l.b16 %v339
          %v596 = vunpack.c.l.b16 %v340
          %v597 = vunpack.c.l.b16 %v341
          %v598 = vunpack.c.l.b16 %v342
          %v599 = vunpack.c.l.b16 %v343
          %v600 = vunpack.c.l.b16 %v344
          %v601 = vunpack.c.l.b16 %v345
          %v602 = vunpack.c.l.b16 %v346
          %v603 = vunpack.c.l.b16 %v347
          %v604 = vunpack.c.l.b16 %v348
          %v605 = vunpack.c.l.b16 %v349
          %v606 = vunpack.c.l.b16 %v350
          %v607 = vunpack.c.l.b16 %v351
          %v608 = vunpack.c.l.b16 %v352
          %v609 = vunpack.c.l.b16 %v353
          %v610 = vunpack.c.l.b16 %v354
          %v611 = vunpack.c.l.b16 %v355
          %v612 = vunpack.c.l.b16 %v356
          %v613 = vunpack.c.l.b16 %v357
          %v614 = vunpack.c.l.b16 %v358
          %v615 = vunpack.c.l.b16 %v359
          %v616 = vunpack.c.l.b16 %v360
          %v617 = vunpack.c.l.b16 %v361
          %v618 = vunpack.c.l.b16 %v362
          %v619 = vunpack.c.l.b16 %v363
          %v620 = vunpack.c.l.b16 %v364
          %v621 = vunpack.c.l.b16 %v365
          %v622 = vunpack.c.l.b16 %v366
          %v623 = vunpack.c.l.b16 %v367
          %v624 = vunpack.c.l.b16 %v368
          %v625 = vunpack.c.l.b16 %v369
          %v626 = vunpack.c.l.b16 %v370
          %v627 = vunpack.c.l.b16 %v371
          %v628 = vunpack.c.l.b16 %v372
          %v629 = vunpack.c.l.b16 %v373
          %v630 = vunpack.c.l.b16 %v374
          %v631 = vunpack.c.l.b16 %v375
          %v632 = vunpack.c.l.b16 %v376
          %v633 = vunpack.c.l.b16 %v377
          %v634 = vunpack.c.l.b16 %v378
          %v635 = vunpack.c.l.b16 %v379
          %v636 = vunpack.c.l.b16 %v380
          %v637 = vunpack.c.l.b16 %v381
          %v638 = vunpack.c.l.b16 %v382
          %v639 = vunpack.c.l.b16 %v383
          %v640 = vunpack.c.l.b16 %v384
          %v641 = vunpack.c.l.b16 %v385
          %v642 = vunpack.c.l.b16 %v386
          %v643 = vunpack.c.l.b16 %v387
          %v644 = vunpack.c.l.b16 %v388
          %v645 = vunpack.c.l.b16 %v389
          %v646 = vunpack.c.l.b16 %v390
          %v647 = vunpack.c.l.b16 %v391
          %v648 = vunpack.c.l.b16 %v392
          %v649 = vunpack.c.l.b16 %v393
          %v650 = vunpack.c.l.b16 %v394
          %v651 = vunpack.c.l.b16 %v395
          %v652 = vunpack.c.l.b16 %v396
          %v653 = vunpack.c.l.b16 %v397
          %v654 = vunpack.c.l.b16 %v398
          %v655 = vunpack.c.l.b16 %v399
          %v656 = vunpack.c.l.b16 %v400
          %v657 = vunpack.c.l.b16 %v401
          %v658 = vunpack.c.l.b16 %v402
          %v659 = vunpack.c.l.b16 %v403
          %v660 = vunpack.c.l.b16 %v404
          %v661 = vunpack.c.l.b16 %v405
          %v662 = vunpack.c.l.b16 %v406
          %v663 = vunpack.c.l.b16 %v407
          %v664 = vunpack.c.l.b16 %v408
          %v665 = vunpack.c.l.b16 %v409
          %v666 = vunpack.c.l.b16 %v410
          %v667 = vunpack.c.l.b16 %v411
          %v668 = vunpack.c.l.b16 %v412
          %v669 = vunpack.c.l.b16 %v413
          %v670 = vunpack.c.l.b16 %v414
          %v671 = vunpack.c.l.b16 %v415
          %v672 = vunpack.c.l.b16 %v416
          %v673 = vunpack.c.l.b16 %v417
          %v674 = vunpack.c.l.b16 %v418
          %v675 = vunpack.c.l.b16 %v419
          %v676 = vunpack.c.l.b16 %v420
          %v677 = vunpack.c.l.b16 %v421
          %v678 = vunpack.c.l.b16 %v422
          %v679 = vunpack.c.l.b16 %v423
          %v680 = vunpack.c.l.b16 %v424
          %v681 = vunpack.c.l.b16 %v425
          %v682 = vunpack.c.l.b16 %v426
          %v683 = vunpack.c.l.b16 %v427
          %v684 = vunpack.c.l.b16 %v428
          %v685 = vpack.c.b16 %v558, %v557
          %v686 = vpack.c.b16 %v560, %v559
          %v687 = vpack.c.b16 %v562, %v561
          %v688 = vpack.c.b16 %v564, %v563
          %v689 = vpack.c.b16 %v566, %v565
          %v690 = vpack.c.b16 %v568, %v567
          %v691 = vpack.c.b16 %v570, %v569
          %v692 = vpack.c.b16 %v572, %v571
          %v693 = vpack.c.b16 %v574, %v573
          %v694 = vpack.c.b16 %v576, %v575
          %v695 = vpack.c.b16 %v578, %v577
          %v696 = vpack.c.b16 %v580, %v579
          %v697 = vpack.c.b16 %v582, %v581
          %v698 = vpack.c.b16 %v584, %v583
          %v699 = vpack.c.b16 %v586, %v585
          %v700 = vpack.c.b16 %v588, %v587
          %v701 = vpack.c.b16 %v590, %v589
          %v702 = vpack.c.b16 %v592, %v591
          %v703 = vpack.c.b16 %v594, %v593
          %v704 = vpack.c.b16 %v596, %v595
          %v705 = vpack.c.b16 %v598, %v597
          %v706 = vpack.c.b16 %v600, %v599
          %v707 = vpack.c.b16 %v602, %v601
          %v708 = vpack.c.b16 %v604, %v603
          %v709 = vpack.c.b16 %v606, %v605
          %v710 = vpack.c.b16 %v608, %v607
          %v711 = vpack.c.b16 %v610, %v609
          %v712 = vpack.c.b16 %v612, %v611
          %v713 = vpack.c.b16 %v614, %v613
          %v714 = vpack.c.b16 %v616, %v615
          %v715 = vpack.c.b16 %v618, %v617
          %v716 = vpack.c.b16 %v620, %v619
          %v717 = vpack.c.b16 %v622, %v621
          %v718 = vpack.c.b16 %v624, %v623
          %v719 = vpack.c.b16 %v626, %v625
          %v720 = vpack.c.b16 %v628, %v627
          %v721 = vpack.c.b16 %v630, %v629
          %v722 = vpack.c.b16 %v632, %v631
          %v723 = vpack.c.b16 %v634, %v633
          %v724 = vpack.c.b16 %v636, %v635
          %v725 = vpack.c.b16 %v638, %v637
          %v726 = vpack.c.b16 %v640, %v639
          %v727 = vpack.c.b16 %v642, %v641
          %v728 = vpack.c.b16 %v644, %v643
          %v729 = vpack.c.b16 %v646, %v645
          %v730 = vpack.c.b16 %v648, %v647
          %v731 = vpack.c.b16 %v650, %v649
          %v732 = vpack.c.b16 %v652, %v651
          %v733 = vpack.c.b16 %v654, %v653
          %v734 = vpack.c.b16 %v656, %v655
          %v735 = vpack.c.b16 %v658, %v657
          %v736 = vpack.c.b16 %v660, %v659
          %v737 = vpack.c.b16 %v662, %v661
          %v738 = vpack.c.b16 %v664, %v663
          %v739 = vpack.c.b16 %v666, %v665
          %v740 = vpack.c.b16 %v668, %v667
          %v741 = vpack.c.b16 %v670, %v669
          %v742 = vpack.c.b16 %v672, %v671
          %v743 = vpack.c.b16 %v674, %v673
          %v744 = vpack.c.b16 %v676, %v675
          %v745 = vpack.c.b16 %v678, %v677
          %v746 = vpack.c.b16 %v680, %v679
          %v747 = vpack.c.b16 %v682, %v681
          %v748 = vpack.c.b16 %v684, %v683
          %s813 = scalar_lea.vmem [#allocation2], 8
          %814 = vst [vmem:[%s813] sm:$0xff] %v685
          %815 = vst [vmem:[%s813 + $0x8] sm:$0xff] %v686
          %816 = vst [vmem:[%s813 + $0x10] sm:$0xff] %v687
          %817 = vst [vmem:[%s813 + $0x18] sm:$0xff] %v688
          %818 = vst [vmem:[%s813 + $0x20] sm:$0xff] %v689
          %819 = vst [vmem:[%s813 + $0x28] sm:$0xff] %v690
          %820 = vst [vmem:[%s813 + $0x30] sm:$0xff] %v691
          %821 = vst [vmem:[%s813 + $0x38] sm:$0xff] %v692
          %822 = vst [vmem:[%s813 + $0x40] sm:$0xff] %v693
          %823 = vst [vmem:[%s813 + $0x48] sm:$0xff] %v694
          %824 = vst [vmem:[%s813 + $0x50] sm:$0xff] %v695
          %825 = vst [vmem:[%s813 + $0x58] sm:$0xff] %v696
          %826 = vst [vmem:[%s813 + $0x60] sm:$0xff] %v697
          %827 = vst [vmem:[%s813 + $0x68] sm:$0xff] %v698
          %828 = vst [vmem:[%s813 + $0x70] sm:$0xff] %v699
          %829 = vst [vmem:[%s813 + $0x78] sm:$0xff] %v700
          %830 = vst [vmem:[%s813 + $0x80] sm:$0xff] %v701
          %831 = vst [vmem:[%s813 + $0x88] sm:$0xff] %v702
          %832 = vst [vmem:[%s813 + $0x90] sm:$0xff] %v703
          %833 = vst [vmem:[%s813 + $0x98] sm:$0xff] %v704
          %834 = vst [vmem:[%s813 + $0xa0] sm:$0xff] %v705
          %835 = vst [vmem:[%s813 + $0xa8] sm:$0xff] %v706
          %836 = vst [vmem:[%s813 + $0xb0] sm:$0xff] %v707
          %837 = vst [vmem:[%s813 + $0xb8] sm:$0xff] %v708
          %838 = vst [vmem:[%s813 + $0xc0] sm:$0xff] %v709
          %839 = vst [vmem:[%s813 + $0xc8] sm:$0xff] %v710
          %840 = vst [vmem:[%s813 + $0xd0] sm:$0xff] %v711
          %841 = vst [vmem:[%s813 + $0xd8] sm:$0xff] %v712
          %842 = vst [vmem:[%s813 + $0xe0] sm:$0xff] %v713
          %843 = vst [vmem:[%s813 + $0xe8] sm:$0xff] %v714
          %844 = vst [vmem:[%s813 + $0xf0] sm:$0xff] %v715
          %845 = vst [vmem:[%s813 + $0xf8] sm:$0xff] %v716
          %846 = vst [vmem:[%s813 + $0x100] sm:$0xff] %v717
          %847 = vst [vmem:[%s813 + $0x108] sm:$0xff] %v718
          %848 = vst [vmem:[%s813 + $0x110] sm:$0xff] %v719
          %849 = vst [vmem:[%s813 + $0x118] sm:$0xff] %v720
          %850 = vst [vmem:[%s813 + $0x120] sm:$0xff] %v721
          %851 = vst [vmem:[%s813 + $0x128] sm:$0xff] %v722
          %852 = vst [vmem:[%s813 + $0x130] sm:$0xff] %v723
          %853 = vst [vmem:[%s813 + $0x138] sm:$0xff] %v724
          %854 = vst [vmem:[%s813 + $0x140] sm:$0xff] %v725
          %855 = vst [vmem:[%s813 + $0x148] sm:$0xff] %v726
          %856 = vst [vmem:[%s813 + $0x150] sm:$0xff] %v727
          %857 = vst [vmem:[%s813 + $0x158] sm:$0xff] %v728
          %858 = vst [vmem:[%s813 + $0x160] sm:$0xff] %v729
          %859 = vst [vmem:[%s813 + $0x168] sm:$0xff] %v730
          %860 = vst [vmem:[%s813 + $0x170] sm:$0xff] %v731
          %861 = vst [vmem:[%s813 + $0x178] sm:$0xff] %v732
          %862 = vst [vmem:[%s813 + $0x180] sm:$0xff] %v733
          %863 = vst [vmem:[%s813 + $0x188] sm:$0xff] %v734
          %864 = vst [vmem:[%s813 + $0x190] sm:$0xff] %v735
          %865 = vst [vmem:[%s813 + $0x198] sm:$0xff] %v736
          %866 = vst [vmem:[%s813 + $0x1a0] sm:$0xff] %v737
          %867 = vst [vmem:[%s813 + $0x1a8] sm:$0xff] %v738
          %868 = vst [vmem:[%s813 + $0x1b0] sm:$0xff] %v739
          %869 = vst [vmem:[%s813 + $0x1b8] sm:$0xff] %v740
          %870 = vst [vmem:[%s813 + $0x1c0] sm:$0xff] %v741
          %871 = vst [vmem:[%s813 + $0x1c8] sm:$0xff] %v742
          %872 = vst [vmem:[%s813 + $0x1d0] sm:$0xff] %v743
          %873 = vst [vmem:[%s813 + $0x1d8] sm:$0xff] %v744
          %874 = vst [vmem:[%s813 + $0x1e0] sm:$0xff] %v745
          %875 = vst [vmem:[%s813 + $0x1e8] sm:$0xff] %v746
          %876 = vst [vmem:[%s813 + $0x1f0] sm:$0xff] %v747
          %877 = vst [vmem:[%s813 + $0x1f8] sm:$0xff] %v748
        $region52: #{simple_lr2hr_forward.3} parent=43 // pred_fallthru
          _
        %s878 = smul.u32 %s23, 16
        %s879 = smul.addr %s878, 8
        %s880 = scalar_lea.vmem [#allocation2], %s879
        %v881 = vld [vmem:[%s880] sm:$0xff]
        %v882 = vld [vmem:[%s880 + $0x8] sm:$0xff]
        %v883 = vld [vmem:[%s880 + $0x10] sm:$0xff]
        %v884 = vld [vmem:[%s880 + $0x18] sm:$0xff]
        %v885 = vld [vmem:[%s880 + $0x20] sm:$0xff]
        %v886 = vld [vmem:[%s880 + $0x28] sm:$0xff]
        %v887 = vld [vmem:[%s880 + $0x30] sm:$0xff]
        %v888 = vld [vmem:[%s880 + $0x38] sm:$0xff]
        %v889 = vld [vmem:[%s880 + $0x40] sm:$0xff]
        %v890 = vld [vmem:[%s880 + $0x48] sm:$0xff]
        %v891 = vld [vmem:[%s880 + $0x50] sm:$0xff]
        %v892 = vld [vmem:[%s880 + $0x58] sm:$0xff]
        %v893 = vld [vmem:[%s880 + $0x60] sm:$0xff]
        %v894 = vld [vmem:[%s880 + $0x68] sm:$0xff]
        %v895 = vld [vmem:[%s880 + $0x70] sm:$0xff]
        %v896 = vld [vmem:[%s880 + $0x78] sm:$0xff]
        %v898 = vshrl.u32 %v881, 16
        %v900 = vrot.slane %v898, 7
        %v901 = vshll.u32 %v881, 16
        %v903 = vor.u32 %v900, %v901
        %v905 = vshrl.u32 %v882, 16
        %v907 = vrot.slane %v905, 7
        %v908 = vshll.u32 %v882, 16
        %v910 = vor.u32 %v907, %v908
        %v912 = vshrl.u32 %v883, 16
        %v914 = vrot.slane %v912, 7
        %v915 = vshll.u32 %v883, 16
        %v917 = vor.u32 %v914, %v915
        %v919 = vshrl.u32 %v884, 16
        %v921 = vrot.slane %v919, 7
        %v922 = vshll.u32 %v884, 16
        %v924 = vor.u32 %v921, %v922
        %v926 = vshrl.u32 %v885, 16
        %v928 = vrot.slane %v926, 7
        %v929 = vshll.u32 %v885, 16
        %v931 = vor.u32 %v928, %v929
        %v933 = vshrl.u32 %v886, 16
        %v935 = vrot.slane %v933, 7
        %v936 = vshll.u32 %v886, 16
        %v938 = vor.u32 %v935, %v936
        %v940 = vshrl.u32 %v887, 16
        %v942 = vrot.slane %v940, 7
        %v943 = vshll.u32 %v887, 16
        %v945 = vor.u32 %v942, %v943
        %v947 = vshrl.u32 %v888, 16
        %v949 = vrot.slane %v947, 7
        %v950 = vshll.u32 %v888, 16
        %v952 = vor.u32 %v949, %v950
        %v954 = vshrl.u32 %v889, 16
        %v956 = vrot.slane %v954, 7
        %v957 = vshll.u32 %v889, 16
        %v959 = vor.u32 %v956, %v957
        %v961 = vshrl.u32 %v890, 16
        %v963 = vrot.slane %v961, 7
        %v964 = vshll.u32 %v890, 16
        %v966 = vor.u32 %v963, %v964
        %v968 = vshrl.u32 %v891, 16
        %v970 = vrot.slane %v968, 7
        %v971 = vshll.u32 %v891, 16
        %v973 = vor.u32 %v970, %v971
        %v975 = vshrl.u32 %v892, 16
        %v977 = vrot.slane %v975, 7
        %v978 = vshll.u32 %v892, 16
        %v980 = vor.u32 %v977, %v978
        %v982 = vshrl.u32 %v893, 16
        %v984 = vrot.slane %v982, 7
        %v985 = vshll.u32 %v893, 16
        %v987 = vor.u32 %v984, %v985
        %v989 = vshrl.u32 %v894, 16
        %v991 = vrot.slane %v989, 7
        %v992 = vshll.u32 %v894, 16
        %v994 = vor.u32 %v991, %v992
        %v996 = vshrl.u32 %v895, 16
        %v998 = vrot.slane %v996, 7
        %v999 = vshll.u32 %v895, 16
        %v1001 = vor.u32 %v998, %v999
        %v1003 = vshrl.u32 %v896, 16
        %v1005 = vrot.slane %v1003, 7
        %v1006 = vshll.u32 %v896, 16
        %v1008 = vor.u32 %v1005, %v1006
        %1009 = vrot.lane.b32.xlu0 %v903, 32
        %v1010 = vpop.permute.xlu0 %1009
        %1011 = vrot.lane.b32.xlu0 %v910, 32
        %v1012 = vpop.permute.xlu0 %1011
        %1013 = vrot.lane.b32.xlu0 %v917, 32
        %v1014 = vpop.permute.xlu0 %1013
        %1015 = vrot.lane.b32.xlu0 %v924, 32
        %v1016 = vpop.permute.xlu0 %1015
        %1017 = vrot.lane.b32.xlu0 %v931, 32
        %v1018 = vpop.permute.xlu0 %1017
        %1019 = vrot.lane.b32.xlu0 %v938, 32
        %v1020 = vpop.permute.xlu0 %1019
        %1021 = vrot.lane.b32.xlu0 %v945, 32
        %v1022 = vpop.permute.xlu0 %1021
        %1023 = vrot.lane.b32.xlu0 %v952, 32
        %v1024 = vpop.permute.xlu0 %1023
        %1025 = vrot.lane.b32.xlu0 %v959, 32
        %v1026 = vpop.permute.xlu0 %1025
        %1027 = vrot.lane.b32.xlu0 %v966, 32
        %v1028 = vpop.permute.xlu0 %1027
        %1029 = vrot.lane.b32.xlu0 %v973, 32
        %v1030 = vpop.permute.xlu0 %1029
        %1031 = vrot.lane.b32.xlu0 %v980, 32
        %v1032 = vpop.permute.xlu0 %1031
        %1033 = vrot.lane.b32.xlu0 %v987, 32
        %v1034 = vpop.permute.xlu0 %1033
        %1035 = vrot.lane.b32.xlu0 %v994, 32
        %v1036 = vpop.permute.xlu0 %1035
        %1037 = vrot.lane.b32.xlu0 %v1001, 32
        %v1038 = vpop.permute.xlu0 %1037
        %1039 = vrot.lane.b32.xlu0 %v1008, 32
        %v1040 = vpop.permute.xlu0 %1039
        %vm1057 = vcmask 1040384
        %vm1058 = vsmask.f32 256
        %vm1059 = vmand %vm1057, %vm1058
        %v1060 = vsel %vm1059, 0, %v1010
        %v1061 = vsel %vm1059, 0, %v1012
        %v1062 = vsel %vm1059, 0, %v1014
        %v1063 = vsel %vm1059, 0, %v1016
        %v1064 = vsel %vm1059, 0, %v1018
        %v1065 = vsel %vm1059, 0, %v1020
        %v1066 = vsel %vm1059, 0, %v1022
        %v1067 = vsel %vm1059, 0, %v1024
        %v1068 = vsel %vm1059, 0, %v1026
        %v1069 = vsel %vm1059, 0, %v1028
        %v1070 = vsel %vm1059, 0, %v1030
        %v1071 = vsel %vm1059, 0, %v1032
        %v1072 = vsel %vm1059, 0, %v1034
        %v1073 = vsel %vm1059, 0, %v1036
        %v1074 = vsel %vm1059, 0, %v1038
        %v1075 = vsel %vm1059, 0, %v1040
        %1092 = vrot.lane.b32.xlu0 %v881, 32
        %v1093 = vpop.permute.xlu0 %1092
        %1094 = vrot.lane.b32.xlu0 %v882, 32
        %v1095 = vpop.permute.xlu0 %1094
        %1096 = vrot.lane.b32.xlu0 %v883, 32
        %v1097 = vpop.permute.xlu0 %1096
        %1098 = vrot.lane.b32.xlu0 %v884, 32
        %v1099 = vpop.permute.xlu0 %1098
        %1100 = vrot.lane.b32.xlu0 %v885, 32
        %v1101 = vpop.permute.xlu0 %1100
        %1102 = vrot.lane.b32.xlu0 %v886, 32
        %v1103 = vpop.permute.xlu0 %1102
        %1104 = vrot.lane.b32.xlu0 %v887, 32
        %v1105 = vpop.permute.xlu0 %1104
        %1106 = vrot.lane.b32.xlu0 %v888, 32
        %v1107 = vpop.permute.xlu0 %1106
        %1108 = vrot.lane.b32.xlu0 %v889, 32
        %v1109 = vpop.permute.xlu0 %1108
        %1110 = vrot.lane.b32.xlu0 %v890, 32
        %v1111 = vpop.permute.xlu0 %1110
        %1112 = vrot.lane.b32.xlu0 %v891, 32
        %v1113 = vpop.permute.xlu0 %1112
        %1114 = vrot.lane.b32.xlu0 %v892, 32
        %v1115 = vpop.permute.xlu0 %1114
        %1116 = vrot.lane.b32.xlu0 %v893, 32
        %v1117 = vpop.permute.xlu0 %1116
        %1118 = vrot.lane.b32.xlu0 %v894, 32
        %v1119 = vpop.permute.xlu0 %1118
        %1120 = vrot.lane.b32.xlu0 %v895, 32
        %v1121 = vpop.permute.xlu0 %1120
        %1122 = vrot.lane.b32.xlu0 %v896, 32
        %v1123 = vpop.permute.xlu0 %1122
        %vm1124 = vcmask 261120
        %v1127 = vsel %vm1124, %v1060, %v1093
        %v1131 = vsel %vm1124, %v1061, %v1095
        %v1135 = vsel %vm1124, %v1062, %v1097
        %v1139 = vsel %vm1124, %v1063, %v1099
        %v1143 = vsel %vm1124, %v1064, %v1101
        %v1147 = vsel %vm1124, %v1065, %v1103
        %v1151 = vsel %vm1124, %v1066, %v1105
        %v1155 = vsel %vm1124, %v1067, %v1107
        %v1159 = vsel %vm1124, %v1068, %v1109
        %v1163 = vsel %vm1124, %v1069, %v1111
        %v1167 = vsel %vm1124, %v1070, %v1113
        %v1171 = vsel %vm1124, %v1071, %v1115
        %v1175 = vsel %vm1124, %v1072, %v1117
        %v1179 = vsel %vm1124, %v1073, %v1119
        %v1183 = vsel %vm1124, %v1074, %v1121
        %v1187 = vsel %vm1124, %v1075, %v1123
        %v1189 = vrot.slane %v901, 1
        %v1190 = vor.u32 %v898, %v1189
        %v1191 = vrot.slane %v908, 1
        %v1192 = vor.u32 %v905, %v1191
        %v1193 = vrot.slane %v915, 1
        %v1194 = vor.u32 %v912, %v1193
        %v1195 = vrot.slane %v922, 1
        %v1196 = vor.u32 %v919, %v1195
        %v1197 = vrot.slane %v929, 1
        %v1198 = vor.u32 %v926, %v1197
        %v1199 = vrot.slane %v936, 1
        %v1200 = vor.u32 %v933, %v1199
        %v1201 = vrot.slane %v943, 1
        %v1202 = vor.u32 %v940, %v1201
        %v1203 = vrot.slane %v950, 1
        %v1204 = vor.u32 %v947, %v1203
        %v1205 = vrot.slane %v957, 1
        %v1206 = vor.u32 %v954, %v1205
        %v1207 = vrot.slane %v964, 1
        %v1208 = vor.u32 %v961, %v1207
        %v1209 = vrot.slane %v971, 1
        %v1210 = vor.u32 %v968, %v1209
        %v1211 = vrot.slane %v978, 1
        %v1212 = vor.u32 %v975, %v1211
        %v1213 = vrot.slane %v985, 1
        %v1214 = vor.u32 %v982, %v1213
        %v1215 = vrot.slane %v992, 1
        %v1216 = vor.u32 %v989, %v1215
        %v1217 = vrot.slane %v999, 1
        %v1218 = vor.u32 %v996, %v1217
        %v1219 = vrot.slane %v1006, 1
        %v1220 = vor.u32 %v1003, %v1219
        %vm1237 = vcmask 1047552
        %vm1238 = vsmask.f32 7424
        %vm1239 = vmand %vm1237, %vm1238
        %v1240 = vsel %vm1239, %v1190, 0
        %v1241 = vsel %vm1239, %v1192, 0
        %v1242 = vsel %vm1239, %v1194, 0
        %v1243 = vsel %vm1239, %v1196, 0
        %v1244 = vsel %vm1239, %v1198, 0
        %v1245 = vsel %vm1239, %v1200, 0
        %v1246 = vsel %vm1239, %v1202, 0
        %v1247 = vsel %vm1239, %v1204, 0
        %v1248 = vsel %vm1239, %v1206, 0
        %v1249 = vsel %vm1239, %v1208, 0
        %v1250 = vsel %vm1239, %v1210, 0
        %v1251 = vsel %vm1239, %v1212, 0
        %v1252 = vsel %vm1239, %v1214, 0
        %v1253 = vsel %vm1239, %v1216, 0
        %v1254 = vsel %vm1239, %v1218, 0
        %v1255 = vsel %vm1239, %v1220, 0
        %1256 = vrot.lane.b32.xlu0 %v881, 96
        %v1257 = vpop.permute.xlu0 %1256
        %1258 = vrot.lane.b32.xlu0 %v882, 96
        %v1259 = vpop.permute.xlu0 %1258
        %1260 = vrot.lane.b32.xlu0 %v883, 96
        %v1261 = vpop.permute.xlu0 %1260
        %1262 = vrot.lane.b32.xlu0 %v884, 96
        %v1263 = vpop.permute.xlu0 %1262
        %1264 = vrot.lane.b32.xlu0 %v885, 96
        %v1265 = vpop.permute.xlu0 %1264
        %1266 = vrot.lane.b32.xlu0 %v886, 96
        %v1267 = vpop.permute.xlu0 %1266
        %1268 = vrot.lane.b32.xlu0 %v887, 96
        %v1269 = vpop.permute.xlu0 %1268
        %1270 = vrot.lane.b32.xlu0 %v888, 96
        %v1271 = vpop.permute.xlu0 %1270
        %1272 = vrot.lane.b32.xlu0 %v889, 96
        %v1273 = vpop.permute.xlu0 %1272
        %1274 = vrot.lane.b32.xlu0 %v890, 96
        %v1275 = vpop.permute.xlu0 %1274
        %1276 = vrot.lane.b32.xlu0 %v891, 96
        %v1277 = vpop.permute.xlu0 %1276
        %1278 = vrot.lane.b32.xlu0 %v892, 96
        %v1279 = vpop.permute.xlu0 %1278
        %1280 = vrot.lane.b32.xlu0 %v893, 96
        %v1281 = vpop.permute.xlu0 %1280
        %1282 = vrot.lane.b32.xlu0 %v894, 96
        %v1283 = vpop.permute.xlu0 %1282
        %1284 = vrot.lane.b32.xlu0 %v895, 96
        %v1285 = vpop.permute.xlu0 %1284
        %1286 = vrot.lane.b32.xlu0 %v896, 96
        %v1287 = vpop.permute.xlu0 %1286
        %1304 = vrot.lane.b32.xlu0 %v1240, 96
        %v1305 = vpop.permute.xlu0 %1304
        %1306 = vrot.lane.b32.xlu0 %v1241, 96
        %v1307 = vpop.permute.xlu0 %1306
        %1308 = vrot.lane.b32.xlu0 %v1242, 96
        %v1309 = vpop.permute.xlu0 %1308
        %1310 = vrot.lane.b32.xlu0 %v1243, 96
        %v1311 = vpop.permute.xlu0 %1310
        %1312 = vrot.lane.b32.xlu0 %v1244, 96
        %v1313 = vpop.permute.xlu0 %1312
        %1314 = vrot.lane.b32.xlu0 %v1245, 96
        %v1315 = vpop.permute.xlu0 %1314
        %1316 = vrot.lane.b32.xlu0 %v1246, 96
        %v1317 = vpop.permute.xlu0 %1316
        %1318 = vrot.lane.b32.xlu0 %v1247, 96
        %v1319 = vpop.permute.xlu0 %1318
        %1320 = vrot.lane.b32.xlu0 %v1248, 96
        %v1321 = vpop.permute.xlu0 %1320
        %1322 = vrot.lane.b32.xlu0 %v1249, 96
        %v1323 = vpop.permute.xlu0 %1322
        %1324 = vrot.lane.b32.xlu0 %v1250, 96
        %v1325 = vpop.permute.xlu0 %1324
        %1326 = vrot.lane.b32.xlu0 %v1251, 96
        %v1327 = vpop.permute.xlu0 %1326
        %1328 = vrot.lane.b32.xlu0 %v1252, 96
        %v1329 = vpop.permute.xlu0 %1328
        %1330 = vrot.lane.b32.xlu0 %v1253, 96
        %v1331 = vpop.permute.xlu0 %1330
        %1332 = vrot.lane.b32.xlu0 %v1254, 96
        %v1333 = vpop.permute.xlu0 %1332
        %1334 = vrot.lane.b32.xlu0 %v1255, 96
        %v1335 = vpop.permute.xlu0 %1334
        %vm1336 = vcmask 785408
        %v1339 = vsel %vm1336, %v1257, %v1305
        %v1343 = vsel %vm1336, %v1259, %v1307
        %v1347 = vsel %vm1336, %v1261, %v1309
        %v1351 = vsel %vm1336, %v1263, %v1311
        %v1355 = vsel %vm1336, %v1265, %v1313
        %v1359 = vsel %vm1336, %v1267, %v1315
        %v1363 = vsel %vm1336, %v1269, %v1317
        %v1367 = vsel %vm1336, %v1271, %v1319
        %v1371 = vsel %vm1336, %v1273, %v1321
        %v1375 = vsel %vm1336, %v1275, %v1323
        %v1379 = vsel %vm1336, %v1277, %v1325
        %v1383 = vsel %vm1336, %v1279, %v1327
        %v1387 = vsel %vm1336, %v1281, %v1329
        %v1391 = vsel %vm1336, %v1283, %v1331
        %v1395 = vsel %vm1336, %v1285, %v1333
        %v1399 = vsel %vm1336, %v1287, %v1335
        %v1401 = vld [vmem:[%s1] sm:$0xf]
        %v1402 = vld [vmem:[%s1 + $0x4] sm:$0xf]
        %v1403 = vld [vmem:[%s1 + $0x8] sm:$0xf]
        %v1404 = vld [vmem:[%s1 + $0xc] sm:$0xf]
        %v1405 = vld [vmem:[%s1 + $0x10] sm:$0xf]
        %v1406 = vld [vmem:[%s1 + $0x14] sm:$0xf]
        %v1407 = vld [vmem:[%s1 + $0x18] sm:$0xf]
        %v1408 = vld [vmem:[%s1 + $0x1c] sm:$0xf]
        %v1409 = vld [vmem:[%s1 + $0x20] sm:$0xf]
        %v1410 = vld [vmem:[%s1 + $0x24] sm:$0xf]
        %v1411 = vld [vmem:[%s1 + $0x28] sm:$0xf]
        %v1412 = vld [vmem:[%s1 + $0x2c] sm:$0xf]
        %v1413 = vld [vmem:[%s1 + $0x30] sm:$0xf]
        %v1414 = vld [vmem:[%s1 + $0x34] sm:$0xf]
        %v1415 = vld [vmem:[%s1 + $0x38] sm:$0xf]
        %v1416 = vld [vmem:[%s1 + $0x3c] sm:$0xf]
        %v1417 = vld [vmem:[%s1 + $0x40] sm:$0xf]
        %v1418 = vld [vmem:[%s1 + $0x44] sm:$0xf]
        %v1419 = vld [vmem:[%s1 + $0x48] sm:$0xf]
        %v1420 = vld [vmem:[%s1 + $0x4c] sm:$0xf]
        %v1421 = vld [vmem:[%s1 + $0x50] sm:$0xf]
        %v1422 = vld [vmem:[%s1 + $0x54] sm:$0xf]
        %v1423 = vld [vmem:[%s1 + $0x58] sm:$0xf]
        %v1424 = vld [vmem:[%s1 + $0x5c] sm:$0xf]
        %v1425 = vld [vmem:[%s1 + $0x60] sm:$0xf]
        %v1426 = vld [vmem:[%s1 + $0x64] sm:$0xf]
        %v1427 = vld [vmem:[%s1 + $0x68] sm:$0xf]
        %v1428 = vld [vmem:[%s1 + $0x6c] sm:$0xf]
        %v1429 = vld [vmem:[%s1 + $0x70] sm:$0xf]
        %v1430 = vld [vmem:[%s1 + $0x74] sm:$0xf]
        %v1431 = vld [vmem:[%s1 + $0x78] sm:$0xf]
        %v1432 = vld [vmem:[%s1 + $0x7c] sm:$0xf]
        %v1433 = vld [vmem:[%s1 + $0x80] sm:$0xf]
        %v1434 = vld [vmem:[%s1 + $0x84] sm:$0xf]
        %v1435 = vld [vmem:[%s1 + $0x88] sm:$0xf]
        %v1436 = vld [vmem:[%s1 + $0x8c] sm:$0xf]
        %v1437 = vld [vmem:[%s1 + $0x90] sm:$0xf]
        %v1438 = vld [vmem:[%s1 + $0x94] sm:$0xf]
        %v1439 = vld [vmem:[%s1 + $0x98] sm:$0xf]
        %v1440 = vld [vmem:[%s1 + $0x9c] sm:$0xf]
        %v1441 = vld [vmem:[%s1 + $0xa0] sm:$0xf]
        %v1442 = vld [vmem:[%s1 + $0xa4] sm:$0xf]
        %v1443 = vld [vmem:[%s1 + $0xa8] sm:$0xf]
        %v1444 = vld [vmem:[%s1 + $0xac] sm:$0xf]
        %v1445 = vld [vmem:[%s1 + $0xb0] sm:$0xf]
        %v1446 = vld [vmem:[%s1 + $0xb4] sm:$0xf]
        %v1447 = vld [vmem:[%s1 + $0xb8] sm:$0xf]
        %v1448 = vld [vmem:[%s1 + $0xbc] sm:$0xf]
        %s1449 = sadd.s32 %s878, 1
        %s1450 = smul.addr %s1449, 8
        %s1451 = scalar_lea.vmem [#allocation2], %s1450
        %v1452 = vld [vmem:[%s1451] sm:$0xff]
        %v1453 = vld [vmem:[%s1451 + $0x8] sm:$0xff]
        %v1454 = vld [vmem:[%s1451 + $0x10] sm:$0xff]
        %v1455 = vld [vmem:[%s1451 + $0x18] sm:$0xff]
        %v1456 = vld [vmem:[%s1451 + $0x20] sm:$0xff]
        %v1457 = vld [vmem:[%s1451 + $0x28] sm:$0xff]
        %v1458 = vld [vmem:[%s1451 + $0x30] sm:$0xff]
        %v1459 = vld [vmem:[%s1451 + $0x38] sm:$0xff]
        %v1460 = vld [vmem:[%s1451 + $0x40] sm:$0xff]
        %v1461 = vld [vmem:[%s1451 + $0x48] sm:$0xff]
        %v1462 = vld [vmem:[%s1451 + $0x50] sm:$0xff]
        %v1463 = vld [vmem:[%s1451 + $0x58] sm:$0xff]
        %v1464 = vld [vmem:[%s1451 + $0x60] sm:$0xff]
        %v1465 = vld [vmem:[%s1451 + $0x68] sm:$0xff]
        %v1466 = vld [vmem:[%s1451 + $0x70] sm:$0xff]
        %v1467 = vld [vmem:[%s1451 + $0x78] sm:$0xff]
        %v1469 = vshrl.u32 %v1452, 16
        %v1471 = vrot.slane %v1469, 7
        %v1472 = vshll.u32 %v1452, 16
        %v1474 = vor.u32 %v1471, %v1472
        %v1476 = vshrl.u32 %v1453, 16
        %v1478 = vrot.slane %v1476, 7
        %v1479 = vshll.u32 %v1453, 16
        %v1481 = vor.u32 %v1478, %v1479
        %v1483 = vshrl.u32 %v1454, 16
        %v1485 = vrot.slane %v1483, 7
        %v1486 = vshll.u32 %v1454, 16
        %v1488 = vor.u32 %v1485, %v1486
        %v1490 = vshrl.u32 %v1455, 16
        %v1492 = vrot.slane %v1490, 7
        %v1493 = vshll.u32 %v1455, 16
        %v1495 = vor.u32 %v1492, %v1493
        %v1497 = vshrl.u32 %v1456, 16
        %v1499 = vrot.slane %v1497, 7
        %v1500 = vshll.u32 %v1456, 16
        %v1502 = vor.u32 %v1499, %v1500
        %v1504 = vshrl.u32 %v1457, 16
        %v1506 = vrot.slane %v1504, 7
        %v1507 = vshll.u32 %v1457, 16
        %v1509 = vor.u32 %v1506, %v1507
        %v1511 = vshrl.u32 %v1458, 16
        %v1513 = vrot.slane %v1511, 7
        %v1514 = vshll.u32 %v1458, 16
        %v1516 = vor.u32 %v1513, %v1514
        %v1518 = vshrl.u32 %v1459, 16
        %v1520 = vrot.slane %v1518, 7
        %v1521 = vshll.u32 %v1459, 16
        %v1523 = vor.u32 %v1520, %v1521
        %v1525 = vshrl.u32 %v1460, 16
        %v1527 = vrot.slane %v1525, 7
        %v1528 = vshll.u32 %v1460, 16
        %v1530 = vor.u32 %v1527, %v1528
        %v1532 = vshrl.u32 %v1461, 16
        %v1534 = vrot.slane %v1532, 7
        %v1535 = vshll.u32 %v1461, 16
        %v1537 = vor.u32 %v1534, %v1535
        %v1539 = vshrl.u32 %v1462, 16
        %v1541 = vrot.slane %v1539, 7
        %v1542 = vshll.u32 %v1462, 16
        %v1544 = vor.u32 %v1541, %v1542
        %v1546 = vshrl.u32 %v1463, 16
        %v1548 = vrot.slane %v1546, 7
        %v1549 = vshll.u32 %v1463, 16
        %v1551 = vor.u32 %v1548, %v1549
        %v1553 = vshrl.u32 %v1464, 16
        %v1555 = vrot.slane %v1553, 7
        %v1556 = vshll.u32 %v1464, 16
        %v1558 = vor.u32 %v1555, %v1556
        %v1560 = vshrl.u32 %v1465, 16
        %v1562 = vrot.slane %v1560, 7
        %v1563 = vshll.u32 %v1465, 16
        %v1565 = vor.u32 %v1562, %v1563
        %v1567 = vshrl.u32 %v1466, 16
        %v1569 = vrot.slane %v1567, 7
        %v1570 = vshll.u32 %v1466, 16
        %v1572 = vor.u32 %v1569, %v1570
        %v1574 = vshrl.u32 %v1467, 16
        %v1576 = vrot.slane %v1574, 7
        %v1577 = vshll.u32 %v1467, 16
        %v1579 = vor.u32 %v1576, %v1577
        %1580 = vrot.lane.b32.xlu0 %v1474, 32
        %v1581 = vpop.permute.xlu0 %1580
        %1582 = vrot.lane.b32.xlu0 %v1481, 32
        %v1583 = vpop.permute.xlu0 %1582
        %1584 = vrot.lane.b32.xlu0 %v1488, 32
        %v1585 = vpop.permute.xlu0 %1584
        %1586 = vrot.lane.b32.xlu0 %v1495, 32
        %v1587 = vpop.permute.xlu0 %1586
        %1588 = vrot.lane.b32.xlu0 %v1502, 32
        %v1589 = vpop.permute.xlu0 %1588
        %1590 = vrot.lane.b32.xlu0 %v1509, 32
        %v1591 = vpop.permute.xlu0 %1590
        %1592 = vrot.lane.b32.xlu0 %v1516, 32
        %v1593 = vpop.permute.xlu0 %1592
        %1594 = vrot.lane.b32.xlu0 %v1523, 32
        %v1595 = vpop.permute.xlu0 %1594
        %1596 = vrot.lane.b32.xlu0 %v1530, 32
        %v1597 = vpop.permute.xlu0 %1596
        %1598 = vrot.lane.b32.xlu0 %v1537, 32
        %v1599 = vpop.permute.xlu0 %1598
        %1600 = vrot.lane.b32.xlu0 %v1544, 32
        %v1601 = vpop.permute.xlu0 %1600
        %1602 = vrot.lane.b32.xlu0 %v1551, 32
        %v1603 = vpop.permute.xlu0 %1602
        %1604 = vrot.lane.b32.xlu0 %v1558, 32
        %v1605 = vpop.permute.xlu0 %1604
        %1606 = vrot.lane.b32.xlu0 %v1565, 32
        %v1607 = vpop.permute.xlu0 %1606
        %1608 = vrot.lane.b32.xlu0 %v1572, 32
        %v1609 = vpop.permute.xlu0 %1608
        %1610 = vrot.lane.b32.xlu0 %v1579, 32
        %v1611 = vpop.permute.xlu0 %1610
        %v1628 = vsel %vm1059, 0, %v1581
        %v1629 = vsel %vm1059, 0, %v1583
        %v1630 = vsel %vm1059, 0, %v1585
        %v1631 = vsel %vm1059, 0, %v1587
        %v1632 = vsel %vm1059, 0, %v1589
        %v1633 = vsel %vm1059, 0, %v1591
        %v1634 = vsel %vm1059, 0, %v1593
        %v1635 = vsel %vm1059, 0, %v1595
        %v1636 = vsel %vm1059, 0, %v1597
        %v1637 = vsel %vm1059, 0, %v1599
        %v1638 = vsel %vm1059, 0, %v1601
        %v1639 = vsel %vm1059, 0, %v1603
        %v1640 = vsel %vm1059, 0, %v1605
        %v1641 = vsel %vm1059, 0, %v1607
        %v1642 = vsel %vm1059, 0, %v1609
        %v1643 = vsel %vm1059, 0, %v1611
        %1660 = vrot.lane.b32.xlu0 %v1452, 32
        %v1661 = vpop.permute.xlu0 %1660
        %1662 = vrot.lane.b32.xlu0 %v1453, 32
        %v1663 = vpop.permute.xlu0 %1662
        %1664 = vrot.lane.b32.xlu0 %v1454, 32
        %v1665 = vpop.permute.xlu0 %1664
        %1666 = vrot.lane.b32.xlu0 %v1455, 32
        %v1667 = vpop.permute.xlu0 %1666
        %1668 = vrot.lane.b32.xlu0 %v1456, 32
        %v1669 = vpop.permute.xlu0 %1668
        %1670 = vrot.lane.b32.xlu0 %v1457, 32
        %v1671 = vpop.permute.xlu0 %1670
        %1672 = vrot.lane.b32.xlu0 %v1458, 32
        %v1673 = vpop.permute.xlu0 %1672
        %1674 = vrot.lane.b32.xlu0 %v1459, 32
        %v1675 = vpop.permute.xlu0 %1674
        %1676 = vrot.lane.b32.xlu0 %v1460, 32
        %v1677 = vpop.permute.xlu0 %1676
        %1678 = vrot.lane.b32.xlu0 %v1461, 32
        %v1679 = vpop.permute.xlu0 %1678
        %1680 = vrot.lane.b32.xlu0 %v1462, 32
        %v1681 = vpop.permute.xlu0 %1680
        %1682 = vrot.lane.b32.xlu0 %v1463, 32
        %v1683 = vpop.permute.xlu0 %1682
        %1684 = vrot.lane.b32.xlu0 %v1464, 32
        %v1685 = vpop.permute.xlu0 %1684
        %1686 = vrot.lane.b32.xlu0 %v1465, 32
        %v1687 = vpop.permute.xlu0 %1686
        %1688 = vrot.lane.b32.xlu0 %v1466, 32
        %v1689 = vpop.permute.xlu0 %1688
        %1690 = vrot.lane.b32.xlu0 %v1467, 32
        %v1691 = vpop.permute.xlu0 %1690
        %v1694 = vsel %vm1124, %v1628, %v1661
        %v1698 = vsel %vm1124, %v1629, %v1663
        %v1702 = vsel %vm1124, %v1630, %v1665
        %v1706 = vsel %vm1124, %v1631, %v1667
        %v1710 = vsel %vm1124, %v1632, %v1669
        %v1714 = vsel %vm1124, %v1633, %v1671
        %v1718 = vsel %vm1124, %v1634, %v1673
        %v1722 = vsel %vm1124, %v1635, %v1675
        %v1726 = vsel %vm1124, %v1636, %v1677
        %v1730 = vsel %vm1124, %v1637, %v1679
        %v1734 = vsel %vm1124, %v1638, %v1681
        %v1738 = vsel %vm1124, %v1639, %v1683
        %v1742 = vsel %vm1124, %v1640, %v1685
        %v1746 = vsel %vm1124, %v1641, %v1687
        %v1750 = vsel %vm1124, %v1642, %v1689
        %v1754 = vsel %vm1124, %v1643, %v1691
        %v1756 = vrot.slane %v1472, 1
        %v1757 = vor.u32 %v1469, %v1756
        %v1758 = vrot.slane %v1479, 1
        %v1759 = vor.u32 %v1476, %v1758
        %v1760 = vrot.slane %v1486, 1
        %v1761 = vor.u32 %v1483, %v1760
        %v1762 = vrot.slane %v1493, 1
        %v1763 = vor.u32 %v1490, %v1762
        %v1764 = vrot.slane %v1500, 1
        %v1765 = vor.u32 %v1497, %v1764
        %v1766 = vrot.slane %v1507, 1
        %v1767 = vor.u32 %v1504, %v1766
        %v1768 = vrot.slane %v1514, 1
        %v1769 = vor.u32 %v1511, %v1768
        %v1770 = vrot.slane %v1521, 1
        %v1771 = vor.u32 %v1518, %v1770
        %v1772 = vrot.slane %v1528, 1
        %v1773 = vor.u32 %v1525, %v1772
        %v1774 = vrot.slane %v1535, 1
        %v1775 = vor.u32 %v1532, %v1774
        %v1776 = vrot.slane %v1542, 1
        %v1777 = vor.u32 %v1539, %v1776
        %v1778 = vrot.slane %v1549, 1
        %v1779 = vor.u32 %v1546, %v1778
        %v1780 = vrot.slane %v1556, 1
        %v1781 = vor.u32 %v1553, %v1780
        %v1782 = vrot.slane %v1563, 1
        %v1783 = vor.u32 %v1560, %v1782
        %v1784 = vrot.slane %v1570, 1
        %v1785 = vor.u32 %v1567, %v1784
        %v1786 = vrot.slane %v1577, 1
        %v1787 = vor.u32 %v1574, %v1786
        %v1804 = vsel %vm1239, %v1757, 0
        %v1805 = vsel %vm1239, %v1759, 0
        %v1806 = vsel %vm1239, %v1761, 0
        %v1807 = vsel %vm1239, %v1763, 0
        %v1808 = vsel %vm1239, %v1765, 0
        %v1809 = vsel %vm1239, %v1767, 0
        %v1810 = vsel %vm1239, %v1769, 0
        %v1811 = vsel %vm1239, %v1771, 0
        %v1812 = vsel %vm1239, %v1773, 0
        %v1813 = vsel %vm1239, %v1775, 0
        %v1814 = vsel %vm1239, %v1777, 0
        %v1815 = vsel %vm1239, %v1779, 0
        %v1816 = vsel %vm1239, %v1781, 0
        %v1817 = vsel %vm1239, %v1783, 0
        %v1818 = vsel %vm1239, %v1785, 0
        %v1819 = vsel %vm1239, %v1787, 0
        %1820 = vrot.lane.b32.xlu0 %v1452, 96
        %v1821 = vpop.permute.xlu0 %1820
        %1822 = vrot.lane.b32.xlu0 %v1453, 96
        %v1823 = vpop.permute.xlu0 %1822
        %1824 = vrot.lane.b32.xlu0 %v1454, 96
        %v1825 = vpop.permute.xlu0 %1824
        %1826 = vrot.lane.b32.xlu0 %v1455, 96
        %v1827 = vpop.permute.xlu0 %1826
        %1828 = vrot.lane.b32.xlu0 %v1456, 96
        %v1829 = vpop.permute.xlu0 %1828
        %1830 = vrot.lane.b32.xlu0 %v1457, 96
        %v1831 = vpop.permute.xlu0 %1830
        %1832 = vrot.lane.b32.xlu0 %v1458, 96
        %v1833 = vpop.permute.xlu0 %1832
        %1834 = vrot.lane.b32.xlu0 %v1459, 96
        %v1835 = vpop.permute.xlu0 %1834
        %1836 = vrot.lane.b32.xlu0 %v1460, 96
        %v1837 = vpop.permute.xlu0 %1836
        %1838 = vrot.lane.b32.xlu0 %v1461, 96
        %v1839 = vpop.permute.xlu0 %1838
        %1840 = vrot.lane.b32.xlu0 %v1462, 96
        %v1841 = vpop.permute.xlu0 %1840
        %1842 = vrot.lane.b32.xlu0 %v1463, 96
        %v1843 = vpop.permute.xlu0 %1842
        %1844 = vrot.lane.b32.xlu0 %v1464, 96
        %v1845 = vpop.permute.xlu0 %1844
        %1846 = vrot.lane.b32.xlu0 %v1465, 96
        %v1847 = vpop.permute.xlu0 %1846
        %1848 = vrot.lane.b32.xlu0 %v1466, 96
        %v1849 = vpop.permute.xlu0 %1848
        %1850 = vrot.lane.b32.xlu0 %v1467, 96
        %v1851 = vpop.permute.xlu0 %1850
        %1868 = vrot.lane.b32.xlu0 %v1804, 96
        %v1869 = vpop.permute.xlu0 %1868
        %1870 = vrot.lane.b32.xlu0 %v1805, 96
        %v1871 = vpop.permute.xlu0 %1870
        %1872 = vrot.lane.b32.xlu0 %v1806, 96
        %v1873 = vpop.permute.xlu0 %1872
        %1874 = vrot.lane.b32.xlu0 %v1807, 96
        %v1875 = vpop.permute.xlu0 %1874
        %1876 = vrot.lane.b32.xlu0 %v1808, 96
        %v1877 = vpop.permute.xlu0 %1876
        %1878 = vrot.lane.b32.xlu0 %v1809, 96
        %v1879 = vpop.permute.xlu0 %1878
        %1880 = vrot.lane.b32.xlu0 %v1810, 96
        %v1881 = vpop.permute.xlu0 %1880
        %1882 = vrot.lane.b32.xlu0 %v1811, 96
        %v1883 = vpop.permute.xlu0 %1882
        %1884 = vrot.lane.b32.xlu0 %v1812, 96
        %v1885 = vpop.permute.xlu0 %1884
        %1886 = vrot.lane.b32.xlu0 %v1813, 96
        %v1887 = vpop.permute.xlu0 %1886
        %1888 = vrot.lane.b32.xlu0 %v1814, 96
        %v1889 = vpop.permute.xlu0 %1888
        %1890 = vrot.lane.b32.xlu0 %v1815, 96
        %v1891 = vpop.permute.xlu0 %1890
        %1892 = vrot.lane.b32.xlu0 %v1816, 96
        %v1893 = vpop.permute.xlu0 %1892
        %1894 = vrot.lane.b32.xlu0 %v1817, 96
        %v1895 = vpop.permute.xlu0 %1894
        %1896 = vrot.lane.b32.xlu0 %v1818, 96
        %v1897 = vpop.permute.xlu0 %1896
        %1898 = vrot.lane.b32.xlu0 %v1819, 96
        %v1899 = vpop.permute.xlu0 %1898
        %v1902 = vsel %vm1336, %v1821, %v1869
        %v1906 = vsel %vm1336, %v1823, %v1871
        %v1910 = vsel %vm1336, %v1825, %v1873
        %v1914 = vsel %vm1336, %v1827, %v1875
        %v1918 = vsel %vm1336, %v1829, %v1877
        %v1922 = vsel %vm1336, %v1831, %v1879
        %v1926 = vsel %vm1336, %v1833, %v1881
        %v1930 = vsel %vm1336, %v1835, %v1883
        %v1934 = vsel %vm1336, %v1837, %v1885
        %v1938 = vsel %vm1336, %v1839, %v1887
        %v1942 = vsel %vm1336, %v1841, %v1889
        %v1946 = vsel %vm1336, %v1843, %v1891
        %v1950 = vsel %vm1336, %v1845, %v1893
        %v1954 = vsel %vm1336, %v1847, %v1895
        %v1958 = vsel %vm1336, %v1849, %v1897
        %v1962 = vsel %vm1336, %v1851, %v1899
        %v1964 = vld [vmem:[%s1 + $0xc0] sm:$0xf]
        %v1965 = vld [vmem:[%s1 + $0xc4] sm:$0xf]
        %v1966 = vld [vmem:[%s1 + $0xc8] sm:$0xf]
        %v1967 = vld [vmem:[%s1 + $0xcc] sm:$0xf]
        %v1968 = vld [vmem:[%s1 + $0xd0] sm:$0xf]
        %v1969 = vld [vmem:[%s1 + $0xd4] sm:$0xf]
        %v1970 = vld [vmem:[%s1 + $0xd8] sm:$0xf]
        %v1971 = vld [vmem:[%s1 + $0xdc] sm:$0xf]
        %v1972 = vld [vmem:[%s1 + $0xe0] sm:$0xf]
        %v1973 = vld [vmem:[%s1 + $0xe4] sm:$0xf]
        %v1974 = vld [vmem:[%s1 + $0xe8] sm:$0xf]
        %v1975 = vld [vmem:[%s1 + $0xec] sm:$0xf]
        %v1976 = vld [vmem:[%s1 + $0xf0] sm:$0xf]
        %v1977 = vld [vmem:[%s1 + $0xf4] sm:$0xf]
        %v1978 = vld [vmem:[%s1 + $0xf8] sm:$0xf]
        %v1979 = vld [vmem:[%s1 + $0xfc] sm:$0xf]
        %v1980 = vld [vmem:[%s1 + $0x100] sm:$0xf]
        %v1981 = vld [vmem:[%s1 + $0x104] sm:$0xf]
        %v1982 = vld [vmem:[%s1 + $0x108] sm:$0xf]
        %v1983 = vld [vmem:[%s1 + $0x10c] sm:$0xf]
        %v1984 = vld [vmem:[%s1 + $0x110] sm:$0xf]
        %v1985 = vld [vmem:[%s1 + $0x114] sm:$0xf]
        %v1986 = vld [vmem:[%s1 + $0x118] sm:$0xf]
        %v1987 = vld [vmem:[%s1 + $0x11c] sm:$0xf]
        %v1988 = vld [vmem:[%s1 + $0x120] sm:$0xf]
        %v1989 = vld [vmem:[%s1 + $0x124] sm:$0xf]
        %v1990 = vld [vmem:[%s1 + $0x128] sm:$0xf]
        %v1991 = vld [vmem:[%s1 + $0x12c] sm:$0xf]
        %v1992 = vld [vmem:[%s1 + $0x130] sm:$0xf]
        %v1993 = vld [vmem:[%s1 + $0x134] sm:$0xf]
        %v1994 = vld [vmem:[%s1 + $0x138] sm:$0xf]
        %v1995 = vld [vmem:[%s1 + $0x13c] sm:$0xf]
        %v1996 = vld [vmem:[%s1 + $0x140] sm:$0xf]
        %v1997 = vld [vmem:[%s1 + $0x144] sm:$0xf]
        %v1998 = vld [vmem:[%s1 + $0x148] sm:$0xf]
        %v1999 = vld [vmem:[%s1 + $0x14c] sm:$0xf]
        %v2000 = vld [vmem:[%s1 + $0x150] sm:$0xf]
        %v2001 = vld [vmem:[%s1 + $0x154] sm:$0xf]
        %v2002 = vld [vmem:[%s1 + $0x158] sm:$0xf]
        %v2003 = vld [vmem:[%s1 + $0x15c] sm:$0xf]
        %v2004 = vld [vmem:[%s1 + $0x160] sm:$0xf]
        %v2005 = vld [vmem:[%s1 + $0x164] sm:$0xf]
        %v2006 = vld [vmem:[%s1 + $0x168] sm:$0xf]
        %v2007 = vld [vmem:[%s1 + $0x16c] sm:$0xf]
        %v2008 = vld [vmem:[%s1 + $0x170] sm:$0xf]
        %v2009 = vld [vmem:[%s1 + $0x174] sm:$0xf]
        %v2010 = vld [vmem:[%s1 + $0x178] sm:$0xf]
        %v2011 = vld [vmem:[%s1 + $0x17c] sm:$0xf]
        %v2060 = vunpack.c.l.b16 %v1964
        %v2061 = vunpack.c.l.b16 %v1965
        %v2062 = vunpack.c.l.b16 %v1966
        %v2063 = vunpack.c.l.b16 %v1967
        %v2064 = vunpack.c.l.b16 %v1968
        %v2065 = vunpack.c.l.b16 %v1969
        %v2066 = vunpack.c.l.b16 %v1970
        %v2067 = vunpack.c.l.b16 %v1971
        %v2068 = vunpack.c.l.b16 %v1972
        %v2069 = vunpack.c.l.b16 %v1973
        %v2070 = vunpack.c.l.b16 %v1974
        %v2071 = vunpack.c.l.b16 %v1975
        %v2072 = vunpack.c.l.b16 %v1976
        %v2073 = vunpack.c.l.b16 %v1977
        %v2074 = vunpack.c.l.b16 %v1978
        %v2075 = vunpack.c.l.b16 %v1979
        %v2076 = vunpack.c.l.b16 %v1980
        %v2077 = vunpack.c.l.b16 %v1981
        %v2078 = vunpack.c.l.b16 %v1982
        %v2079 = vunpack.c.l.b16 %v1983
        %v2080 = vunpack.c.l.b16 %v1984
        %v2081 = vunpack.c.l.b16 %v1985
        %v2082 = vunpack.c.l.b16 %v1986
        %v2083 = vunpack.c.l.b16 %v1987
        %v2084 = vunpack.c.l.b16 %v1988
        %v2085 = vunpack.c.l.b16 %v1989
        %v2086 = vunpack.c.l.b16 %v1990
        %v2087 = vunpack.c.l.b16 %v1991
        %v2088 = vunpack.c.l.b16 %v1992
        %v2089 = vunpack.c.l.b16 %v1993
        %v2090 = vunpack.c.l.b16 %v1994
        %v2091 = vunpack.c.l.b16 %v1995
        %v2092 = vunpack.c.l.b16 %v1996
        %v2093 = vunpack.c.l.b16 %v1997
        %v2094 = vunpack.c.l.b16 %v1998
        %v2095 = vunpack.c.l.b16 %v1999
        %v2096 = vunpack.c.l.b16 %v2000
        %v2097 = vunpack.c.l.b16 %v2001
        %v2098 = vunpack.c.l.b16 %v2002
        %v2099 = vunpack.c.l.b16 %v2003
        %v2100 = vunpack.c.l.b16 %v2004
        %v2101 = vunpack.c.l.b16 %v2005
        %v2102 = vunpack.c.l.b16 %v2006
        %v2103 = vunpack.c.l.b16 %v2007
        %v2104 = vunpack.c.l.b16 %v2008
        %v2105 = vunpack.c.l.b16 %v2009
        %v2106 = vunpack.c.l.b16 %v2010
        %v2107 = vunpack.c.l.b16 %v2011
        %v2108 = vpack.c.b16 %v2061, %v2060
        %v2109 = vpack.c.b16 %v2063, %v2062
        %v2110 = vpack.c.b16 %v2065, %v2064
        %v2111 = vpack.c.b16 %v2067, %v2066
        %v2112 = vpack.c.b16 %v2069, %v2068
        %v2113 = vpack.c.b16 %v2071, %v2070
        %v2114 = vpack.c.b16 %v2073, %v2072
        %v2115 = vpack.c.b16 %v2075, %v2074
        %v2116 = vpack.c.b16 %v2077, %v2076
        %v2117 = vpack.c.b16 %v2079, %v2078
        %v2118 = vpack.c.b16 %v2081, %v2080
        %v2119 = vpack.c.b16 %v2083, %v2082
        %v2120 = vpack.c.b16 %v2085, %v2084
        %v2121 = vpack.c.b16 %v2087, %v2086
        %v2122 = vpack.c.b16 %v2089, %v2088
        %v2123 = vpack.c.b16 %v2091, %v2090
        %v2124 = vpack.c.b16 %v2093, %v2092
        %v2125 = vpack.c.b16 %v2095, %v2094
        %v2126 = vpack.c.b16 %v2097, %v2096
        %v2127 = vpack.c.b16 %v2099, %v2098
        %v2128 = vpack.c.b16 %v2101, %v2100
        %v2129 = vpack.c.b16 %v2103, %v2102
        %v2130 = vpack.c.b16 %v2105, %v2104
        %v2131 = vpack.c.b16 %v2107, %v2106
        %2156 = vmatprep.subr.bf16.mxu0 0
        %2157 = vmatpush1.bf16.msra.mxu0 %v2108
        %2158 = vmatprep.subr.bf16.mxu0 0
        %2159 = vmatpush1.bf16.msra.mxu0 %v2109
        %2160 = vmatprep.subr.bf16.mxu0 0
        %2161 = vmatpush1.bf16.msra.mxu0 %v2110
        %2162 = vmatprep.subr.bf16.mxu0 0
        %2163 = vmatpush1.bf16.msra.mxu0 %v2111
        %2164 = vmatprep.subr.bf16.mxu0 0
        %2165 = vmatpush1.bf16.msra.mxu0 %v2112
        %2166 = vmatprep.subr.bf16.mxu0 0
        %2167 = vmatpush1.bf16.msra.mxu0 %v2113
        %2168 = vmatprep.subr.bf16.mxu0 0
        %2169 = vmatpush1.bf16.msra.mxu0 %v2114
        %2170 = vmatprep.subr.bf16.mxu0 0
        %2171 = vmatpush1.bf16.msra.mxu0 %v2115
        %2172 = vmatprep.subr.bf16.mxu0 0
        %2173 = vmatpush1.bf16.msra.mxu0 %v2116
        %2174 = vmatprep.subr.bf16.mxu0 0
        %2175 = vmatpush1.bf16.msra.mxu0 %v2117
        %2176 = vmatprep.subr.bf16.mxu0 0
        %2177 = vmatpush1.bf16.msra.mxu0 %v2118
        %2178 = vmatprep.subr.bf16.mxu0 0
        %2179 = vmatpush1.bf16.msra.mxu0 %v2119
        %2180 = vmatprep.subr.bf16.mxu0 0
        %2181 = vmatpush1.bf16.msra.mxu0 %v2120
        %2182 = vmatprep.subr.bf16.mxu0 0
        %2183 = vmatpush1.bf16.msra.mxu0 %v2121
        %2184 = vmatprep.subr.bf16.mxu0 0
        %2185 = vmatpush1.bf16.msra.mxu0 %v2122
        %2186 = vmatprep.subr.bf16.mxu0 0
        %2187 = vmatpush1.bf16.msra.mxu0 %v2123
        %2188 = vmatprep.mubr.bf16.mxu0 %v1452
        %2189 = vmatmul.mubr.bf16.gmra.mrb[0].mxu0 %v1694
        %v2190 = vpop.f32.mrb[0].mxu0
        %v2191 = vadd.f32 0.0, %v2190
        %v2192 = vpop.f32.mrb[0].mxu0
        %v2193 = vpop.f32.mrb[0].mxu0
        %v2194 = vadd.f32 0.0, %v2193
        %v2195 = vpop.f32.mrb[0].mxu0
        %2196 = vmatprep.mubr.bf16.mxu0 %v1453
        %2197 = vmatmul.mubr.bf16.gmra.mrb[0].mxu0 %v1698
        %v2198 = vpop.f32.mrb[0].mxu0
        %v2199 = vadd.f32 0.0, %v2198
        %v2200 = vpop.f32.mrb[0].mxu0
        %v2201 = vpop.f32.mrb[0].mxu0
        %v2202 = vadd.f32 0.0, %v2201
        %v2203 = vpop.f32.mrb[0].mxu0
        %2204 = vmatprep.mubr.bf16.mxu0 %v1454
        %2205 = vmatmul.mubr.bf16.gmra.mrb[0].mxu0 %v1702
        %v2206 = vpop.f32.mrb[0].mxu0
        %v2207 = vadd.f32 0.0, %v2206
        %v2208 = vpop.f32.mrb[0].mxu0
        %v2209 = vpop.f32.mrb[0].mxu0
        %v2210 = vadd.f32 0.0, %v2209
        %v2211 = vpop.f32.mrb[0].mxu0
        %2212 = vmatprep.mubr.bf16.mxu0 %v1455
        %2213 = vmatmul.mubr.bf16.gmra.mrb[0].mxu0 %v1706
        %v2214 = vpop.f32.mrb[0].mxu0
        %v2215 = vadd.f32 0.0, %v2214
        %v2216 = vpop.f32.mrb[0].mxu0
        %v2217 = vpop.f32.mrb[0].mxu0
        %v2218 = vadd.f32 0.0, %v2217
        %v2219 = vpop.f32.mrb[0].mxu0
        %2220 = vmatprep.mubr.bf16.mxu0 %v1456
        %2221 = vmatmul.mubr.bf16.gmra.mrb[0].mxu0 %v1710
        %v2222 = vpop.f32.mrb[0].mxu0
        %v2223 = vadd.f32 0.0, %v2222
        %v2224 = vpop.f32.mrb[0].mxu0
        %v2225 = vpop.f32.mrb[0].mxu0
        %v2226 = vadd.f32 0.0, %v2225
        %v2227 = vpop.f32.mrb[0].mxu0
        %2228 = vmatprep.mubr.bf16.mxu0 %v1457
        %2229 = vmatmul.mubr.bf16.gmra.mrb[0].mxu0 %v1714
        %v2230 = vpop.f32.mrb[0].mxu0
        %v2231 = vadd.f32 0.0, %v2230
        %v2232 = vpop.f32.mrb[0].mxu0
        %v2233 = vpop.f32.mrb[0].mxu0
        %v2234 = vadd.f32 0.0, %v2233
        %v2235 = vpop.f32.mrb[0].mxu0
        %2236 = vmatprep.mubr.bf16.mxu0 %v1458
        %2237 = vmatmul.mubr.bf16.gmra.mrb[0].mxu0 %v1718
        %v2238 = vpop.f32.mrb[0].mxu0
        %v2239 = vadd.f32 0.0, %v2238
        %v2240 = vpop.f32.mrb[0].mxu0
        %v2241 = vpop.f32.mrb[0].mxu0
        %v2242 = vadd.f32 0.0, %v2241
        %v2243 = vpop.f32.mrb[0].mxu0
        %2244 = vmatprep.mubr.bf16.mxu0 %v1459
        %2245 = vmatmul.mubr.bf16.gmra.mrb[0].mxu0 %v1722
        %v2246 = vpop.f32.mrb[0].mxu0
        %v2247 = vadd.f32 0.0, %v2246
        %v2248 = vpop.f32.mrb[0].mxu0
        %v2249 = vpop.f32.mrb[0].mxu0
        %v2250 = vadd.f32 0.0, %v2249
        %v2251 = vpop.f32.mrb[0].mxu0
        %2252 = vmatprep.mubr.bf16.mxu0 %v1460
        %2253 = vmatmul.mubr.bf16.gmra.mrb[0].mxu0 %v1726
        %v2254 = vpop.f32.mrb[0].mxu0
        %v2255 = vadd.f32 0.0, %v2254
        %v2256 = vpop.f32.mrb[0].mxu0
        %v2257 = vpop.f32.mrb[0].mxu0
        %v2258 = vadd.f32 0.0, %v2257
        %v2259 = vpop.f32.mrb[0].mxu0
        %2260 = vmatprep.mubr.bf16.mxu0 %v1461
        %2261 = vmatmul.mubr.bf16.gmra.mrb[0].mxu0 %v1730
        %v2262 = vpop.f32.mrb[0].mxu0
        %v2263 = vadd.f32 0.0, %v2262
        %v2264 = vpop.f32.mrb[0].mxu0
        %v2265 = vpop.f32.mrb[0].mxu0
        %v2266 = vadd.f32 0.0, %v2265
        %v2267 = vpop.f32.mrb[0].mxu0
        %2268 = vmatprep.mubr.bf16.mxu0 %v1462
        %2269 = vmatmul.mubr.bf16.gmra.mrb[0].mxu0 %v1734
        %v2270 = vpop.f32.mrb[0].mxu0
        %v2271 = vadd.f32 0.0, %v2270
        %v2272 = vpop.f32.mrb[0].mxu0
        %v2273 = vpop.f32.mrb[0].mxu0
        %v2274 = vadd.f32 0.0, %v2273
        %v2275 = vpop.f32.mrb[0].mxu0
        %2276 = vmatprep.mubr.bf16.mxu0 %v1463
        %2277 = vmatmul.mubr.bf16.gmra.mrb[0].mxu0 %v1738
        %v2278 = vpop.f32.mrb[0].mxu0
        %v2279 = vadd.f32 0.0, %v2278
        %v2280 = vpop.f32.mrb[0].mxu0
        %v2281 = vpop.f32.mrb[0].mxu0
        %v2282 = vadd.f32 0.0, %v2281
        %v2283 = vpop.f32.mrb[0].mxu0
        %2284 = vmatprep.mubr.bf16.mxu0 %v1464
        %2285 = vmatmul.mubr.bf16.gmra.mrb[0].mxu0 %v1742
        %v2286 = vpop.f32.mrb[0].mxu0
        %v2287 = vadd.f32 0.0, %v2286
        %v2288 = vpop.f32.mrb[0].mxu0
        %v2289 = vpop.f32.mrb[0].mxu0
        %v2290 = vadd.f32 0.0, %v2289
        %v2291 = vpop.f32.mrb[0].mxu0
        %2292 = vmatprep.mubr.bf16.mxu0 %v1465
        %2293 = vmatmul.mubr.bf16.gmra.mrb[0].mxu0 %v1746
        %v2294 = vpop.f32.mrb[0].mxu0
        %v2295 = vadd.f32 0.0, %v2294
        %v2296 = vpop.f32.mrb[0].mxu0
        %v2297 = vpop.f32.mrb[0].mxu0
        %v2298 = vadd.f32 0.0, %v2297
        %v2299 = vpop.f32.mrb[0].mxu0
        %2300 = vmatprep.mubr.bf16.mxu0 %v1466
        %2301 = vmatmul.mubr.bf16.gmra.mrb[0].mxu0 %v1750
        %v2302 = vpop.f32.mrb[0].mxu0
        %v2303 = vadd.f32 0.0, %v2302
        %v2304 = vpop.f32.mrb[0].mxu0
        %v2305 = vpop.f32.mrb[0].mxu0
        %v2306 = vadd.f32 0.0, %v2305
        %v2307 = vpop.f32.mrb[0].mxu0
        %2308 = vmatprep.mubr.bf16.mxu0 %v1467
        %2309 = vmatmul.mubr.bf16.gmra.mrb[0].mxu0 %v1754
        %v2310 = vpop.f32.mrb[0].mxu0
        %v2311 = vadd.f32 0.0, %v2310
        %v2312 = vpop.f32.mrb[0].mxu0
        %v2313 = vpop.f32.mrb[0].mxu0
        %v2314 = vadd.f32 0.0, %v2313
        %v2315 = vpop.f32.mrb[0].mxu0
        %2316 = vdwg.mxu0
        %2317 = vmatprep.subr.bf16.mxu0 0
        %2318 = vmatpush1.bf16.msra.mxu0 %v2124
        %2319 = vmatprep.subr.bf16.mxu0 0
        %2320 = vmatpush1.bf16.msra.mxu0 %v2125
        %2321 = vmatprep.subr.bf16.mxu0 0
        %2322 = vmatpush1.bf16.msra.mxu0 %v2126
        %2323 = vmatprep.subr.bf16.mxu0 0
        %2324 = vmatpush1.bf16.msra.mxu0 %v2127
        %2325 = vmatprep.subr.bf16.mxu0 0
        %2326 = vmatpush1.bf16.msra.mxu0 %v2128
        %2327 = vmatprep.subr.bf16.mxu0 0
        %2328 = vmatpush1.bf16.msra.mxu0 %v2129
        %2329 = vmatprep.subr.bf16.mxu0 0
        %2330 = vmatpush1.bf16.msra.mxu0 %v2130
        %2331 = vmatprep.subr.bf16.mxu0 0
        %2332 = vmatpush1.bf16.msra.mxu0 %v2131
        %2333 = vmatprep.subr.bf16.mxu0 0
        %2334 = vmatpush1.bf16.msra.mxu0 0
        %2335 = vmatprep.subr.bf16.mxu0 0
        %2336 = vmatpush1.bf16.msra.mxu0 0
        %2337 = vmatprep.subr.bf16.mxu0 0
        %2338 = vmatpush1.bf16.msra.mxu0 0
        %2339 = vmatprep.subr.bf16.mxu0 0
        %2340 = vmatpush1.bf16.msra.mxu0 0
        %2341 = vmatprep.subr.bf16.mxu0 0
        %2342 = vmatpush1.bf16.msra.mxu0 0
        %2343 = vmatprep.subr.bf16.mxu0 0
        %2344 = vmatpush1.bf16.msra.mxu0 0
        %2345 = vmatprep.subr.bf16.mxu0 0
        %2346 = vmatpush1.bf16.msra.mxu0 0
        %2347 = vmatprep.subr.bf16.mxu0 0
        %2348 = vmatpush1.bf16.msra.mxu0 0
        %2349 = vmatprep.mubr.bf16.mxu0 0
        %2350 = vmatmul.mubr.bf16.gmra.mrb[0].mxu0 %v1902
        %v2351 = vpop.f32.mrb[0].mxu0
        %v2352 = vadd.f32 %v2191, %v2351
        %v2353 = vpop.f32.mrb[0].mxu0
        %v2354 = vpop.f32.mrb[0].mxu0
        %v2355 = vadd.f32 %v2194, %v2354
        %v2356 = vpop.f32.mrb[0].mxu0
        %2357 = vmatprep.mubr.bf16.mxu0 0
        %2358 = vmatmul.mubr.bf16.gmra.mrb[0].mxu0 %v1906
        %v2359 = vpop.f32.mrb[0].mxu0
        %v2360 = vadd.f32 %v2199, %v2359
        %v2361 = vpop.f32.mrb[0].mxu0
        %v2362 = vpop.f32.mrb[0].mxu0
        %v2363 = vadd.f32 %v2202, %v2362
        %v2364 = vpop.f32.mrb[0].mxu0
        %2365 = vmatprep.mubr.bf16.mxu0 0
        %2366 = vmatmul.mubr.bf16.gmra.mrb[0].mxu0 %v1910
        %v2367 = vpop.f32.mrb[0].mxu0
        %v2368 = vadd.f32 %v2207, %v2367
        %v2369 = vpop.f32.mrb[0].mxu0
        %v2370 = vpop.f32.mrb[0].mxu0
        %v2371 = vadd.f32 %v2210, %v2370
        %v2372 = vpop.f32.mrb[0].mxu0
        %2373 = vmatprep.mubr.bf16.mxu0 0
        %2374 = vmatmul.mubr.bf16.gmra.mrb[0].mxu0 %v1914
        %v2375 = vpop.f32.mrb[0].mxu0
        %v2376 = vadd.f32 %v2215, %v2375
        %v2377 = vpop.f32.mrb[0].mxu0
        %v2378 = vpop.f32.mrb[0].mxu0
        %v2379 = vadd.f32 %v2218, %v2378
        %v2380 = vpop.f32.mrb[0].mxu0
        %2381 = vmatprep.mubr.bf16.mxu0 0
        %2382 = vmatmul.mubr.bf16.gmra.mrb[0].mxu0 %v1918
        %v2383 = vpop.f32.mrb[0].mxu0
        %v2384 = vadd.f32 %v2223, %v2383
        %v2385 = vpop.f32.mrb[0].mxu0
        %v2386 = vpop.f32.mrb[0].mxu0
        %v2387 = vadd.f32 %v2226, %v2386
        %v2388 = vpop.f32.mrb[0].mxu0
        %2389 = vmatprep.mubr.bf16.mxu0 0
        %2390 = vmatmul.mubr.bf16.gmra.mrb[0].mxu0 %v1922
        %v2391 = vpop.f32.mrb[0].mxu0
        %v2392 = vadd.f32 %v2231, %v2391
        %v2393 = vpop.f32.mrb[0].mxu0
        %v2394 = vpop.f32.mrb[0].mxu0
        %v2395 = vadd.f32 %v2234, %v2394
        %v2396 = vpop.f32.mrb[0].mxu0
        %2397 = vmatprep.mubr.bf16.mxu0 0
        %2398 = vmatmul.mubr.bf16.gmra.mrb[0].mxu0 %v1926
        %v2399 = vpop.f32.mrb[0].mxu0
        %v2400 = vadd.f32 %v2239, %v2399
        %v2401 = vpop.f32.mrb[0].mxu0
        %v2402 = vpop.f32.mrb[0].mxu0
        %v2403 = vadd.f32 %v2242, %v2402
        %v2404 = vpop.f32.mrb[0].mxu0
        %2405 = vmatprep.mubr.bf16.mxu0 0
        %2406 = vmatmul.mubr.bf16.gmra.mrb[0].mxu0 %v1930
        %v2407 = vpop.f32.mrb[0].mxu0
        %v2408 = vadd.f32 %v2247, %v2407
        %v2409 = vpop.f32.mrb[0].mxu0
        %v2410 = vpop.f32.mrb[0].mxu0
        %v2411 = vadd.f32 %v2250, %v2410
        %v2412 = vpop.f32.mrb[0].mxu0
        %2413 = vmatprep.mubr.bf16.mxu0 0
        %2414 = vmatmul.mubr.bf16.gmra.mrb[0].mxu0 %v1934
        %v2415 = vpop.f32.mrb[0].mxu0
        %v2416 = vadd.f32 %v2255, %v2415
        %v2417 = vpop.f32.mrb[0].mxu0
        %v2418 = vpop.f32.mrb[0].mxu0
        %v2419 = vadd.f32 %v2258, %v2418
        %v2420 = vpop.f32.mrb[0].mxu0
        %2421 = vmatprep.mubr.bf16.mxu0 0
        %2422 = vmatmul.mubr.bf16.gmra.mrb[0].mxu0 %v1938
        %v2423 = vpop.f32.mrb[0].mxu0
        %v2424 = vadd.f32 %v2263, %v2423
        %v2425 = vpop.f32.mrb[0].mxu0
        %v2426 = vpop.f32.mrb[0].mxu0
        %v2427 = vadd.f32 %v2266, %v2426
        %v2428 = vpop.f32.mrb[0].mxu0
        %2429 = vmatprep.mubr.bf16.mxu0 0
        %2430 = vmatmul.mubr.bf16.gmra.mrb[0].mxu0 %v1942
        %v2431 = vpop.f32.mrb[0].mxu0
        %v2432 = vadd.f32 %v2271, %v2431
        %v2433 = vpop.f32.mrb[0].mxu0
        %v2434 = vpop.f32.mrb[0].mxu0
        %v2435 = vadd.f32 %v2274, %v2434
        %v2436 = vpop.f32.mrb[0].mxu0
        %2437 = vmatprep.mubr.bf16.mxu0 0
        %2438 = vmatmul.mubr.bf16.gmra.mrb[0].mxu0 %v1946
        %v2439 = vpop.f32.mrb[0].mxu0
        %v2440 = vadd.f32 %v2279, %v2439
        %v2441 = vpop.f32.mrb[0].mxu0
        %v2442 = vpop.f32.mrb[0].mxu0
        %v2443 = vadd.f32 %v2282, %v2442
        %v2444 = vpop.f32.mrb[0].mxu0
        %2445 = vmatprep.mubr.bf16.mxu0 0
        %2446 = vmatmul.mubr.bf16.gmra.mrb[0].mxu0 %v1950
        %v2447 = vpop.f32.mrb[0].mxu0
        %v2448 = vadd.f32 %v2287, %v2447
        %v2449 = vpop.f32.mrb[0].mxu0
        %v2450 = vpop.f32.mrb[0].mxu0
        %v2451 = vadd.f32 %v2290, %v2450
        %v2452 = vpop.f32.mrb[0].mxu0
        %2453 = vmatprep.mubr.bf16.mxu0 0
        %2454 = vmatmul.mubr.bf16.gmra.mrb[0].mxu0 %v1954
        %v2455 = vpop.f32.mrb[0].mxu0
        %v2456 = vadd.f32 %v2295, %v2455
        %v2457 = vpop.f32.mrb[0].mxu0
        %v2458 = vpop.f32.mrb[0].mxu0
        %v2459 = vadd.f32 %v2298, %v2458
        %v2460 = vpop.f32.mrb[0].mxu0
        %2461 = vmatprep.mubr.bf16.mxu0 0
        %2462 = vmatmul.mubr.bf16.gmra.mrb[0].mxu0 %v1958
        %v2463 = vpop.f32.mrb[0].mxu0
        %v2464 = vadd.f32 %v2303, %v2463
        %v2465 = vpop.f32.mrb[0].mxu0
        %v2466 = vpop.f32.mrb[0].mxu0
        %v2467 = vadd.f32 %v2306, %v2466
        %v2468 = vpop.f32.mrb[0].mxu0
        %2469 = vmatprep.mubr.bf16.mxu0 0
        %2470 = vmatmul.mubr.bf16.gmra.mrb[0].mxu0 %v1962
        %v2471 = vpop.f32.mrb[0].mxu0
        %v2472 = vadd.f32 %v2311, %v2471
        %v2473 = vpop.f32.mrb[0].mxu0
        %v2474 = vpop.f32.mrb[0].mxu0
        %v2475 = vadd.f32 %v2314, %v2474
        %v2476 = vpop.f32.mrb[0].mxu0
        %2477 = vdwg.mxu0
        %v2526 = vunpack.c.l.b16 %v1401
        %v2527 = vunpack.c.l.b16 %v1402
        %v2528 = vunpack.c.l.b16 %v1403
        %v2529 = vunpack.c.l.b16 %v1404
        %v2530 = vunpack.c.l.b16 %v1405
        %v2531 = vunpack.c.l.b16 %v1406
        %v2532 = vunpack.c.l.b16 %v1407
        %v2533 = vunpack.c.l.b16 %v1408
        %v2534 = vunpack.c.l.b16 %v1409
        %v2535 = vunpack.c.l.b16 %v1410
        %v2536 = vunpack.c.l.b16 %v1411
        %v2537 = vunpack.c.l.b16 %v1412
        %v2538 = vunpack.c.l.b16 %v1413
        %v2539 = vunpack.c.l.b16 %v1414
        %v2540 = vunpack.c.l.b16 %v1415
        %v2541 = vunpack.c.l.b16 %v1416
        %v2542 = vunpack.c.l.b16 %v1417
        %v2543 = vunpack.c.l.b16 %v1418
        %v2544 = vunpack.c.l.b16 %v1419
        %v2545 = vunpack.c.l.b16 %v1420
        %v2546 = vunpack.c.l.b16 %v1421
        %v2547 = vunpack.c.l.b16 %v1422
        %v2548 = vunpack.c.l.b16 %v1423
        %v2549 = vunpack.c.l.b16 %v1424
        %v2550 = vunpack.c.l.b16 %v1425
        %v2551 = vunpack.c.l.b16 %v1426
        %v2552 = vunpack.c.l.b16 %v1427
        %v2553 = vunpack.c.l.b16 %v1428
        %v2554 = vunpack.c.l.b16 %v1429
        %v2555 = vunpack.c.l.b16 %v1430
        %v2556 = vunpack.c.l.b16 %v1431
        %v2557 = vunpack.c.l.b16 %v1432
        %v2558 = vunpack.c.l.b16 %v1433
        %v2559 = vunpack.c.l.b16 %v1434
        %v2560 = vunpack.c.l.b16 %v1435
        %v2561 = vunpack.c.l.b16 %v1436
        %v2562 = vunpack.c.l.b16 %v1437
        %v2563 = vunpack.c.l.b16 %v1438
        %v2564 = vunpack.c.l.b16 %v1439
        %v2565 = vunpack.c.l.b16 %v1440
        %v2566 = vunpack.c.l.b16 %v1441
        %v2567 = vunpack.c.l.b16 %v1442
        %v2568 = vunpack.c.l.b16 %v1443
        %v2569 = vunpack.c.l.b16 %v1444
        %v2570 = vunpack.c.l.b16 %v1445
        %v2571 = vunpack.c.l.b16 %v1446
        %v2572 = vunpack.c.l.b16 %v1447
        %v2573 = vunpack.c.l.b16 %v1448
        %v2574 = vpack.c.b16 %v2527, %v2526
        %v2575 = vpack.c.b16 %v2529, %v2528
        %v2576 = vpack.c.b16 %v2531, %v2530
        %v2577 = vpack.c.b16 %v2533, %v2532
        %v2578 = vpack.c.b16 %v2535, %v2534
        %v2579 = vpack.c.b16 %v2537, %v2536
        %v2580 = vpack.c.b16 %v2539, %v2538
        %v2581 = vpack.c.b16 %v2541, %v2540
        %v2582 = vpack.c.b16 %v2543, %v2542
        %v2583 = vpack.c.b16 %v2545, %v2544
        %v2584 = vpack.c.b16 %v2547, %v2546
        %v2585 = vpack.c.b16 %v2549, %v2548
        %v2586 = vpack.c.b16 %v2551, %v2550
        %v2587 = vpack.c.b16 %v2553, %v2552
        %v2588 = vpack.c.b16 %v2555, %v2554
        %v2589 = vpack.c.b16 %v2557, %v2556
        %v2590 = vpack.c.b16 %v2559, %v2558
        %v2591 = vpack.c.b16 %v2561, %v2560
        %v2592 = vpack.c.b16 %v2563, %v2562
        %v2593 = vpack.c.b16 %v2565, %v2564
        %v2594 = vpack.c.b16 %v2567, %v2566
        %v2595 = vpack.c.b16 %v2569, %v2568
        %v2596 = vpack.c.b16 %v2571, %v2570
        %v2597 = vpack.c.b16 %v2573, %v2572
        %2622 = vmatprep.subr.bf16.mxu0 0
        %2623 = vmatpush1.bf16.msra.mxu0 %v2574
        %2624 = vmatprep.subr.bf16.mxu0 0
        %2625 = vmatpush1.bf16.msra.mxu0 %v2575
        %2626 = vmatprep.subr.bf16.mxu0 0
        %2627 = vmatpush1.bf16.msra.mxu0 %v2576
        %2628 = vmatprep.subr.bf16.mxu0 0
        %2629 = vmatpush1.bf16.msra.mxu0 %v2577
        %2630 = vmatprep.subr.bf16.mxu0 0
        %2631 = vmatpush1.bf16.msra.mxu0 %v2578
        %2632 = vmatprep.subr.bf16.mxu0 0
        %2633 = vmatpush1.bf16.msra.mxu0 %v2579
        %2634 = vmatprep.subr.bf16.mxu0 0
        %2635 = vmatpush1.bf16.msra.mxu0 %v2580
        %2636 = vmatprep.subr.bf16.mxu0 0
        %2637 = vmatpush1.bf16.msra.mxu0 %v2581
        %2638 = vmatprep.subr.bf16.mxu0 0
        %2639 = vmatpush1.bf16.msra.mxu0 %v2582
        %2640 = vmatprep.subr.bf16.mxu0 0
        %2641 = vmatpush1.bf16.msra.mxu0 %v2583
        %2642 = vmatprep.subr.bf16.mxu0 0
        %2643 = vmatpush1.bf16.msra.mxu0 %v2584
        %2644 = vmatprep.subr.bf16.mxu0 0
        %2645 = vmatpush1.bf16.msra.mxu0 %v2585
        %2646 = vmatprep.subr.bf16.mxu0 0
        %2647 = vmatpush1.bf16.msra.mxu0 %v2586
        %2648 = vmatprep.subr.bf16.mxu0 0
        %2649 = vmatpush1.bf16.msra.mxu0 %v2587
        %2650 = vmatprep.subr.bf16.mxu0 0
        %2651 = vmatpush1.bf16.msra.mxu0 %v2588
        %2652 = vmatprep.subr.bf16.mxu0 0
        %2653 = vmatpush1.bf16.msra.mxu0 %v2589
        %2654 = vmatprep.mubr.bf16.mxu0 %v881
        %2655 = vmatmul.mubr.bf16.gmra.mrb[0].mxu0 %v1127
        %v2656 = vpop.f32.mrb[0].mxu0
        %v2657 = vadd.f32 %v2352, %v2656
        %v2658 = vpop.f32.mrb[0].mxu0
        %v2659 = vpop.f32.mrb[0].mxu0
        %v2660 = vadd.f32 %v2355, %v2659
        %v2661 = vpop.f32.mrb[0].mxu0
        %2662 = vmatprep.mubr.bf16.mxu0 %v882
        %2663 = vmatmul.mubr.bf16.gmra.mrb[0].mxu0 %v1131
        %v2664 = vpop.f32.mrb[0].mxu0
        %v2665 = vadd.f32 %v2360, %v2664
        %v2666 = vpop.f32.mrb[0].mxu0
        %v2667 = vpop.f32.mrb[0].mxu0
        %v2668 = vadd.f32 %v2363, %v2667
        %v2669 = vpop.f32.mrb[0].mxu0
        %2670 = vmatprep.mubr.bf16.mxu0 %v883
        %2671 = vmatmul.mubr.bf16.gmra.mrb[0].mxu0 %v1135
        %v2672 = vpop.f32.mrb[0].mxu0
        %v2673 = vadd.f32 %v2368, %v2672
        %v2674 = vpop.f32.mrb[0].mxu0
        %v2675 = vpop.f32.mrb[0].mxu0
        %v2676 = vadd.f32 %v2371, %v2675
        %v2677 = vpop.f32.mrb[0].mxu0
        %2678 = vmatprep.mubr.bf16.mxu0 %v884
        %2679 = vmatmul.mubr.bf16.gmra.mrb[0].mxu0 %v1139
        %v2680 = vpop.f32.mrb[0].mxu0
        %v2681 = vadd.f32 %v2376, %v2680
        %v2682 = vpop.f32.mrb[0].mxu0
        %v2683 = vpop.f32.mrb[0].mxu0
        %v2684 = vadd.f32 %v2379, %v2683
        %v2685 = vpop.f32.mrb[0].mxu0
        %2686 = vmatprep.mubr.bf16.mxu0 %v885
        %2687 = vmatmul.mubr.bf16.gmra.mrb[0].mxu0 %v1143
        %v2688 = vpop.f32.mrb[0].mxu0
        %v2689 = vadd.f32 %v2384, %v2688
        %v2690 = vpop.f32.mrb[0].mxu0
        %v2691 = vpop.f32.mrb[0].mxu0
        %v2692 = vadd.f32 %v2387, %v2691
        %v2693 = vpop.f32.mrb[0].mxu0
        %2694 = vmatprep.mubr.bf16.mxu0 %v886
        %2695 = vmatmul.mubr.bf16.gmra.mrb[0].mxu0 %v1147
        %v2696 = vpop.f32.mrb[0].mxu0
        %v2697 = vadd.f32 %v2392, %v2696
        %v2698 = vpop.f32.mrb[0].mxu0
        %v2699 = vpop.f32.mrb[0].mxu0
        %v2700 = vadd.f32 %v2395, %v2699
        %v2701 = vpop.f32.mrb[0].mxu0
        %2702 = vmatprep.mubr.bf16.mxu0 %v887
        %2703 = vmatmul.mubr.bf16.gmra.mrb[0].mxu0 %v1151
        %v2704 = vpop.f32.mrb[0].mxu0
        %v2705 = vadd.f32 %v2400, %v2704
        %v2706 = vpop.f32.mrb[0].mxu0
        %v2707 = vpop.f32.mrb[0].mxu0
        %v2708 = vadd.f32 %v2403, %v2707
        %v2709 = vpop.f32.mrb[0].mxu0
        %2710 = vmatprep.mubr.bf16.mxu0 %v888
        %2711 = vmatmul.mubr.bf16.gmra.mrb[0].mxu0 %v1155
        %v2712 = vpop.f32.mrb[0].mxu0
        %v2713 = vadd.f32 %v2408, %v2712
        %v2714 = vpop.f32.mrb[0].mxu0
        %v2715 = vpop.f32.mrb[0].mxu0
        %v2716 = vadd.f32 %v2411, %v2715
        %v2717 = vpop.f32.mrb[0].mxu0
        %2718 = vmatprep.mubr.bf16.mxu0 %v889
        %2719 = vmatmul.mubr.bf16.gmra.mrb[0].mxu0 %v1159
        %v2720 = vpop.f32.mrb[0].mxu0
        %v2721 = vadd.f32 %v2416, %v2720
        %v2722 = vpop.f32.mrb[0].mxu0
        %v2723 = vpop.f32.mrb[0].mxu0
        %v2724 = vadd.f32 %v2419, %v2723
        %v2725 = vpop.f32.mrb[0].mxu0
        %2726 = vmatprep.mubr.bf16.mxu0 %v890
        %2727 = vmatmul.mubr.bf16.gmra.mrb[0].mxu0 %v1163
        %v2728 = vpop.f32.mrb[0].mxu0
        %v2729 = vadd.f32 %v2424, %v2728
        %v2730 = vpop.f32.mrb[0].mxu0
        %v2731 = vpop.f32.mrb[0].mxu0
        %v2732 = vadd.f32 %v2427, %v2731
        %v2733 = vpop.f32.mrb[0].mxu0
        %2734 = vmatprep.mubr.bf16.mxu0 %v891
        %2735 = vmatmul.mubr.bf16.gmra.mrb[0].mxu0 %v1167
        %v2736 = vpop.f32.mrb[0].mxu0
        %v2737 = vadd.f32 %v2432, %v2736
        %v2738 = vpop.f32.mrb[0].mxu0
        %v2739 = vpop.f32.mrb[0].mxu0
        %v2740 = vadd.f32 %v2435, %v2739
        %v2741 = vpop.f32.mrb[0].mxu0
        %2742 = vmatprep.mubr.bf16.mxu0 %v892
        %2743 = vmatmul.mubr.bf16.gmra.mrb[0].mxu0 %v1171
        %v2744 = vpop.f32.mrb[0].mxu0
        %v2745 = vadd.f32 %v2440, %v2744
        %v2746 = vpop.f32.mrb[0].mxu0
        %v2747 = vpop.f32.mrb[0].mxu0
        %v2748 = vadd.f32 %v2443, %v2747
        %v2749 = vpop.f32.mrb[0].mxu0
        %2750 = vmatprep.mubr.bf16.mxu0 %v893
        %2751 = vmatmul.mubr.bf16.gmra.mrb[0].mxu0 %v1175
        %v2752 = vpop.f32.mrb[0].mxu0
        %v2753 = vadd.f32 %v2448, %v2752
        %v2754 = vpop.f32.mrb[0].mxu0
        %v2755 = vpop.f32.mrb[0].mxu0
        %v2756 = vadd.f32 %v2451, %v2755
        %v2757 = vpop.f32.mrb[0].mxu0
        %2758 = vmatprep.mubr.bf16.mxu0 %v894
        %2759 = vmatmul.mubr.bf16.gmra.mrb[0].mxu0 %v1179
        %v2760 = vpop.f32.mrb[0].mxu0
        %v2761 = vadd.f32 %v2456, %v2760
        %v2762 = vpop.f32.mrb[0].mxu0
        %v2763 = vpop.f32.mrb[0].mxu0
        %v2764 = vadd.f32 %v2459, %v2763
        %v2765 = vpop.f32.mrb[0].mxu0
        %2766 = vmatprep.mubr.bf16.mxu0 %v895
        %2767 = vmatmul.mubr.bf16.gmra.mrb[0].mxu0 %v1183
        %v2768 = vpop.f32.mrb[0].mxu0
        %v2769 = vadd.f32 %v2464, %v2768
        %v2770 = vpop.f32.mrb[0].mxu0
        %v2771 = vpop.f32.mrb[0].mxu0
        %v2772 = vadd.f32 %v2467, %v2771
        %v2773 = vpop.f32.mrb[0].mxu0
        %2774 = vmatprep.mubr.bf16.mxu0 %v896
        %2775 = vmatmul.mubr.bf16.gmra.mrb[0].mxu0 %v1187
        %v2776 = vpop.f32.mrb[0].mxu0
        %v2777 = vadd.f32 %v2472, %v2776
        %v2778 = vpop.f32.mrb[0].mxu0
        %v2779 = vpop.f32.mrb[0].mxu0
        %v2780 = vadd.f32 %v2475, %v2779
        %v2781 = vpop.f32.mrb[0].mxu0
        %2782 = vdwg.mxu0
        %2783 = vmatprep.subr.bf16.mxu0 0
        %2784 = vmatpush1.bf16.msra.mxu0 %v2590
        %2785 = vmatprep.subr.bf16.mxu0 0
        %2786 = vmatpush1.bf16.msra.mxu0 %v2591
        %2787 = vmatprep.subr.bf16.mxu0 0
        %2788 = vmatpush1.bf16.msra.mxu0 %v2592
        %2789 = vmatprep.subr.bf16.mxu0 0
        %2790 = vmatpush1.bf16.msra.mxu0 %v2593
        %2791 = vmatprep.subr.bf16.mxu0 0
        %2792 = vmatpush1.bf16.msra.mxu0 %v2594
        %2793 = vmatprep.subr.bf16.mxu0 0
        %2794 = vmatpush1.bf16.msra.mxu0 %v2595
        %2795 = vmatprep.subr.bf16.mxu0 0
        %2796 = vmatpush1.bf16.msra.mxu0 %v2596
        %2797 = vmatprep.subr.bf16.mxu0 0
        %2798 = vmatpush1.bf16.msra.mxu0 %v2597
        %2799 = vmatprep.subr.bf16.mxu0 0
        %2800 = vmatpush1.bf16.msra.mxu0 0
        %2801 = vmatprep.subr.bf16.mxu0 0
        %2802 = vmatpush1.bf16.msra.mxu0 0
        %2803 = vmatprep.subr.bf16.mxu0 0
        %2804 = vmatpush1.bf16.msra.mxu0 0
        %2805 = vmatprep.subr.bf16.mxu0 0
        %2806 = vmatpush1.bf16.msra.mxu0 0
        %2807 = vmatprep.subr.bf16.mxu0 0
        %2808 = vmatpush1.bf16.msra.mxu0 0
        %2809 = vmatprep.subr.bf16.mxu0 0
        %2810 = vmatpush1.bf16.msra.mxu0 0
        %2811 = vmatprep.subr.bf16.mxu0 0
        %2812 = vmatpush1.bf16.msra.mxu0 0
        %2813 = vmatprep.subr.bf16.mxu0 0
        %2814 = vmatpush1.bf16.msra.mxu0 0
        %2815 = vmatprep.mubr.bf16.mxu0 0
        %2816 = vmatmul.mubr.bf16.gmra.mrb[0].mxu0 %v1339
        %v2817 = vpop.f32.mrb[0].mxu0
        %v2818 = vadd.f32 %v2657, %v2817
        %v2819 = vpop.f32.mrb[0].mxu0
        %v2820 = vpop.f32.mrb[0].mxu0
        %v2821 = vadd.f32 %v2660, %v2820
        %v2822 = vpop.f32.mrb[0].mxu0
        %2823 = vmatprep.mubr.bf16.mxu0 0
        %2824 = vmatmul.mubr.bf16.gmra.mrb[0].mxu0 %v1343
        %v2825 = vpop.f32.mrb[0].mxu0
        %v2826 = vadd.f32 %v2665, %v2825
        %v2827 = vpop.f32.mrb[0].mxu0
        %v2828 = vpop.f32.mrb[0].mxu0
        %v2829 = vadd.f32 %v2668, %v2828
        %v2830 = vpop.f32.mrb[0].mxu0
        %2831 = vmatprep.mubr.bf16.mxu0 0
        %2832 = vmatmul.mubr.bf16.gmra.mrb[0].mxu0 %v1347
        %v2833 = vpop.f32.mrb[0].mxu0
        %v2834 = vadd.f32 %v2673, %v2833
        %v2835 = vpop.f32.mrb[0].mxu0
        %v2836 = vpop.f32.mrb[0].mxu0
        %v2837 = vadd.f32 %v2676, %v2836
        %v2838 = vpop.f32.mrb[0].mxu0
        %2839 = vmatprep.mubr.bf16.mxu0 0
        %2840 = vmatmul.mubr.bf16.gmra.mrb[0].mxu0 %v1351
        %v2841 = vpop.f32.mrb[0].mxu0
        %v2842 = vadd.f32 %v2681, %v2841
        %v2843 = vpop.f32.mrb[0].mxu0
        %v2844 = vpop.f32.mrb[0].mxu0
        %v2845 = vadd.f32 %v2684, %v2844
        %v2846 = vpop.f32.mrb[0].mxu0
        %2847 = vmatprep.mubr.bf16.mxu0 0
        %2848 = vmatmul.mubr.bf16.gmra.mrb[0].mxu0 %v1355
        %v2849 = vpop.f32.mrb[0].mxu0
        %v2850 = vadd.f32 %v2689, %v2849
        %v2851 = vpop.f32.mrb[0].mxu0
        %v2852 = vpop.f32.mrb[0].mxu0
        %v2853 = vadd.f32 %v2692, %v2852
        %v2854 = vpop.f32.mrb[0].mxu0
        %2855 = vmatprep.mubr.bf16.mxu0 0
        %2856 = vmatmul.mubr.bf16.gmra.mrb[0].mxu0 %v1359
        %v2857 = vpop.f32.mrb[0].mxu0
        %v2858 = vadd.f32 %v2697, %v2857
        %v2859 = vpop.f32.mrb[0].mxu0
        %v2860 = vpop.f32.mrb[0].mxu0
        %v2861 = vadd.f32 %v2700, %v2860
        %v2862 = vpop.f32.mrb[0].mxu0
        %2863 = vmatprep.mubr.bf16.mxu0 0
        %2864 = vmatmul.mubr.bf16.gmra.mrb[0].mxu0 %v1363
        %v2865 = vpop.f32.mrb[0].mxu0
        %v2866 = vadd.f32 %v2705, %v2865
        %v2867 = vpop.f32.mrb[0].mxu0
        %v2868 = vpop.f32.mrb[0].mxu0
        %v2869 = vadd.f32 %v2708, %v2868
        %v2870 = vpop.f32.mrb[0].mxu0
        %2871 = vmatprep.mubr.bf16.mxu0 0
        %2872 = vmatmul.mubr.bf16.gmra.mrb[0].mxu0 %v1367
        %v2873 = vpop.f32.mrb[0].mxu0
        %v2874 = vadd.f32 %v2713, %v2873
        %v2875 = vpop.f32.mrb[0].mxu0
        %v2876 = vpop.f32.mrb[0].mxu0
        %v2877 = vadd.f32 %v2716, %v2876
        %v2878 = vpop.f32.mrb[0].mxu0
        %2879 = vmatprep.mubr.bf16.mxu0 0
        %2880 = vmatmul.mubr.bf16.gmra.mrb[0].mxu0 %v1371
        %v2881 = vpop.f32.mrb[0].mxu0
        %v2882 = vadd.f32 %v2721, %v2881
        %v2883 = vpop.f32.mrb[0].mxu0
        %v2884 = vpop.f32.mrb[0].mxu0
        %v2885 = vadd.f32 %v2724, %v2884
        %v2886 = vpop.f32.mrb[0].mxu0
        %2887 = vmatprep.mubr.bf16.mxu0 0
        %2888 = vmatmul.mubr.bf16.gmra.mrb[0].mxu0 %v1375
        %v2889 = vpop.f32.mrb[0].mxu0
        %v2890 = vadd.f32 %v2729, %v2889
        %v2891 = vpop.f32.mrb[0].mxu0
        %v2892 = vpop.f32.mrb[0].mxu0
        %v2893 = vadd.f32 %v2732, %v2892
        %v2894 = vpop.f32.mrb[0].mxu0
        %2895 = vmatprep.mubr.bf16.mxu0 0
        %2896 = vmatmul.mubr.bf16.gmra.mrb[0].mxu0 %v1379
        %v2897 = vpop.f32.mrb[0].mxu0
        %v2898 = vadd.f32 %v2737, %v2897
        %v2899 = vpop.f32.mrb[0].mxu0
        %v2900 = vpop.f32.mrb[0].mxu0
        %v2901 = vadd.f32 %v2740, %v2900
        %v2902 = vpop.f32.mrb[0].mxu0
        %2903 = vmatprep.mubr.bf16.mxu0 0
        %2904 = vmatmul.mubr.bf16.gmra.mrb[0].mxu0 %v1383
        %v2905 = vpop.f32.mrb[0].mxu0
        %v2906 = vadd.f32 %v2745, %v2905
        %v2907 = vpop.f32.mrb[0].mxu0
        %v2908 = vpop.f32.mrb[0].mxu0
        %v2909 = vadd.f32 %v2748, %v2908
        %v2910 = vpop.f32.mrb[0].mxu0
        %2911 = vmatprep.mubr.bf16.mxu0 0
        %2912 = vmatmul.mubr.bf16.gmra.mrb[0].mxu0 %v1387
        %v2913 = vpop.f32.mrb[0].mxu0
        %v2914 = vadd.f32 %v2753, %v2913
        %v2915 = vpop.f32.mrb[0].mxu0
        %v2916 = vpop.f32.mrb[0].mxu0
        %v2917 = vadd.f32 %v2756, %v2916
        %v2918 = vpop.f32.mrb[0].mxu0
        %2919 = vmatprep.mubr.bf16.mxu0 0
        %2920 = vmatmul.mubr.bf16.gmra.mrb[0].mxu0 %v1391
        %v2921 = vpop.f32.mrb[0].mxu0
        %v2922 = vadd.f32 %v2761, %v2921
        %v2923 = vpop.f32.mrb[0].mxu0
        %v2924 = vpop.f32.mrb[0].mxu0
        %v2925 = vadd.f32 %v2764, %v2924
        %v2926 = vpop.f32.mrb[0].mxu0
        %2927 = vmatprep.mubr.bf16.mxu0 0
        %2928 = vmatmul.mubr.bf16.gmra.mrb[0].mxu0 %v1395
        %v2929 = vpop.f32.mrb[0].mxu0
        %v2930 = vadd.f32 %v2769, %v2929
        %v2931 = vpop.f32.mrb[0].mxu0
        %v2932 = vpop.f32.mrb[0].mxu0
        %v2933 = vadd.f32 %v2772, %v2932
        %v2934 = vpop.f32.mrb[0].mxu0
        %2935 = vmatprep.mubr.bf16.mxu0 0
        %2936 = vmatmul.mubr.bf16.gmra.mrb[0].mxu0 %v1399
        %v2937 = vpop.f32.mrb[0].mxu0
        %v2938 = vadd.f32 %v2777, %v2937
        %v2939 = vpop.f32.mrb[0].mxu0
        %v2940 = vpop.f32.mrb[0].mxu0
        %v2941 = vadd.f32 %v2780, %v2940
        %v2942 = vpop.f32.mrb[0].mxu0
        %2943 = vdwg.mxu0
        %s2944 = sadd.s32 %s878, 2
        %s2945 = smul.addr %s2944, 8
        %s2946 = scalar_lea.vmem [#allocation2], %s2945
        %v2947 = vld [vmem:[%s2946] sm:$0xff]
        %v2948 = vld [vmem:[%s2946 + $0x8] sm:$0xff]
        %v2949 = vld [vmem:[%s2946 + $0x10] sm:$0xff]
        %v2950 = vld [vmem:[%s2946 + $0x18] sm:$0xff]
        %v2951 = vld [vmem:[%s2946 + $0x20] sm:$0xff]
        %v2952 = vld [vmem:[%s2946 + $0x28] sm:$0xff]
        %v2953 = vld [vmem:[%s2946 + $0x30] sm:$0xff]
        %v2954 = vld [vmem:[%s2946 + $0x38] sm:$0xff]
        %v2955 = vld [vmem:[%s2946 + $0x40] sm:$0xff]
        %v2956 = vld [vmem:[%s2946 + $0x48] sm:$0xff]
        %v2957 = vld [vmem:[%s2946 + $0x50] sm:$0xff]
        %v2958 = vld [vmem:[%s2946 + $0x58] sm:$0xff]
        %v2959 = vld [vmem:[%s2946 + $0x60] sm:$0xff]
        %v2960 = vld [vmem:[%s2946 + $0x68] sm:$0xff]
        %v2961 = vld [vmem:[%s2946 + $0x70] sm:$0xff]
        %v2962 = vld [vmem:[%s2946 + $0x78] sm:$0xff]
        %v2964 = vshrl.u32 %v2947, 16
        %v2966 = vrot.slane %v2964, 7
        %v2967 = vshll.u32 %v2947, 16
        %v2969 = vor.u32 %v2966, %v2967
        %v2971 = vshrl.u32 %v2948, 16
        %v2973 = vrot.slane %v2971, 7
        %v2974 = vshll.u32 %v2948, 16
        %v2976 = vor.u32 %v2973, %v2974
        %v2978 = vshrl.u32 %v2949, 16
        %v2980 = vrot.slane %v2978, 7
        %v2981 = vshll.u32 %v2949, 16
        %v2983 = vor.u32 %v2980, %v2981
        %v2985 = vshrl.u32 %v2950, 16
        %v2987 = vrot.slane %v2985, 7
        %v2988 = vshll.u32 %v2950, 16
        %v2990 = vor.u32 %v2987, %v2988
        %v2992 = vshrl.u32 %v2951, 16
        %v2994 = vrot.slane %v2992, 7
        %v2995 = vshll.u32 %v2951, 16
        %v2997 = vor.u32 %v2994, %v2995
        %v2999 = vshrl.u32 %v2952, 16
        %v3001 = vrot.slane %v2999, 7
        %v3002 = vshll.u32 %v2952, 16
        %v3004 = vor.u32 %v3001, %v3002
        %v3006 = vshrl.u32 %v2953, 16
        %v3008 = vrot.slane %v3006, 7
        %v3009 = vshll.u32 %v2953, 16
        %v3011 = vor.u32 %v3008, %v3009
        %v3013 = vshrl.u32 %v2954, 16
        %v3015 = vrot.slane %v3013, 7
        %v3016 = vshll.u32 %v2954, 16
        %v3018 = vor.u32 %v3015, %v3016
        %v3020 = vshrl.u32 %v2955, 16
        %v3022 = vrot.slane %v3020, 7
        %v3023 = vshll.u32 %v2955, 16
        %v3025 = vor.u32 %v3022, %v3023
        %v3027 = vshrl.u32 %v2956, 16
        %v3029 = vrot.slane %v3027, 7
        %v3030 = vshll.u32 %v2956, 16
        %v3032 = vor.u32 %v3029, %v3030
        %v3034 = vshrl.u32 %v2957, 16
        %v3036 = vrot.slane %v3034, 7
        %v3037 = vshll.u32 %v2957, 16
        %v3039 = vor.u32 %v3036, %v3037
        %v3041 = vshrl.u32 %v2958, 16
        %v3043 = vrot.slane %v3041, 7
        %v3044 = vshll.u32 %v2958, 16
        %v3046 = vor.u32 %v3043, %v3044
        %v3048 = vshrl.u32 %v2959, 16
        %v3050 = vrot.slane %v3048, 7
        %v3051 = vshll.u32 %v2959, 16
        %v3053 = vor.u32 %v3050, %v3051
        %v3055 = vshrl.u32 %v2960, 16
        %v3057 = vrot.slane %v3055, 7
        %v3058 = vshll.u32 %v2960, 16
        %v3060 = vor.u32 %v3057, %v3058
        %v3062 = vshrl.u32 %v2961, 16
        %v3064 = vrot.slane %v3062, 7
        %v3065 = vshll.u32 %v2961, 16
        %v3067 = vor.u32 %v3064, %v3065
        %v3069 = vshrl.u32 %v2962, 16
        %v3071 = vrot.slane %v3069, 7
        %v3072 = vshll.u32 %v2962, 16
        %v3074 = vor.u32 %v3071, %v3072
        %3075 = vrot.lane.b32.xlu0 %v2969, 32
        %v3076 = vpop.permute.xlu0 %3075
        %3077 = vrot.lane.b32.xlu0 %v2976, 32
        %v3078 = vpop.permute.xlu0 %3077
        %3079 = vrot.lane.b32.xlu0 %v2983, 32
        %v3080 = vpop.permute.xlu0 %3079
        %3081 = vrot.lane.b32.xlu0 %v2990, 32
        %v3082 = vpop.permute.xlu0 %3081
        %3083 = vrot.lane.b32.xlu0 %v2997, 32
        %v3084 = vpop.permute.xlu0 %3083
        %3085 = vrot.lane.b32.xlu0 %v3004, 32
        %v3086 = vpop.permute.xlu0 %3085
        %3087 = vrot.lane.b32.xlu0 %v3011, 32
        %v3088 = vpop.permute.xlu0 %3087
        %3089 = vrot.lane.b32.xlu0 %v3018, 32
        %v3090 = vpop.permute.xlu0 %3089
        %3091 = vrot.lane.b32.xlu0 %v3025, 32
        %v3092 = vpop.permute.xlu0 %3091
        %3093 = vrot.lane.b32.xlu0 %v3032, 32
        %v3094 = vpop.permute.xlu0 %3093
        %3095 = vrot.lane.b32.xlu0 %v3039, 32
        %v3096 = vpop.permute.xlu0 %3095
        %3097 = vrot.lane.b32.xlu0 %v3046, 32
        %v3098 = vpop.permute.xlu0 %3097
        %3099 = vrot.lane.b32.xlu0 %v3053, 32
        %v3100 = vpop.permute.xlu0 %3099
        %3101 = vrot.lane.b32.xlu0 %v3060, 32
        %v3102 = vpop.permute.xlu0 %3101
        %3103 = vrot.lane.b32.xlu0 %v3067, 32
        %v3104 = vpop.permute.xlu0 %3103
        %3105 = vrot.lane.b32.xlu0 %v3074, 32
        %v3106 = vpop.permute.xlu0 %3105
        %v3123 = vsel %vm1059, 0, %v3076
        %v3124 = vsel %vm1059, 0, %v3078
        %v3125 = vsel %vm1059, 0, %v3080
        %v3126 = vsel %vm1059, 0, %v3082
        %v3127 = vsel %vm1059, 0, %v3084
        %v3128 = vsel %vm1059, 0, %v3086
        %v3129 = vsel %vm1059, 0, %v3088
        %v3130 = vsel %vm1059, 0, %v3090
        %v3131 = vsel %vm1059, 0, %v3092
        %v3132 = vsel %vm1059, 0, %v3094
        %v3133 = vsel %vm1059, 0, %v3096
        %v3134 = vsel %vm1059, 0, %v3098
        %v3135 = vsel %vm1059, 0, %v3100
        %v3136 = vsel %vm1059, 0, %v3102
        %v3137 = vsel %vm1059, 0, %v3104
        %v3138 = vsel %vm1059, 0, %v3106
        %3155 = vrot.lane.b32.xlu0 %v2947, 32
        %v3156 = vpop.permute.xlu0 %3155
        %3157 = vrot.lane.b32.xlu0 %v2948, 32
        %v3158 = vpop.permute.xlu0 %3157
        %3159 = vrot.lane.b32.xlu0 %v2949, 32
        %v3160 = vpop.permute.xlu0 %3159
        %3161 = vrot.lane.b32.xlu0 %v2950, 32
        %v3162 = vpop.permute.xlu0 %3161
        %3163 = vrot.lane.b32.xlu0 %v2951, 32
        %v3164 = vpop.permute.xlu0 %3163
        %3165 = vrot.lane.b32.xlu0 %v2952, 32
        %v3166 = vpop.permute.xlu0 %3165
        %3167 = vrot.lane.b32.xlu0 %v2953, 32
        %v3168 = vpop.permute.xlu0 %3167
        %3169 = vrot.lane.b32.xlu0 %v2954, 32
        %v3170 = vpop.permute.xlu0 %3169
        %3171 = vrot.lane.b32.xlu0 %v2955, 32
        %v3172 = vpop.permute.xlu0 %3171
        %3173 = vrot.lane.b32.xlu0 %v2956, 32
        %v3174 = vpop.permute.xlu0 %3173
        %3175 = vrot.lane.b32.xlu0 %v2957, 32
        %v3176 = vpop.permute.xlu0 %3175
        %3177 = vrot.lane.b32.xlu0 %v2958, 32
        %v3178 = vpop.permute.xlu0 %3177
        %3179 = vrot.lane.b32.xlu0 %v2959, 32
        %v3180 = vpop.permute.xlu0 %3179
        %3181 = vrot.lane.b32.xlu0 %v2960, 32
        %v3182 = vpop.permute.xlu0 %3181
        %3183 = vrot.lane.b32.xlu0 %v2961, 32
        %v3184 = vpop.permute.xlu0 %3183
        %3185 = vrot.lane.b32.xlu0 %v2962, 32
        %v3186 = vpop.permute.xlu0 %3185
        %v3189 = vsel %vm1124, %v3123, %v3156
        %v3193 = vsel %vm1124, %v3124, %v3158
        %v3197 = vsel %vm1124, %v3125, %v3160
        %v3201 = vsel %vm1124, %v3126, %v3162
        %v3205 = vsel %vm1124, %v3127, %v3164
        %v3209 = vsel %vm1124, %v3128, %v3166
        %v3213 = vsel %vm1124, %v3129, %v3168
        %v3217 = vsel %vm1124, %v3130, %v3170
        %v3221 = vsel %vm1124, %v3131, %v3172
        %v3225 = vsel %vm1124, %v3132, %v3174
        %v3229 = vsel %vm1124, %v3133, %v3176
        %v3233 = vsel %vm1124, %v3134, %v3178
        %v3237 = vsel %vm1124, %v3135, %v3180
        %v3241 = vsel %vm1124, %v3136, %v3182
        %v3245 = vsel %vm1124, %v3137, %v3184
        %v3249 = vsel %vm1124, %v3138, %v3186
        %v3251 = vrot.slane %v2967, 1
        %v3252 = vor.u32 %v2964, %v3251
        %v3253 = vrot.slane %v2974, 1
        %v3254 = vor.u32 %v2971, %v3253
        %v3255 = vrot.slane %v2981, 1
        %v3256 = vor.u32 %v2978, %v3255
        %v3257 = vrot.slane %v2988, 1
        %v3258 = vor.u32 %v2985, %v3257
        %v3259 = vrot.slane %v2995, 1
        %v3260 = vor.u32 %v2992, %v3259
        %v3261 = vrot.slane %v3002, 1
        %v3262 = vor.u32 %v2999, %v3261
        %v3263 = vrot.slane %v3009, 1
        %v3264 = vor.u32 %v3006, %v3263
        %v3265 = vrot.slane %v3016, 1
        %v3266 = vor.u32 %v3013, %v3265
        %v3267 = vrot.slane %v3023, 1
        %v3268 = vor.u32 %v3020, %v3267
        %v3269 = vrot.slane %v3030, 1
        %v3270 = vor.u32 %v3027, %v3269
        %v3271 = vrot.slane %v3037, 1
        %v3272 = vor.u32 %v3034, %v3271
        %v3273 = vrot.slane %v3044, 1
        %v3274 = vor.u32 %v3041, %v3273
        %v3275 = vrot.slane %v3051, 1
        %v3276 = vor.u32 %v3048, %v3275
        %v3277 = vrot.slane %v3058, 1
        %v3278 = vor.u32 %v3055, %v3277
        %v3279 = vrot.slane %v3065, 1
        %v3280 = vor.u32 %v3062, %v3279
        %v3281 = vrot.slane %v3072, 1
        %v3282 = vor.u32 %v3069, %v3281
        %v3299 = vsel %vm1239, %v3252, 0
        %v3300 = vsel %vm1239, %v3254, 0
        %v3301 = vsel %vm1239, %v3256, 0
        %v3302 = vsel %vm1239, %v3258, 0
        %v3303 = vsel %vm1239, %v3260, 0
        %v3304 = vsel %vm1239, %v3262, 0
        %v3305 = vsel %vm1239, %v3264, 0
        %v3306 = vsel %vm1239, %v3266, 0
        %v3307 = vsel %vm1239, %v3268, 0
        %v3308 = vsel %vm1239, %v3270, 0
        %v3309 = vsel %vm1239, %v3272, 0
        %v3310 = vsel %vm1239, %v3274, 0
        %v3311 = vsel %vm1239, %v3276, 0
        %v3312 = vsel %vm1239, %v3278, 0
        %v3313 = vsel %vm1239, %v3280, 0
        %v3314 = vsel %vm1239, %v3282, 0
        %3315 = vrot.lane.b32.xlu0 %v2947, 96
        %v3316 = vpop.permute.xlu0 %3315
        %3317 = vrot.lane.b32.xlu0 %v2948, 96
        %v3318 = vpop.permute.xlu0 %3317
        %3319 = vrot.lane.b32.xlu0 %v2949, 96
        %v3320 = vpop.permute.xlu0 %3319
        %3321 = vrot.lane.b32.xlu0 %v2950, 96
        %v3322 = vpop.permute.xlu0 %3321
        %3323 = vrot.lane.b32.xlu0 %v2951, 96
        %v3324 = vpop.permute.xlu0 %3323
        %3325 = vrot.lane.b32.xlu0 %v2952, 96
        %v3326 = vpop.permute.xlu0 %3325
        %3327 = vrot.lane.b32.xlu0 %v2953, 96
        %v3328 = vpop.permute.xlu0 %3327
        %3329 = vrot.lane.b32.xlu0 %v2954, 96
        %v3330 = vpop.permute.xlu0 %3329
        %3331 = vrot.lane.b32.xlu0 %v2955, 96
        %v3332 = vpop.permute.xlu0 %3331
        %3333 = vrot.lane.b32.xlu0 %v2956, 96
        %v3334 = vpop.permute.xlu0 %3333
        %3335 = vrot.lane.b32.xlu0 %v2957, 96
        %v3336 = vpop.permute.xlu0 %3335
        %3337 = vrot.lane.b32.xlu0 %v2958, 96
        %v3338 = vpop.permute.xlu0 %3337
        %3339 = vrot.lane.b32.xlu0 %v2959, 96
        %v3340 = vpop.permute.xlu0 %3339
        %3341 = vrot.lane.b32.xlu0 %v2960, 96
        %v3342 = vpop.permute.xlu0 %3341
        %3343 = vrot.lane.b32.xlu0 %v2961, 96
        %v3344 = vpop.permute.xlu0 %3343
        %3345 = vrot.lane.b32.xlu0 %v2962, 96
        %v3346 = vpop.permute.xlu0 %3345
        %3363 = vrot.lane.b32.xlu0 %v3299, 96
        %v3364 = vpop.permute.xlu0 %3363
        %3365 = vrot.lane.b32.xlu0 %v3300, 96
        %v3366 = vpop.permute.xlu0 %3365
        %3367 = vrot.lane.b32.xlu0 %v3301, 96
        %v3368 = vpop.permute.xlu0 %3367
        %3369 = vrot.lane.b32.xlu0 %v3302, 96
        %v3370 = vpop.permute.xlu0 %3369
        %3371 = vrot.lane.b32.xlu0 %v3303, 96
        %v3372 = vpop.permute.xlu0 %3371
        %3373 = vrot.lane.b32.xlu0 %v3304, 96
        %v3374 = vpop.permute.xlu0 %3373
        %3375 = vrot.lane.b32.xlu0 %v3305, 96
        %v3376 = vpop.permute.xlu0 %3375
        %3377 = vrot.lane.b32.xlu0 %v3306, 96
        %v3378 = vpop.permute.xlu0 %3377
        %3379 = vrot.lane.b32.xlu0 %v3307, 96
        %v3380 = vpop.permute.xlu0 %3379
        %3381 = vrot.lane.b32.xlu0 %v3308, 96
        %v3382 = vpop.permute.xlu0 %3381
        %3383 = vrot.lane.b32.xlu0 %v3309, 96
        %v3384 = vpop.permute.xlu0 %3383
        %3385 = vrot.lane.b32.xlu0 %v3310, 96
        %v3386 = vpop.permute.xlu0 %3385
        %3387 = vrot.lane.b32.xlu0 %v3311, 96
        %v3388 = vpop.permute.xlu0 %3387
        %3389 = vrot.lane.b32.xlu0 %v3312, 96
        %v3390 = vpop.permute.xlu0 %3389
        %3391 = vrot.lane.b32.xlu0 %v3313, 96
        %v3392 = vpop.permute.xlu0 %3391
        %3393 = vrot.lane.b32.xlu0 %v3314, 96
        %v3394 = vpop.permute.xlu0 %3393
        %v3397 = vsel %vm1336, %v3316, %v3364
        %v3401 = vsel %vm1336, %v3318, %v3366
        %v3405 = vsel %vm1336, %v3320, %v3368
        %v3409 = vsel %vm1336, %v3322, %v3370
        %v3413 = vsel %vm1336, %v3324, %v3372
        %v3417 = vsel %vm1336, %v3326, %v3374
        %v3421 = vsel %vm1336, %v3328, %v3376
        %v3425 = vsel %vm1336, %v3330, %v3378
        %v3429 = vsel %vm1336, %v3332, %v3380
        %v3433 = vsel %vm1336, %v3334, %v3382
        %v3437 = vsel %vm1336, %v3336, %v3384
        %v3441 = vsel %vm1336, %v3338, %v3386
        %v3445 = vsel %vm1336, %v3340, %v3388
        %v3449 = vsel %vm1336, %v3342, %v3390
        %v3453 = vsel %vm1336, %v3344, %v3392
        %v3457 = vsel %vm1336, %v3346, %v3394
        %v3459 = vld [vmem:[%s1 + $0x180] sm:$0xf]
        %v3460 = vld [vmem:[%s1 + $0x184] sm:$0xf]
        %v3461 = vld [vmem:[%s1 + $0x188] sm:$0xf]
        %v3462 = vld [vmem:[%s1 + $0x18c] sm:$0xf]
        %v3463 = vld [vmem:[%s1 + $0x190] sm:$0xf]
        %v3464 = vld [vmem:[%s1 + $0x194] sm:$0xf]
        %v3465 = vld [vmem:[%s1 + $0x198] sm:$0xf]
        %v3466 = vld [vmem:[%s1 + $0x19c] sm:$0xf]
        %v3467 = vld [vmem:[%s1 + $0x1a0] sm:$0xf]
        %v3468 = vld [vmem:[%s1 + $0x1a4] sm:$0xf]
        %v3469 = vld [vmem:[%s1 + $0x1a8] sm:$0xf]
        %v3470 = vld [vmem:[%s1 + $0x1ac] sm:$0xf]
        %v3471 = vld [vmem:[%s1 + $0x1b0] sm:$0xf]
        %v3472 = vld [vmem:[%s1 + $0x1b4] sm:$0xf]
        %v3473 = vld [vmem:[%s1 + $0x1b8] sm:$0xf]
        %v3474 = vld [vmem:[%s1 + $0x1bc] sm:$0xf]
        %v3475 = vld [vmem:[%s1 + $0x1c0] sm:$0xf]
        %v3476 = vld [vmem:[%s1 + $0x1c4] sm:$0xf]
        %v3477 = vld [vmem:[%s1 + $0x1c8] sm:$0xf]
        %v3478 = vld [vmem:[%s1 + $0x1cc] sm:$0xf]
        %v3479 = vld [vmem:[%s1 + $0x1d0] sm:$0xf]
        %v3480 = vld [vmem:[%s1 + $0x1d4] sm:$0xf]
        %v3481 = vld [vmem:[%s1 + $0x1d8] sm:$0xf]
        %v3482 = vld [vmem:[%s1 + $0x1dc] sm:$0xf]
        %v3483 = vld [vmem:[%s1 + $0x1e0] sm:$0xf]
        %v3484 = vld [vmem:[%s1 + $0x1e4] sm:$0xf]
        %v3485 = vld [vmem:[%s1 + $0x1e8] sm:$0xf]
        %v3486 = vld [vmem:[%s1 + $0x1ec] sm:$0xf]
        %v3487 = vld [vmem:[%s1 + $0x1f0] sm:$0xf]
        %v3488 = vld [vmem:[%s1 + $0x1f4] sm:$0xf]
        %v3489 = vld [vmem:[%s1 + $0x1f8] sm:$0xf]
        %v3490 = vld [vmem:[%s1 + $0x1fc] sm:$0xf]
        %v3491 = vld [vmem:[%s1 + $0x200] sm:$0xf]
        %v3492 = vld [vmem:[%s1 + $0x204] sm:$0xf]
        %v3493 = vld [vmem:[%s1 + $0x208] sm:$0xf]
        %v3494 = vld [vmem:[%s1 + $0x20c] sm:$0xf]
        %v3495 = vld [vmem:[%s1 + $0x210] sm:$0xf]
        %v3496 = vld [vmem:[%s1 + $0x214] sm:$0xf]
        %v3497 = vld [vmem:[%s1 + $0x218] sm:$0xf]
        %v3498 = vld [vmem:[%s1 + $0x21c] sm:$0xf]
        %v3499 = vld [vmem:[%s1 + $0x220] sm:$0xf]
        %v3500 = vld [vmem:[%s1 + $0x224] sm:$0xf]
        %v3501 = vld [vmem:[%s1 + $0x228] sm:$0xf]
        %v3502 = vld [vmem:[%s1 + $0x22c] sm:$0xf]
        %v3503 = vld [vmem:[%s1 + $0x230] sm:$0xf]
        %v3504 = vld [vmem:[%s1 + $0x234] sm:$0xf]
        %v3505 = vld [vmem:[%s1 + $0x238] sm:$0xf]
        %v3506 = vld [vmem:[%s1 + $0x23c] sm:$0xf]
        %v3555 = vunpack.c.l.b16 %v3459
        %v3556 = vunpack.c.l.b16 %v3460
        %v3557 = vunpack.c.l.b16 %v3461
        %v3558 = vunpack.c.l.b16 %v3462
        %v3559 = vunpack.c.l.b16 %v3463
        %v3560 = vunpack.c.l.b16 %v3464
        %v3561 = vunpack.c.l.b16 %v3465
        %v3562 = vunpack.c.l.b16 %v3466
        %v3563 = vunpack.c.l.b16 %v3467
        %v3564 = vunpack.c.l.b16 %v3468
        %v3565 = vunpack.c.l.b16 %v3469
        %v3566 = vunpack.c.l.b16 %v3470
        %v3567 = vunpack.c.l.b16 %v3471
        %v3568 = vunpack.c.l.b16 %v3472
        %v3569 = vunpack.c.l.b16 %v3473
        %v3570 = vunpack.c.l.b16 %v3474
        %v3571 = vunpack.c.l.b16 %v3475
        %v3572 = vunpack.c.l.b16 %v3476
        %v3573 = vunpack.c.l.b16 %v3477
        %v3574 = vunpack.c.l.b16 %v3478
        %v3575 = vunpack.c.l.b16 %v3479
        %v3576 = vunpack.c.l.b16 %v3480
        %v3577 = vunpack.c.l.b16 %v3481
        %v3578 = vunpack.c.l.b16 %v3482
        %v3579 = vunpack.c.l.b16 %v3483
        %v3580 = vunpack.c.l.b16 %v3484
        %v3581 = vunpack.c.l.b16 %v3485
        %v3582 = vunpack.c.l.b16 %v3486
        %v3583 = vunpack.c.l.b16 %v3487
        %v3584 = vunpack.c.l.b16 %v3488
        %v3585 = vunpack.c.l.b16 %v3489
        %v3586 = vunpack.c.l.b16 %v3490
        %v3587 = vunpack.c.l.b16 %v3491
        %v3588 = vunpack.c.l.b16 %v3492
        %v3589 = vunpack.c.l.b16 %v3493
        %v3590 = vunpack.c.l.b16 %v3494
        %v3591 = vunpack.c.l.b16 %v3495
        %v3592 = vunpack.c.l.b16 %v3496
        %v3593 = vunpack.c.l.b16 %v3497
        %v3594 = vunpack.c.l.b16 %v3498
        %v3595 = vunpack.c.l.b16 %v3499
        %v3596 = vunpack.c.l.b16 %v3500
        %v3597 = vunpack.c.l.b16 %v3501
        %v3598 = vunpack.c.l.b16 %v3502
        %v3599 = vunpack.c.l.b16 %v3503
        %v3600 = vunpack.c.l.b16 %v3504
        %v3601 = vunpack.c.l.b16 %v3505
        %v3602 = vunpack.c.l.b16 %v3506
        %v3603 = vpack.c.b16 %v3556, %v3555
        %v3604 = vpack.c.b16 %v3558, %v3557
        %v3605 = vpack.c.b16 %v3560, %v3559
        %v3606 = vpack.c.b16 %v3562, %v3561
        %v3607 = vpack.c.b16 %v3564, %v3563
        %v3608 = vpack.c.b16 %v3566, %v3565
        %v3609 = vpack.c.b16 %v3568, %v3567
        %v3610 = vpack.c.b16 %v3570, %v3569
        %v3611 = vpack.c.b16 %v3572, %v3571
        %v3612 = vpack.c.b16 %v3574, %v3573
        %v3613 = vpack.c.b16 %v3576, %v3575
        %v3614 = vpack.c.b16 %v3578, %v3577
        %v3615 = vpack.c.b16 %v3580, %v3579
        %v3616 = vpack.c.b16 %v3582, %v3581
        %v3617 = vpack.c.b16 %v3584, %v3583
        %v3618 = vpack.c.b16 %v3586, %v3585
        %v3619 = vpack.c.b16 %v3588, %v3587
        %v3620 = vpack.c.b16 %v3590, %v3589
        %v3621 = vpack.c.b16 %v3592, %v3591
        %v3622 = vpack.c.b16 %v3594, %v3593
        %v3623 = vpack.c.b16 %v3596, %v3595
        %v3624 = vpack.c.b16 %v3598, %v3597
        %v3625 = vpack.c.b16 %v3600, %v3599
        %v3626 = vpack.c.b16 %v3602, %v3601
        %3651 = vmatprep.subr.bf16.mxu0 0
        %3652 = vmatpush1.bf16.msra.mxu0 %v3603
        %3653 = vmatprep.subr.bf16.mxu0 0
        %3654 = vmatpush1.bf16.msra.mxu0 %v3604
        %3655 = vmatprep.subr.bf16.mxu0 0
        %3656 = vmatpush1.bf16.msra.mxu0 %v3605
        %3657 = vmatprep.subr.bf16.mxu0 0
        %3658 = vmatpush1.bf16.msra.mxu0 %v3606
        %3659 = vmatprep.subr.bf16.mxu0 0
        %3660 = vmatpush1.bf16.msra.mxu0 %v3607
        %3661 = vmatprep.subr.bf16.mxu0 0
        %3662 = vmatpush1.bf16.msra.mxu0 %v3608
        %3663 = vmatprep.subr.bf16.mxu0 0
        %3664 = vmatpush1.bf16.msra.mxu0 %v3609
        %3665 = vmatprep.subr.bf16.mxu0 0
        %3666 = vmatpush1.bf16.msra.mxu0 %v3610
        %3667 = vmatprep.subr.bf16.mxu0 0
        %3668 = vmatpush1.bf16.msra.mxu0 %v3611
        %3669 = vmatprep.subr.bf16.mxu0 0
        %3670 = vmatpush1.bf16.msra.mxu0 %v3612
        %3671 = vmatprep.subr.bf16.mxu0 0
        %3672 = vmatpush1.bf16.msra.mxu0 %v3613
        %3673 = vmatprep.subr.bf16.mxu0 0
        %3674 = vmatpush1.bf16.msra.mxu0 %v3614
        %3675 = vmatprep.subr.bf16.mxu0 0
        %3676 = vmatpush1.bf16.msra.mxu0 %v3615
        %3677 = vmatprep.subr.bf16.mxu0 0
        %3678 = vmatpush1.bf16.msra.mxu0 %v3616
        %3679 = vmatprep.subr.bf16.mxu0 0
        %3680 = vmatpush1.bf16.msra.mxu0 %v3617
        %3681 = vmatprep.subr.bf16.mxu0 0
        %3682 = vmatpush1.bf16.msra.mxu0 %v3618
        %3683 = vmatprep.mubr.bf16.mxu0 %v2947
        %3684 = vmatmul.mubr.bf16.gmra.mrb[0].mxu0 %v3189
        %v3685 = vpop.f32.mrb[0].mxu0
        %v3686 = vadd.f32 0.0, %v3685
        %v3687 = vpop.f32.mrb[0].mxu0
        %v3688 = vpop.f32.mrb[0].mxu0
        %v3689 = vadd.f32 0.0, %v3688
        %v3690 = vpop.f32.mrb[0].mxu0
        %3691 = vmatprep.mubr.bf16.mxu0 %v2948
        %3692 = vmatmul.mubr.bf16.gmra.mrb[0].mxu0 %v3193
        %v3693 = vpop.f32.mrb[0].mxu0
        %v3694 = vadd.f32 0.0, %v3693
        %v3695 = vpop.f32.mrb[0].mxu0
        %v3696 = vpop.f32.mrb[0].mxu0
        %v3697 = vadd.f32 0.0, %v3696
        %v3698 = vpop.f32.mrb[0].mxu0
        %3699 = vmatprep.mubr.bf16.mxu0 %v2949
        %3700 = vmatmul.mubr.bf16.gmra.mrb[0].mxu0 %v3197
        %v3701 = vpop.f32.mrb[0].mxu0
        %v3702 = vadd.f32 0.0, %v3701
        %v3703 = vpop.f32.mrb[0].mxu0
        %v3704 = vpop.f32.mrb[0].mxu0
        %v3705 = vadd.f32 0.0, %v3704
        %v3706 = vpop.f32.mrb[0].mxu0
        %3707 = vmatprep.mubr.bf16.mxu0 %v2950
        %3708 = vmatmul.mubr.bf16.gmra.mrb[0].mxu0 %v3201
        %v3709 = vpop.f32.mrb[0].mxu0
        %v3710 = vadd.f32 0.0, %v3709
        %v3711 = vpop.f32.mrb[0].mxu0
        %v3712 = vpop.f32.mrb[0].mxu0
        %v3713 = vadd.f32 0.0, %v3712
        %v3714 = vpop.f32.mrb[0].mxu0
        %3715 = vmatprep.mubr.bf16.mxu0 %v2951
        %3716 = vmatmul.mubr.bf16.gmra.mrb[0].mxu0 %v3205
        %v3717 = vpop.f32.mrb[0].mxu0
        %v3718 = vadd.f32 0.0, %v3717
        %v3719 = vpop.f32.mrb[0].mxu0
        %v3720 = vpop.f32.mrb[0].mxu0
        %v3721 = vadd.f32 0.0, %v3720
        %v3722 = vpop.f32.mrb[0].mxu0
        %3723 = vmatprep.mubr.bf16.mxu0 %v2952
        %3724 = vmatmul.mubr.bf16.gmra.mrb[0].mxu0 %v3209
        %v3725 = vpop.f32.mrb[0].mxu0
        %v3726 = vadd.f32 0.0, %v3725
        %v3727 = vpop.f32.mrb[0].mxu0
        %v3728 = vpop.f32.mrb[0].mxu0
        %v3729 = vadd.f32 0.0, %v3728
        %v3730 = vpop.f32.mrb[0].mxu0
        %3731 = vmatprep.mubr.bf16.mxu0 %v2953
        %3732 = vmatmul.mubr.bf16.gmra.mrb[0].mxu0 %v3213
        %v3733 = vpop.f32.mrb[0].mxu0
        %v3734 = vadd.f32 0.0, %v3733
        %v3735 = vpop.f32.mrb[0].mxu0
        %v3736 = vpop.f32.mrb[0].mxu0
        %v3737 = vadd.f32 0.0, %v3736
        %v3738 = vpop.f32.mrb[0].mxu0
        %3739 = vmatprep.mubr.bf16.mxu0 %v2954
        %3740 = vmatmul.mubr.bf16.gmra.mrb[0].mxu0 %v3217
        %v3741 = vpop.f32.mrb[0].mxu0
        %v3742 = vadd.f32 0.0, %v3741
        %v3743 = vpop.f32.mrb[0].mxu0
        %v3744 = vpop.f32.mrb[0].mxu0
        %v3745 = vadd.f32 0.0, %v3744
        %v3746 = vpop.f32.mrb[0].mxu0
        %3747 = vmatprep.mubr.bf16.mxu0 %v2955
        %3748 = vmatmul.mubr.bf16.gmra.mrb[0].mxu0 %v3221
        %v3749 = vpop.f32.mrb[0].mxu0
        %v3750 = vadd.f32 0.0, %v3749
        %v3751 = vpop.f32.mrb[0].mxu0
        %v3752 = vpop.f32.mrb[0].mxu0
        %v3753 = vadd.f32 0.0, %v3752
        %v3754 = vpop.f32.mrb[0].mxu0
        %3755 = vmatprep.mubr.bf16.mxu0 %v2956
        %3756 = vmatmul.mubr.bf16.gmra.mrb[0].mxu0 %v3225
        %v3757 = vpop.f32.mrb[0].mxu0
        %v3758 = vadd.f32 0.0, %v3757
        %v3759 = vpop.f32.mrb[0].mxu0
        %v3760 = vpop.f32.mrb[0].mxu0
        %v3761 = vadd.f32 0.0, %v3760
        %v3762 = vpop.f32.mrb[0].mxu0
        %3763 = vmatprep.mubr.bf16.mxu0 %v2957
        %3764 = vmatmul.mubr.bf16.gmra.mrb[0].mxu0 %v3229
        %v3765 = vpop.f32.mrb[0].mxu0
        %v3766 = vadd.f32 0.0, %v3765
        %v3767 = vpop.f32.mrb[0].mxu0
        %v3768 = vpop.f32.mrb[0].mxu0
        %v3769 = vadd.f32 0.0, %v3768
        %v3770 = vpop.f32.mrb[0].mxu0
        %3771 = vmatprep.mubr.bf16.mxu0 %v2958
        %3772 = vmatmul.mubr.bf16.gmra.mrb[0].mxu0 %v3233
        %v3773 = vpop.f32.mrb[0].mxu0
        %v3774 = vadd.f32 0.0, %v3773
        %v3775 = vpop.f32.mrb[0].mxu0
        %v3776 = vpop.f32.mrb[0].mxu0
        %v3777 = vadd.f32 0.0, %v3776
        %v3778 = vpop.f32.mrb[0].mxu0
        %3779 = vmatprep.mubr.bf16.mxu0 %v2959
        %3780 = vmatmul.mubr.bf16.gmra.mrb[0].mxu0 %v3237
        %v3781 = vpop.f32.mrb[0].mxu0
        %v3782 = vadd.f32 0.0, %v3781
        %v3783 = vpop.f32.mrb[0].mxu0
        %v3784 = vpop.f32.mrb[0].mxu0
        %v3785 = vadd.f32 0.0, %v3784
        %v3786 = vpop.f32.mrb[0].mxu0
        %3787 = vmatprep.mubr.bf16.mxu0 %v2960
        %3788 = vmatmul.mubr.bf16.gmra.mrb[0].mxu0 %v3241
        %v3789 = vpop.f32.mrb[0].mxu0
        %v3790 = vadd.f32 0.0, %v3789
        %v3791 = vpop.f32.mrb[0].mxu0
        %v3792 = vpop.f32.mrb[0].mxu0
        %v3793 = vadd.f32 0.0, %v3792
        %v3794 = vpop.f32.mrb[0].mxu0
        %3795 = vmatprep.mubr.bf16.mxu0 %v2961
        %3796 = vmatmul.mubr.bf16.gmra.mrb[0].mxu0 %v3245
        %v3797 = vpop.f32.mrb[0].mxu0
        %v3798 = vadd.f32 0.0, %v3797
        %v3799 = vpop.f32.mrb[0].mxu0
        %v3800 = vpop.f32.mrb[0].mxu0
        %v3801 = vadd.f32 0.0, %v3800
        %v3802 = vpop.f32.mrb[0].mxu0
        %3803 = vmatprep.mubr.bf16.mxu0 %v2962
        %3804 = vmatmul.mubr.bf16.gmra.mrb[0].mxu0 %v3249
        %v3805 = vpop.f32.mrb[0].mxu0
        %v3806 = vadd.f32 0.0, %v3805
        %v3807 = vpop.f32.mrb[0].mxu0
        %v3808 = vpop.f32.mrb[0].mxu0
        %v3809 = vadd.f32 0.0, %v3808
        %v3810 = vpop.f32.mrb[0].mxu0
        %3811 = vdwg.mxu0
        %3812 = vmatprep.subr.bf16.mxu0 0
        %3813 = vmatpush1.bf16.msra.mxu0 %v3619
        %3814 = vmatprep.subr.bf16.mxu0 0
        %3815 = vmatpush1.bf16.msra.mxu0 %v3620
        %3816 = vmatprep.subr.bf16.mxu0 0
        %3817 = vmatpush1.bf16.msra.mxu0 %v3621
        %3818 = vmatprep.subr.bf16.mxu0 0
        %3819 = vmatpush1.bf16.msra.mxu0 %v3622
        %3820 = vmatprep.subr.bf16.mxu0 0
        %3821 = vmatpush1.bf16.msra.mxu0 %v3623
        %3822 = vmatprep.subr.bf16.mxu0 0
        %3823 = vmatpush1.bf16.msra.mxu0 %v3624
        %3824 = vmatprep.subr.bf16.mxu0 0
        %3825 = vmatpush1.bf16.msra.mxu0 %v3625
        %3826 = vmatprep.subr.bf16.mxu0 0
        %3827 = vmatpush1.bf16.msra.mxu0 %v3626
        %3828 = vmatprep.subr.bf16.mxu0 0
        %3829 = vmatpush1.bf16.msra.mxu0 0
        %3830 = vmatprep.subr.bf16.mxu0 0
        %3831 = vmatpush1.bf16.msra.mxu0 0
        %3832 = vmatprep.subr.bf16.mxu0 0
        %3833 = vmatpush1.bf16.msra.mxu0 0
        %3834 = vmatprep.subr.bf16.mxu0 0
        %3835 = vmatpush1.bf16.msra.mxu0 0
        %3836 = vmatprep.subr.bf16.mxu0 0
        %3837 = vmatpush1.bf16.msra.mxu0 0
        %3838 = vmatprep.subr.bf16.mxu0 0
        %3839 = vmatpush1.bf16.msra.mxu0 0
        %3840 = vmatprep.subr.bf16.mxu0 0
        %3841 = vmatpush1.bf16.msra.mxu0 0
        %3842 = vmatprep.subr.bf16.mxu0 0
        %3843 = vmatpush1.bf16.msra.mxu0 0
        %3844 = vmatprep.mubr.bf16.mxu0 0
        %3845 = vmatmul.mubr.bf16.gmra.mrb[0].mxu0 %v3397
        %v3846 = vpop.f32.mrb[0].mxu0
        %v3847 = vadd.f32 %v3686, %v3846
        %v3848 = vpop.f32.mrb[0].mxu0
        %v3849 = vpop.f32.mrb[0].mxu0
        %v3850 = vadd.f32 %v3689, %v3849
        %v3851 = vpop.f32.mrb[0].mxu0
        %3852 = vmatprep.mubr.bf16.mxu0 0
        %3853 = vmatmul.mubr.bf16.gmra.mrb[0].mxu0 %v3401
        %v3854 = vpop.f32.mrb[0].mxu0
        %v3855 = vadd.f32 %v3694, %v3854
        %v3856 = vpop.f32.mrb[0].mxu0
        %v3857 = vpop.f32.mrb[0].mxu0
        %v3858 = vadd.f32 %v3697, %v3857
        %v3859 = vpop.f32.mrb[0].mxu0
        %3860 = vmatprep.mubr.bf16.mxu0 0
        %3861 = vmatmul.mubr.bf16.gmra.mrb[0].mxu0 %v3405
        %v3862 = vpop.f32.mrb[0].mxu0
        %v3863 = vadd.f32 %v3702, %v3862
        %v3864 = vpop.f32.mrb[0].mxu0
        %v3865 = vpop.f32.mrb[0].mxu0
        %v3866 = vadd.f32 %v3705, %v3865
        %v3867 = vpop.f32.mrb[0].mxu0
        %3868 = vmatprep.mubr.bf16.mxu0 0
        %3869 = vmatmul.mubr.bf16.gmra.mrb[0].mxu0 %v3409
        %v3870 = vpop.f32.mrb[0].mxu0
        %v3871 = vadd.f32 %v3710, %v3870
        %v3872 = vpop.f32.mrb[0].mxu0
        %v3873 = vpop.f32.mrb[0].mxu0
        %v3874 = vadd.f32 %v3713, %v3873
        %v3875 = vpop.f32.mrb[0].mxu0
        %3876 = vmatprep.mubr.bf16.mxu0 0
        %3877 = vmatmul.mubr.bf16.gmra.mrb[0].mxu0 %v3413
        %v3878 = vpop.f32.mrb[0].mxu0
        %v3879 = vadd.f32 %v3718, %v3878
        %v3880 = vpop.f32.mrb[0].mxu0
        %v3881 = vpop.f32.mrb[0].mxu0
        %v3882 = vadd.f32 %v3721, %v3881
        %v3883 = vpop.f32.mrb[0].mxu0
        %3884 = vmatprep.mubr.bf16.mxu0 0
        %3885 = vmatmul.mubr.bf16.gmra.mrb[0].mxu0 %v3417
        %v3886 = vpop.f32.mrb[0].mxu0
        %v3887 = vadd.f32 %v3726, %v3886
        %v3888 = vpop.f32.mrb[0].mxu0
        %v3889 = vpop.f32.mrb[0].mxu0
        %v3890 = vadd.f32 %v3729, %v3889
        %v3891 = vpop.f32.mrb[0].mxu0
        %3892 = vmatprep.mubr.bf16.mxu0 0
        %3893 = vmatmul.mubr.bf16.gmra.mrb[0].mxu0 %v3421
        %v3894 = vpop.f32.mrb[0].mxu0
        %v3895 = vadd.f32 %v3734, %v3894
        %v3896 = vpop.f32.mrb[0].mxu0
        %v3897 = vpop.f32.mrb[0].mxu0
        %v3898 = vadd.f32 %v3737, %v3897
        %v3899 = vpop.f32.mrb[0].mxu0
        %3900 = vmatprep.mubr.bf16.mxu0 0
        %3901 = vmatmul.mubr.bf16.gmra.mrb[0].mxu0 %v3425
        %v3902 = vpop.f32.mrb[0].mxu0
        %v3903 = vadd.f32 %v3742, %v3902
        %v3904 = vpop.f32.mrb[0].mxu0
        %v3905 = vpop.f32.mrb[0].mxu0
        %v3906 = vadd.f32 %v3745, %v3905
        %v3907 = vpop.f32.mrb[0].mxu0
        %3908 = vmatprep.mubr.bf16.mxu0 0
        %3909 = vmatmul.mubr.bf16.gmra.mrb[0].mxu0 %v3429
        %v3910 = vpop.f32.mrb[0].mxu0
        %v3911 = vadd.f32 %v3750, %v3910
        %v3912 = vpop.f32.mrb[0].mxu0
        %v3913 = vpop.f32.mrb[0].mxu0
        %v3914 = vadd.f32 %v3753, %v3913
        %v3915 = vpop.f32.mrb[0].mxu0
        %3916 = vmatprep.mubr.bf16.mxu0 0
        %3917 = vmatmul.mubr.bf16.gmra.mrb[0].mxu0 %v3433
        %v3918 = vpop.f32.mrb[0].mxu0
        %v3919 = vadd.f32 %v3758, %v3918
        %v3920 = vpop.f32.mrb[0].mxu0
        %v3921 = vpop.f32.mrb[0].mxu0
        %v3922 = vadd.f32 %v3761, %v3921
        %v3923 = vpop.f32.mrb[0].mxu0
        %3924 = vmatprep.mubr.bf16.mxu0 0
        %3925 = vmatmul.mubr.bf16.gmra.mrb[0].mxu0 %v3437
        %v3926 = vpop.f32.mrb[0].mxu0
        %v3927 = vadd.f32 %v3766, %v3926
        %v3928 = vpop.f32.mrb[0].mxu0
        %v3929 = vpop.f32.mrb[0].mxu0
        %v3930 = vadd.f32 %v3769, %v3929
        %v3931 = vpop.f32.mrb[0].mxu0
        %3932 = vmatprep.mubr.bf16.mxu0 0
        %3933 = vmatmul.mubr.bf16.gmra.mrb[0].mxu0 %v3441
        %v3934 = vpop.f32.mrb[0].mxu0
        %v3935 = vadd.f32 %v3774, %v3934
        %v3936 = vpop.f32.mrb[0].mxu0
        %v3937 = vpop.f32.mrb[0].mxu0
        %v3938 = vadd.f32 %v3777, %v3937
        %v3939 = vpop.f32.mrb[0].mxu0
        %3940 = vmatprep.mubr.bf16.mxu0 0
        %3941 = vmatmul.mubr.bf16.gmra.mrb[0].mxu0 %v3445
        %v3942 = vpop.f32.mrb[0].mxu0
        %v3943 = vadd.f32 %v3782, %v3942
        %v3944 = vpop.f32.mrb[0].mxu0
        %v3945 = vpop.f32.mrb[0].mxu0
        %v3946 = vadd.f32 %v3785, %v3945
        %v3947 = vpop.f32.mrb[0].mxu0
        %3948 = vmatprep.mubr.bf16.mxu0 0
        %3949 = vmatmul.mubr.bf16.gmra.mrb[0].mxu0 %v3449
        %v3950 = vpop.f32.mrb[0].mxu0
        %v3951 = vadd.f32 %v3790, %v3950
        %v3952 = vpop.f32.mrb[0].mxu0
        %v3953 = vpop.f32.mrb[0].mxu0
        %v3954 = vadd.f32 %v3793, %v3953
        %v3955 = vpop.f32.mrb[0].mxu0
        %3956 = vmatprep.mubr.bf16.mxu0 0
        %3957 = vmatmul.mubr.bf16.gmra.mrb[0].mxu0 %v3453
        %v3958 = vpop.f32.mrb[0].mxu0
        %v3959 = vadd.f32 %v3798, %v3958
        %v3960 = vpop.f32.mrb[0].mxu0
        %v3961 = vpop.f32.mrb[0].mxu0
        %v3962 = vadd.f32 %v3801, %v3961
        %v3963 = vpop.f32.mrb[0].mxu0
        %3964 = vmatprep.mubr.bf16.mxu0 0
        %3965 = vmatmul.mubr.bf16.gmra.mrb[0].mxu0 %v3457
        %v3966 = vpop.f32.mrb[0].mxu0
        %v3967 = vadd.f32 %v3806, %v3966
        %v3968 = vpop.f32.mrb[0].mxu0
        %v3969 = vpop.f32.mrb[0].mxu0
        %v3970 = vadd.f32 %v3809, %v3969
        %v3971 = vpop.f32.mrb[0].mxu0
        %3972 = vdwg.mxu0
        %v3973 = vadd.f32 %v2818, %v3847
        %v3974 = vadd.f32 %v2821, %v3850
        %v3975 = vadd.f32 %v2826, %v3855
        %v3976 = vadd.f32 %v2829, %v3858
        %v3977 = vadd.f32 %v2834, %v3863
        %v3978 = vadd.f32 %v2837, %v3866
        %v3979 = vadd.f32 %v2842, %v3871
        %v3980 = vadd.f32 %v2845, %v3874
        %v3981 = vadd.f32 %v2850, %v3879
        %v3982 = vadd.f32 %v2853, %v3882
        %v3983 = vadd.f32 %v2858, %v3887
        %v3984 = vadd.f32 %v2861, %v3890
        %v3985 = vadd.f32 %v2866, %v3895
        %v3986 = vadd.f32 %v2869, %v3898
        %v3987 = vadd.f32 %v2874, %v3903
        %v3988 = vadd.f32 %v2877, %v3906
        %v3989 = vadd.f32 %v2882, %v3911
        %v3990 = vadd.f32 %v2885, %v3914
        %v3991 = vadd.f32 %v2890, %v3919
        %v3992 = vadd.f32 %v2893, %v3922
        %v3993 = vadd.f32 %v2898, %v3927
        %v3994 = vadd.f32 %v2901, %v3930
        %v3995 = vadd.f32 %v2906, %v3935
        %v3996 = vadd.f32 %v2909, %v3938
        %v3997 = vadd.f32 %v2914, %v3943
        %v3998 = vadd.f32 %v2917, %v3946
        %v3999 = vadd.f32 %v2922, %v3951
        %v4000 = vadd.f32 %v2925, %v3954
        %v4001 = vadd.f32 %v2930, %v3959
        %v4002 = vadd.f32 %v2933, %v3962
        %v4003 = vadd.f32 %v2938, %v3967
        %v4004 = vadd.f32 %v2941, %v3970
        %v4005 = vld [vmem:[%s2] sm:$0x1]
        %v4007 = vlaneseq
        %v4008 = vshrl.u32 %v4007, 7
        %v4009 = vsub.s32 0, %v4008
        %v4010 = vrot.slane %v4005, %v4009
        %v4012 = vadd.f32 %v3973, %v4010
        %v4013 = vadd.f32 %v3974, %v4010
        %v4014 = vadd.f32 %v3975, %v4010
        %v4015 = vadd.f32 %v3976, %v4010
        %v4016 = vadd.f32 %v3977, %v4010
        %v4017 = vadd.f32 %v3978, %v4010
        %v4018 = vadd.f32 %v3979, %v4010
        %v4019 = vadd.f32 %v3980, %v4010
        %v4020 = vadd.f32 %v3981, %v4010
        %v4021 = vadd.f32 %v3982, %v4010
        %v4022 = vadd.f32 %v3983, %v4010
        %v4023 = vadd.f32 %v3984, %v4010
        %v4024 = vadd.f32 %v3985, %v4010
        %v4025 = vadd.f32 %v3986, %v4010
        %v4026 = vadd.f32 %v3987, %v4010
        %v4027 = vadd.f32 %v3988, %v4010
        %v4028 = vadd.f32 %v3989, %v4010
        %v4029 = vadd.f32 %v3990, %v4010
        %v4030 = vadd.f32 %v3991, %v4010
        %v4031 = vadd.f32 %v3992, %v4010
        %v4032 = vadd.f32 %v3993, %v4010
        %v4033 = vadd.f32 %v3994, %v4010
        %v4034 = vadd.f32 %v3995, %v4010
        %v4035 = vadd.f32 %v3996, %v4010
        %v4036 = vadd.f32 %v3997, %v4010
        %v4037 = vadd.f32 %v3998, %v4010
        %v4038 = vadd.f32 %v3999, %v4010
        %v4039 = vadd.f32 %v4000, %v4010
        %v4040 = vadd.f32 %v4001, %v4010
        %v4041 = vadd.f32 %v4002, %v4010
        %v4042 = vadd.f32 %v4003, %v4010
        %v4043 = vadd.f32 %v4004, %v4010
        %vm4044 = vcmp.ge.f32.partialorder %v4012, 0.0
        %vm4045 = vcmp.ge.f32.partialorder %v4013, 0.0
        %vm4046 = vcmp.ge.f32.partialorder %v4014, 0.0
        %vm4047 = vcmp.ge.f32.partialorder %v4015, 0.0
        %vm4048 = vcmp.ge.f32.partialorder %v4016, 0.0
        %vm4049 = vcmp.ge.f32.partialorder %v4017, 0.0
        %vm4050 = vcmp.ge.f32.partialorder %v4018, 0.0
        %vm4051 = vcmp.ge.f32.partialorder %v4019, 0.0
        %vm4052 = vcmp.ge.f32.partialorder %v4020, 0.0
        %vm4053 = vcmp.ge.f32.partialorder %v4021, 0.0
        %vm4054 = vcmp.ge.f32.partialorder %v4022, 0.0
        %vm4055 = vcmp.ge.f32.partialorder %v4023, 0.0
        %vm4056 = vcmp.ge.f32.partialorder %v4024, 0.0
        %vm4057 = vcmp.ge.f32.partialorder %v4025, 0.0
        %vm4058 = vcmp.ge.f32.partialorder %v4026, 0.0
        %vm4059 = vcmp.ge.f32.partialorder %v4027, 0.0
        %vm4060 = vcmp.ge.f32.partialorder %v4028, 0.0
        %vm4061 = vcmp.ge.f32.partialorder %v4029, 0.0
        %vm4062 = vcmp.ge.f32.partialorder %v4030, 0.0
        %vm4063 = vcmp.ge.f32.partialorder %v4031, 0.0
        %vm4064 = vcmp.ge.f32.partialorder %v4032, 0.0
        %vm4065 = vcmp.ge.f32.partialorder %v4033, 0.0
        %vm4066 = vcmp.ge.f32.partialorder %v4034, 0.0
        %vm4067 = vcmp.ge.f32.partialorder %v4035, 0.0
        %vm4068 = vcmp.ge.f32.partialorder %v4036, 0.0
        %vm4069 = vcmp.ge.f32.partialorder %v4037, 0.0
        %vm4070 = vcmp.ge.f32.partialorder %v4038, 0.0
        %vm4071 = vcmp.ge.f32.partialorder %v4039, 0.0
        %vm4072 = vcmp.ge.f32.partialorder %v4040, 0.0
        %vm4073 = vcmp.ge.f32.partialorder %v4041, 0.0
        %vm4074 = vcmp.ge.f32.partialorder %v4042, 0.0
        %vm4075 = vcmp.ge.f32.partialorder %v4043, 0.0
        %v4076 = vstv %s292
        %v4077 = vmul.f32 %v4076, %v4012
        %v4078 = vmul.f32 %v4076, %v4013
        %v4079 = vmul.f32 %v4076, %v4014
        %v4080 = vmul.f32 %v4076, %v4015
        %v4081 = vmul.f32 %v4076, %v4016
        %v4082 = vmul.f32 %v4076, %v4017
        %v4083 = vmul.f32 %v4076, %v4018
        %v4084 = vmul.f32 %v4076, %v4019
        %v4085 = vmul.f32 %v4076, %v4020
        %v4086 = vmul.f32 %v4076, %v4021
        %v4087 = vmul.f32 %v4076, %v4022
        %v4088 = vmul.f32 %v4076, %v4023
        %v4089 = vmul.f32 %v4076, %v4024
        %v4090 = vmul.f32 %v4076, %v4025
        %v4091 = vmul.f32 %v4076, %v4026
        %v4092 = vmul.f32 %v4076, %v4027
        %v4093 = vmul.f32 %v4076, %v4028
        %v4094 = vmul.f32 %v4076, %v4029
        %v4095 = vmul.f32 %v4076, %v4030
        %v4096 = vmul.f32 %v4076, %v4031
        %v4097 = vmul.f32 %v4076, %v4032
        %v4098 = vmul.f32 %v4076, %v4033
        %v4099 = vmul.f32 %v4076, %v4034
        %v4100 = vmul.f32 %v4076, %v4035
        %v4101 = vmul.f32 %v4076, %v4036
        %v4102 = vmul.f32 %v4076, %v4037
        %v4103 = vmul.f32 %v4076, %v4038
        %v4104 = vmul.f32 %v4076, %v4039
        %v4105 = vmul.f32 %v4076, %v4040
        %v4106 = vmul.f32 %v4076, %v4041
        %v4107 = vmul.f32 %v4076, %v4042
        %v4108 = vmul.f32 %v4076, %v4043
        %v4109 = vsel %vm4044, %v4012, %v4077
        %v4110 = vsel %vm4045, %v4013, %v4078
        %v4111 = vsel %vm4046, %v4014, %v4079
        %v4112 = vsel %vm4047, %v4015, %v4080
        %v4113 = vsel %vm4048, %v4016, %v4081
        %v4114 = vsel %vm4049, %v4017, %v4082
        %v4115 = vsel %vm4050, %v4018, %v4083
        %v4116 = vsel %vm4051, %v4019, %v4084
        %v4117 = vsel %vm4052, %v4020, %v4085
        %v4118 = vsel %vm4053, %v4021, %v4086
        %v4119 = vsel %vm4054, %v4022, %v4087
        %v4120 = vsel %vm4055, %v4023, %v4088
        %v4121 = vsel %vm4056, %v4024, %v4089
        %v4122 = vsel %vm4057, %v4025, %v4090
        %v4123 = vsel %vm4058, %v4026, %v4091
        %v4124 = vsel %vm4059, %v4027, %v4092
        %v4125 = vsel %vm4060, %v4028, %v4093
        %v4126 = vsel %vm4061, %v4029, %v4094
        %v4127 = vsel %vm4062, %v4030, %v4095
        %v4128 = vsel %vm4063, %v4031, %v4096
        %v4129 = vsel %vm4064, %v4032, %v4097
        %v4130 = vsel %vm4065, %v4033, %v4098
        %v4131 = vsel %vm4066, %v4034, %v4099
        %v4132 = vsel %vm4067, %v4035, %v4100
        %v4133 = vsel %vm4068, %v4036, %v4101
        %v4134 = vsel %vm4069, %v4037, %v4102
        %v4135 = vsel %vm4070, %v4038, %v4103
        %v4136 = vsel %vm4071, %v4039, %v4104
        %v4137 = vsel %vm4072, %v4040, %v4105
        %v4138 = vsel %vm4073, %v4041, %v4106
        %v4139 = vsel %vm4074, %v4042, %v4107
        %v4140 = vsel %vm4075, %v4043, %v4108
        %v4141 = vpack.c.bf16 %v4110, %v4109
        %v4142 = vpack.c.bf16 %v4112, %v4111
        %v4143 = vpack.c.bf16 %v4114, %v4113
        %v4144 = vpack.c.bf16 %v4116, %v4115
        %v4145 = vpack.c.bf16 %v4118, %v4117
        %v4146 = vpack.c.bf16 %v4120, %v4119
        %v4147 = vpack.c.bf16 %v4122, %v4121
        %v4148 = vpack.c.bf16 %v4124, %v4123
        %v4149 = vpack.c.bf16 %v4126, %v4125
        %v4150 = vpack.c.bf16 %v4128, %v4127
        %v4151 = vpack.c.bf16 %v4130, %v4129
        %v4152 = vpack.c.bf16 %v4132, %v4131
        %v4153 = vpack.c.bf16 %v4134, %v4133
        %v4154 = vpack.c.bf16 %v4136, %v4135
        %v4155 = vpack.c.bf16 %v4138, %v4137
        %v4156 = vpack.c.bf16 %v4140, %v4139
        %v4157 = vld [vmem:[%s3] sm:$0xf]
        %v4158 = vld [vmem:[%s3 + $0x4] sm:$0xf]
        %v4159 = vld [vmem:[%s3 + $0x8] sm:$0xf]
        %v4160 = vld [vmem:[%s3 + $0xc] sm:$0xf]
        %v4161 = vld [vmem:[%s3 + $0x10] sm:$0xf]
        %v4162 = vld [vmem:[%s3 + $0x14] sm:$0xf]
        %v4163 = vld [vmem:[%s3 + $0x18] sm:$0xf]
        %v4164 = vld [vmem:[%s3 + $0x1c] sm:$0xf]
        %v4165 = vld [vmem:[%s3 + $0x20] sm:$0xf]
        %v4166 = vld [vmem:[%s3 + $0x24] sm:$0xf]
        %v4167 = vld [vmem:[%s3 + $0x28] sm:$0xf]
        %v4168 = vld [vmem:[%s3 + $0x2c] sm:$0xf]
        %v4169 = vld [vmem:[%s3 + $0x30] sm:$0xf]
        %v4170 = vld [vmem:[%s3 + $0x34] sm:$0xf]
        %v4171 = vld [vmem:[%s3 + $0x38] sm:$0xf]
        %v4172 = vld [vmem:[%s3 + $0x3c] sm:$0xf]
        %v4173 = vld [vmem:[%s4] sm:$0x1]
        %v4175 = vlaneseq
        %v4176 = vshrl.u32 %v4175, 7
        %v4177 = vsub.s32 0, %v4176
        %v4178 = vrot.slane %v4173, %v4177
        %v4196 = vunpack.c.l.b16 %v4157
        %v4197 = vunpack.c.l.b16 %v4158
        %v4198 = vunpack.c.l.b16 %v4159
        %v4199 = vunpack.c.l.b16 %v4160
        %v4200 = vunpack.c.l.b16 %v4161
        %v4201 = vunpack.c.l.b16 %v4162
        %v4202 = vunpack.c.l.b16 %v4163
        %v4203 = vunpack.c.l.b16 %v4164
        %v4204 = vunpack.c.l.b16 %v4165
        %v4205 = vunpack.c.l.b16 %v4166
        %v4206 = vunpack.c.l.b16 %v4167
        %v4207 = vunpack.c.l.b16 %v4168
        %v4208 = vunpack.c.l.b16 %v4169
        %v4209 = vunpack.c.l.b16 %v4170
        %v4210 = vunpack.c.l.b16 %v4171
        %v4211 = vunpack.c.l.b16 %v4172
        %v4212 = vpack.c.b16 %v4197, %v4196
        %v4213 = vpack.c.b16 %v4199, %v4198
        %v4214 = vpack.c.b16 %v4201, %v4200
        %v4215 = vpack.c.b16 %v4203, %v4202
        %v4216 = vpack.c.b16 %v4205, %v4204
        %v4217 = vpack.c.b16 %v4207, %v4206
        %v4218 = vpack.c.b16 %v4209, %v4208
        %v4219 = vpack.c.b16 %v4211, %v4210
        %4228 = vmatprep.subr.bf16.mxu0 0
        %4229 = vmatpush1.bf16.msra.mxu0 %v4212
        %4230 = vmatprep.subr.bf16.mxu0 0
        %4231 = vmatpush1.bf16.msra.mxu0 %v4213
        %4232 = vmatprep.subr.bf16.mxu0 0
        %4233 = vmatpush1.bf16.msra.mxu0 %v4214
        %4234 = vmatprep.subr.bf16.mxu0 0
        %4235 = vmatpush1.bf16.msra.mxu0 %v4215
        %4236 = vmatprep.subr.bf16.mxu0 0
        %4237 = vmatpush1.bf16.msra.mxu0 %v4216
        %4238 = vmatprep.subr.bf16.mxu0 0
        %4239 = vmatpush1.bf16.msra.mxu0 %v4217
        %4240 = vmatprep.subr.bf16.mxu0 0
        %4241 = vmatpush1.bf16.msra.mxu0 %v4218
        %4242 = vmatprep.subr.bf16.mxu0 0
        %4243 = vmatpush1.bf16.msra.mxu0 %v4219
        %4244 = vmatprep.subr.bf16.mxu0 0
        %4245 = vmatpush1.bf16.msra.mxu0 0
        %4246 = vmatprep.subr.bf16.mxu0 0
        %4247 = vmatpush1.bf16.msra.mxu0 0
        %4248 = vmatprep.subr.bf16.mxu0 0
        %4249 = vmatpush1.bf16.msra.mxu0 0
        %4250 = vmatprep.subr.bf16.mxu0 0
        %4251 = vmatpush1.bf16.msra.mxu0 0
        %4252 = vmatprep.subr.bf16.mxu0 0
        %4253 = vmatpush1.bf16.msra.mxu0 0
        %4254 = vmatprep.subr.bf16.mxu0 0
        %4255 = vmatpush1.bf16.msra.mxu0 0
        %4256 = vmatprep.subr.bf16.mxu0 0
        %4257 = vmatpush1.bf16.msra.mxu0 0
        %4258 = vmatprep.subr.bf16.mxu0 0
        %4259 = vmatpush1.bf16.msra.mxu0 0
        %4260 = vmatprep.mubr.bf16.mxu0 0
        %4261 = vmatmul.mubr.bf16.gmra.mrb[0].mxu0 %v4141
        %v4262 = vpop.f32.mrb[0].mxu0
        %v4263 = vadd.f32 %v4178, %v4262
        %v4264 = vpop.f32.mrb[0].mxu0
        %v4265 = vpop.f32.mrb[0].mxu0
        %v4266 = vadd.f32 %v4178, %v4265
        %v4267 = vpop.f32.mrb[0].mxu0
        %4268 = vmatprep.mubr.bf16.mxu0 0
        %4269 = vmatmul.mubr.bf16.gmra.mrb[0].mxu0 %v4142
        %v4270 = vpop.f32.mrb[0].mxu0
        %v4271 = vadd.f32 %v4178, %v4270
        %v4272 = vpop.f32.mrb[0].mxu0
        %v4273 = vpop.f32.mrb[0].mxu0
        %v4274 = vadd.f32 %v4178, %v4273
        %v4275 = vpop.f32.mrb[0].mxu0
        %4276 = vmatprep.mubr.bf16.mxu0 0
        %4277 = vmatmul.mubr.bf16.gmra.mrb[0].mxu0 %v4143
        %v4278 = vpop.f32.mrb[0].mxu0
        %v4279 = vadd.f32 %v4178, %v4278
        %v4280 = vpop.f32.mrb[0].mxu0
        %v4281 = vpop.f32.mrb[0].mxu0
        %v4282 = vadd.f32 %v4178, %v4281
        %v4283 = vpop.f32.mrb[0].mxu0
        %4284 = vmatprep.mubr.bf16.mxu0 0
        %4285 = vmatmul.mubr.bf16.gmra.mrb[0].mxu0 %v4144
        %v4286 = vpop.f32.mrb[0].mxu0
        %v4287 = vadd.f32 %v4178, %v4286
        %v4288 = vpop.f32.mrb[0].mxu0
        %v4289 = vpop.f32.mrb[0].mxu0
        %v4290 = vadd.f32 %v4178, %v4289
        %v4291 = vpop.f32.mrb[0].mxu0
        %4292 = vmatprep.mubr.bf16.mxu0 0
        %4293 = vmatmul.mubr.bf16.gmra.mrb[0].mxu0 %v4145
        %v4294 = vpop.f32.mrb[0].mxu0
        %v4295 = vadd.f32 %v4178, %v4294
        %v4296 = vpop.f32.mrb[0].mxu0
        %v4297 = vpop.f32.mrb[0].mxu0
        %v4298 = vadd.f32 %v4178, %v4297
        %v4299 = vpop.f32.mrb[0].mxu0
        %4300 = vmatprep.mubr.bf16.mxu0 0
        %4301 = vmatmul.mubr.bf16.gmra.mrb[0].mxu0 %v4146
        %v4302 = vpop.f32.mrb[0].mxu0
        %v4303 = vadd.f32 %v4178, %v4302
        %v4304 = vpop.f32.mrb[0].mxu0
        %v4305 = vpop.f32.mrb[0].mxu0
        %v4306 = vadd.f32 %v4178, %v4305
        %v4307 = vpop.f32.mrb[0].mxu0
        %4308 = vmatprep.mubr.bf16.mxu0 0
        %4309 = vmatmul.mubr.bf16.gmra.mrb[0].mxu0 %v4147
        %v4310 = vpop.f32.mrb[0].mxu0
        %v4311 = vadd.f32 %v4178, %v4310
        %v4312 = vpop.f32.mrb[0].mxu0
        %v4313 = vpop.f32.mrb[0].mxu0
        %v4314 = vadd.f32 %v4178, %v4313
        %v4315 = vpop.f32.mrb[0].mxu0
        %4316 = vmatprep.mubr.bf16.mxu0 0
        %4317 = vmatmul.mubr.bf16.gmra.mrb[0].mxu0 %v4148
        %v4318 = vpop.f32.mrb[0].mxu0
        %v4319 = vadd.f32 %v4178, %v4318
        %v4320 = vpop.f32.mrb[0].mxu0
        %v4321 = vpop.f32.mrb[0].mxu0
        %v4322 = vadd.f32 %v4178, %v4321
        %v4323 = vpop.f32.mrb[0].mxu0
        %4324 = vmatprep.mubr.bf16.mxu0 0
        %4325 = vmatmul.mubr.bf16.gmra.mrb[0].mxu0 %v4149
        %v4326 = vpop.f32.mrb[0].mxu0
        %v4327 = vadd.f32 %v4178, %v4326
        %v4328 = vpop.f32.mrb[0].mxu0
        %v4329 = vpop.f32.mrb[0].mxu0
        %v4330 = vadd.f32 %v4178, %v4329
        %v4331 = vpop.f32.mrb[0].mxu0
        %4332 = vmatprep.mubr.bf16.mxu0 0
        %4333 = vmatmul.mubr.bf16.gmra.mrb[0].mxu0 %v4150
        %v4334 = vpop.f32.mrb[0].mxu0
        %v4335 = vadd.f32 %v4178, %v4334
        %v4336 = vpop.f32.mrb[0].mxu0
        %v4337 = vpop.f32.mrb[0].mxu0
        %v4338 = vadd.f32 %v4178, %v4337
        %v4339 = vpop.f32.mrb[0].mxu0
        %4340 = vmatprep.mubr.bf16.mxu0 0
        %4341 = vmatmul.mubr.bf16.gmra.mrb[0].mxu0 %v4151
        %v4342 = vpop.f32.mrb[0].mxu0
        %v4343 = vadd.f32 %v4178, %v4342
        %v4344 = vpop.f32.mrb[0].mxu0
        %v4345 = vpop.f32.mrb[0].mxu0
        %v4346 = vadd.f32 %v4178, %v4345
        %v4347 = vpop.f32.mrb[0].mxu0
        %4348 = vmatprep.mubr.bf16.mxu0 0
        %4349 = vmatmul.mubr.bf16.gmra.mrb[0].mxu0 %v4152
        %v4350 = vpop.f32.mrb[0].mxu0
        %v4351 = vadd.f32 %v4178, %v4350
        %v4352 = vpop.f32.mrb[0].mxu0
        %v4353 = vpop.f32.mrb[0].mxu0
        %v4354 = vadd.f32 %v4178, %v4353
        %v4355 = vpop.f32.mrb[0].mxu0
        %4356 = vmatprep.mubr.bf16.mxu0 0
        %4357 = vmatmul.mubr.bf16.gmra.mrb[0].mxu0 %v4153
        %v4358 = vpop.f32.mrb[0].mxu0
        %v4359 = vadd.f32 %v4178, %v4358
        %v4360 = vpop.f32.mrb[0].mxu0
        %v4361 = vpop.f32.mrb[0].mxu0
        %v4362 = vadd.f32 %v4178, %v4361
        %v4363 = vpop.f32.mrb[0].mxu0
        %4364 = vmatprep.mubr.bf16.mxu0 0
        %4365 = vmatmul.mubr.bf16.gmra.mrb[0].mxu0 %v4154
        %v4366 = vpop.f32.mrb[0].mxu0
        %v4367 = vadd.f32 %v4178, %v4366
        %v4368 = vpop.f32.mrb[0].mxu0
        %v4369 = vpop.f32.mrb[0].mxu0
        %v4370 = vadd.f32 %v4178, %v4369
        %v4371 = vpop.f32.mrb[0].mxu0
        %4372 = vmatprep.mubr.bf16.mxu0 0
        %4373 = vmatmul.mubr.bf16.gmra.mrb[0].mxu0 %v4155
        %v4374 = vpop.f32.mrb[0].mxu0
        %v4375 = vadd.f32 %v4178, %v4374
        %v4376 = vpop.f32.mrb[0].mxu0
        %v4377 = vpop.f32.mrb[0].mxu0
        %v4378 = vadd.f32 %v4178, %v4377
        %v4379 = vpop.f32.mrb[0].mxu0
        %4380 = vmatprep.mubr.bf16.mxu0 0
        %4381 = vmatmul.mubr.bf16.gmra.mrb[0].mxu0 %v4156
        %v4382 = vpop.f32.mrb[0].mxu0
        %v4383 = vadd.f32 %v4178, %v4382
        %v4384 = vpop.f32.mrb[0].mxu0
        %v4385 = vpop.f32.mrb[0].mxu0
        %v4386 = vadd.f32 %v4178, %v4385
        %v4387 = vpop.f32.mrb[0].mxu0
        %4388 = vdwg.mxu0
        %vm4389 = vcmp.ge.f32.partialorder %v4263, 0.0
        %vm4390 = vcmp.ge.f32.partialorder %v4266, 0.0
        %vm4391 = vcmp.ge.f32.partialorder %v4271, 0.0
        %vm4392 = vcmp.ge.f32.partialorder %v4274, 0.0
        %vm4393 = vcmp.ge.f32.partialorder %v4279, 0.0
        %vm4394 = vcmp.ge.f32.partialorder %v4282, 0.0
        %vm4395 = vcmp.ge.f32.partialorder %v4287, 0.0
        %vm4396 = vcmp.ge.f32.partialorder %v4290, 0.0
        %vm4397 = vcmp.ge.f32.partialorder %v4295, 0.0
        %vm4398 = vcmp.ge.f32.partialorder %v4298, 0.0
        %vm4399 = vcmp.ge.f32.partialorder %v4303, 0.0
        %vm4400 = vcmp.ge.f32.partialorder %v4306, 0.0
        %vm4401 = vcmp.ge.f32.partialorder %v4311, 0.0
        %vm4402 = vcmp.ge.f32.partialorder %v4314, 0.0
        %vm4403 = vcmp.ge.f32.partialorder %v4319, 0.0
        %vm4404 = vcmp.ge.f32.partialorder %v4322, 0.0
        %vm4405 = vcmp.ge.f32.partialorder %v4327, 0.0
        %vm4406 = vcmp.ge.f32.partialorder %v4330, 0.0
        %vm4407 = vcmp.ge.f32.partialorder %v4335, 0.0
        %vm4408 = vcmp.ge.f32.partialorder %v4338, 0.0
        %vm4409 = vcmp.ge.f32.partialorder %v4343, 0.0
        %vm4410 = vcmp.ge.f32.partialorder %v4346, 0.0
        %vm4411 = vcmp.ge.f32.partialorder %v4351, 0.0
        %vm4412 = vcmp.ge.f32.partialorder %v4354, 0.0
        %vm4413 = vcmp.ge.f32.partialorder %v4359, 0.0
        %vm4414 = vcmp.ge.f32.partialorder %v4362, 0.0
        %vm4415 = vcmp.ge.f32.partialorder %v4367, 0.0
        %vm4416 = vcmp.ge.f32.partialorder %v4370, 0.0
        %vm4417 = vcmp.ge.f32.partialorder %v4375, 0.0
        %vm4418 = vcmp.ge.f32.partialorder %v4378, 0.0
        %vm4419 = vcmp.ge.f32.partialorder %v4383, 0.0
        %vm4420 = vcmp.ge.f32.partialorder %v4386, 0.0
        %v4421 = vstv %s293
        %v4422 = vmul.f32 %v4421, %v4263
        %v4423 = vmul.f32 %v4421, %v4266
        %v4424 = vmul.f32 %v4421, %v4271
        %v4425 = vmul.f32 %v4421, %v4274
        %v4426 = vmul.f32 %v4421, %v4279
        %v4427 = vmul.f32 %v4421, %v4282
        %v4428 = vmul.f32 %v4421, %v4287
        %v4429 = vmul.f32 %v4421, %v4290
        %v4430 = vmul.f32 %v4421, %v4295
        %v4431 = vmul.f32 %v4421, %v4298
        %v4432 = vmul.f32 %v4421, %v4303
        %v4433 = vmul.f32 %v4421, %v4306
        %v4434 = vmul.f32 %v4421, %v4311
        %v4435 = vmul.f32 %v4421, %v4314
        %v4436 = vmul.f32 %v4421, %v4319
        %v4437 = vmul.f32 %v4421, %v4322
        %v4438 = vmul.f32 %v4421, %v4327
        %v4439 = vmul.f32 %v4421, %v4330
        %v4440 = vmul.f32 %v4421, %v4335
        %v4441 = vmul.f32 %v4421, %v4338
        %v4442 = vmul.f32 %v4421, %v4343
        %v4443 = vmul.f32 %v4421, %v4346
        %v4444 = vmul.f32 %v4421, %v4351
        %v4445 = vmul.f32 %v4421, %v4354
        %v4446 = vmul.f32 %v4421, %v4359
        %v4447 = vmul.f32 %v4421, %v4362
        %v4448 = vmul.f32 %v4421, %v4367
        %v4449 = vmul.f32 %v4421, %v4370
        %v4450 = vmul.f32 %v4421, %v4375
        %v4451 = vmul.f32 %v4421, %v4378
        %v4452 = vmul.f32 %v4421, %v4383
        %v4453 = vmul.f32 %v4421, %v4386
        %v4454 = vsel %vm4389, %v4263, %v4422
        %v4455 = vsel %vm4390, %v4266, %v4423
        %v4456 = vsel %vm4391, %v4271, %v4424
        %v4457 = vsel %vm4392, %v4274, %v4425
        %v4458 = vsel %vm4393, %v4279, %v4426
        %v4459 = vsel %vm4394, %v4282, %v4427
        %v4460 = vsel %vm4395, %v4287, %v4428
        %v4461 = vsel %vm4396, %v4290, %v4429
        %v4462 = vsel %vm4397, %v4295, %v4430
        %v4463 = vsel %vm4398, %v4298, %v4431
        %v4464 = vsel %vm4399, %v4303, %v4432
        %v4465 = vsel %vm4400, %v4306, %v4433
        %v4466 = vsel %vm4401, %v4311, %v4434
        %v4467 = vsel %vm4402, %v4314, %v4435
        %v4468 = vsel %vm4403, %v4319, %v4436
        %v4469 = vsel %vm4404, %v4322, %v4437
        %v4470 = vsel %vm4405, %v4327, %v4438
        %v4471 = vsel %vm4406, %v4330, %v4439
        %v4472 = vsel %vm4407, %v4335, %v4440
        %v4473 = vsel %vm4408, %v4338, %v4441
        %v4474 = vsel %vm4409, %v4343, %v4442
        %v4475 = vsel %vm4410, %v4346, %v4443
        %v4476 = vsel %vm4411, %v4351, %v4444
        %v4477 = vsel %vm4412, %v4354, %v4445
        %v4478 = vsel %vm4413, %v4359, %v4446
        %v4479 = vsel %vm4414, %v4362, %v4447
        %v4480 = vsel %vm4415, %v4367, %v4448
        %v4481 = vsel %vm4416, %v4370, %v4449
        %v4482 = vsel %vm4417, %v4375, %v4450
        %v4483 = vsel %vm4418, %v4378, %v4451
        %v4484 = vsel %vm4419, %v4383, %v4452
        %v4485 = vsel %vm4420, %v4386, %v4453
        %4486 = vst [vmem:[%s289] sm:$0xff] %v4454
        %4487 = vst [vmem:[%s289 + $0x8] sm:$0xff] %v4455
        %4488 = vst [vmem:[%s289 + $0x10] sm:$0xff] %v4456
        %4489 = vst [vmem:[%s289 + $0x18] sm:$0xff] %v4457
        %4490 = vst [vmem:[%s289 + $0x20] sm:$0xff] %v4458
        %4491 = vst [vmem:[%s289 + $0x28] sm:$0xff] %v4459
        %4492 = vst [vmem:[%s289 + $0x30] sm:$0xff] %v4460
        %4493 = vst [vmem:[%s289 + $0x38] sm:$0xff] %v4461
        %4494 = vst [vmem:[%s289 + $0x40] sm:$0xff] %v4462
        %4495 = vst [vmem:[%s289 + $0x48] sm:$0xff] %v4463
        %4496 = vst [vmem:[%s289 + $0x50] sm:$0xff] %v4464
        %4497 = vst [vmem:[%s289 + $0x58] sm:$0xff] %v4465
        %4498 = vst [vmem:[%s289 + $0x60] sm:$0xff] %v4466
        %4499 = vst [vmem:[%s289 + $0x68] sm:$0xff] %v4467
        %4500 = vst [vmem:[%s289 + $0x70] sm:$0xff] %v4468
        %4501 = vst [vmem:[%s289 + $0x78] sm:$0xff] %v4469
        %4502 = vst [vmem:[%s289 + $0x80] sm:$0xff] %v4470
        %4503 = vst [vmem:[%s289 + $0x88] sm:$0xff] %v4471
        %4504 = vst [vmem:[%s289 + $0x90] sm:$0xff] %v4472
        %4505 = vst [vmem:[%s289 + $0x98] sm:$0xff] %v4473
        %4506 = vst [vmem:[%s289 + $0xa0] sm:$0xff] %v4474
        %4507 = vst [vmem:[%s289 + $0xa8] sm:$0xff] %v4475
        %4508 = vst [vmem:[%s289 + $0xb0] sm:$0xff] %v4476
        %4509 = vst [vmem:[%s289 + $0xb8] sm:$0xff] %v4477
        %4510 = vst [vmem:[%s289 + $0xc0] sm:$0xff] %v4478
        %4511 = vst [vmem:[%s289 + $0xc8] sm:$0xff] %v4479
        %4512 = vst [vmem:[%s289 + $0xd0] sm:$0xff] %v4480
        %4513 = vst [vmem:[%s289 + $0xd8] sm:$0xff] %v4481
        %4514 = vst [vmem:[%s289 + $0xe0] sm:$0xff] %v4482
        %4515 = vst [vmem:[%s289 + $0xe8] sm:$0xff] %v4483
        %4516 = vst [vmem:[%s289 + $0xf0] sm:$0xff] %v4484
        %4517 = vst [vmem:[%s289 + $0xf8] sm:$0xff] %v4485
        %s4518 = smul.u32 16, %s23
        %p4519 = scmp.lt.s32.totalorder %s22, 1
        %s4520 = scalar_select %p4519, %s22, 1
        %p4521 = scmp.lt.s32.totalorder %s4518, 63
        %s4522 = scalar_select %p4521, %s4518, 63
        %s4523 = smul.addr %s4522, 2
        %s4524 = smul.addr %s4520, 128
        %s4525 = sadd.s32 %s4523, %s4524
        %s4526 = smul.addr %s4525, 8
        %s4527 = scalar_lea.vmem %s6, %s4526
        // Predicated region
        $region53: #{simple_lr2hr_forward.3} parent=43 // pred_check
          %p4528 = pneg %p181
        $region54: #{simple_lr2hr_forward.3} parent=43 // pred_check_branch
          %4530 = sbr.rel (%p4528) target = $region56
        $region55: #{simple_lr2hr_forward.3} parent=43 // pred_region
          %s4531 = smul.u32 16, %s23
        $region56: #{simple_lr2hr_forward.3} parent=43 // pred_fallthru
          _
      $region44: #{simple_lr2hr_forward.3} parent=5 // pred_fallthru
        _
      %p4532 = scmp.le.s32.totalorder 2, %s13
      // Predicated region
      $region57: #{simple_lr2hr_forward.3} parent=5 // pred_check
        %p4533 = pneg %p4532
      $region58: #{simple_lr2hr_forward.3} parent=5 // pred_check_branch
        %4535 = sbr.rel (%p4533) target = $region60
      $region59: #{simple_lr2hr_forward.3} parent=5 // pred_region
        %s4536 = ssub.s32 %s13, 2
        // Predicated region
        $region61: #{simple_lr2hr_forward.3} parent=59 // pred_check
          %p4537 = pneg %p187
        $region62: #{simple_lr2hr_forward.3} parent=59 // pred_check_branch
          %4539 = sbr.rel (%p4537) target = $region64
        $region63: #{simple_lr2hr_forward.3} parent=59 // pred_region
          %s4540 = smul.u32 16, %s25
          %p4541 = scmp.lt.s32.totalorder %s24, 1
          %s4542 = scalar_select %p4541, %s24, 1
          %p4543 = scmp.lt.s32.totalorder %s4540, 63
          %s4544 = scalar_select %p4543, %s4540, 63
          %s4545 = smul.addr %s4544, 2
          %s4546 = smul.addr %s4542, 128
          %s4547 = sadd.s32 %s4545, %s4546
          %s4548 = smul.addr %s4547, 8
          %s4549 = scalar_lea.vmem %s6, %s4548
        $region64: #{simple_lr2hr_forward.3} parent=59 // pred_fallthru
          _
      $region60: #{simple_lr2hr_forward.3} parent=5 // pred_fallthru
        _
    $region6: #{simple_lr2hr_forward.3} parent=1 // loop_footer
      %s17 = sadd.s32 1, %s13
    $region7: #{simple_lr2hr_forward.3} parent=1 // loop_footer_branch
      %12 = sbr.rel target = $region3
    $region8: #{simple_lr2hr_forward.3} parent=1 // loop_exit
      _
    %4550 = vsyncpa [#allocation4], 1
    %s4551 = scalar_lea.sflag [#allocation4], 1
    %4552 = vsyncpa %s4551, 1

// kernel: simple_lr2hr_forward.2
$region0: #{simple_lr2hr_forward.2}
  #allocation0 [shape = 'u32[]', space=smem, size = 0x4, offset = 0x4, fixed_abs, tag = 'smem constant byte address 0x4 - core index']
  #allocation1 [shape = 'u32[144,128]{1,0:T(1,128)}', space=vmem, size = 0x12000, scoped, tag = 'internal scratch']
  %s0 = inlined_call_operand.vmem [shape: bf16[2,256,36], index: 0, kind: input, shape index: {}]
  %s1 = inlined_call_operand.vmem [shape: bf16[36,32], index: 1, kind: input, shape index: {}]
  %s2 = inlined_call_operand.hbm [shape: f32[1,32], index: 2, kind: input, shape index: {}]
  %s3 = inlined_call_operand.hbm [shape: bf16[32,96], index: 3, kind: input, shape index: {}]
  %s4 = inlined_call_operand.hbm [shape: f32[1,32], index: 4, kind: input, shape index: {}]
  %s5 = inlined_call_operand.hbm [shape: bf16[32,32], index: 5, kind: input, shape index: {}]
  %s6 = inlined_call_operand.hbm [shape: f32[1,32], index: 6, kind: input, shape index: {}]
  %s7 = inlined_call_operand.vmem [shape: bf16[288,32], index: 7, kind: input, shape index: {}]
  %s8 = inlined_call_operand.hbm [shape: f32[1,32], index: 8, kind: input, shape index: {}]
  %s9 = inlined_call_operand.hbm [shape: bf16[32,32], index: 9, kind: input, shape index: {}]
  %s10 = inlined_call_operand.hbm [shape: f32[1,32], index: 10, kind: input, shape index: {}]
  %s11 = inlined_call_operand.vmem [shape: bf16[288,512], index: 11, kind: input, shape index: {}]
  %s12 = inlined_call_operand.hbm [shape: f32[1,512], index: 12, kind: input, shape index: {}]
  %s13 = inlined_call_operand.hbm [shape: f32[6], index: 13, kind: input, shape index: {}]
  %s14 = inlined_call_operand.vmem [shape: bf16[2,16,4,16,128], index: 14, kind: output, shape index: {}]
  %s15 = sld [smem:[#allocation0]]
  $region129: #{simple_lr2hr_forward.2} parent=0
    _
  %s17 = ssub.s32 1, %s15
  %s18 = scalar_select 0, %s17, %s15
  $region1: #{simple_lr2hr_forward.2} parent=0
    #allocation2 [shape = 'u8[512]{0}', space=vmem, size = 0x400, scoped, tag = 'input window, operand 2, single buffered']
    #allocation3 [shape = 's32[2]{0}', space=sflag, size = 0x8, scoped, tag = 'scoped memory for simple_lr2hr_forward.2']
    #allocation4 [shape = 's32[2]{0}', space=sflag, size = 0x8, scoped, tag = 'scoped memory for simple_lr2hr_forward.2']
    #allocation5 [shape = 'u8[8192]{0}', space=vmem, size = 0x2000, scoped, tag = 'input window, operand 3, single buffered']
    #allocation6 [shape = 's32[1]{0}', space=sflag, size = 0x4, scoped, tag = 'scoped memory for simple_lr2hr_forward.2']
    #allocation7 [shape = 'u8[512]{0}', space=vmem, size = 0x400, scoped, tag = 'input window, operand 4, single buffered']
    #allocation8 [shape = 'u8[8192]{0}', space=vmem, size = 0x2000, scoped, tag = 'input window, operand 5, single buffered']
    #allocation9 [shape = 's32[1]{0}', space=sflag, size = 0x4, scoped, tag = 'scoped memory for simple_lr2hr_forward.2']
    #allocation10 [shape = 'u8[512]{0}', space=vmem, size = 0x400, scoped, tag = 'input window, operand 6, single buffered']
    #allocation11 [shape = 'u8[512]{0}', space=vmem, size = 0x400, scoped, tag = 'input window, operand 8, single buffered']
    #allocation12 [shape = 's32[1]{0}', space=sflag, size = 0x4, scoped, tag = 'scoped memory for simple_lr2hr_forward.2']
    #allocation13 [shape = 'u8[8192]{0}', space=vmem, size = 0x2000, scoped, tag = 'input window, operand 9, single buffered']
    #allocation14 [shape = 'u8[512]{0}', space=vmem, size = 0x400, scoped, tag = 'input window, operand 10, single buffered']
    #allocation15 [shape = 's32[1]{0}', space=sflag, size = 0x4, scoped, tag = 'scoped memory for simple_lr2hr_forward.2']
    #allocation16 [shape = 'u8[2048]{0}', space=vmem, size = 0x800, scoped, tag = 'input window, operand 12, single buffered']
    #allocation17 [shape = 'u8[512]{0}', space=smem, size = 0x200, scoped, tag = 'input window, operand 13, single buffered']
    %19 = vsyncpa [#allocation3], 0
    %20 = vsyncpa [#allocation6], 0
    %21 = vsyncpa [#allocation9], 0
    %22 = vsyncpa [#allocation12], 0
    %23 = vsyncpa [#allocation15], 0
    %24 = vsyncpa [#allocation4], 0
    loop: start=0, step=1, limit=4
    $region2: #{simple_lr2hr_forward.2} parent=1 // loop_pre_header
      _
    $region3: #{simple_lr2hr_forward.2} parent=1 // loop_header
      %s26 = sphi 0, %s30
      %p27 = scmp.ge.s32.totalorder %s26, 4
      %s36 = sphi 0, %s38
      %s39 = sphi 0, %s36
      %s40 = sphi 0, %s39
      %s56 = sphi 0, %s40
      %s60 = sphi 0, %s60
      %s62 = sphi 0, %s60
      %s63 = sphi 0, %s62
      %s77 = sphi 0, %s63
      %s81 = sphi 0, %s81
      %s83 = sphi 0, %s81
      %s84 = sphi 0, %s83
      %s98 = sphi 0, %s84
      %s102 = sphi 0, %s102
      %s104 = sphi 0, %s102
      %s105 = sphi 0, %s104
      %s119 = sphi 0, %s105
      %s123 = sphi 0, %s123
      %s125 = sphi 0, %s123
      %s126 = sphi 0, %s125
      %s140 = sphi 0, %s126
      %s144 = sphi 0, %s144
      %s146 = sphi 0, %s144
      %s147 = sphi 0, %s146
      %s161 = sphi 0, %s147
      %s165 = sphi 0, %s165
      %s167 = sphi 0, %s165
      %s168 = sphi 0, %s167
      %s182 = sphi 0, %s168
      %s186 = sphi 0, %s186
      %s188 = sphi 0, %s186
      %s189 = sphi 0, %s188
      %s203 = sphi 0, %s189
      %s207 = sphi 0, %s207
      %s209 = sphi 0, %s207
      %s210 = sphi 0, %s209
      %s224 = sphi 0, %s210
      %s228 = sphi 0, %s228
      %s230 = sphi 0, %s228
      %s231 = sphi 0, %s230
      %s245 = sphi 0, %s231
      %s249 = sphi 0, %s249
      %s251 = sphi 0, %s249
      %s252 = sphi 0, %s251
      %s266 = sphi 0, %s252
      %s270 = sphi 0, %s270
      %s272 = sphi 0, %s270
      %s273 = sphi 0, %s272
      %s287 = sphi 0, %s273
      %s291 = sphi 0, %s291
      %s293 = sphi 0, %s291
      %s294 = sphi 0, %s293
      %s308 = sphi 0, %s294
      %s312 = sphi 0, %s312
      %s314 = sphi 0, %s312
      %s315 = sphi 0, %s314
      %s329 = sphi 0, %s315
      %s335 = sphi 0, %s337
      %s338 = sphi 0, %s335
      %s339 = sphi 0, %s338
      %s355 = sphi 0, %s339
    $region4: #{simple_lr2hr_forward.2} parent=1 // loop_header_branch
      %29 = sbr.rel (%p27) target = $region8
    $region5: #{simple_lr2hr_forward.2} parent=1 // loop_body
      %s31 = ssub.s32 %s26, 1
      %s32 = ssub.s32 %s26, 2
      %s33 = sadd.s32 %s26, 1
      %s34 = ssub.s32 %s26, %s33
      %p35 = scmp.eq.s32.totalorder %s34, 0
      %s37 = sadd.s32 %s36, 1
      %s38 = scalar_select %p35, %s36, %s37
      %p41 = pneg %p35
      %p42 = scmp.eq.s32.totalorder %s26, 1
      %p43 = por %p41, %p42
      %p44 = scmp.ne.s32.totalorder %s36, %s39
      %p45 = scmp.eq.s32.totalorder %s26, 0
      %p46 = por %p44, %p45
      %p47 = scmp.ne.s32.totalorder %s36, %s39
      %p48 = scmp.eq.s32.totalorder %s31, 1
      %p49 = por %p47, %p48
      %p50 = scmp.ne.s32.totalorder %s39, %s40
      %p51 = scmp.eq.s32.totalorder %s31, 0
      %p52 = por %p50, %p51
      %p53 = scmp.ne.s32.totalorder %s39, %s40
      %p54 = scmp.eq.s32.totalorder %s32, 1
      %p55 = por %p53, %p54
      %p57 = scmp.ne.s32.totalorder %s40, %s56
      %p58 = scmp.eq.s32.totalorder %s32, 0
      %p59 = por %p57, %p58
      %s61 = sadd.s32 %s60, 1
      %p64 = scmp.eq.s32.totalorder %s26, 1
      %p65 = scmp.ne.s32.totalorder %s60, %s62
      %p66 = scmp.eq.s32.totalorder %s26, 0
      %p67 = por %p65, %p66
      %p68 = scmp.ne.s32.totalorder %s60, %s62
      %p69 = scmp.eq.s32.totalorder %s31, 1
      %p70 = por %p68, %p69
      %p71 = scmp.ne.s32.totalorder %s62, %s63
      %p72 = scmp.eq.s32.totalorder %s31, 0
      %p73 = por %p71, %p72
      %p74 = scmp.ne.s32.totalorder %s62, %s63
      %p75 = scmp.eq.s32.totalorder %s32, 1
      %p76 = por %p74, %p75
      %p78 = scmp.ne.s32.totalorder %s63, %s77
      %p79 = scmp.eq.s32.totalorder %s32, 0
      %p80 = por %p78, %p79
      %s82 = sadd.s32 %s81, 1
      %p85 = scmp.eq.s32.totalorder %s26, 1
      %p86 = scmp.ne.s32.totalorder %s81, %s83
      %p87 = scmp.eq.s32.totalorder %s26, 0
      %p88 = por %p86, %p87
      %p89 = scmp.ne.s32.totalorder %s81, %s83
      %p90 = scmp.eq.s32.totalorder %s31, 1
      %p91 = por %p89, %p90
      %p92 = scmp.ne.s32.totalorder %s83, %s84
      %p93 = scmp.eq.s32.totalorder %s31, 0
      %p94 = por %p92, %p93
      %p95 = scmp.ne.s32.totalorder %s83, %s84
      %p96 = scmp.eq.s32.totalorder %s32, 1
      %p97 = por %p95, %p96
      %p99 = scmp.ne.s32.totalorder %s84, %s98
      %p100 = scmp.eq.s32.totalorder %s32, 0
      %p101 = por %p99, %p100
      %s103 = sadd.s32 %s102, 1
      %p106 = scmp.eq.s32.totalorder %s26, 1
      %p107 = scmp.ne.s32.totalorder %s102, %s104
      %p108 = scmp.eq.s32.totalorder %s26, 0
      %p109 = por %p107, %p108
      %p110 = scmp.ne.s32.totalorder %s102, %s104
      %p111 = scmp.eq.s32.totalorder %s31, 1
      %p112 = por %p110, %p111
      %p113 = scmp.ne.s32.totalorder %s104, %s105
      %p114 = scmp.eq.s32.totalorder %s31, 0
      %p115 = por %p113, %p114
      %p116 = scmp.ne.s32.totalorder %s104, %s105
      %p117 = scmp.eq.s32.totalorder %s32, 1
      %p118 = por %p116, %p117
      %p120 = scmp.ne.s32.totalorder %s105, %s119
      %p121 = scmp.eq.s32.totalorder %s32, 0
      %p122 = por %p120, %p121
      %s124 = sadd.s32 %s123, 1
      %p127 = scmp.eq.s32.totalorder %s26, 1
      %p128 = scmp.ne.s32.totalorder %s123, %s125
      %p129 = scmp.eq.s32.totalorder %s26, 0
      %p130 = por %p128, %p129
      %p131 = scmp.ne.s32.totalorder %s123, %s125
      %p132 = scmp.eq.s32.totalorder %s31, 1
      %p133 = por %p131, %p132
      %p134 = scmp.ne.s32.totalorder %s125, %s126
      %p135 = scmp.eq.s32.totalorder %s31, 0
      %p136 = por %p134, %p135
      %p137 = scmp.ne.s32.totalorder %s125, %s126
      %p138 = scmp.eq.s32.totalorder %s32, 1
      %p139 = por %p137, %p138
      %p141 = scmp.ne.s32.totalorder %s126, %s140
      %p142 = scmp.eq.s32.totalorder %s32, 0
      %p143 = por %p141, %p142
      %s145 = sadd.s32 %s144, 1
      %p148 = scmp.eq.s32.totalorder %s26, 1
      %p149 = scmp.ne.s32.totalorder %s144, %s146
      %p150 = scmp.eq.s32.totalorder %s26, 0
      %p151 = por %p149, %p150
      %p152 = scmp.ne.s32.totalorder %s144, %s146
      %p153 = scmp.eq.s32.totalorder %s31, 1
      %p154 = por %p152, %p153
      %p155 = scmp.ne.s32.totalorder %s146, %s147
      %p156 = scmp.eq.s32.totalorder %s31, 0
      %p157 = por %p155, %p156
      %p158 = scmp.ne.s32.totalorder %s146, %s147
      %p159 = scmp.eq.s32.totalorder %s32, 1
      %p160 = por %p158, %p159
      %p162 = scmp.ne.s32.totalorder %s147, %s161
      %p163 = scmp.eq.s32.totalorder %s32, 0
      %p164 = por %p162, %p163
      %s166 = sadd.s32 %s165, 1
      %p169 = scmp.eq.s32.totalorder %s26, 1
      %p170 = scmp.ne.s32.totalorder %s165, %s167
      %p171 = scmp.eq.s32.totalorder %s26, 0
      %p172 = por %p170, %p171
      %p173 = scmp.ne.s32.totalorder %s165, %s167
      %p174 = scmp.eq.s32.totalorder %s31, 1
      %p175 = por %p173, %p174
      %p176 = scmp.ne.s32.totalorder %s167, %s168
      %p177 = scmp.eq.s32.totalorder %s31, 0
      %p178 = por %p176, %p177
      %p179 = scmp.ne.s32.totalorder %s167, %s168
      %p180 = scmp.eq.s32.totalorder %s32, 1
      %p181 = por %p179, %p180
      %p183 = scmp.ne.s32.totalorder %s168, %s182
      %p184 = scmp.eq.s32.totalorder %s32, 0
      %p185 = por %p183, %p184
      %s187 = sadd.s32 %s186, 1
      %p190 = scmp.eq.s32.totalorder %s26, 1
      %p191 = scmp.ne.s32.totalorder %s186, %s188
      %p192 = scmp.eq.s32.totalorder %s26, 0
      %p193 = por %p191, %p192
      %p194 = scmp.ne.s32.totalorder %s186, %s188
      %p195 = scmp.eq.s32.totalorder %s31, 1
      %p196 = por %p194, %p195
      %p197 = scmp.ne.s32.totalorder %s188, %s189
      %p198 = scmp.eq.s32.totalorder %s31, 0
      %p199 = por %p197, %p198
      %p200 = scmp.ne.s32.totalorder %s188, %s189
      %p201 = scmp.eq.s32.totalorder %s32, 1
      %p202 = por %p200, %p201
      %p204 = scmp.ne.s32.totalorder %s189, %s203
      %p205 = scmp.eq.s32.totalorder %s32, 0
      %p206 = por %p204, %p205
      %s208 = sadd.s32 %s207, 1
      %p211 = scmp.eq.s32.totalorder %s26, 1
      %p212 = scmp.ne.s32.totalorder %s207, %s209
      %p213 = scmp.eq.s32.totalorder %s26, 0
      %p214 = por %p212, %p213
      %p215 = scmp.ne.s32.totalorder %s207, %s209
      %p216 = scmp.eq.s32.totalorder %s31, 1
      %p217 = por %p215, %p216
      %p218 = scmp.ne.s32.totalorder %s209, %s210
      %p219 = scmp.eq.s32.totalorder %s31, 0
      %p220 = por %p218, %p219
      %p221 = scmp.ne.s32.totalorder %s209, %s210
      %p222 = scmp.eq.s32.totalorder %s32, 1
      %p223 = por %p221, %p222
      %p225 = scmp.ne.s32.totalorder %s210, %s224
      %p226 = scmp.eq.s32.totalorder %s32, 0
      %p227 = por %p225, %p226
      %s229 = sadd.s32 %s228, 1
      %p232 = scmp.eq.s32.totalorder %s26, 1
      %p233 = scmp.ne.s32.totalorder %s228, %s230
      %p234 = scmp.eq.s32.totalorder %s26, 0
      %p235 = por %p233, %p234
      %p236 = scmp.ne.s32.totalorder %s228, %s230
      %p237 = scmp.eq.s32.totalorder %s31, 1
      %p238 = por %p236, %p237
      %p239 = scmp.ne.s32.totalorder %s230, %s231
      %p240 = scmp.eq.s32.totalorder %s31, 0
      %p241 = por %p239, %p240
      %p242 = scmp.ne.s32.totalorder %s230, %s231
      %p243 = scmp.eq.s32.totalorder %s32, 1
      %p244 = por %p242, %p243
      %p246 = scmp.ne.s32.totalorder %s231, %s245
      %p247 = scmp.eq.s32.totalorder %s32, 0
      %p248 = por %p246, %p247
      %s250 = sadd.s32 %s249, 1
      %p253 = scmp.eq.s32.totalorder %s26, 1
      %p254 = scmp.ne.s32.totalorder %s249, %s251
      %p255 = scmp.eq.s32.totalorder %s26, 0
      %p256 = por %p254, %p255
      %p257 = scmp.ne.s32.totalorder %s249, %s251
      %p258 = scmp.eq.s32.totalorder %s31, 1
      %p259 = por %p257, %p258
      %p260 = scmp.ne.s32.totalorder %s251, %s252
      %p261 = scmp.eq.s32.totalorder %s31, 0
      %p262 = por %p260, %p261
      %p263 = scmp.ne.s32.totalorder %s251, %s252
      %p264 = scmp.eq.s32.totalorder %s32, 1
      %p265 = por %p263, %p264
      %p267 = scmp.ne.s32.totalorder %s252, %s266
      %p268 = scmp.eq.s32.totalorder %s32, 0
      %p269 = por %p267, %p268
      %s271 = sadd.s32 %s270, 1
      %p274 = scmp.eq.s32.totalorder %s26, 1
      %p275 = scmp.ne.s32.totalorder %s270, %s272
      %p276 = scmp.eq.s32.totalorder %s26, 0
      %p277 = por %p275, %p276
      %p278 = scmp.ne.s32.totalorder %s270, %s272
      %p279 = scmp.eq.s32.totalorder %s31, 1
      %p280 = por %p278, %p279
      %p281 = scmp.ne.s32.totalorder %s272, %s273
      %p282 = scmp.eq.s32.totalorder %s31, 0
      %p283 = por %p281, %p282
      %p284 = scmp.ne.s32.totalorder %s272, %s273
      %p285 = scmp.eq.s32.totalorder %s32, 1
      %p286 = por %p284, %p285
      %p288 = scmp.ne.s32.totalorder %s273, %s287
      %p289 = scmp.eq.s32.totalorder %s32, 0
      %p290 = por %p288, %p289
      %s292 = sadd.s32 %s291, 1
      %p295 = scmp.eq.s32.totalorder %s26, 1
      %p296 = scmp.ne.s32.totalorder %s291, %s293
      %p297 = scmp.eq.s32.totalorder %s26, 0
      %p298 = por %p296, %p297
      %p299 = scmp.ne.s32.totalorder %s291, %s293
      %p300 = scmp.eq.s32.totalorder %s31, 1
      %p301 = por %p299, %p300
      %p302 = scmp.ne.s32.totalorder %s293, %s294
      %p303 = scmp.eq.s32.totalorder %s31, 0
      %p304 = por %p302, %p303
      %p305 = scmp.ne.s32.totalorder %s293, %s294
      %p306 = scmp.eq.s32.totalorder %s32, 1
      %p307 = por %p305, %p306
      %p309 = scmp.ne.s32.totalorder %s294, %s308
      %p310 = scmp.eq.s32.totalorder %s32, 0
      %p311 = por %p309, %p310
      %s313 = sadd.s32 %s312, 1
      %p316 = scmp.eq.s32.totalorder %s26, 1
      %p317 = scmp.ne.s32.totalorder %s312, %s314
      %p318 = scmp.eq.s32.totalorder %s26, 0
      %p319 = por %p317, %p318
      %p320 = scmp.ne.s32.totalorder %s312, %s314
      %p321 = scmp.eq.s32.totalorder %s31, 1
      %p322 = por %p320, %p321
      %p323 = scmp.ne.s32.totalorder %s314, %s315
      %p324 = scmp.eq.s32.totalorder %s31, 0
      %p325 = por %p323, %p324
      %p326 = scmp.ne.s32.totalorder %s314, %s315
      %p327 = scmp.eq.s32.totalorder %s32, 1
      %p328 = por %p326, %p327
      %p330 = scmp.ne.s32.totalorder %s315, %s329
      %p331 = scmp.eq.s32.totalorder %s32, 0
      %p332 = por %p330, %p331
      %s333 = ssub.s32 %s26, %s33
      %p334 = scmp.eq.s32.totalorder %s333, 0
      %s336 = sadd.s32 %s335, 1
      %s337 = scalar_select %p334, %s335, %s336
      %p340 = pneg %p334
      %p341 = scmp.eq.s32.totalorder %s26, 1
      %p342 = por %p340, %p341
      %p343 = scmp.ne.s32.totalorder %s335, %s338
      %p344 = scmp.eq.s32.totalorder %s26, 0
      %p345 = por %p343, %p344
      %p346 = scmp.ne.s32.totalorder %s335, %s338
      %p347 = scmp.eq.s32.totalorder %s31, 1
      %p348 = por %p346, %p347
      %p349 = scmp.ne.s32.totalorder %s338, %s339
      %p350 = scmp.eq.s32.totalorder %s31, 0
      %p351 = por %p349, %p350
      %p352 = scmp.ne.s32.totalorder %s338, %s339
      %p353 = scmp.eq.s32.totalorder %s32, 1
      %p354 = por %p352, %p353
      %p356 = scmp.ne.s32.totalorder %s339, %s355
      %p357 = scmp.eq.s32.totalorder %s32, 0
      %p358 = por %p356, %p357
      %p359 = scmp.le.s32.totalorder 1, %s26
      %p360 = scmp.lt.s32.totalorder %s26, 3
      %p361 = pnand %p359, %p360
      %p362 = pneg %p361
      // Predicated region
      $region9: #{simple_lr2hr_forward.2} parent=5 // pred_check
        _
      $region10: #{simple_lr2hr_forward.2} parent=5 // pred_check_branch
        %364 = sbr.rel (%p361) target = $region12
      $region11: #{simple_lr2hr_forward.2} parent=5 // pred_region
        %s365 = ssub.s32 %s26, 1
        // Predicated region
        $region13: #{simple_lr2hr_forward.2} parent=11 // pred_check
          %p366 = pneg %p73
        $region14: #{simple_lr2hr_forward.2} parent=11 // pred_check_branch
          %368 = sbr.rel (%p366) target = $region16
        $region15: #{simple_lr2hr_forward.2} parent=11 // pred_region
          _
        $region16: #{simple_lr2hr_forward.2} parent=11 // pred_fallthru
          _
        // Predicated region
        $region17: #{simple_lr2hr_forward.2} parent=11 // pred_check
          %p369 = pneg %p94
        $region18: #{simple_lr2hr_forward.2} parent=11 // pred_check_branch
          %371 = sbr.rel (%p369) target = $region20
        $region19: #{simple_lr2hr_forward.2} parent=11 // pred_region
          %s373 = ssub.s32 16, 16
          %374 = vsyncadd [#allocation3], %s373
          %s376 = sshll.u32 [#allocation2], 4
          %s377 = int_to_ptr.vmem [resolvable:$true] %s376
          %379 = dma.hbm_to_vmem [thread:$0]  %s2, 16, %s377, [#allocation3]
        $region20: #{simple_lr2hr_forward.2} parent=11 // pred_fallthru
          _
        // Predicated region
        $region21: #{simple_lr2hr_forward.2} parent=11 // pred_check
          %p380 = pneg %p115
        $region22: #{simple_lr2hr_forward.2} parent=11 // pred_check_branch
          %382 = sbr.rel (%p380) target = $region24
        $region23: #{simple_lr2hr_forward.2} parent=11 // pred_region
          %s384 = ssub.s32 256, 256
          %385 = vsyncadd [#allocation6], %s384
          %s386 = sshll.u32 [#allocation5], 4
          %s387 = int_to_ptr.vmem [resolvable:$true] %s386
          %392 = dma.hbm_to_vmem [thread:$0]  %s3, 256, %s387, [#allocation6], 64, 64, 4
        $region24: #{simple_lr2hr_forward.2} parent=11 // pred_fallthru
          _
        // Predicated region
        $region25: #{simple_lr2hr_forward.2} parent=11 // pred_check
          %p393 = pneg %p136
        $region26: #{simple_lr2hr_forward.2} parent=11 // pred_check_branch
          %395 = sbr.rel (%p393) target = $region28
        $region27: #{simple_lr2hr_forward.2} parent=11 // pred_region
          %s397 = ssub.s32 16, 16
          %398 = vsyncadd [#allocation6], %s397
          %s400 = sshll.u32 [#allocation7], 4
          %s401 = int_to_ptr.vmem [resolvable:$true] %s400
          %403 = dma.hbm_to_vmem [thread:$0]  %s4, 16, %s401, [#allocation6]
        $region28: #{simple_lr2hr_forward.2} parent=11 // pred_fallthru
          _
        // Predicated region
        $region29: #{simple_lr2hr_forward.2} parent=11 // pred_check
          %p404 = pneg %p157
        $region30: #{simple_lr2hr_forward.2} parent=11 // pred_check_branch
          %406 = sbr.rel (%p404) target = $region32
        $region31: #{simple_lr2hr_forward.2} parent=11 // pred_region
          %s408 = ssub.s32 256, 256
          %409 = vsyncadd [#allocation9], %s408
          %s410 = sshll.u32 [#allocation8], 4
          %s411 = int_to_ptr.vmem [resolvable:$true] %s410
          %416 = dma.hbm_to_vmem [thread:$0]  %s5, 256, %s411, [#allocation9], 64, 64, 4
        $region32: #{simple_lr2hr_forward.2} parent=11 // pred_fallthru
          _
        // Predicated region
        $region33: #{simple_lr2hr_forward.2} parent=11 // pred_check
          %p417 = pneg %p178
        $region34: #{simple_lr2hr_forward.2} parent=11 // pred_check_branch
          %419 = sbr.rel (%p417) target = $region36
        $region35: #{simple_lr2hr_forward.2} parent=11 // pred_region
          %s421 = ssub.s32 16, 16
          %422 = vsyncadd [#allocation9], %s421
          %s424 = sshll.u32 [#allocation10], 4
          %s425 = int_to_ptr.vmem [resolvable:$true] %s424
          %427 = dma.hbm_to_vmem [thread:$0]  %s6, 16, %s425, [#allocation9]
        $region36: #{simple_lr2hr_forward.2} parent=11 // pred_fallthru
          _
        // Predicated region
        $region37: #{simple_lr2hr_forward.2} parent=11 // pred_check
          %p428 = pneg %p199
        $region38: #{simple_lr2hr_forward.2} parent=11 // pred_check_branch
          %430 = sbr.rel (%p428) target = $region40
        $region39: #{simple_lr2hr_forward.2} parent=11 // pred_region
          _
        $region40: #{simple_lr2hr_forward.2} parent=11 // pred_fallthru
          _
        // Predicated region
        $region41: #{simple_lr2hr_forward.2} parent=11 // pred_check
          %p431 = pneg %p220
        $region42: #{simple_lr2hr_forward.2} parent=11 // pred_check_branch
          %433 = sbr.rel (%p431) target = $region44
        $region43: #{simple_lr2hr_forward.2} parent=11 // pred_region
          %s435 = ssub.s32 16, 16
          %436 = vsyncadd [#allocation12], %s435
          %s438 = sshll.u32 [#allocation11], 4
          %s439 = int_to_ptr.vmem [resolvable:$true] %s438
          %441 = dma.hbm_to_vmem [thread:$0]  %s8, 16, %s439, [#allocation12]
        $region44: #{simple_lr2hr_forward.2} parent=11 // pred_fallthru
          _
        // Predicated region
        $region45: #{simple_lr2hr_forward.2} parent=11 // pred_check
          %p442 = pneg %p241
        $region46: #{simple_lr2hr_forward.2} parent=11 // pred_check_branch
          %444 = sbr.rel (%p442) target = $region48
        $region47: #{simple_lr2hr_forward.2} parent=11 // pred_region
          %s446 = ssub.s32 256, 256
          %447 = vsyncadd [#allocation12], %s446
          %s448 = sshll.u32 [#allocation13], 4
          %s449 = int_to_ptr.vmem [resolvable:$true] %s448
          %454 = dma.hbm_to_vmem [thread:$0]  %s9, 256, %s449, [#allocation12], 64, 64, 4
        $region48: #{simple_lr2hr_forward.2} parent=11 // pred_fallthru
          _
        // Predicated region
        $region49: #{simple_lr2hr_forward.2} parent=11 // pred_check
          %p455 = pneg %p262
        $region50: #{simple_lr2hr_forward.2} parent=11 // pred_check_branch
          %457 = sbr.rel (%p455) target = $region52
        $region51: #{simple_lr2hr_forward.2} parent=11 // pred_region
          %s459 = ssub.s32 16, 16
          %460 = vsyncadd [#allocation15], %s459
          %s462 = sshll.u32 [#allocation14], 4
          %s463 = int_to_ptr.vmem [resolvable:$true] %s462
          %465 = dma.hbm_to_vmem [thread:$0]  %s10, 16, %s463, [#allocation15]
        $region52: #{simple_lr2hr_forward.2} parent=11 // pred_fallthru
          _
        // Predicated region
        $region53: #{simple_lr2hr_forward.2} parent=11 // pred_check
          %p466 = pneg %p283
        $region54: #{simple_lr2hr_forward.2} parent=11 // pred_check_branch
          %468 = sbr.rel (%p466) target = $region56
        $region55: #{simple_lr2hr_forward.2} parent=11 // pred_region
          _
        $region56: #{simple_lr2hr_forward.2} parent=11 // pred_fallthru
          _
        // Predicated region
        $region57: #{simple_lr2hr_forward.2} parent=11 // pred_check
          %p469 = pneg %p304
        $region58: #{simple_lr2hr_forward.2} parent=11 // pred_check_branch
          %471 = sbr.rel (%p469) target = $region60
        $region59: #{simple_lr2hr_forward.2} parent=11 // pred_region
          %s473 = ssub.s32 64, 64
          %474 = vsyncadd [#allocation15], %s473
          %s476 = sshll.u32 [#allocation16], 4
          %s477 = int_to_ptr.vmem [resolvable:$true] %s476
          %479 = dma.hbm_to_vmem [thread:$0]  %s12, 64, %s477, [#allocation15]
        $region60: #{simple_lr2hr_forward.2} parent=11 // pred_fallthru
          _
        // Predicated region
        $region61: #{simple_lr2hr_forward.2} parent=11 // pred_check
          %p480 = pneg %p325
        $region62: #{simple_lr2hr_forward.2} parent=11 // pred_check_branch
          %482 = sbr.rel (%p480) target = $region64
        $region63: #{simple_lr2hr_forward.2} parent=11 // pred_region
          %s484 = ssub.s32 16, 16
          %485 = vsyncadd [#allocation4], %s484
          %488 = dma.hbm_to_smem %s13, 16, [#allocation17], [#allocation4]
        $region64: #{simple_lr2hr_forward.2} parent=11 // pred_fallthru
          _
      $region12: #{simple_lr2hr_forward.2} parent=5 // pred_fallthru
        _
      %p489 = scmp.lt.s32.totalorder %s26, 2
      // Predicated region
      $region65: #{simple_lr2hr_forward.2} parent=5 // pred_check
        %p490 = pneg %p489
      $region66: #{simple_lr2hr_forward.2} parent=5 // pred_check_branch
        %492 = sbr.rel (%p490) target = $region68
      $region67: #{simple_lr2hr_forward.2} parent=5 // pred_region
        // Predicated region
        $region69: #{simple_lr2hr_forward.2} parent=67 // pred_check
          %p493 = pneg %p46
        $region70: #{simple_lr2hr_forward.2} parent=67 // pred_check_branch
          %495 = sbr.rel (%p493) target = $region72
        $region71: #{simple_lr2hr_forward.2} parent=67 // pred_region
          %p496 = scmp.lt.s32.totalorder %s26, 1
          %s497 = scalar_select %p496, %s26, 1
          %s498 = smul.addr %s497, 32
          %s499 = smul.addr %s498, 4
          %s500 = scalar_lea.vmem %s0, %s499
        $region72: #{simple_lr2hr_forward.2} parent=67 // pred_fallthru
          _
      $region68: #{simple_lr2hr_forward.2} parent=5 // pred_fallthru
        _
      %p501 = scmp.le.s32.totalorder 1, %s26
      %p502 = scmp.lt.s32.totalorder %s26, 3
      %p503 = pnand %p501, %p502
      %p504 = pneg %p503
      // Predicated region
      $region73: #{simple_lr2hr_forward.2} parent=5 // pred_check
        _
      $region74: #{simple_lr2hr_forward.2} parent=5 // pred_check_branch
        %506 = sbr.rel (%p503) target = $region76
      $region75: #{simple_lr2hr_forward.2} parent=5 // pred_region
        %s507 = ssub.s32 %s26, 1
        // Predicated region
        $region77: #{simple_lr2hr_forward.2} parent=75 // pred_check
          %p508 = pneg %p94
        $region78: #{simple_lr2hr_forward.2} parent=75 // pred_check_branch
          %510 = sbr.rel (%p508) target = $region80
        $region79: #{simple_lr2hr_forward.2} parent=75 // pred_region
          %511 = dma.done [#allocation3], 16
        $region80: #{simple_lr2hr_forward.2} parent=75 // pred_fallthru
          _
        // Predicated region
        $region81: #{simple_lr2hr_forward.2} parent=75 // pred_check
          %p512 = pneg %p115
        $region82: #{simple_lr2hr_forward.2} parent=75 // pred_check_branch
          %514 = sbr.rel (%p512) target = $region84
        $region83: #{simple_lr2hr_forward.2} parent=75 // pred_region
          %515 = dma.done [#allocation6], 256
        $region84: #{simple_lr2hr_forward.2} parent=75 // pred_fallthru
          _
        // Predicated region
        $region85: #{simple_lr2hr_forward.2} parent=75 // pred_check
          %p516 = pneg %p136
        $region86: #{simple_lr2hr_forward.2} parent=75 // pred_check_branch
          %518 = sbr.rel (%p516) target = $region88
        $region87: #{simple_lr2hr_forward.2} parent=75 // pred_region
          %519 = dma.done [#allocation6], 16
        $region88: #{simple_lr2hr_forward.2} parent=75 // pred_fallthru
          _
        // Predicated region
        $region89: #{simple_lr2hr_forward.2} parent=75 // pred_check
          %p520 = pneg %p157
        $region90: #{simple_lr2hr_forward.2} parent=75 // pred_check_branch
          %522 = sbr.rel (%p520) target = $region92
        $region91: #{simple_lr2hr_forward.2} parent=75 // pred_region
          %523 = dma.done [#allocation9], 256
        $region92: #{simple_lr2hr_forward.2} parent=75 // pred_fallthru
          _
        // Predicated region
        $region93: #{simple_lr2hr_forward.2} parent=75 // pred_check
          %p524 = pneg %p178
        $region94: #{simple_lr2hr_forward.2} parent=75 // pred_check_branch
          %526 = sbr.rel (%p524) target = $region96
        $region95: #{simple_lr2hr_forward.2} parent=75 // pred_region
          %527 = dma.done [#allocation9], 16
        $region96: #{simple_lr2hr_forward.2} parent=75 // pred_fallthru
          _
        // Predicated region
        $region97: #{simple_lr2hr_forward.2} parent=75 // pred_check
          %p528 = pneg %p220
        $region98: #{simple_lr2hr_forward.2} parent=75 // pred_check_branch
          %530 = sbr.rel (%p528) target = $region100
        $region99: #{simple_lr2hr_forward.2} parent=75 // pred_region
          %531 = dma.done [#allocation12], 16
        $region100: #{simple_lr2hr_forward.2} parent=75 // pred_fallthru
          _
        // Predicated region
        $region101: #{simple_lr2hr_forward.2} parent=75 // pred_check
          %p532 = pneg %p241
        $region102: #{simple_lr2hr_forward.2} parent=75 // pred_check_branch
          %534 = sbr.rel (%p532) target = $region104
        $region103: #{simple_lr2hr_forward.2} parent=75 // pred_region
          %535 = dma.done [#allocation12], 256
        $region104: #{simple_lr2hr_forward.2} parent=75 // pred_fallthru
          _
        // Predicated region
        $region105: #{simple_lr2hr_forward.2} parent=75 // pred_check
          %p536 = pneg %p262
        $region106: #{simple_lr2hr_forward.2} parent=75 // pred_check_branch
          %538 = sbr.rel (%p536) target = $region108
        $region107: #{simple_lr2hr_forward.2} parent=75 // pred_region
          %539 = dma.done [#allocation15], 16
        $region108: #{simple_lr2hr_forward.2} parent=75 // pred_fallthru
          _
        // Predicated region
        $region109: #{simple_lr2hr_forward.2} parent=75 // pred_check
          %p540 = pneg %p304
        $region110: #{simple_lr2hr_forward.2} parent=75 // pred_check_branch
          %542 = sbr.rel (%p540) target = $region112
        $region111: #{simple_lr2hr_forward.2} parent=75 // pred_region
          %543 = dma.done [#allocation15], 64
        $region112: #{simple_lr2hr_forward.2} parent=75 // pred_fallthru
          _
        // Predicated region
        $region113: #{simple_lr2hr_forward.2} parent=75 // pred_check
          %p544 = pneg %p325
        $region114: #{simple_lr2hr_forward.2} parent=75 // pred_check_branch
          %546 = sbr.rel (%p544) target = $region116
        $region115: #{simple_lr2hr_forward.2} parent=75 // pred_region
          %547 = dma.done [#allocation4], 16
        $region116: #{simple_lr2hr_forward.2} parent=75 // pred_fallthru
          _
        %548 = sfence
        %p549 = scmp.lt.s32.totalorder %s31, 1
        %s550 = scalar_select %p549, %s31, 1
        %s551 = smul.addr %s550, 32
        %s552 = smul.addr %s551, 4
        %s553 = scalar_lea.vmem %s0, %s552
        %p554 = pneg %p52
        %p555 = pneg %p49
        %p556 = pneg %p73
        %p557 = pneg %p70
        %p558 = pneg %p94
        %p559 = pneg %p91
        %p560 = pneg %p115
        %p561 = pneg %p112
        %p562 = pneg %p136
        %p563 = pneg %p133
        %p564 = pneg %p157
        %p565 = pneg %p154
        %p566 = pneg %p178
        %p567 = pneg %p175
        %p568 = pneg %p199
        %p569 = pneg %p196
        %p570 = pneg %p220
        %p571 = pneg %p217
        %p572 = pneg %p241
        %p573 = pneg %p238
        %p574 = pneg %p262
        %p575 = pneg %p259
        %p576 = pneg %p283
        %p577 = pneg %p280
        %p578 = pneg %p304
        %p579 = pneg %p301
        %p580 = pneg %p325
        %p581 = pneg %p322
        %p582 = pneg %p351
        %p583 = pneg %p348
        %p584 = scmp.lt.s32.totalorder %s31, 1
        %s585 = scalar_select %p584, %s31, 1
        %s586 = smul.addr %s585, 128
        %s587 = smul.addr %s586, 4
        %s588 = scalar_lea.vmem %s14, %s587
        %p589 = scmp.lt.s32.totalorder %s31, 1
        %s590 = scalar_select %p589, %s31, 1
        %s591 = smul.addr %s590, 32
        %s592 = smul.addr %s591, 4
        %s593 = scalar_lea.vmem %s0, %s592
        %p594 = scmp.lt.s32.totalorder %s31, 1
        %s595 = scalar_select %p594, %s31, 1
        %s596 = smul.addr %s595, 128
        %s597 = smul.addr %s596, 4
        %s598 = scalar_lea.vmem %s14, %s597
        %s600 = sld [smem:[#allocation17]]
        %s601 = sld [smem:[#allocation17 + $0x1]]
        %s602 = sld [smem:[#allocation17 + $0x2]]
        %s603 = sld [smem:[#allocation17 + $0x3]]
        %s604 = sld [smem:[#allocation17 + $0x4]]
        %s605 = sld [smem:[#allocation17 + $0x5]]
        %v606 = vld [vmem:[%s593] sm:$0xf]
        %v607 = vld [vmem:[%s593 + $0x4] sm:$0xf]
        %v608 = vld [vmem:[%s593 + $0x8] sm:$0xf]
        %v609 = vld [vmem:[%s593 + $0xc] sm:$0xf]
        %v610 = vld [vmem:[%s593 + $0x10] sm:$0xf]
        %v611 = vld [vmem:[%s593 + $0x14] sm:$0xf]
        %v612 = vld [vmem:[%s593 + $0x18] sm:$0xf]
        %v613 = vld [vmem:[%s593 + $0x1c] sm:$0xf]
        %v614 = vld [vmem:[%s593 + $0x20] sm:$0xf]
        %v615 = vld [vmem:[%s593 + $0x24] sm:$0xf]
        %v616 = vld [vmem:[%s593 + $0x28] sm:$0xf]
        %v617 = vld [vmem:[%s593 + $0x2c] sm:$0xf]
        %v618 = vld [vmem:[%s593 + $0x30] sm:$0xf]
        %v619 = vld [vmem:[%s593 + $0x34] sm:$0xf]
        %v620 = vld [vmem:[%s593 + $0x38] sm:$0xf]
        %v621 = vld [vmem:[%s593 + $0x3c] sm:$0xf]
        %v622 = vld [vmem:[%s593 + $0x40] sm:$0xf]
        %v623 = vld [vmem:[%s593 + $0x44] sm:$0xf]
        %v624 = vld [vmem:[%s593 + $0x48] sm:$0xf]
        %v625 = vld [vmem:[%s593 + $0x4c] sm:$0xf]
        %v626 = vld [vmem:[%s593 + $0x50] sm:$0xf]
        %v627 = vld [vmem:[%s593 + $0x54] sm:$0xf]
        %v628 = vld [vmem:[%s593 + $0x58] sm:$0xf]
        %v629 = vld [vmem:[%s593 + $0x5c] sm:$0xf]
        %v630 = vld [vmem:[%s593 + $0x60] sm:$0xf]
        %v631 = vld [vmem:[%s593 + $0x64] sm:$0xf]
        %v632 = vld [vmem:[%s593 + $0x68] sm:$0xf]
        %v633 = vld [vmem:[%s593 + $0x6c] sm:$0xf]
        %v634 = vld [vmem:[%s593 + $0x70] sm:$0xf]
        %v635 = vld [vmem:[%s593 + $0x74] sm:$0xf]
        %v636 = vld [vmem:[%s593 + $0x78] sm:$0xf]
        %v637 = vld [vmem:[%s593 + $0x7c] sm:$0xf]
        %v638 = vld [vmem:[%s1] sm:$0xf]
        %v639 = vld [vmem:[%s1 + $0x4] sm:$0xf]
        %v640 = vld [vmem:[%s1 + $0x8] sm:$0xf]
        %v641 = vld [vmem:[%s1 + $0xc] sm:$0xf]
        %v642 = vld [vmem:[%s1 + $0x10] sm:$0x3]
        %v643 = vld [vmem:[#allocation2] sm:$0x1]
        %v645 = vlaneseq
        %v646 = vshrl.u32 %v645, 7
        %v647 = vsub.s32 0, %v646
        %v648 = vrot.slane %v643, %v647
        %v682 = vunpack.c.l.b16 %v606
        %v683 = vunpack.c.l.b16 %v607
        %v684 = vunpack.c.l.b16 %v608
        %v685 = vunpack.c.l.b16 %v609
        %v686 = vunpack.c.l.b16 %v610
        %v687 = vunpack.c.l.b16 %v611
        %v688 = vunpack.c.l.b16 %v612
        %v689 = vunpack.c.l.b16 %v613
        %v690 = vunpack.c.l.b16 %v614
        %v691 = vunpack.c.l.b16 %v615
        %v692 = vunpack.c.l.b16 %v616
        %v693 = vunpack.c.l.b16 %v617
        %v694 = vunpack.c.l.b16 %v618
        %v695 = vunpack.c.l.b16 %v619
        %v696 = vunpack.c.l.b16 %v620
        %v697 = vunpack.c.l.b16 %v621
        %v698 = vunpack.c.l.b16 %v622
        %v699 = vunpack.c.l.b16 %v623
        %v700 = vunpack.c.l.b16 %v624
        %v701 = vunpack.c.l.b16 %v625
        %v702 = vunpack.c.l.b16 %v626
        %v703 = vunpack.c.l.b16 %v627
        %v704 = vunpack.c.l.b16 %v628
        %v705 = vunpack.c.l.b16 %v629
        %v706 = vunpack.c.l.b16 %v630
        %v707 = vunpack.c.l.b16 %v631
        %v708 = vunpack.c.l.b16 %v632
        %v709 = vunpack.c.l.b16 %v633
        %v710 = vunpack.c.l.b16 %v634
        %v711 = vunpack.c.l.b16 %v635
        %v712 = vunpack.c.l.b16 %v636
        %v713 = vunpack.c.l.b16 %v637
        %v714 = vpack.c.b16 %v683, %v682
        %v715 = vpack.c.b16 %v685, %v684
        %v716 = vpack.c.b16 %v687, %v686
        %v717 = vpack.c.b16 %v689, %v688
        %v718 = vpack.c.b16 %v691, %v690
        %v719 = vpack.c.b16 %v693, %v692
        %v720 = vpack.c.b16 %v695, %v694
        %v721 = vpack.c.b16 %v697, %v696
        %v722 = vpack.c.b16 %v699, %v698
        %v723 = vpack.c.b16 %v701, %v700
        %v724 = vpack.c.b16 %v703, %v702
        %v725 = vpack.c.b16 %v705, %v704
        %v726 = vpack.c.b16 %v707, %v706
        %v727 = vpack.c.b16 %v709, %v708
        %v728 = vpack.c.b16 %v711, %v710
        %v729 = vpack.c.b16 %v713, %v712
        %v735 = vunpack.c.l.b16 %v638
        %v736 = vunpack.c.l.b16 %v639
        %v737 = vunpack.c.l.b16 %v640
        %v738 = vunpack.c.l.b16 %v641
        %v739 = vunpack.c.l.b16 %v642
        %v740 = vpack.c.b16 %v736, %v735
        %v741 = vpack.c.b16 %v738, %v737
        %v742 = vpack.c.b16 %v739, %v739
        %vm745 = vcmask 293888
        %v747 = vsel %vm745, %v714, 0
        %v750 = vsel %vm745, %v715, 0
        %v753 = vsel %vm745, %v716, 0
        %v756 = vsel %vm745, %v717, 0
        %v759 = vsel %vm745, %v718, 0
        %v762 = vsel %vm745, %v719, 0
        %v765 = vsel %vm745, %v720, 0
        %v768 = vsel %vm745, %v721, 0
        %v771 = vsel %vm745, %v722, 0
        %v774 = vsel %vm745, %v723, 0
        %v777 = vsel %vm745, %v724, 0
        %v780 = vsel %vm745, %v725, 0
        %v783 = vsel %vm745, %v726, 0
        %v786 = vsel %vm745, %v727, 0
        %v789 = vsel %vm745, %v728, 0
        %v792 = vsel %vm745, %v729, 0
        %vm794 = vcmask 1041408
        %v796 = vsel %vm794, %v742, 0
        %798 = vmatprep.subr.bf16.mxu0 0
        %799 = vmatpush1.bf16.msra.mxu0 %v740
        %800 = vmatprep.subr.bf16.mxu0 0
        %801 = vmatpush1.bf16.msra.mxu0 %v741
        %802 = vmatprep.subr.bf16.mxu0 0
        %803 = vmatpush1.bf16.msra.mxu0 %v796
        %804 = vmatprep.subr.bf16.mxu0 0
        %805 = vmatpush1.bf16.msra.mxu0 0
        %806 = vmatprep.subr.bf16.mxu0 0
        %807 = vmatpush1.bf16.msra.mxu0 0
        %808 = vmatprep.subr.bf16.mxu0 0
        %809 = vmatpush1.bf16.msra.mxu0 0
        %810 = vmatprep.subr.bf16.mxu0 0
        %811 = vmatpush1.bf16.msra.mxu0 0
        %812 = vmatprep.subr.bf16.mxu0 0
        %813 = vmatpush1.bf16.msra.mxu0 0
        %814 = vmatprep.subr.bf16.mxu0 0
        %815 = vmatpush1.bf16.msra.mxu0 0
        %816 = vmatprep.subr.bf16.mxu0 0
        %817 = vmatpush1.bf16.msra.mxu0 0
        %818 = vmatprep.subr.bf16.mxu0 0
        %819 = vmatpush1.bf16.msra.mxu0 0
        %820 = vmatprep.subr.bf16.mxu0 0
        %821 = vmatpush1.bf16.msra.mxu0 0
        %822 = vmatprep.subr.bf16.mxu0 0
        %823 = vmatpush1.bf16.msra.mxu0 0
        %824 = vmatprep.subr.bf16.mxu0 0
        %825 = vmatpush1.bf16.msra.mxu0 0
        %826 = vmatprep.subr.bf16.mxu0 0
        %827 = vmatpush1.bf16.msra.mxu0 0
        %828 = vmatprep.subr.bf16.mxu0 0
        %829 = vmatpush1.bf16.msra.mxu0 0
        %830 = vmatprep.mubr.bf16.mxu0 0
        %831 = vmatmul.mubr.bf16.gmra.mrb[0].mxu0 %v747
        %v832 = vpop.f32.mrb[0].mxu0
        %v833 = vadd.f32 %v648, %v832
        %v834 = vpop.f32.mrb[0].mxu0
        %v835 = vpop.f32.mrb[0].mxu0
        %v836 = vadd.f32 %v648, %v835
        %v837 = vpop.f32.mrb[0].mxu0
        %838 = vmatprep.mubr.bf16.mxu0 0
        %839 = vmatmul.mubr.bf16.gmra.mrb[0].mxu0 %v750
        %v840 = vpop.f32.mrb[0].mxu0
        %v841 = vadd.f32 %v648, %v840
        %v842 = vpop.f32.mrb[0].mxu0
        %v843 = vpop.f32.mrb[0].mxu0
        %v844 = vadd.f32 %v648, %v843
        %v845 = vpop.f32.mrb[0].mxu0
        %846 = vmatprep.mubr.bf16.mxu0 0
        %847 = vmatmul.mubr.bf16.gmra.mrb[0].mxu0 %v753
        %v848 = vpop.f32.mrb[0].mxu0
        %v849 = vadd.f32 %v648, %v848
        %v850 = vpop.f32.mrb[0].mxu0
        %v851 = vpop.f32.mrb[0].mxu0
        %v852 = vadd.f32 %v648, %v851
        %v853 = vpop.f32.mrb[0].mxu0
        %854 = vmatprep.mubr.bf16.mxu0 0
        %855 = vmatmul.mubr.bf16.gmra.mrb[0].mxu0 %v756
        %v856 = vpop.f32.mrb[0].mxu0
        %v857 = vadd.f32 %v648, %v856
        %v858 = vpop.f32.mrb[0].mxu0
        %v859 = vpop.f32.mrb[0].mxu0
        %v860 = vadd.f32 %v648, %v859
        %v861 = vpop.f32.mrb[0].mxu0
        %862 = vmatprep.mubr.bf16.mxu0 0
        %863 = vmatmul.mubr.bf16.gmra.mrb[0].mxu0 %v759
        %v864 = vpop.f32.mrb[0].mxu0
        %v865 = vadd.f32 %v648, %v864
        %v866 = vpop.f32.mrb[0].mxu0
        %v867 = vpop.f32.mrb[0].mxu0
        %v868 = vadd.f32 %v648, %v867
        %v869 = vpop.f32.mrb[0].mxu0
        %870 = vmatprep.mubr.bf16.mxu0 0
        %871 = vmatmul.mubr.bf16.gmra.mrb[0].mxu0 %v762
        %v872 = vpop.f32.mrb[0].mxu0
        %v873 = vadd.f32 %v648, %v872
        %v874 = vpop.f32.mrb[0].mxu0
        %v875 = vpop.f32.mrb[0].mxu0
        %v876 = vadd.f32 %v648, %v875
        %v877 = vpop.f32.mrb[0].mxu0
        %878 = vmatprep.mubr.bf16.mxu0 0
        %879 = vmatmul.mubr.bf16.gmra.mrb[0].mxu0 %v765
        %v880 = vpop.f32.mrb[0].mxu0
        %v881 = vadd.f32 %v648, %v880
        %v882 = vpop.f32.mrb[0].mxu0
        %v883 = vpop.f32.mrb[0].mxu0
        %v884 = vadd.f32 %v648, %v883
        %v885 = vpop.f32.mrb[0].mxu0
        %886 = vmatprep.mubr.bf16.mxu0 0
        %887 = vmatmul.mubr.bf16.gmra.mrb[0].mxu0 %v768
        %v888 = vpop.f32.mrb[0].mxu0
        %v889 = vadd.f32 %v648, %v888
        %v890 = vpop.f32.mrb[0].mxu0
        %v891 = vpop.f32.mrb[0].mxu0
        %v892 = vadd.f32 %v648, %v891
        %v893 = vpop.f32.mrb[0].mxu0
        %894 = vmatprep.mubr.bf16.mxu0 0
        %895 = vmatmul.mubr.bf16.gmra.mrb[0].mxu0 %v771
        %v896 = vpop.f32.mrb[0].mxu0
        %v897 = vadd.f32 %v648, %v896
        %v898 = vpop.f32.mrb[0].mxu0
        %v899 = vpop.f32.mrb[0].mxu0
        %v900 = vadd.f32 %v648, %v899
        %v901 = vpop.f32.mrb[0].mxu0
        %902 = vmatprep.mubr.bf16.mxu0 0
        %903 = vmatmul.mubr.bf16.gmra.mrb[0].mxu0 %v774
        %v904 = vpop.f32.mrb[0].mxu0
        %v905 = vadd.f32 %v648, %v904
        %v906 = vpop.f32.mrb[0].mxu0
        %v907 = vpop.f32.mrb[0].mxu0
        %v908 = vadd.f32 %v648, %v907
        %v909 = vpop.f32.mrb[0].mxu0
        %910 = vmatprep.mubr.bf16.mxu0 0
        %911 = vmatmul.mubr.bf16.gmra.mrb[0].mxu0 %v777
        %v912 = vpop.f32.mrb[0].mxu0
        %v913 = vadd.f32 %v648, %v912
        %v914 = vpop.f32.mrb[0].mxu0
        %v915 = vpop.f32.mrb[0].mxu0
        %v916 = vadd.f32 %v648, %v915
        %v917 = vpop.f32.mrb[0].mxu0
        %918 = vmatprep.mubr.bf16.mxu0 0
        %919 = vmatmul.mubr.bf16.gmra.mrb[0].mxu0 %v780
        %v920 = vpop.f32.mrb[0].mxu0
        %v921 = vadd.f32 %v648, %v920
        %v922 = vpop.f32.mrb[0].mxu0
        %v923 = vpop.f32.mrb[0].mxu0
        %v924 = vadd.f32 %v648, %v923
        %v925 = vpop.f32.mrb[0].mxu0
        %926 = vmatprep.mubr.bf16.mxu0 0
        %927 = vmatmul.mubr.bf16.gmra.mrb[0].mxu0 %v783
        %v928 = vpop.f32.mrb[0].mxu0
        %v929 = vadd.f32 %v648, %v928
        %v930 = vpop.f32.mrb[0].mxu0
        %v931 = vpop.f32.mrb[0].mxu0
        %v932 = vadd.f32 %v648, %v931
        %v933 = vpop.f32.mrb[0].mxu0
        %934 = vmatprep.mubr.bf16.mxu0 0
        %935 = vmatmul.mubr.bf16.gmra.mrb[0].mxu0 %v786
        %v936 = vpop.f32.mrb[0].mxu0
        %v937 = vadd.f32 %v648, %v936
        %v938 = vpop.f32.mrb[0].mxu0
        %v939 = vpop.f32.mrb[0].mxu0
        %v940 = vadd.f32 %v648, %v939
        %v941 = vpop.f32.mrb[0].mxu0
        %942 = vmatprep.mubr.bf16.mxu0 0
        %943 = vmatmul.mubr.bf16.gmra.mrb[0].mxu0 %v789
        %v944 = vpop.f32.mrb[0].mxu0
        %v945 = vadd.f32 %v648, %v944
        %v946 = vpop.f32.mrb[0].mxu0
        %v947 = vpop.f32.mrb[0].mxu0
        %v948 = vadd.f32 %v648, %v947
        %v949 = vpop.f32.mrb[0].mxu0
        %950 = vmatprep.mubr.bf16.mxu0 0
        %951 = vmatmul.mubr.bf16.gmra.mrb[0].mxu0 %v792
        %v952 = vpop.f32.mrb[0].mxu0
        %v953 = vadd.f32 %v648, %v952
        %v954 = vpop.f32.mrb[0].mxu0
        %v955 = vpop.f32.mrb[0].mxu0
        %v956 = vadd.f32 %v648, %v955
        %v957 = vpop.f32.mrb[0].mxu0
        %958 = vdwg.mxu0
        %vm959 = vcmp.ge.f32.partialorder %v833, 0.0
        %vm960 = vcmp.ge.f32.partialorder %v836, 0.0
        %vm961 = vcmp.ge.f32.partialorder %v841, 0.0
        %vm962 = vcmp.ge.f32.partialorder %v844, 0.0
        %vm963 = vcmp.ge.f32.partialorder %v849, 0.0
        %vm964 = vcmp.ge.f32.partialorder %v852, 0.0
        %vm965 = vcmp.ge.f32.partialorder %v857, 0.0
        %vm966 = vcmp.ge.f32.partialorder %v860, 0.0
        %vm967 = vcmp.ge.f32.partialorder %v865, 0.0
        %vm968 = vcmp.ge.f32.partialorder %v868, 0.0
        %vm969 = vcmp.ge.f32.partialorder %v873, 0.0
        %vm970 = vcmp.ge.f32.partialorder %v876, 0.0
        %vm971 = vcmp.ge.f32.partialorder %v881, 0.0
        %vm972 = vcmp.ge.f32.partialorder %v884, 0.0
        %vm973 = vcmp.ge.f32.partialorder %v889, 0.0
        %vm974 = vcmp.ge.f32.partialorder %v892, 0.0
        %vm975 = vcmp.ge.f32.partialorder %v897, 0.0
        %vm976 = vcmp.ge.f32.partialorder %v900, 0.0
        %vm977 = vcmp.ge.f32.partialorder %v905, 0.0
        %vm978 = vcmp.ge.f32.partialorder %v908, 0.0
        %vm979 = vcmp.ge.f32.partialorder %v913, 0.0
        %vm980 = vcmp.ge.f32.partialorder %v916, 0.0
        %vm981 = vcmp.ge.f32.partialorder %v921, 0.0
        %vm982 = vcmp.ge.f32.partialorder %v924, 0.0
        %vm983 = vcmp.ge.f32.partialorder %v929, 0.0
        %vm984 = vcmp.ge.f32.partialorder %v932, 0.0
        %vm985 = vcmp.ge.f32.partialorder %v937, 0.0
        %vm986 = vcmp.ge.f32.partialorder %v940, 0.0
        %vm987 = vcmp.ge.f32.partialorder %v945, 0.0
        %vm988 = vcmp.ge.f32.partialorder %v948, 0.0
        %vm989 = vcmp.ge.f32.partialorder %v953, 0.0
        %vm990 = vcmp.ge.f32.partialorder %v956, 0.0
        %v991 = vstv %s600
        %v992 = vmul.f32 %v991, %v833
        %v993 = vmul.f32 %v991, %v836
        %v994 = vmul.f32 %v991, %v841
        %v995 = vmul.f32 %v991, %v844
        %v996 = vmul.f32 %v991, %v849
        %v997 = vmul.f32 %v991, %v852
        %v998 = vmul.f32 %v991, %v857
        %v999 = vmul.f32 %v991, %v860
        %v1000 = vmul.f32 %v991, %v865
        %v1001 = vmul.f32 %v991, %v868
        %v1002 = vmul.f32 %v991, %v873
        %v1003 = vmul.f32 %v991, %v876
        %v1004 = vmul.f32 %v991, %v881
        %v1005 = vmul.f32 %v991, %v884
        %v1006 = vmul.f32 %v991, %v889
        %v1007 = vmul.f32 %v991, %v892
        %v1008 = vmul.f32 %v991, %v897
        %v1009 = vmul.f32 %v991, %v900
        %v1010 = vmul.f32 %v991, %v905
        %v1011 = vmul.f32 %v991, %v908
        %v1012 = vmul.f32 %v991, %v913
        %v1013 = vmul.f32 %v991, %v916
        %v1014 = vmul.f32 %v991, %v921
        %v1015 = vmul.f32 %v991, %v924
        %v1016 = vmul.f32 %v991, %v929
        %v1017 = vmul.f32 %v991, %v932
        %v1018 = vmul.f32 %v991, %v937
        %v1019 = vmul.f32 %v991, %v940
        %v1020 = vmul.f32 %v991, %v945
        %v1021 = vmul.f32 %v991, %v948
        %v1022 = vmul.f32 %v991, %v953
        %v1023 = vmul.f32 %v991, %v956
        %v1024 = vsel %vm959, %v833, %v992
        %v1025 = vsel %vm960, %v836, %v993
        %v1026 = vsel %vm961, %v841, %v994
        %v1027 = vsel %vm962, %v844, %v995
        %v1028 = vsel %vm963, %v849, %v996
        %v1029 = vsel %vm964, %v852, %v997
        %v1030 = vsel %vm965, %v857, %v998
        %v1031 = vsel %vm966, %v860, %v999
        %v1032 = vsel %vm967, %v865, %v1000
        %v1033 = vsel %vm968, %v868, %v1001
        %v1034 = vsel %vm969, %v873, %v1002
        %v1035 = vsel %vm970, %v876, %v1003
        %v1036 = vsel %vm971, %v881, %v1004
        %v1037 = vsel %vm972, %v884, %v1005
        %v1038 = vsel %vm973, %v889, %v1006
        %v1039 = vsel %vm974, %v892, %v1007
        %v1040 = vsel %vm975, %v897, %v1008
        %v1041 = vsel %vm976, %v900, %v1009
        %v1042 = vsel %vm977, %v905, %v1010
        %v1043 = vsel %vm978, %v908, %v1011
        %v1044 = vsel %vm979, %v913, %v1012
        %v1045 = vsel %vm980, %v916, %v1013
        %v1046 = vsel %vm981, %v921, %v1014
        %v1047 = vsel %vm982, %v924, %v1015
        %v1048 = vsel %vm983, %v929, %v1016
        %v1049 = vsel %vm984, %v932, %v1017
        %v1050 = vsel %vm985, %v937, %v1018
        %v1051 = vsel %vm986, %v940, %v1019
        %v1052 = vsel %vm987, %v945, %v1020
        %v1053 = vsel %vm988, %v948, %v1021
        %v1054 = vsel %vm989, %v953, %v1022
        %v1055 = vsel %vm990, %v956, %v1023
        %v1056 = vpack.c.bf16 %v1025, %v1024
        %v1057 = vpack.c.bf16 %v1027, %v1026
        %v1058 = vpack.c.bf16 %v1029, %v1028
        %v1059 = vpack.c.bf16 %v1031, %v1030
        %v1060 = vpack.c.bf16 %v1033, %v1032
        %v1061 = vpack.c.bf16 %v1035, %v1034
        %v1062 = vpack.c.bf16 %v1037, %v1036
        %v1063 = vpack.c.bf16 %v1039, %v1038
        %v1064 = vpack.c.bf16 %v1041, %v1040
        %v1065 = vpack.c.bf16 %v1043, %v1042
        %v1066 = vpack.c.bf16 %v1045, %v1044
        %v1067 = vpack.c.bf16 %v1047, %v1046
        %v1068 = vpack.c.bf16 %v1049, %v1048
        %v1069 = vpack.c.bf16 %v1051, %v1050
        %v1070 = vpack.c.bf16 %v1053, %v1052
        %v1071 = vpack.c.bf16 %v1055, %v1054
        %v1072 = vld [vmem:[#allocation5] sm:$0xf]
        %v1073 = vld [vmem:[#allocation5 + $0x4] sm:$0xf]
        %v1074 = vld [vmem:[#allocation5 + $0x8] sm:$0xf]
        %v1075 = vld [vmem:[#allocation5 + $0xc] sm:$0xf]
        %v1080 = vunpack.c.l.b16 %v1072
        %v1081 = vunpack.c.l.b16 %v1073
        %v1082 = vunpack.c.l.b16 %v1074
        %v1083 = vunpack.c.l.b16 %v1075
        %v1084 = vpack.c.b16 %v1081, %v1080
        %v1085 = vpack.c.b16 %v1083, %v1082
        %vm1088 = vcmask 261120
        %v1090 = vsel %vm1088, %v1056, 0
        %v1093 = vsel %vm1088, %v1057, 0
        %v1096 = vsel %vm1088, %v1058, 0
        %v1099 = vsel %vm1088, %v1059, 0
        %v1102 = vsel %vm1088, %v1060, 0
        %v1105 = vsel %vm1088, %v1061, 0
        %v1108 = vsel %vm1088, %v1062, 0
        %v1111 = vsel %vm1088, %v1063, 0
        %v1114 = vsel %vm1088, %v1064, 0
        %v1117 = vsel %vm1088, %v1065, 0
        %v1120 = vsel %vm1088, %v1066, 0
        %v1123 = vsel %vm1088, %v1067, 0
        %v1126 = vsel %vm1088, %v1068, 0
        %v1129 = vsel %vm1088, %v1069, 0
        %v1132 = vsel %vm1088, %v1070, 0
        %v1135 = vsel %vm1088, %v1071, 0
        %1137 = vmatprep.subr.bf16.mxu0 0
        %1138 = vmatpush1.bf16.msra.mxu0 %v1084
        %1139 = vmatprep.subr.bf16.mxu0 0
        %1140 = vmatpush1.bf16.msra.mxu0 %v1085
        %1141 = vmatprep.subr.bf16.mxu0 0
        %1142 = vmatpush1.bf16.msra.mxu0 0
        %1143 = vmatprep.subr.bf16.mxu0 0
        %1144 = vmatpush1.bf16.msra.mxu0 0
        %1145 = vmatprep.subr.bf16.mxu0 0
        %1146 = vmatpush1.bf16.msra.mxu0 0
        %1147 = vmatprep.subr.bf16.mxu0 0
        %1148 = vmatpush1.bf16.msra.mxu0 0
        %1149 = vmatprep.subr.bf16.mxu0 0
        %1150 = vmatpush1.bf16.msra.mxu0 0
        %1151 = vmatprep.subr.bf16.mxu0 0
        %1152 = vmatpush1.bf16.msra.mxu0 0
        %1153 = vmatprep.subr.bf16.mxu0 0
        %1154 = vmatpush1.bf16.msra.mxu0 0
        %1155 = vmatprep.subr.bf16.mxu0 0
        %1156 = vmatpush1.bf16.msra.mxu0 0
        %1157 = vmatprep.subr.bf16.mxu0 0
        %1158 = vmatpush1.bf16.msra.mxu0 0
        %1159 = vmatprep.subr.bf16.mxu0 0
        %1160 = vmatpush1.bf16.msra.mxu0 0
        %1161 = vmatprep.subr.bf16.mxu0 0
        %1162 = vmatpush1.bf16.msra.mxu0 0
        %1163 = vmatprep.subr.bf16.mxu0 0
        %1164 = vmatpush1.bf16.msra.mxu0 0
        %1165 = vmatprep.subr.bf16.mxu0 0
        %1166 = vmatpush1.bf16.msra.mxu0 0
        %1167 = vmatprep.subr.bf16.mxu0 0
        %1168 = vmatpush1.bf16.msra.mxu0 0
        %1169 = vmatprep.mubr.bf16.mxu0 0
        %1170 = vmatmul.mubr.bf16.gmra.mrb[0].mxu0 %v1090
        %v1171 = vpop.f32.mrb[0].mxu0
        %v1172 = vadd.f32 0.0, %v1171
        %v1173 = vpop.f32.mrb[0].mxu0
        %v1174 = vpop.f32.mrb[0].mxu0
        %v1175 = vadd.f32 0.0, %v1174
        %v1176 = vpop.f32.mrb[0].mxu0
        %1177 = vmatprep.mubr.bf16.mxu0 0
        %1178 = vmatmul.mubr.bf16.gmra.mrb[0].mxu0 %v1093
        %v1179 = vpop.f32.mrb[0].mxu0
        %v1180 = vadd.f32 0.0, %v1179
        %v1181 = vpop.f32.mrb[0].mxu0
        %v1182 = vpop.f32.mrb[0].mxu0
        %v1183 = vadd.f32 0.0, %v1182
        %v1184 = vpop.f32.mrb[0].mxu0
        %1185 = vmatprep.mubr.bf16.mxu0 0
        %1186 = vmatmul.mubr.bf16.gmra.mrb[0].mxu0 %v1096
        %v1187 = vpop.f32.mrb[0].mxu0
        %v1188 = vadd.f32 0.0, %v1187
        %v1189 = vpop.f32.mrb[0].mxu0
        %v1190 = vpop.f32.mrb[0].mxu0
        %v1191 = vadd.f32 0.0, %v1190
        %v1192 = vpop.f32.mrb[0].mxu0
        %1193 = vmatprep.mubr.bf16.mxu0 0
        %1194 = vmatmul.mubr.bf16.gmra.mrb[0].mxu0 %v1099
        %v1195 = vpop.f32.mrb[0].mxu0
        %v1196 = vadd.f32 0.0, %v1195
        %v1197 = vpop.f32.mrb[0].mxu0
        %v1198 = vpop.f32.mrb[0].mxu0
        %v1199 = vadd.f32 0.0, %v1198
        %v1200 = vpop.f32.mrb[0].mxu0
        %1201 = vmatprep.mubr.bf16.mxu0 0
        %1202 = vmatmul.mubr.bf16.gmra.mrb[0].mxu0 %v1102
        %v1203 = vpop.f32.mrb[0].mxu0
        %v1204 = vadd.f32 0.0, %v1203
        %v1205 = vpop.f32.mrb[0].mxu0
        %v1206 = vpop.f32.mrb[0].mxu0
        %v1207 = vadd.f32 0.0, %v1206
        %v1208 = vpop.f32.mrb[0].mxu0
        %1209 = vmatprep.mubr.bf16.mxu0 0
        %1210 = vmatmul.mubr.bf16.gmra.mrb[0].mxu0 %v1105
        %v1211 = vpop.f32.mrb[0].mxu0
        %v1212 = vadd.f32 0.0, %v1211
        %v1213 = vpop.f32.mrb[0].mxu0
        %v1214 = vpop.f32.mrb[0].mxu0
        %v1215 = vadd.f32 0.0, %v1214
        %v1216 = vpop.f32.mrb[0].mxu0
        %1217 = vmatprep.mubr.bf16.mxu0 0
        %1218 = vmatmul.mubr.bf16.gmra.mrb[0].mxu0 %v1108
        %v1219 = vpop.f32.mrb[0].mxu0
        %v1220 = vadd.f32 0.0, %v1219
        %v1221 = vpop.f32.mrb[0].mxu0
        %v1222 = vpop.f32.mrb[0].mxu0
        %v1223 = vadd.f32 0.0, %v1222
        %v1224 = vpop.f32.mrb[0].mxu0
        %1225 = vmatprep.mubr.bf16.mxu0 0
        %1226 = vmatmul.mubr.bf16.gmra.mrb[0].mxu0 %v1111
        %v1227 = vpop.f32.mrb[0].mxu0
        %v1228 = vadd.f32 0.0, %v1227
        %v1229 = vpop.f32.mrb[0].mxu0
        %v1230 = vpop.f32.mrb[0].mxu0
        %v1231 = vadd.f32 0.0, %v1230
        %v1232 = vpop.f32.mrb[0].mxu0
        %1233 = vmatprep.mubr.bf16.mxu0 0
        %1234 = vmatmul.mubr.bf16.gmra.mrb[0].mxu0 %v1114
        %v1235 = vpop.f32.mrb[0].mxu0
        %v1236 = vadd.f32 0.0, %v1235
        %v1237 = vpop.f32.mrb[0].mxu0
        %v1238 = vpop.f32.mrb[0].mxu0
        %v1239 = vadd.f32 0.0, %v1238
        %v1240 = vpop.f32.mrb[0].mxu0
        %1241 = vmatprep.mubr.bf16.mxu0 0
        %1242 = vmatmul.mubr.bf16.gmra.mrb[0].mxu0 %v1117
        %v1243 = vpop.f32.mrb[0].mxu0
        %v1244 = vadd.f32 0.0, %v1243
        %v1245 = vpop.f32.mrb[0].mxu0
        %v1246 = vpop.f32.mrb[0].mxu0
        %v1247 = vadd.f32 0.0, %v1246
        %v1248 = vpop.f32.mrb[0].mxu0
        %1249 = vmatprep.mubr.bf16.mxu0 0
        %1250 = vmatmul.mubr.bf16.gmra.mrb[0].mxu0 %v1120
        %v1251 = vpop.f32.mrb[0].mxu0
        %v1252 = vadd.f32 0.0, %v1251
        %v1253 = vpop.f32.mrb[0].mxu0
        %v1254 = vpop.f32.mrb[0].mxu0
        %v1255 = vadd.f32 0.0, %v1254
        %v1256 = vpop.f32.mrb[0].mxu0
        %1257 = vmatprep.mubr.bf16.mxu0 0
        %1258 = vmatmul.mubr.bf16.gmra.mrb[0].mxu0 %v1123
        %v1259 = vpop.f32.mrb[0].mxu0
        %v1260 = vadd.f32 0.0, %v1259
        %v1261 = vpop.f32.mrb[0].mxu0
        %v1262 = vpop.f32.mrb[0].mxu0
        %v1263 = vadd.f32 0.0, %v1262
        %v1264 = vpop.f32.mrb[0].mxu0
        %1265 = vmatprep.mubr.bf16.mxu0 0
        %1266 = vmatmul.mubr.bf16.gmra.mrb[0].mxu0 %v1126
        %v1267 = vpop.f32.mrb[0].mxu0
        %v1268 = vadd.f32 0.0, %v1267
        %v1269 = vpop.f32.mrb[0].mxu0
        %v1270 = vpop.f32.mrb[0].mxu0
        %v1271 = vadd.f32 0.0, %v1270
        %v1272 = vpop.f32.mrb[0].mxu0
        %1273 = vmatprep.mubr.bf16.mxu0 0
        %1274 = vmatmul.mubr.bf16.gmra.mrb[0].mxu0 %v1129
        %v1275 = vpop.f32.mrb[0].mxu0
        %v1276 = vadd.f32 0.0, %v1275
        %v1277 = vpop.f32.mrb[0].mxu0
        %v1278 = vpop.f32.mrb[0].mxu0
        %v1279 = vadd.f32 0.0, %v1278
        %v1280 = vpop.f32.mrb[0].mxu0
        %1281 = vmatprep.mubr.bf16.mxu0 0
        %1282 = vmatmul.mubr.bf16.gmra.mrb[0].mxu0 %v1132
        %v1283 = vpop.f32.mrb[0].mxu0
        %v1284 = vadd.f32 0.0, %v1283
        %v1285 = vpop.f32.mrb[0].mxu0
        %v1286 = vpop.f32.mrb[0].mxu0
        %v1287 = vadd.f32 0.0, %v1286
        %v1288 = vpop.f32.mrb[0].mxu0
        %1289 = vmatprep.mubr.bf16.mxu0 0
        %1290 = vmatmul.mubr.bf16.gmra.mrb[0].mxu0 %v1135
        %v1291 = vpop.f32.mrb[0].mxu0
        %v1292 = vadd.f32 0.0, %v1291
        %v1293 = vpop.f32.mrb[0].mxu0
        %v1294 = vpop.f32.mrb[0].mxu0
        %v1295 = vadd.f32 0.0, %v1294
        %v1296 = vpop.f32.mrb[0].mxu0
        %1297 = vdwg.mxu0
        %v1298 = vld [vmem:[#allocation7] sm:$0x1]
        %v1300 = vlaneseq
        %v1301 = vshrl.u32 %v1300, 7
        %v1302 = vsub.s32 0, %v1301
        %v1303 = vrot.slane %v1298, %v1302
        %v1305 = vadd.f32 %v1172, %v1303
        %v1306 = vadd.f32 %v1175, %v1303
        %v1307 = vadd.f32 %v1180, %v1303
        %v1308 = vadd.f32 %v1183, %v1303
        %v1309 = vadd.f32 %v1188, %v1303
        %v1310 = vadd.f32 %v1191, %v1303
        %v1311 = vadd.f32 %v1196, %v1303
        %v1312 = vadd.f32 %v1199, %v1303
        %v1313 = vadd.f32 %v1204, %v1303
        %v1314 = vadd.f32 %v1207, %v1303
        %v1315 = vadd.f32 %v1212, %v1303
        %v1316 = vadd.f32 %v1215, %v1303
        %v1317 = vadd.f32 %v1220, %v1303
        %v1318 = vadd.f32 %v1223, %v1303
        %v1319 = vadd.f32 %v1228, %v1303
        %v1320 = vadd.f32 %v1231, %v1303
        %v1321 = vadd.f32 %v1236, %v1303
        %v1322 = vadd.f32 %v1239, %v1303
        %v1323 = vadd.f32 %v1244, %v1303
        %v1324 = vadd.f32 %v1247, %v1303
        %v1325 = vadd.f32 %v1252, %v1303
        %v1326 = vadd.f32 %v1255, %v1303
        %v1327 = vadd.f32 %v1260, %v1303
        %v1328 = vadd.f32 %v1263, %v1303
        %v1329 = vadd.f32 %v1268, %v1303
        %v1330 = vadd.f32 %v1271, %v1303
        %v1331 = vadd.f32 %v1276, %v1303
        %v1332 = vadd.f32 %v1279, %v1303
        %v1333 = vadd.f32 %v1284, %v1303
        %v1334 = vadd.f32 %v1287, %v1303
        %v1335 = vadd.f32 %v1292, %v1303
        %v1336 = vadd.f32 %v1295, %v1303
        %vm1337 = vcmp.ge.f32.partialorder %v1305, 0.0
        %vm1338 = vcmp.ge.f32.partialorder %v1306, 0.0
        %vm1339 = vcmp.ge.f32.partialorder %v1307, 0.0
        %vm1340 = vcmp.ge.f32.partialorder %v1308, 0.0
        %vm1341 = vcmp.ge.f32.partialorder %v1309, 0.0
        %vm1342 = vcmp.ge.f32.partialorder %v1310, 0.0
        %vm1343 = vcmp.ge.f32.partialorder %v1311, 0.0
        %vm1344 = vcmp.ge.f32.partialorder %v1312, 0.0
        %vm1345 = vcmp.ge.f32.partialorder %v1313, 0.0
        %vm1346 = vcmp.ge.f32.partialorder %v1314, 0.0
        %vm1347 = vcmp.ge.f32.partialorder %v1315, 0.0
        %vm1348 = vcmp.ge.f32.partialorder %v1316, 0.0
        %vm1349 = vcmp.ge.f32.partialorder %v1317, 0.0
        %vm1350 = vcmp.ge.f32.partialorder %v1318, 0.0
        %vm1351 = vcmp.ge.f32.partialorder %v1319, 0.0
        %vm1352 = vcmp.ge.f32.partialorder %v1320, 0.0
        %vm1353 = vcmp.ge.f32.partialorder %v1321, 0.0
        %vm1354 = vcmp.ge.f32.partialorder %v1322, 0.0
        %vm1355 = vcmp.ge.f32.partialorder %v1323, 0.0
        %vm1356 = vcmp.ge.f32.partialorder %v1324, 0.0
        %vm1357 = vcmp.ge.f32.partialorder %v1325, 0.0
        %vm1358 = vcmp.ge.f32.partialorder %v1326, 0.0
        %vm1359 = vcmp.ge.f32.partialorder %v1327, 0.0
        %vm1360 = vcmp.ge.f32.partialorder %v1328, 0.0
        %vm1361 = vcmp.ge.f32.partialorder %v1329, 0.0
        %vm1362 = vcmp.ge.f32.partialorder %v1330, 0.0
        %vm1363 = vcmp.ge.f32.partialorder %v1331, 0.0
        %vm1364 = vcmp.ge.f32.partialorder %v1332, 0.0
        %vm1365 = vcmp.ge.f32.partialorder %v1333, 0.0
        %vm1366 = vcmp.ge.f32.partialorder %v1334, 0.0
        %vm1367 = vcmp.ge.f32.partialorder %v1335, 0.0
        %vm1368 = vcmp.ge.f32.partialorder %v1336, 0.0
        %v1369 = vstv %s601
        %v1370 = vmul.f32 %v1369, %v1305
        %v1371 = vmul.f32 %v1369, %v1306
        %v1372 = vmul.f32 %v1369, %v1307
        %v1373 = vmul.f32 %v1369, %v1308
        %v1374 = vmul.f32 %v1369, %v1309
        %v1375 = vmul.f32 %v1369, %v1310
        %v1376 = vmul.f32 %v1369, %v1311
        %v1377 = vmul.f32 %v1369, %v1312
        %v1378 = vmul.f32 %v1369, %v1313
        %v1379 = vmul.f32 %v1369, %v1314
        %v1380 = vmul.f32 %v1369, %v1315
        %v1381 = vmul.f32 %v1369, %v1316
        %v1382 = vmul.f32 %v1369, %v1317
        %v1383 = vmul.f32 %v1369, %v1318
        %v1384 = vmul.f32 %v1369, %v1319
        %v1385 = vmul.f32 %v1369, %v1320
        %v1386 = vmul.f32 %v1369, %v1321
        %v1387 = vmul.f32 %v1369, %v1322
        %v1388 = vmul.f32 %v1369, %v1323
        %v1389 = vmul.f32 %v1369, %v1324
        %v1390 = vmul.f32 %v1369, %v1325
        %v1391 = vmul.f32 %v1369, %v1326
        %v1392 = vmul.f32 %v1369, %v1327
        %v1393 = vmul.f32 %v1369, %v1328
        %v1394 = vmul.f32 %v1369, %v1329
        %v1395 = vmul.f32 %v1369, %v1330
        %v1396 = vmul.f32 %v1369, %v1331
        %v1397 = vmul.f32 %v1369, %v1332
        %v1398 = vmul.f32 %v1369, %v1333
        %v1399 = vmul.f32 %v1369, %v1334
        %v1400 = vmul.f32 %v1369, %v1335
        %v1401 = vmul.f32 %v1369, %v1336
        %v1402 = vsel %vm1337, %v1305, %v1370
        %v1403 = vsel %vm1338, %v1306, %v1371
        %v1404 = vsel %vm1339, %v1307, %v1372
        %v1405 = vsel %vm1340, %v1308, %v1373
        %v1406 = vsel %vm1341, %v1309, %v1374
        %v1407 = vsel %vm1342, %v1310, %v1375
        %v1408 = vsel %vm1343, %v1311, %v1376
        %v1409 = vsel %vm1344, %v1312, %v1377
        %v1410 = vsel %vm1345, %v1313, %v1378
        %v1411 = vsel %vm1346, %v1314, %v1379
        %v1412 = vsel %vm1347, %v1315, %v1380
        %v1413 = vsel %vm1348, %v1316, %v1381
        %v1414 = vsel %vm1349, %v1317, %v1382
        %v1415 = vsel %vm1350, %v1318, %v1383
        %v1416 = vsel %vm1351, %v1319, %v1384
        %v1417 = vsel %vm1352, %v1320, %v1385
        %v1418 = vsel %vm1353, %v1321, %v1386
        %v1419 = vsel %vm1354, %v1322, %v1387
        %v1420 = vsel %vm1355, %v1323, %v1388
        %v1421 = vsel %vm1356, %v1324, %v1389
        %v1422 = vsel %vm1357, %v1325, %v1390
        %v1423 = vsel %vm1358, %v1326, %v1391
        %v1424 = vsel %vm1359, %v1327, %v1392
        %v1425 = vsel %vm1360, %v1328, %v1393
        %v1426 = vsel %vm1361, %v1329, %v1394
        %v1427 = vsel %vm1362, %v1330, %v1395
        %v1428 = vsel %vm1363, %v1331, %v1396
        %v1429 = vsel %vm1364, %v1332, %v1397
        %v1430 = vsel %vm1365, %v1333, %v1398
        %v1431 = vsel %vm1366, %v1334, %v1399
        %v1432 = vsel %vm1367, %v1335, %v1400
        %v1433 = vsel %vm1368, %v1336, %v1401
        %v1434 = vpack.c.bf16 %v1403, %v1402
        %v1435 = vpack.c.bf16 %v1405, %v1404
        %v1436 = vpack.c.bf16 %v1407, %v1406
        %v1437 = vpack.c.bf16 %v1409, %v1408
        %v1438 = vpack.c.bf16 %v1411, %v1410
        %v1439 = vpack.c.bf16 %v1413, %v1412
        %v1440 = vpack.c.bf16 %v1415, %v1414
        %v1441 = vpack.c.bf16 %v1417, %v1416
        %v1442 = vpack.c.bf16 %v1419, %v1418
        %v1443 = vpack.c.bf16 %v1421, %v1420
        %v1444 = vpack.c.bf16 %v1423, %v1422
        %v1445 = vpack.c.bf16 %v1425, %v1424
        %v1446 = vpack.c.bf16 %v1427, %v1426
        %v1447 = vpack.c.bf16 %v1429, %v1428
        %v1448 = vpack.c.bf16 %v1431, %v1430
        %v1449 = vpack.c.bf16 %v1433, %v1432
        %v1450 = vld [vmem:[#allocation8] sm:$0xf]
        %v1451 = vld [vmem:[#allocation8 + $0x4] sm:$0xf]
        %v1452 = vld [vmem:[#allocation8 + $0x8] sm:$0xf]
        %v1453 = vld [vmem:[#allocation8 + $0xc] sm:$0xf]
        %v1458 = vunpack.c.l.b16 %v1450
        %v1459 = vunpack.c.l.b16 %v1451
        %v1460 = vunpack.c.l.b16 %v1452
        %v1461 = vunpack.c.l.b16 %v1453
        %v1462 = vpack.c.b16 %v1459, %v1458
        %v1463 = vpack.c.b16 %v1461, %v1460
        %v1467 = vsel %vm1088, %v1434, 0
        %v1470 = vsel %vm1088, %v1435, 0
        %v1473 = vsel %vm1088, %v1436, 0
        %v1476 = vsel %vm1088, %v1437, 0
        %v1479 = vsel %vm1088, %v1438, 0
        %v1482 = vsel %vm1088, %v1439, 0
        %v1485 = vsel %vm1088, %v1440, 0
        %v1488 = vsel %vm1088, %v1441, 0
        %v1491 = vsel %vm1088, %v1442, 0
        %v1494 = vsel %vm1088, %v1443, 0
        %v1497 = vsel %vm1088, %v1444, 0
        %v1500 = vsel %vm1088, %v1445, 0
        %v1503 = vsel %vm1088, %v1446, 0
        %v1506 = vsel %vm1088, %v1447, 0
        %v1509 = vsel %vm1088, %v1448, 0
        %v1512 = vsel %vm1088, %v1449, 0
        %1514 = vmatprep.subr.bf16.mxu0 0
        %1515 = vmatpush1.bf16.msra.mxu0 %v1462
        %1516 = vmatprep.subr.bf16.mxu0 0
        %1517 = vmatpush1.bf16.msra.mxu0 %v1463
        %1518 = vmatprep.subr.bf16.mxu0 0
        %1519 = vmatpush1.bf16.msra.mxu0 0
        %1520 = vmatprep.subr.bf16.mxu0 0
        %1521 = vmatpush1.bf16.msra.mxu0 0
        %1522 = vmatprep.subr.bf16.mxu0 0
        %1523 = vmatpush1.bf16.msra.mxu0 0
        %1524 = vmatprep.subr.bf16.mxu0 0
        %1525 = vmatpush1.bf16.msra.mxu0 0
        %1526 = vmatprep.subr.bf16.mxu0 0
        %1527 = vmatpush1.bf16.msra.mxu0 0
        %1528 = vmatprep.subr.bf16.mxu0 0
        %1529 = vmatpush1.bf16.msra.mxu0 0
        %1530 = vmatprep.subr.bf16.mxu0 0
        %1531 = vmatpush1.bf16.msra.mxu0 0
        %1532 = vmatprep.subr.bf16.mxu0 0
        %1533 = vmatpush1.bf16.msra.mxu0 0
        %1534 = vmatprep.subr.bf16.mxu0 0
        %1535 = vmatpush1.bf16.msra.mxu0 0
        %1536 = vmatprep.subr.bf16.mxu0 0
        %1537 = vmatpush1.bf16.msra.mxu0 0
        %1538 = vmatprep.subr.bf16.mxu0 0
        %1539 = vmatpush1.bf16.msra.mxu0 0
        %1540 = vmatprep.subr.bf16.mxu0 0
        %1541 = vmatpush1.bf16.msra.mxu0 0
        %1542 = vmatprep.subr.bf16.mxu0 0
        %1543 = vmatpush1.bf16.msra.mxu0 0
        %1544 = vmatprep.subr.bf16.mxu0 0
        %1545 = vmatpush1.bf16.msra.mxu0 0
        %1546 = vmatprep.mubr.bf16.mxu0 0
        %1547 = vmatmul.mubr.bf16.gmra.mrb[0].mxu0 %v1467
        %v1548 = vpop.f32.mrb[0].mxu0
        %v1549 = vadd.f32 0.0, %v1548
        %v1550 = vpop.f32.mrb[0].mxu0
        %v1551 = vpop.f32.mrb[0].mxu0
        %v1552 = vadd.f32 0.0, %v1551
        %v1553 = vpop.f32.mrb[0].mxu0
        %1554 = vmatprep.mubr.bf16.mxu0 0
        %1555 = vmatmul.mubr.bf16.gmra.mrb[0].mxu0 %v1470
        %v1556 = vpop.f32.mrb[0].mxu0
        %v1557 = vadd.f32 0.0, %v1556
        %v1558 = vpop.f32.mrb[0].mxu0
        %v1559 = vpop.f32.mrb[0].mxu0
        %v1560 = vadd.f32 0.0, %v1559
        %v1561 = vpop.f32.mrb[0].mxu0
        %1562 = vmatprep.mubr.bf16.mxu0 0
        %1563 = vmatmul.mubr.bf16.gmra.mrb[0].mxu0 %v1473
        %v1564 = vpop.f32.mrb[0].mxu0
        %v1565 = vadd.f32 0.0, %v1564
        %v1566 = vpop.f32.mrb[0].mxu0
        %v1567 = vpop.f32.mrb[0].mxu0
        %v1568 = vadd.f32 0.0, %v1567
        %v1569 = vpop.f32.mrb[0].mxu0
        %1570 = vmatprep.mubr.bf16.mxu0 0
        %1571 = vmatmul.mubr.bf16.gmra.mrb[0].mxu0 %v1476
        %v1572 = vpop.f32.mrb[0].mxu0
        %v1573 = vadd.f32 0.0, %v1572
        %v1574 = vpop.f32.mrb[0].mxu0
        %v1575 = vpop.f32.mrb[0].mxu0
        %v1576 = vadd.f32 0.0, %v1575
        %v1577 = vpop.f32.mrb[0].mxu0
        %1578 = vmatprep.mubr.bf16.mxu0 0
        %1579 = vmatmul.mubr.bf16.gmra.mrb[0].mxu0 %v1479
        %v1580 = vpop.f32.mrb[0].mxu0
        %v1581 = vadd.f32 0.0, %v1580
        %v1582 = vpop.f32.mrb[0].mxu0
        %v1583 = vpop.f32.mrb[0].mxu0
        %v1584 = vadd.f32 0.0, %v1583
        %v1585 = vpop.f32.mrb[0].mxu0
        %1586 = vmatprep.mubr.bf16.mxu0 0
        %1587 = vmatmul.mubr.bf16.gmra.mrb[0].mxu0 %v1482
        %v1588 = vpop.f32.mrb[0].mxu0
        %v1589 = vadd.f32 0.0, %v1588
        %v1590 = vpop.f32.mrb[0].mxu0
        %v1591 = vpop.f32.mrb[0].mxu0
        %v1592 = vadd.f32 0.0, %v1591
        %v1593 = vpop.f32.mrb[0].mxu0
        %1594 = vmatprep.mubr.bf16.mxu0 0
        %1595 = vmatmul.mubr.bf16.gmra.mrb[0].mxu0 %v1485
        %v1596 = vpop.f32.mrb[0].mxu0
        %v1597 = vadd.f32 0.0, %v1596
        %v1598 = vpop.f32.mrb[0].mxu0
        %v1599 = vpop.f32.mrb[0].mxu0
        %v1600 = vadd.f32 0.0, %v1599
        %v1601 = vpop.f32.mrb[0].mxu0
        %1602 = vmatprep.mubr.bf16.mxu0 0
        %1603 = vmatmul.mubr.bf16.gmra.mrb[0].mxu0 %v1488
        %v1604 = vpop.f32.mrb[0].mxu0
        %v1605 = vadd.f32 0.0, %v1604
        %v1606 = vpop.f32.mrb[0].mxu0
        %v1607 = vpop.f32.mrb[0].mxu0
        %v1608 = vadd.f32 0.0, %v1607
        %v1609 = vpop.f32.mrb[0].mxu0
        %1610 = vmatprep.mubr.bf16.mxu0 0
        %1611 = vmatmul.mubr.bf16.gmra.mrb[0].mxu0 %v1491
        %v1612 = vpop.f32.mrb[0].mxu0
        %v1613 = vadd.f32 0.0, %v1612
        %v1614 = vpop.f32.mrb[0].mxu0
        %v1615 = vpop.f32.mrb[0].mxu0
        %v1616 = vadd.f32 0.0, %v1615
        %v1617 = vpop.f32.mrb[0].mxu0
        %1618 = vmatprep.mubr.bf16.mxu0 0
        %1619 = vmatmul.mubr.bf16.gmra.mrb[0].mxu0 %v1494
        %v1620 = vpop.f32.mrb[0].mxu0
        %v1621 = vadd.f32 0.0, %v1620
        %v1622 = vpop.f32.mrb[0].mxu0
        %v1623 = vpop.f32.mrb[0].mxu0
        %v1624 = vadd.f32 0.0, %v1623
        %v1625 = vpop.f32.mrb[0].mxu0
        %1626 = vmatprep.mubr.bf16.mxu0 0
        %1627 = vmatmul.mubr.bf16.gmra.mrb[0].mxu0 %v1497
        %v1628 = vpop.f32.mrb[0].mxu0
        %v1629 = vadd.f32 0.0, %v1628
        %v1630 = vpop.f32.mrb[0].mxu0
        %v1631 = vpop.f32.mrb[0].mxu0
        %v1632 = vadd.f32 0.0, %v1631
        %v1633 = vpop.f32.mrb[0].mxu0
        %1634 = vmatprep.mubr.bf16.mxu0 0
        %1635 = vmatmul.mubr.bf16.gmra.mrb[0].mxu0 %v1500
        %v1636 = vpop.f32.mrb[0].mxu0
        %v1637 = vadd.f32 0.0, %v1636
        %v1638 = vpop.f32.mrb[0].mxu0
        %v1639 = vpop.f32.mrb[0].mxu0
        %v1640 = vadd.f32 0.0, %v1639
        %v1641 = vpop.f32.mrb[0].mxu0
        %1642 = vmatprep.mubr.bf16.mxu0 0
        %1643 = vmatmul.mubr.bf16.gmra.mrb[0].mxu0 %v1503
        %v1644 = vpop.f32.mrb[0].mxu0
        %v1645 = vadd.f32 0.0, %v1644
        %v1646 = vpop.f32.mrb[0].mxu0
        %v1647 = vpop.f32.mrb[0].mxu0
        %v1648 = vadd.f32 0.0, %v1647
        %v1649 = vpop.f32.mrb[0].mxu0
        %1650 = vmatprep.mubr.bf16.mxu0 0
        %1651 = vmatmul.mubr.bf16.gmra.mrb[0].mxu0 %v1506
        %v1652 = vpop.f32.mrb[0].mxu0
        %v1653 = vadd.f32 0.0, %v1652
        %v1654 = vpop.f32.mrb[0].mxu0
        %v1655 = vpop.f32.mrb[0].mxu0
        %v1656 = vadd.f32 0.0, %v1655
        %v1657 = vpop.f32.mrb[0].mxu0
        %1658 = vmatprep.mubr.bf16.mxu0 0
        %1659 = vmatmul.mubr.bf16.gmra.mrb[0].mxu0 %v1509
        %v1660 = vpop.f32.mrb[0].mxu0
        %v1661 = vadd.f32 0.0, %v1660
        %v1662 = vpop.f32.mrb[0].mxu0
        %v1663 = vpop.f32.mrb[0].mxu0
        %v1664 = vadd.f32 0.0, %v1663
        %v1665 = vpop.f32.mrb[0].mxu0
        %1666 = vmatprep.mubr.bf16.mxu0 0
        %1667 = vmatmul.mubr.bf16.gmra.mrb[0].mxu0 %v1512
        %v1668 = vpop.f32.mrb[0].mxu0
        %v1669 = vadd.f32 0.0, %v1668
        %v1670 = vpop.f32.mrb[0].mxu0
        %v1671 = vpop.f32.mrb[0].mxu0
        %v1672 = vadd.f32 0.0, %v1671
        %v1673 = vpop.f32.mrb[0].mxu0
        %1674 = vdwg.mxu0
        %1707 = vrot.lane.b32.xlu0 %v1549, 32
        %v1708 = vpop.permute.xlu0 %1707
        %1709 = vrot.lane.b32.xlu0 %v1552, 32
        %v1710 = vpop.permute.xlu0 %1709
        %1711 = vrot.lane.b32.xlu0 %v1557, 32
        %v1712 = vpop.permute.xlu0 %1711
        %1713 = vrot.lane.b32.xlu0 %v1560, 32
        %v1714 = vpop.permute.xlu0 %1713
        %1715 = vrot.lane.b32.xlu0 %v1565, 32
        %v1716 = vpop.permute.xlu0 %1715
        %1717 = vrot.lane.b32.xlu0 %v1568, 32
        %v1718 = vpop.permute.xlu0 %1717
        %1719 = vrot.lane.b32.xlu0 %v1573, 32
        %v1720 = vpop.permute.xlu0 %1719
        %1721 = vrot.lane.b32.xlu0 %v1576, 32
        %v1722 = vpop.permute.xlu0 %1721
        %1723 = vrot.lane.b32.xlu0 %v1581, 32
        %v1724 = vpop.permute.xlu0 %1723
        %1725 = vrot.lane.b32.xlu0 %v1584, 32
        %v1726 = vpop.permute.xlu0 %1725
        %1727 = vrot.lane.b32.xlu0 %v1589, 32
        %v1728 = vpop.permute.xlu0 %1727
        %1729 = vrot.lane.b32.xlu0 %v1592, 32
        %v1730 = vpop.permute.xlu0 %1729
        %1731 = vrot.lane.b32.xlu0 %v1597, 32
        %v1732 = vpop.permute.xlu0 %1731
        %1733 = vrot.lane.b32.xlu0 %v1600, 32
        %v1734 = vpop.permute.xlu0 %1733
        %1735 = vrot.lane.b32.xlu0 %v1605, 32
        %v1736 = vpop.permute.xlu0 %1735
        %1737 = vrot.lane.b32.xlu0 %v1608, 32
        %v1738 = vpop.permute.xlu0 %1737
        %1739 = vrot.lane.b32.xlu0 %v1613, 32
        %v1740 = vpop.permute.xlu0 %1739
        %1741 = vrot.lane.b32.xlu0 %v1616, 32
        %v1742 = vpop.permute.xlu0 %1741
        %1743 = vrot.lane.b32.xlu0 %v1621, 32
        %v1744 = vpop.permute.xlu0 %1743
        %1745 = vrot.lane.b32.xlu0 %v1624, 32
        %v1746 = vpop.permute.xlu0 %1745
        %1747 = vrot.lane.b32.xlu0 %v1629, 32
        %v1748 = vpop.permute.xlu0 %1747
        %1749 = vrot.lane.b32.xlu0 %v1632, 32
        %v1750 = vpop.permute.xlu0 %1749
        %1751 = vrot.lane.b32.xlu0 %v1637, 32
        %v1752 = vpop.permute.xlu0 %1751
        %1753 = vrot.lane.b32.xlu0 %v1640, 32
        %v1754 = vpop.permute.xlu0 %1753
        %1755 = vrot.lane.b32.xlu0 %v1645, 32
        %v1756 = vpop.permute.xlu0 %1755
        %1757 = vrot.lane.b32.xlu0 %v1648, 32
        %v1758 = vpop.permute.xlu0 %1757
        %1759 = vrot.lane.b32.xlu0 %v1653, 32
        %v1760 = vpop.permute.xlu0 %1759
        %1761 = vrot.lane.b32.xlu0 %v1656, 32
        %v1762 = vpop.permute.xlu0 %1761
        %1763 = vrot.lane.b32.xlu0 %v1661, 32
        %v1764 = vpop.permute.xlu0 %1763
        %1765 = vrot.lane.b32.xlu0 %v1664, 32
        %v1766 = vpop.permute.xlu0 %1765
        %1767 = vrot.lane.b32.xlu0 %v1669, 32
        %v1768 = vpop.permute.xlu0 %1767
        %1769 = vrot.lane.b32.xlu0 %v1672, 32
        %v1770 = vpop.permute.xlu0 %1769
        %v1803 = vadd.f32 %v1172, %v1708
        %v1804 = vadd.f32 %v1175, %v1710
        %v1805 = vadd.f32 %v1180, %v1712
        %v1806 = vadd.f32 %v1183, %v1714
        %v1807 = vadd.f32 %v1188, %v1716
        %v1808 = vadd.f32 %v1191, %v1718
        %v1809 = vadd.f32 %v1196, %v1720
        %v1810 = vadd.f32 %v1199, %v1722
        %v1811 = vadd.f32 %v1204, %v1724
        %v1812 = vadd.f32 %v1207, %v1726
        %v1813 = vadd.f32 %v1212, %v1728
        %v1814 = vadd.f32 %v1215, %v1730
        %v1815 = vadd.f32 %v1220, %v1732
        %v1816 = vadd.f32 %v1223, %v1734
        %v1817 = vadd.f32 %v1228, %v1736
        %v1818 = vadd.f32 %v1231, %v1738
        %v1819 = vadd.f32 %v1236, %v1740
        %v1820 = vadd.f32 %v1239, %v1742
        %v1821 = vadd.f32 %v1244, %v1744
        %v1822 = vadd.f32 %v1247, %v1746
        %v1823 = vadd.f32 %v1252, %v1748
        %v1824 = vadd.f32 %v1255, %v1750
        %v1825 = vadd.f32 %v1260, %v1752
        %v1826 = vadd.f32 %v1263, %v1754
        %v1827 = vadd.f32 %v1268, %v1756
        %v1828 = vadd.f32 %v1271, %v1758
        %v1829 = vadd.f32 %v1276, %v1760
        %v1830 = vadd.f32 %v1279, %v1762
        %v1831 = vadd.f32 %v1284, %v1764
        %v1832 = vadd.f32 %v1287, %v1766
        %v1833 = vadd.f32 %v1292, %v1768
        %v1834 = vadd.f32 %v1295, %v1770
        %v1835 = vld [vmem:[#allocation10] sm:$0x1]
        %v1837 = vlaneseq
        %v1838 = vshrl.u32 %v1837, 7
        %v1839 = vsub.s32 0, %v1838
        %v1840 = vrot.slane %v1835, %v1839
        %1841 = vrot.lane.b32.xlu0 %v1840, 32
        %v1842 = vpop.permute.xlu0 %1841
        %v1844 = vadd.f32 %v1803, %v1842
        %v1845 = vadd.f32 %v1804, %v1842
        %v1846 = vadd.f32 %v1805, %v1842
        %v1847 = vadd.f32 %v1806, %v1842
        %v1848 = vadd.f32 %v1807, %v1842
        %v1849 = vadd.f32 %v1808, %v1842
        %v1850 = vadd.f32 %v1809, %v1842
        %v1851 = vadd.f32 %v1810, %v1842
        %v1852 = vadd.f32 %v1811, %v1842
        %v1853 = vadd.f32 %v1812, %v1842
        %v1854 = vadd.f32 %v1813, %v1842
        %v1855 = vadd.f32 %v1814, %v1842
        %v1856 = vadd.f32 %v1815, %v1842
        %v1857 = vadd.f32 %v1816, %v1842
        %v1858 = vadd.f32 %v1817, %v1842
        %v1859 = vadd.f32 %v1818, %v1842
        %v1860 = vadd.f32 %v1819, %v1842
        %v1861 = vadd.f32 %v1820, %v1842
        %v1862 = vadd.f32 %v1821, %v1842
        %v1863 = vadd.f32 %v1822, %v1842
        %v1864 = vadd.f32 %v1823, %v1842
        %v1865 = vadd.f32 %v1824, %v1842
        %v1866 = vadd.f32 %v1825, %v1842
        %v1867 = vadd.f32 %v1826, %v1842
        %v1868 = vadd.f32 %v1827, %v1842
        %v1869 = vadd.f32 %v1828, %v1842
        %v1870 = vadd.f32 %v1829, %v1842
        %v1871 = vadd.f32 %v1830, %v1842
        %v1872 = vadd.f32 %v1831, %v1842
        %v1873 = vadd.f32 %v1832, %v1842
        %v1874 = vadd.f32 %v1833, %v1842
        %v1875 = vadd.f32 %v1834, %v1842
        %vm1876 = vcmp.ge.f32.partialorder %v1844, 0.0
        %vm1877 = vcmp.ge.f32.partialorder %v1845, 0.0
        %vm1878 = vcmp.ge.f32.partialorder %v1846, 0.0
        %vm1879 = vcmp.ge.f32.partialorder %v1847, 0.0
        %vm1880 = vcmp.ge.f32.partialorder %v1848, 0.0
        %vm1881 = vcmp.ge.f32.partialorder %v1849, 0.0
        %vm1882 = vcmp.ge.f32.partialorder %v1850, 0.0
        %vm1883 = vcmp.ge.f32.partialorder %v1851, 0.0
        %vm1884 = vcmp.ge.f32.partialorder %v1852, 0.0
        %vm1885 = vcmp.ge.f32.partialorder %v1853, 0.0
        %vm1886 = vcmp.ge.f32.partialorder %v1854, 0.0
        %vm1887 = vcmp.ge.f32.partialorder %v1855, 0.0
        %vm1888 = vcmp.ge.f32.partialorder %v1856, 0.0
        %vm1889 = vcmp.ge.f32.partialorder %v1857, 0.0
        %vm1890 = vcmp.ge.f32.partialorder %v1858, 0.0
        %vm1891 = vcmp.ge.f32.partialorder %v1859, 0.0
        %vm1892 = vcmp.ge.f32.partialorder %v1860, 0.0
        %vm1893 = vcmp.ge.f32.partialorder %v1861, 0.0
        %vm1894 = vcmp.ge.f32.partialorder %v1862, 0.0
        %vm1895 = vcmp.ge.f32.partialorder %v1863, 0.0
        %vm1896 = vcmp.ge.f32.partialorder %v1864, 0.0
        %vm1897 = vcmp.ge.f32.partialorder %v1865, 0.0
        %vm1898 = vcmp.ge.f32.partialorder %v1866, 0.0
        %vm1899 = vcmp.ge.f32.partialorder %v1867, 0.0
        %vm1900 = vcmp.ge.f32.partialorder %v1868, 0.0
        %vm1901 = vcmp.ge.f32.partialorder %v1869, 0.0
        %vm1902 = vcmp.ge.f32.partialorder %v1870, 0.0
        %vm1903 = vcmp.ge.f32.partialorder %v1871, 0.0
        %vm1904 = vcmp.ge.f32.partialorder %v1872, 0.0
        %vm1905 = vcmp.ge.f32.partialorder %v1873, 0.0
        %vm1906 = vcmp.ge.f32.partialorder %v1874, 0.0
        %vm1907 = vcmp.ge.f32.partialorder %v1875, 0.0
        %v1908 = vstv %s602
        %v1909 = vmul.f32 %v1908, %v1844
        %v1910 = vmul.f32 %v1908, %v1845
        %v1911 = vmul.f32 %v1908, %v1846
        %v1912 = vmul.f32 %v1908, %v1847
        %v1913 = vmul.f32 %v1908, %v1848
        %v1914 = vmul.f32 %v1908, %v1849
        %v1915 = vmul.f32 %v1908, %v1850
        %v1916 = vmul.f32 %v1908, %v1851
        %v1917 = vmul.f32 %v1908, %v1852
        %v1918 = vmul.f32 %v1908, %v1853
        %v1919 = vmul.f32 %v1908, %v1854
        %v1920 = vmul.f32 %v1908, %v1855
        %v1921 = vmul.f32 %v1908, %v1856
        %v1922 = vmul.f32 %v1908, %v1857
        %v1923 = vmul.f32 %v1908, %v1858
        %v1924 = vmul.f32 %v1908, %v1859
        %v1925 = vmul.f32 %v1908, %v1860
        %v1926 = vmul.f32 %v1908, %v1861
        %v1927 = vmul.f32 %v1908, %v1862
        %v1928 = vmul.f32 %v1908, %v1863
        %v1929 = vmul.f32 %v1908, %v1864
        %v1930 = vmul.f32 %v1908, %v1865
        %v1931 = vmul.f32 %v1908, %v1866
        %v1932 = vmul.f32 %v1908, %v1867
        %v1933 = vmul.f32 %v1908, %v1868
        %v1934 = vmul.f32 %v1908, %v1869
        %v1935 = vmul.f32 %v1908, %v1870
        %v1936 = vmul.f32 %v1908, %v1871
        %v1937 = vmul.f32 %v1908, %v1872
        %v1938 = vmul.f32 %v1908, %v1873
        %v1939 = vmul.f32 %v1908, %v1874
        %v1940 = vmul.f32 %v1908, %v1875
        %v1941 = vsel %vm1876, %v1844, %v1909
        %v1942 = vsel %vm1877, %v1845, %v1910
        %v1943 = vsel %vm1878, %v1846, %v1911
        %v1944 = vsel %vm1879, %v1847, %v1912
        %v1945 = vsel %vm1880, %v1848, %v1913
        %v1946 = vsel %vm1881, %v1849, %v1914
        %v1947 = vsel %vm1882, %v1850, %v1915
        %v1948 = vsel %vm1883, %v1851, %v1916
        %v1949 = vsel %vm1884, %v1852, %v1917
        %v1950 = vsel %vm1885, %v1853, %v1918
        %v1951 = vsel %vm1886, %v1854, %v1919
        %v1952 = vsel %vm1887, %v1855, %v1920
        %v1953 = vsel %vm1888, %v1856, %v1921
        %v1954 = vsel %vm1889, %v1857, %v1922
        %v1955 = vsel %vm1890, %v1858, %v1923
        %v1956 = vsel %vm1891, %v1859, %v1924
        %v1957 = vsel %vm1892, %v1860, %v1925
        %v1958 = vsel %vm1893, %v1861, %v1926
        %v1959 = vsel %vm1894, %v1862, %v1927
        %v1960 = vsel %vm1895, %v1863, %v1928
        %v1961 = vsel %vm1896, %v1864, %v1929
        %v1962 = vsel %vm1897, %v1865, %v1930
        %v1963 = vsel %vm1898, %v1866, %v1931
        %v1964 = vsel %vm1899, %v1867, %v1932
        %v1965 = vsel %vm1900, %v1868, %v1933
        %v1966 = vsel %vm1901, %v1869, %v1934
        %v1967 = vsel %vm1902, %v1870, %v1935
        %v1968 = vsel %vm1903, %v1871, %v1936
        %v1969 = vsel %vm1904, %v1872, %v1937
        %v1970 = vsel %vm1905, %v1873, %v1938
        %v1971 = vsel %vm1906, %v1874, %v1939
        %v1972 = vsel %vm1907, %v1875, %v1940
        %v1973 = vpack.c.bf16 %v1942, %v1941
        %v1974 = vpack.c.bf16 %v1944, %v1943
        %v1975 = vpack.c.bf16 %v1946, %v1945
        %v1976 = vpack.c.bf16 %v1948, %v1947
        %v1977 = vpack.c.bf16 %v1950, %v1949
        %v1978 = vpack.c.bf16 %v1952, %v1951
        %v1979 = vpack.c.bf16 %v1954, %v1953
        %v1980 = vpack.c.bf16 %v1956, %v1955
        %v1981 = vpack.c.bf16 %v1958, %v1957
        %v1982 = vpack.c.bf16 %v1960, %v1959
        %v1983 = vpack.c.bf16 %v1962, %v1961
        %v1984 = vpack.c.bf16 %v1964, %v1963
        %v1985 = vpack.c.bf16 %v1966, %v1965
        %v1986 = vpack.c.bf16 %v1968, %v1967
        %v1987 = vpack.c.bf16 %v1970, %v1969
        %v1988 = vpack.c.bf16 %v1972, %v1971
        %2005 = vrot.lane.b32.xlu0 %v1973, 96
        %v2006 = vpop.permute.xlu0 %2005
        %2007 = vrot.lane.b32.xlu0 %v1974, 96
        %v2008 = vpop.permute.xlu0 %2007
        %2009 = vrot.lane.b32.xlu0 %v1975, 96
        %v2010 = vpop.permute.xlu0 %2009
        %2011 = vrot.lane.b32.xlu0 %v1976, 96
        %v2012 = vpop.permute.xlu0 %2011
        %2013 = vrot.lane.b32.xlu0 %v1977, 96
        %v2014 = vpop.permute.xlu0 %2013
        %2015 = vrot.lane.b32.xlu0 %v1978, 96
        %v2016 = vpop.permute.xlu0 %2015
        %2017 = vrot.lane.b32.xlu0 %v1979, 96
        %v2018 = vpop.permute.xlu0 %2017
        %2019 = vrot.lane.b32.xlu0 %v1980, 96
        %v2020 = vpop.permute.xlu0 %2019
        %2021 = vrot.lane.b32.xlu0 %v1981, 96
        %v2022 = vpop.permute.xlu0 %2021
        %2023 = vrot.lane.b32.xlu0 %v1982, 96
        %v2024 = vpop.permute.xlu0 %2023
        %2025 = vrot.lane.b32.xlu0 %v1983, 96
        %v2026 = vpop.permute.xlu0 %2025
        %2027 = vrot.lane.b32.xlu0 %v1984, 96
        %v2028 = vpop.permute.xlu0 %2027
        %2029 = vrot.lane.b32.xlu0 %v1985, 96
        %v2030 = vpop.permute.xlu0 %2029
        %2031 = vrot.lane.b32.xlu0 %v1986, 96
        %v2032 = vpop.permute.xlu0 %2031
        %2033 = vrot.lane.b32.xlu0 %v1987, 96
        %v2034 = vpop.permute.xlu0 %2033
        %2035 = vrot.lane.b32.xlu0 %v1988, 96
        %v2036 = vpop.permute.xlu0 %2035
        %v2038 = vshrl.u32 0, 16
        %v2040 = vrot.slane %v2038, 7
        %v2041 = vshll.u32 0, 16
        %v2043 = vor.u32 %v2040, %v2041
        %v2045 = vshrl.u32 %v2006, 16
        %v2047 = vrot.slane %v2045, 7
        %v2048 = vshll.u32 %v2006, 16
        %v2050 = vor.u32 %v2047, %v2048
        %v2052 = vshrl.u32 %v2008, 16
        %v2054 = vrot.slane %v2052, 7
        %v2055 = vshll.u32 %v2008, 16
        %v2057 = vor.u32 %v2054, %v2055
        %v2059 = vshrl.u32 %v2010, 16
        %v2061 = vrot.slane %v2059, 7
        %v2062 = vshll.u32 %v2010, 16
        %v2064 = vor.u32 %v2061, %v2062
        %v2066 = vshrl.u32 %v2012, 16
        %v2068 = vrot.slane %v2066, 7
        %v2069 = vshll.u32 %v2012, 16
        %v2071 = vor.u32 %v2068, %v2069
        %v2073 = vshrl.u32 %v2014, 16
        %v2075 = vrot.slane %v2073, 7
        %v2076 = vshll.u32 %v2014, 16
        %v2078 = vor.u32 %v2075, %v2076
        %v2080 = vshrl.u32 %v2016, 16
        %v2082 = vrot.slane %v2080, 7
        %v2083 = vshll.u32 %v2016, 16
        %v2085 = vor.u32 %v2082, %v2083
        %v2087 = vshrl.u32 %v2018, 16
        %v2089 = vrot.slane %v2087, 7
        %v2090 = vshll.u32 %v2018, 16
        %v2092 = vor.u32 %v2089, %v2090
        %v2094 = vshrl.u32 %v2020, 16
        %v2096 = vrot.slane %v2094, 7
        %v2097 = vshll.u32 %v2020, 16
        %v2099 = vor.u32 %v2096, %v2097
        %v2101 = vshrl.u32 %v2022, 16
        %v2103 = vrot.slane %v2101, 7
        %v2104 = vshll.u32 %v2022, 16
        %v2106 = vor.u32 %v2103, %v2104
        %v2108 = vshrl.u32 %v2024, 16
        %v2110 = vrot.slane %v2108, 7
        %v2111 = vshll.u32 %v2024, 16
        %v2113 = vor.u32 %v2110, %v2111
        %v2115 = vshrl.u32 %v2026, 16
        %v2117 = vrot.slane %v2115, 7
        %v2118 = vshll.u32 %v2026, 16
        %v2120 = vor.u32 %v2117, %v2118
        %v2122 = vshrl.u32 %v2028, 16
        %v2124 = vrot.slane %v2122, 7
        %v2125 = vshll.u32 %v2028, 16
        %v2127 = vor.u32 %v2124, %v2125
        %v2129 = vshrl.u32 %v2030, 16
        %v2131 = vrot.slane %v2129, 7
        %v2132 = vshll.u32 %v2030, 16
        %v2134 = vor.u32 %v2131, %v2132
        %v2136 = vshrl.u32 %v2032, 16
        %v2138 = vrot.slane %v2136, 7
        %v2139 = vshll.u32 %v2032, 16
        %v2141 = vor.u32 %v2138, %v2139
        %v2143 = vshrl.u32 %v2034, 16
        %v2145 = vrot.slane %v2143, 7
        %v2146 = vshll.u32 %v2034, 16
        %v2148 = vor.u32 %v2145, %v2146
        %v2150 = vshrl.u32 %v2036, 16
        %v2152 = vrot.slane %v2150, 7
        %v2153 = vshll.u32 %v2036, 16
        %v2155 = vor.u32 %v2152, %v2153
        %vm2190 = vcmask 1040384
        %vm2191 = vsmask.f32 256
        %vm2192 = vmand %vm2190, %vm2191
        %v2193 = vsel %vm2192, 0, %v2043
        %v2194 = vsel %vm2192, 0, %v2050
        %v2195 = vsel %vm2192, 0, %v2057
        %v2196 = vsel %vm2192, 0, %v2064
        %v2197 = vsel %vm2192, 0, %v2071
        %v2198 = vsel %vm2192, 0, %v2078
        %v2199 = vsel %vm2192, 0, %v2085
        %v2200 = vsel %vm2192, 0, %v2092
        %v2201 = vsel %vm2192, 0, %v2099
        %v2202 = vsel %vm2192, 0, %v2106
        %v2203 = vsel %vm2192, 0, %v2113
        %v2204 = vsel %vm2192, 0, %v2120
        %v2205 = vsel %vm2192, 0, %v2127
        %v2206 = vsel %vm2192, 0, %v2134
        %v2207 = vsel %vm2192, 0, %v2141
        %v2208 = vsel %vm2192, 0, %v2148
        %v2209 = vsel %vm2192, 0, %v2155
        %v2210 = vsel %vm2192, %v2040, 0
        %v2211 = vsel %vm2192, %v2047, 0
        %v2212 = vsel %vm2192, %v2054, 0
        %v2213 = vsel %vm2192, %v2061, 0
        %v2214 = vsel %vm2192, %v2068, 0
        %v2215 = vsel %vm2192, %v2075, 0
        %v2216 = vsel %vm2192, %v2082, 0
        %v2217 = vsel %vm2192, %v2089, 0
        %v2218 = vsel %vm2192, %v2096, 0
        %v2219 = vsel %vm2192, %v2103, 0
        %v2220 = vsel %vm2192, %v2110, 0
        %v2221 = vsel %vm2192, %v2117, 0
        %v2222 = vsel %vm2192, %v2124, 0
        %v2223 = vsel %vm2192, %v2131, 0
        %v2224 = vsel %vm2192, %v2138, 0
        %v2225 = vsel %vm2192, %v2145, 0
        %v2226 = vsel %vm2192, %v2152, 0
        %vm2227 = vsmask.f32 7424
        %v2229 = vshrl.u32 %v2193, 16
        %v2231 = vshll.u32 %v2193, 16
        %v2233 = vrot.slane %v2231, 1
        %v2234 = vor.u32 %v2229, %v2233
        %v2236 = vshll.u32 %v2210, 16
        %v2238 = vrot.slane %v2236, 1
        %v2239 = vsel %vm2227, %v2234, %v2238
        %v2241 = vshrl.u32 %v2194, 16
        %v2243 = vshll.u32 %v2194, 16
        %v2245 = vrot.slane %v2243, 1
        %v2246 = vor.u32 %v2241, %v2245
        %v2248 = vshll.u32 %v2211, 16
        %v2250 = vrot.slane %v2248, 1
        %v2251 = vsel %vm2227, %v2246, %v2250
        %v2253 = vshrl.u32 %v2195, 16
        %v2255 = vshll.u32 %v2195, 16
        %v2257 = vrot.slane %v2255, 1
        %v2258 = vor.u32 %v2253, %v2257
        %v2260 = vshll.u32 %v2212, 16
        %v2262 = vrot.slane %v2260, 1
        %v2263 = vsel %vm2227, %v2258, %v2262
        %v2265 = vshrl.u32 %v2196, 16
        %v2267 = vshll.u32 %v2196, 16
        %v2269 = vrot.slane %v2267, 1
        %v2270 = vor.u32 %v2265, %v2269
        %v2272 = vshll.u32 %v2213, 16
        %v2274 = vrot.slane %v2272, 1
        %v2275 = vsel %vm2227, %v2270, %v2274
        %v2277 = vshrl.u32 %v2197, 16
        %v2279 = vshll.u32 %v2197, 16
        %v2281 = vrot.slane %v2279, 1
        %v2282 = vor.u32 %v2277, %v2281
        %v2284 = vshll.u32 %v2214, 16
        %v2286 = vrot.slane %v2284, 1
        %v2287 = vsel %vm2227, %v2282, %v2286
        %v2289 = vshrl.u32 %v2198, 16
        %v2291 = vshll.u32 %v2198, 16
        %v2293 = vrot.slane %v2291, 1
        %v2294 = vor.u32 %v2289, %v2293
        %v2296 = vshll.u32 %v2215, 16
        %v2298 = vrot.slane %v2296, 1
        %v2299 = vsel %vm2227, %v2294, %v2298
        %v2301 = vshrl.u32 %v2199, 16
        %v2303 = vshll.u32 %v2199, 16
        %v2305 = vrot.slane %v2303, 1
        %v2306 = vor.u32 %v2301, %v2305
        %v2308 = vshll.u32 %v2216, 16
        %v2310 = vrot.slane %v2308, 1
        %v2311 = vsel %vm2227, %v2306, %v2310
        %v2313 = vshrl.u32 %v2200, 16
        %v2315 = vshll.u32 %v2200, 16
        %v2317 = vrot.slane %v2315, 1
        %v2318 = vor.u32 %v2313, %v2317
        %v2320 = vshll.u32 %v2217, 16
        %v2322 = vrot.slane %v2320, 1
        %v2323 = vsel %vm2227, %v2318, %v2322
        %v2325 = vshrl.u32 %v2201, 16
        %v2327 = vshll.u32 %v2201, 16
        %v2329 = vrot.slane %v2327, 1
        %v2330 = vor.u32 %v2325, %v2329
        %v2332 = vshll.u32 %v2218, 16
        %v2334 = vrot.slane %v2332, 1
        %v2335 = vsel %vm2227, %v2330, %v2334
        %v2337 = vshrl.u32 %v2202, 16
        %v2339 = vshll.u32 %v2202, 16
        %v2341 = vrot.slane %v2339, 1
        %v2342 = vor.u32 %v2337, %v2341
        %v2344 = vshll.u32 %v2219, 16
        %v2346 = vrot.slane %v2344, 1
        %v2347 = vsel %vm2227, %v2342, %v2346
        %v2349 = vshrl.u32 %v2203, 16
        %v2351 = vshll.u32 %v2203, 16
        %v2353 = vrot.slane %v2351, 1
        %v2354 = vor.u32 %v2349, %v2353
        %v2356 = vshll.u32 %v2220, 16
        %v2358 = vrot.slane %v2356, 1
        %v2359 = vsel %vm2227, %v2354, %v2358
        %v2361 = vshrl.u32 %v2204, 16
        %v2363 = vshll.u32 %v2204, 16
        %v2365 = vrot.slane %v2363, 1
        %v2366 = vor.u32 %v2361, %v2365
        %v2368 = vshll.u32 %v2221, 16
        %v2370 = vrot.slane %v2368, 1
        %v2371 = vsel %vm2227, %v2366, %v2370
        %v2373 = vshrl.u32 %v2205, 16
        %v2375 = vshll.u32 %v2205, 16
        %v2377 = vrot.slane %v2375, 1
        %v2378 = vor.u32 %v2373, %v2377
        %v2380 = vshll.u32 %v2222, 16
        %v2382 = vrot.slane %v2380, 1
        %v2383 = vsel %vm2227, %v2378, %v2382
        %v2385 = vshrl.u32 %v2206, 16
        %v2387 = vshll.u32 %v2206, 16
        %v2389 = vrot.slane %v2387, 1
        %v2390 = vor.u32 %v2385, %v2389
        %v2392 = vshll.u32 %v2223, 16
        %v2394 = vrot.slane %v2392, 1
        %v2395 = vsel %vm2227, %v2390, %v2394
        %v2397 = vshrl.u32 %v2207, 16
        %v2399 = vshll.u32 %v2207, 16
        %v2401 = vrot.slane %v2399, 1
        %v2402 = vor.u32 %v2397, %v2401
        %v2404 = vshll.u32 %v2224, 16
        %v2406 = vrot.slane %v2404, 1
        %v2407 = vsel %vm2227, %v2402, %v2406
        %v2409 = vshrl.u32 %v2208, 16
        %v2411 = vshll.u32 %v2208, 16
        %v2413 = vrot.slane %v2411, 1
        %v2414 = vor.u32 %v2409, %v2413
        %v2416 = vshll.u32 %v2225, 16
        %v2418 = vrot.slane %v2416, 1
        %v2419 = vsel %vm2227, %v2414, %v2418
        %vm2452 = vcmask 1046528
        %v2453 = vrot.slane %v2193, 1
        %v2454 = vrot.slane %v2210, 1
        %v2455 = vsel %vm2452, %v2453, %v2454
        %v2456 = vrot.slane %v2194, 1
        %v2457 = vrot.slane %v2211, 1
        %v2458 = vsel %vm2452, %v2456, %v2457
        %v2459 = vrot.slane %v2195, 1
        %v2460 = vrot.slane %v2212, 1
        %v2461 = vsel %vm2452, %v2459, %v2460
        %v2462 = vrot.slane %v2196, 1
        %v2463 = vrot.slane %v2213, 1
        %v2464 = vsel %vm2452, %v2462, %v2463
        %v2465 = vrot.slane %v2197, 1
        %v2466 = vrot.slane %v2214, 1
        %v2467 = vsel %vm2452, %v2465, %v2466
        %v2468 = vrot.slane %v2198, 1
        %v2469 = vrot.slane %v2215, 1
        %v2470 = vsel %vm2452, %v2468, %v2469
        %v2471 = vrot.slane %v2199, 1
        %v2472 = vrot.slane %v2216, 1
        %v2473 = vsel %vm2452, %v2471, %v2472
        %v2474 = vrot.slane %v2200, 1
        %v2475 = vrot.slane %v2217, 1
        %v2476 = vsel %vm2452, %v2474, %v2475
        %v2477 = vrot.slane %v2201, 1
        %v2478 = vrot.slane %v2218, 1
        %v2479 = vsel %vm2452, %v2477, %v2478
        %v2480 = vrot.slane %v2202, 1
        %v2481 = vrot.slane %v2219, 1
        %v2482 = vsel %vm2452, %v2480, %v2481
        %v2483 = vrot.slane %v2203, 1
        %v2484 = vrot.slane %v2220, 1
        %v2485 = vsel %vm2452, %v2483, %v2484
        %v2486 = vrot.slane %v2204, 1
        %v2487 = vrot.slane %v2221, 1
        %v2488 = vsel %vm2452, %v2486, %v2487
        %v2489 = vrot.slane %v2205, 1
        %v2490 = vrot.slane %v2222, 1
        %v2491 = vsel %vm2452, %v2489, %v2490
        %v2492 = vrot.slane %v2206, 1
        %v2493 = vrot.slane %v2223, 1
        %v2494 = vsel %vm2452, %v2492, %v2493
        %v2495 = vrot.slane %v2207, 1
        %v2496 = vrot.slane %v2224, 1
        %v2497 = vsel %vm2452, %v2495, %v2496
        %v2498 = vrot.slane %v2208, 1
        %v2499 = vrot.slane %v2225, 1
        %v2500 = vsel %vm2452, %v2498, %v2499
        %v2502 = vshrl.u32 %v2209, 16
        %v2504 = vshll.u32 %v2209, 16
        %v2506 = vrot.slane %v2504, 1
        %v2507 = vor.u32 %v2502, %v2506
        %v2509 = vshll.u32 %v2226, 16
        %v2511 = vrot.slane %v2509, 1
        %v2512 = vsel %vm2227, %v2507, %v2511
        %v2515 = vrot.slane %v2209, 1
        %v2516 = vrot.slane %v2226, 1
        %v2517 = vsel %vm2452, %v2515, %v2516
        %2518 = vrot.lane.b32.xlu0 %v2239, 32
        %v2519 = vpop.permute.xlu0 %2518
        %2520 = vrot.lane.b32.xlu0 %v2251, 32
        %v2521 = vpop.permute.xlu0 %2520
        %2522 = vrot.lane.b32.xlu0 %v2263, 32
        %v2523 = vpop.permute.xlu0 %2522
        %2524 = vrot.lane.b32.xlu0 %v2275, 32
        %v2525 = vpop.permute.xlu0 %2524
        %2526 = vrot.lane.b32.xlu0 %v2287, 32
        %v2527 = vpop.permute.xlu0 %2526
        %2528 = vrot.lane.b32.xlu0 %v2299, 32
        %v2529 = vpop.permute.xlu0 %2528
        %2530 = vrot.lane.b32.xlu0 %v2311, 32
        %v2531 = vpop.permute.xlu0 %2530
        %2532 = vrot.lane.b32.xlu0 %v2323, 32
        %v2533 = vpop.permute.xlu0 %2532
        %2534 = vrot.lane.b32.xlu0 %v2335, 32
        %v2535 = vpop.permute.xlu0 %2534
        %2536 = vrot.lane.b32.xlu0 %v2347, 32
        %v2537 = vpop.permute.xlu0 %2536
        %2538 = vrot.lane.b32.xlu0 %v2359, 32
        %v2539 = vpop.permute.xlu0 %2538
        %2540 = vrot.lane.b32.xlu0 %v2371, 32
        %v2541 = vpop.permute.xlu0 %2540
        %2542 = vrot.lane.b32.xlu0 %v2383, 32
        %v2543 = vpop.permute.xlu0 %2542
        %2544 = vrot.lane.b32.xlu0 %v2395, 32
        %v2545 = vpop.permute.xlu0 %2544
        %2546 = vrot.lane.b32.xlu0 %v2407, 32
        %v2547 = vpop.permute.xlu0 %2546
        %2548 = vrot.lane.b32.xlu0 %v2419, 32
        %v2549 = vpop.permute.xlu0 %2548
        %2550 = vrot.lane.b32.xlu0 %v2455, 64
        %v2551 = vpop.permute.xlu0 %2550
        %2552 = vrot.lane.b32.xlu0 %v2458, 64
        %v2553 = vpop.permute.xlu0 %2552
        %2554 = vrot.lane.b32.xlu0 %v2461, 64
        %v2555 = vpop.permute.xlu0 %2554
        %2556 = vrot.lane.b32.xlu0 %v2464, 64
        %v2557 = vpop.permute.xlu0 %2556
        %2558 = vrot.lane.b32.xlu0 %v2467, 64
        %v2559 = vpop.permute.xlu0 %2558
        %2560 = vrot.lane.b32.xlu0 %v2470, 64
        %v2561 = vpop.permute.xlu0 %2560
        %2562 = vrot.lane.b32.xlu0 %v2473, 64
        %v2563 = vpop.permute.xlu0 %2562
        %2564 = vrot.lane.b32.xlu0 %v2476, 64
        %v2565 = vpop.permute.xlu0 %2564
        %2566 = vrot.lane.b32.xlu0 %v2479, 64
        %v2567 = vpop.permute.xlu0 %2566
        %2568 = vrot.lane.b32.xlu0 %v2482, 64
        %v2569 = vpop.permute.xlu0 %2568
        %2570 = vrot.lane.b32.xlu0 %v2485, 64
        %v2571 = vpop.permute.xlu0 %2570
        %2572 = vrot.lane.b32.xlu0 %v2488, 64
        %v2573 = vpop.permute.xlu0 %2572
        %2574 = vrot.lane.b32.xlu0 %v2491, 64
        %v2575 = vpop.permute.xlu0 %2574
        %2576 = vrot.lane.b32.xlu0 %v2494, 64
        %v2577 = vpop.permute.xlu0 %2576
        %2578 = vrot.lane.b32.xlu0 %v2497, 64
        %v2579 = vpop.permute.xlu0 %2578
        %2580 = vrot.lane.b32.xlu0 %v2500, 64
        %v2581 = vpop.permute.xlu0 %2580
        %2582 = vrot.lane.b32.xlu0 %v2194, 96
        %v2583 = vpop.permute.xlu0 %2582
        %2584 = vrot.lane.b32.xlu0 %v2195, 96
        %v2585 = vpop.permute.xlu0 %2584
        %2586 = vrot.lane.b32.xlu0 %v2196, 96
        %v2587 = vpop.permute.xlu0 %2586
        %2588 = vrot.lane.b32.xlu0 %v2197, 96
        %v2589 = vpop.permute.xlu0 %2588
        %2590 = vrot.lane.b32.xlu0 %v2198, 96
        %v2591 = vpop.permute.xlu0 %2590
        %2592 = vrot.lane.b32.xlu0 %v2199, 96
        %v2593 = vpop.permute.xlu0 %2592
        %2594 = vrot.lane.b32.xlu0 %v2200, 96
        %v2595 = vpop.permute.xlu0 %2594
        %2596 = vrot.lane.b32.xlu0 %v2201, 96
        %v2597 = vpop.permute.xlu0 %2596
        %2598 = vrot.lane.b32.xlu0 %v2202, 96
        %v2599 = vpop.permute.xlu0 %2598
        %2600 = vrot.lane.b32.xlu0 %v2203, 96
        %v2601 = vpop.permute.xlu0 %2600
        %2602 = vrot.lane.b32.xlu0 %v2204, 96
        %v2603 = vpop.permute.xlu0 %2602
        %2604 = vrot.lane.b32.xlu0 %v2205, 96
        %v2605 = vpop.permute.xlu0 %2604
        %2606 = vrot.lane.b32.xlu0 %v2206, 96
        %v2607 = vpop.permute.xlu0 %2606
        %2608 = vrot.lane.b32.xlu0 %v2207, 96
        %v2609 = vpop.permute.xlu0 %2608
        %2610 = vrot.lane.b32.xlu0 %v2208, 96
        %v2611 = vpop.permute.xlu0 %2610
        %2612 = vrot.lane.b32.xlu0 %v2209, 96
        %v2613 = vpop.permute.xlu0 %2612
        %2614 = vrot.lane.b32.xlu0 %v2458, 32
        %v2615 = vpop.permute.xlu0 %2614
        %2616 = vrot.lane.b32.xlu0 %v2461, 32
        %v2617 = vpop.permute.xlu0 %2616
        %2618 = vrot.lane.b32.xlu0 %v2464, 32
        %v2619 = vpop.permute.xlu0 %2618
        %2620 = vrot.lane.b32.xlu0 %v2467, 32
        %v2621 = vpop.permute.xlu0 %2620
        %2622 = vrot.lane.b32.xlu0 %v2470, 32
        %v2623 = vpop.permute.xlu0 %2622
        %2624 = vrot.lane.b32.xlu0 %v2473, 32
        %v2625 = vpop.permute.xlu0 %2624
        %2626 = vrot.lane.b32.xlu0 %v2476, 32
        %v2627 = vpop.permute.xlu0 %2626
        %2628 = vrot.lane.b32.xlu0 %v2479, 32
        %v2629 = vpop.permute.xlu0 %2628
        %2630 = vrot.lane.b32.xlu0 %v2482, 32
        %v2631 = vpop.permute.xlu0 %2630
        %2632 = vrot.lane.b32.xlu0 %v2485, 32
        %v2633 = vpop.permute.xlu0 %2632
        %2634 = vrot.lane.b32.xlu0 %v2488, 32
        %v2635 = vpop.permute.xlu0 %2634
        %2636 = vrot.lane.b32.xlu0 %v2491, 32
        %v2637 = vpop.permute.xlu0 %2636
        %2638 = vrot.lane.b32.xlu0 %v2494, 32
        %v2639 = vpop.permute.xlu0 %2638
        %2640 = vrot.lane.b32.xlu0 %v2497, 32
        %v2641 = vpop.permute.xlu0 %2640
        %2642 = vrot.lane.b32.xlu0 %v2500, 32
        %v2643 = vpop.permute.xlu0 %2642
        %2644 = vrot.lane.b32.xlu0 %v2517, 32
        %v2645 = vpop.permute.xlu0 %2644
        %2646 = vrot.lane.b32.xlu0 %v2195, 64
        %v2647 = vpop.permute.xlu0 %2646
        %2648 = vrot.lane.b32.xlu0 %v2196, 64
        %v2649 = vpop.permute.xlu0 %2648
        %2650 = vrot.lane.b32.xlu0 %v2197, 64
        %v2651 = vpop.permute.xlu0 %2650
        %2652 = vrot.lane.b32.xlu0 %v2198, 64
        %v2653 = vpop.permute.xlu0 %2652
        %2654 = vrot.lane.b32.xlu0 %v2199, 64
        %v2655 = vpop.permute.xlu0 %2654
        %2656 = vrot.lane.b32.xlu0 %v2200, 64
        %v2657 = vpop.permute.xlu0 %2656
        %2658 = vrot.lane.b32.xlu0 %v2201, 64
        %v2659 = vpop.permute.xlu0 %2658
        %2660 = vrot.lane.b32.xlu0 %v2202, 64
        %v2661 = vpop.permute.xlu0 %2660
        %2662 = vrot.lane.b32.xlu0 %v2203, 64
        %v2663 = vpop.permute.xlu0 %2662
        %2664 = vrot.lane.b32.xlu0 %v2204, 64
        %v2665 = vpop.permute.xlu0 %2664
        %2666 = vrot.lane.b32.xlu0 %v2205, 64
        %v2667 = vpop.permute.xlu0 %2666
        %2668 = vrot.lane.b32.xlu0 %v2206, 64
        %v2669 = vpop.permute.xlu0 %2668
        %2670 = vrot.lane.b32.xlu0 %v2207, 64
        %v2671 = vpop.permute.xlu0 %2670
        %2672 = vrot.lane.b32.xlu0 %v2208, 64
        %v2673 = vpop.permute.xlu0 %2672
        %2674 = vrot.lane.b32.xlu0 %v2209, 64
        %v2675 = vpop.permute.xlu0 %2674
        %2676 = vrot.lane.b32.xlu0 %v2193, 64
        %v2677 = vpop.permute.xlu0 %2676
        %2678 = vrot.lane.b32.xlu0 %v2263, 96
        %v2679 = vpop.permute.xlu0 %2678
        %2680 = vrot.lane.b32.xlu0 %v2275, 96
        %v2681 = vpop.permute.xlu0 %2680
        %2682 = vrot.lane.b32.xlu0 %v2287, 96
        %v2683 = vpop.permute.xlu0 %2682
        %2684 = vrot.lane.b32.xlu0 %v2299, 96
        %v2685 = vpop.permute.xlu0 %2684
        %2686 = vrot.lane.b32.xlu0 %v2311, 96
        %v2687 = vpop.permute.xlu0 %2686
        %2688 = vrot.lane.b32.xlu0 %v2323, 96
        %v2689 = vpop.permute.xlu0 %2688
        %2690 = vrot.lane.b32.xlu0 %v2335, 96
        %v2691 = vpop.permute.xlu0 %2690
        %2692 = vrot.lane.b32.xlu0 %v2347, 96
        %v2693 = vpop.permute.xlu0 %2692
        %2694 = vrot.lane.b32.xlu0 %v2359, 96
        %v2695 = vpop.permute.xlu0 %2694
        %2696 = vrot.lane.b32.xlu0 %v2371, 96
        %v2697 = vpop.permute.xlu0 %2696
        %2698 = vrot.lane.b32.xlu0 %v2383, 96
        %v2699 = vpop.permute.xlu0 %2698
        %2700 = vrot.lane.b32.xlu0 %v2395, 96
        %v2701 = vpop.permute.xlu0 %2700
        %2702 = vrot.lane.b32.xlu0 %v2407, 96
        %v2703 = vpop.permute.xlu0 %2702
        %2704 = vrot.lane.b32.xlu0 %v2419, 96
        %v2705 = vpop.permute.xlu0 %2704
        %2706 = vrot.lane.b32.xlu0 %v2512, 96
        %v2707 = vpop.permute.xlu0 %2706
        %2708 = vrot.lane.b32.xlu0 %v2239, 96
        %v2709 = vpop.permute.xlu0 %2708
        %v2711 = vsel %vm1088, %v2193, %v2519
        %v2713 = vsel %vm1088, %v2194, %v2521
        %v2715 = vsel %vm1088, %v2195, %v2523
        %v2717 = vsel %vm1088, %v2196, %v2525
        %v2719 = vsel %vm1088, %v2197, %v2527
        %v2721 = vsel %vm1088, %v2198, %v2529
        %v2723 = vsel %vm1088, %v2199, %v2531
        %v2725 = vsel %vm1088, %v2200, %v2533
        %v2727 = vsel %vm1088, %v2201, %v2535
        %v2729 = vsel %vm1088, %v2202, %v2537
        %v2731 = vsel %vm1088, %v2203, %v2539
        %v2733 = vsel %vm1088, %v2204, %v2541
        %v2735 = vsel %vm1088, %v2205, %v2543
        %v2737 = vsel %vm1088, %v2206, %v2545
        %v2739 = vsel %vm1088, %v2207, %v2547
        %v2741 = vsel %vm1088, %v2208, %v2549
        %vm2742 = vcmask 523264
        %v2744 = vsel %vm2742, %v2711, %v2551
        %v2746 = vsel %vm2742, %v2713, %v2553
        %v2748 = vsel %vm2742, %v2715, %v2555
        %v2750 = vsel %vm2742, %v2717, %v2557
        %v2752 = vsel %vm2742, %v2719, %v2559
        %v2754 = vsel %vm2742, %v2721, %v2561
        %v2756 = vsel %vm2742, %v2723, %v2563
        %v2758 = vsel %vm2742, %v2725, %v2565
        %v2760 = vsel %vm2742, %v2727, %v2567
        %v2762 = vsel %vm2742, %v2729, %v2569
        %v2764 = vsel %vm2742, %v2731, %v2571
        %v2766 = vsel %vm2742, %v2733, %v2573
        %v2768 = vsel %vm2742, %v2735, %v2575
        %v2770 = vsel %vm2742, %v2737, %v2577
        %v2772 = vsel %vm2742, %v2739, %v2579
        %v2774 = vsel %vm2742, %v2741, %v2581
        %vm2775 = vcmask 785408
        %v2777 = vsel %vm2775, %v2744, %v2583
        %v2780 = vsel %vm2775, %v2746, %v2585
        %v2783 = vsel %vm2775, %v2748, %v2587
        %v2786 = vsel %vm2775, %v2750, %v2589
        %v2789 = vsel %vm2775, %v2752, %v2591
        %v2792 = vsel %vm2775, %v2754, %v2593
        %v2795 = vsel %vm2775, %v2756, %v2595
        %v2798 = vsel %vm2775, %v2758, %v2597
        %v2801 = vsel %vm2775, %v2760, %v2599
        %v2804 = vsel %vm2775, %v2762, %v2601
        %v2807 = vsel %vm2775, %v2764, %v2603
        %v2810 = vsel %vm2775, %v2766, %v2605
        %v2813 = vsel %vm2775, %v2768, %v2607
        %v2816 = vsel %vm2775, %v2770, %v2609
        %v2819 = vsel %vm2775, %v2772, %v2611
        %v2822 = vsel %vm2775, %v2774, %v2613
        %v2826 = vsel %vm1088, %v2251, %v2615
        %v2829 = vsel %vm1088, %v2263, %v2617
        %v2832 = vsel %vm1088, %v2275, %v2619
        %v2835 = vsel %vm1088, %v2287, %v2621
        %v2838 = vsel %vm1088, %v2299, %v2623
        %v2841 = vsel %vm1088, %v2311, %v2625
        %v2844 = vsel %vm1088, %v2323, %v2627
        %v2847 = vsel %vm1088, %v2335, %v2629
        %v2850 = vsel %vm1088, %v2347, %v2631
        %v2853 = vsel %vm1088, %v2359, %v2633
        %v2856 = vsel %vm1088, %v2371, %v2635
        %v2859 = vsel %vm1088, %v2383, %v2637
        %v2862 = vsel %vm1088, %v2395, %v2639
        %v2865 = vsel %vm1088, %v2407, %v2641
        %v2868 = vsel %vm1088, %v2419, %v2643
        %v2871 = vsel %vm1088, %v2512, %v2645
        %v2873 = vsel %vm2742, %v2826, %v2647
        %v2875 = vsel %vm2742, %v2829, %v2649
        %v2877 = vsel %vm2742, %v2832, %v2651
        %v2879 = vsel %vm2742, %v2835, %v2653
        %v2881 = vsel %vm2742, %v2838, %v2655
        %v2883 = vsel %vm2742, %v2841, %v2657
        %v2885 = vsel %vm2742, %v2844, %v2659
        %v2887 = vsel %vm2742, %v2847, %v2661
        %v2889 = vsel %vm2742, %v2850, %v2663
        %v2891 = vsel %vm2742, %v2853, %v2665
        %v2893 = vsel %vm2742, %v2856, %v2667
        %v2895 = vsel %vm2742, %v2859, %v2669
        %v2897 = vsel %vm2742, %v2862, %v2671
        %v2899 = vsel %vm2742, %v2865, %v2673
        %v2901 = vsel %vm2742, %v2868, %v2675
        %v2903 = vsel %vm2742, %v2871, %v2677
        %v2905 = vsel %vm2775, %v2873, %v2679
        %v2908 = vsel %vm2775, %v2875, %v2681
        %v2911 = vsel %vm2775, %v2877, %v2683
        %v2914 = vsel %vm2775, %v2879, %v2685
        %v2917 = vsel %vm2775, %v2881, %v2687
        %v2920 = vsel %vm2775, %v2883, %v2689
        %v2923 = vsel %vm2775, %v2885, %v2691
        %v2926 = vsel %vm2775, %v2887, %v2693
        %v2929 = vsel %vm2775, %v2889, %v2695
        %v2932 = vsel %vm2775, %v2891, %v2697
        %v2935 = vsel %vm2775, %v2893, %v2699
        %v2938 = vsel %vm2775, %v2895, %v2701
        %v2941 = vsel %vm2775, %v2897, %v2703
        %v2944 = vsel %vm2775, %v2899, %v2705
        %v2947 = vsel %vm2775, %v2901, %v2707
        %v2950 = vsel %vm2775, %v2903, %v2709
        %v2952 = vld [vmem:[%s7] sm:$0xf]
        %v2953 = vld [vmem:[%s7 + $0x4] sm:$0xf]
        %v2954 = vld [vmem:[%s7 + $0x8] sm:$0xf]
        %v2955 = vld [vmem:[%s7 + $0xc] sm:$0xf]
        %v2956 = vld [vmem:[%s7 + $0x10] sm:$0xf]
        %v2957 = vld [vmem:[%s7 + $0x14] sm:$0xf]
        %v2958 = vld [vmem:[%s7 + $0x18] sm:$0xf]
        %v2959 = vld [vmem:[%s7 + $0x1c] sm:$0xf]
        %v2960 = vld [vmem:[%s7 + $0x20] sm:$0xf]
        %v2961 = vld [vmem:[%s7 + $0x24] sm:$0xf]
        %v2962 = vld [vmem:[%s7 + $0x28] sm:$0xf]
        %v2963 = vld [vmem:[%s7 + $0x2c] sm:$0xf]
        %v2964 = vld [vmem:[%s7 + $0x30] sm:$0xf]
        %v2965 = vld [vmem:[%s7 + $0x34] sm:$0xf]
        %v2966 = vld [vmem:[%s7 + $0x38] sm:$0xf]
        %v2967 = vld [vmem:[%s7 + $0x3c] sm:$0xf]
        %v2968 = vld [vmem:[%s7 + $0x40] sm:$0xf]
        %v2969 = vld [vmem:[%s7 + $0x44] sm:$0xf]
        %v2970 = vld [vmem:[%s7 + $0x48] sm:$0xf]
        %v2971 = vld [vmem:[%s7 + $0x4c] sm:$0xf]
        %v2972 = vld [vmem:[%s7 + $0x50] sm:$0xf]
        %v2973 = vld [vmem:[%s7 + $0x54] sm:$0xf]
        %v2974 = vld [vmem:[%s7 + $0x58] sm:$0xf]
        %v2975 = vld [vmem:[%s7 + $0x5c] sm:$0xf]
        %v2976 = vld [vmem:[%s7 + $0x60] sm:$0xf]
        %v2977 = vld [vmem:[%s7 + $0x64] sm:$0xf]
        %v2978 = vld [vmem:[%s7 + $0x68] sm:$0xf]
        %v2979 = vld [vmem:[%s7 + $0x6c] sm:$0xf]
        %v2980 = vld [vmem:[%s7 + $0x70] sm:$0xf]
        %v2981 = vld [vmem:[%s7 + $0x74] sm:$0xf]
        %v2982 = vld [vmem:[%s7 + $0x78] sm:$0xf]
        %v2983 = vld [vmem:[%s7 + $0x7c] sm:$0xf]
        %v2984 = vld [vmem:[%s7 + $0x80] sm:$0xf]
        %v2985 = vld [vmem:[%s7 + $0x84] sm:$0xf]
        %v2986 = vld [vmem:[%s7 + $0x88] sm:$0xf]
        %v2987 = vld [vmem:[%s7 + $0x8c] sm:$0xf]
        %v2988 = vld [vmem:[#allocation11] sm:$0x1]
        %v2990 = vlaneseq
        %v2991 = vshrl.u32 %v2990, 7
        %v2992 = vsub.s32 0, %v2991
        %v2993 = vrot.slane %v2988, %v2992
        %v3031 = vunpack.c.l.b16 %v2952
        %v3032 = vunpack.c.l.b16 %v2953
        %v3033 = vunpack.c.l.b16 %v2954
        %v3034 = vunpack.c.l.b16 %v2955
        %v3035 = vunpack.c.l.b16 %v2956
        %v3036 = vunpack.c.l.b16 %v2957
        %v3037 = vunpack.c.l.b16 %v2958
        %v3038 = vunpack.c.l.b16 %v2959
        %v3039 = vunpack.c.l.b16 %v2960
        %v3040 = vunpack.c.l.b16 %v2961
        %v3041 = vunpack.c.l.b16 %v2962
        %v3042 = vunpack.c.l.b16 %v2963
        %v3043 = vunpack.c.l.b16 %v2964
        %v3044 = vunpack.c.l.b16 %v2965
        %v3045 = vunpack.c.l.b16 %v2966
        %v3046 = vunpack.c.l.b16 %v2967
        %v3047 = vunpack.c.l.b16 %v2968
        %v3048 = vunpack.c.l.b16 %v2969
        %v3049 = vunpack.c.l.b16 %v2970
        %v3050 = vunpack.c.l.b16 %v2971
        %v3051 = vunpack.c.l.b16 %v2972
        %v3052 = vunpack.c.l.b16 %v2973
        %v3053 = vunpack.c.l.b16 %v2974
        %v3054 = vunpack.c.l.b16 %v2975
        %v3055 = vunpack.c.l.b16 %v2976
        %v3056 = vunpack.c.l.b16 %v2977
        %v3057 = vunpack.c.l.b16 %v2978
        %v3058 = vunpack.c.l.b16 %v2979
        %v3059 = vunpack.c.l.b16 %v2980
        %v3060 = vunpack.c.l.b16 %v2981
        %v3061 = vunpack.c.l.b16 %v2982
        %v3062 = vunpack.c.l.b16 %v2983
        %v3063 = vunpack.c.l.b16 %v2984
        %v3064 = vunpack.c.l.b16 %v2985
        %v3065 = vunpack.c.l.b16 %v2986
        %v3066 = vunpack.c.l.b16 %v2987
        %v3067 = vpack.c.b16 %v3032, %v3031
        %v3068 = vpack.c.b16 %v3034, %v3033
        %v3069 = vpack.c.b16 %v3036, %v3035
        %v3070 = vpack.c.b16 %v3038, %v3037
        %v3071 = vpack.c.b16 %v3040, %v3039
        %v3072 = vpack.c.b16 %v3042, %v3041
        %v3073 = vpack.c.b16 %v3044, %v3043
        %v3074 = vpack.c.b16 %v3046, %v3045
        %v3075 = vpack.c.b16 %v3048, %v3047
        %v3076 = vpack.c.b16 %v3050, %v3049
        %v3077 = vpack.c.b16 %v3052, %v3051
        %v3078 = vpack.c.b16 %v3054, %v3053
        %v3079 = vpack.c.b16 %v3056, %v3055
        %v3080 = vpack.c.b16 %v3058, %v3057
        %v3081 = vpack.c.b16 %v3060, %v3059
        %v3082 = vpack.c.b16 %v3062, %v3061
        %v3083 = vpack.c.b16 %v3064, %v3063
        %v3084 = vpack.c.b16 %v3066, %v3065
        %v3104 = vsel %vm1088, %v2461, 0
        %v3107 = vsel %vm1088, %v2464, 0
        %v3110 = vsel %vm1088, %v2467, 0
        %v3113 = vsel %vm1088, %v2470, 0
        %v3116 = vsel %vm1088, %v2473, 0
        %v3119 = vsel %vm1088, %v2476, 0
        %v3122 = vsel %vm1088, %v2479, 0
        %v3125 = vsel %vm1088, %v2482, 0
        %v3128 = vsel %vm1088, %v2485, 0
        %v3131 = vsel %vm1088, %v2488, 0
        %v3134 = vsel %vm1088, %v2491, 0
        %v3137 = vsel %vm1088, %v2494, 0
        %v3140 = vsel %vm1088, %v2497, 0
        %v3143 = vsel %vm1088, %v2500, 0
        %v3146 = vsel %vm1088, %v2517, 0
        %v3149 = vsel %vm1088, %v2455, 0
        %3151 = vmatprep.subr.bf16.mxu0 0
        %3152 = vmatpush1.bf16.msra.mxu0 %v3067
        %3153 = vmatprep.subr.bf16.mxu0 0
        %3154 = vmatpush1.bf16.msra.mxu0 %v3068
        %3155 = vmatprep.subr.bf16.mxu0 0
        %3156 = vmatpush1.bf16.msra.mxu0 %v3069
        %3157 = vmatprep.subr.bf16.mxu0 0
        %3158 = vmatpush1.bf16.msra.mxu0 %v3070
        %3159 = vmatprep.subr.bf16.mxu0 0
        %3160 = vmatpush1.bf16.msra.mxu0 %v3071
        %3161 = vmatprep.subr.bf16.mxu0 0
        %3162 = vmatpush1.bf16.msra.mxu0 %v3072
        %3163 = vmatprep.subr.bf16.mxu0 0
        %3164 = vmatpush1.bf16.msra.mxu0 %v3073
        %3165 = vmatprep.subr.bf16.mxu0 0
        %3166 = vmatpush1.bf16.msra.mxu0 %v3074
        %3167 = vmatprep.subr.bf16.mxu0 0
        %3168 = vmatpush1.bf16.msra.mxu0 %v3075
        %3169 = vmatprep.subr.bf16.mxu0 0
        %3170 = vmatpush1.bf16.msra.mxu0 %v3076
        %3171 = vmatprep.subr.bf16.mxu0 0
        %3172 = vmatpush1.bf16.msra.mxu0 %v3077
        %3173 = vmatprep.subr.bf16.mxu0 0
        %3174 = vmatpush1.bf16.msra.mxu0 %v3078
        %3175 = vmatprep.subr.bf16.mxu0 0
        %3176 = vmatpush1.bf16.msra.mxu0 %v3079
        %3177 = vmatprep.subr.bf16.mxu0 0
        %3178 = vmatpush1.bf16.msra.mxu0 %v3080
        %3179 = vmatprep.subr.bf16.mxu0 0
        %3180 = vmatpush1.bf16.msra.mxu0 %v3081
        %3181 = vmatprep.subr.bf16.mxu0 0
        %3182 = vmatpush1.bf16.msra.mxu0 %v3082
        %3183 = vmatprep.mubr.bf16.mxu0 %v2905
        %3184 = vmatmul.mubr.bf16.gmra.mrb[0].mxu0 %v2777
        %v3185 = vpop.f32.mrb[0].mxu0
        %v3186 = vadd.f32 %v2993, %v3185
        %v3187 = vpop.f32.mrb[0].mxu0
        %v3188 = vpop.f32.mrb[0].mxu0
        %v3189 = vadd.f32 %v2993, %v3188
        %v3190 = vpop.f32.mrb[0].mxu0
        %3191 = vmatprep.mubr.bf16.mxu0 %v2908
        %3192 = vmatmul.mubr.bf16.gmra.mrb[0].mxu0 %v2780
        %v3193 = vpop.f32.mrb[0].mxu0
        %v3194 = vadd.f32 %v2993, %v3193
        %v3195 = vpop.f32.mrb[0].mxu0
        %v3196 = vpop.f32.mrb[0].mxu0
        %v3197 = vadd.f32 %v2993, %v3196
        %v3198 = vpop.f32.mrb[0].mxu0
        %3199 = vmatprep.mubr.bf16.mxu0 %v2911
        %3200 = vmatmul.mubr.bf16.gmra.mrb[0].mxu0 %v2783
        %v3201 = vpop.f32.mrb[0].mxu0
        %v3202 = vadd.f32 %v2993, %v3201
        %v3203 = vpop.f32.mrb[0].mxu0
        %v3204 = vpop.f32.mrb[0].mxu0
        %v3205 = vadd.f32 %v2993, %v3204
        %v3206 = vpop.f32.mrb[0].mxu0
        %3207 = vmatprep.mubr.bf16.mxu0 %v2914
        %3208 = vmatmul.mubr.bf16.gmra.mrb[0].mxu0 %v2786
        %v3209 = vpop.f32.mrb[0].mxu0
        %v3210 = vadd.f32 %v2993, %v3209
        %v3211 = vpop.f32.mrb[0].mxu0
        %v3212 = vpop.f32.mrb[0].mxu0
        %v3213 = vadd.f32 %v2993, %v3212
        %v3214 = vpop.f32.mrb[0].mxu0
        %3215 = vmatprep.mubr.bf16.mxu0 %v2917
        %3216 = vmatmul.mubr.bf16.gmra.mrb[0].mxu0 %v2789
        %v3217 = vpop.f32.mrb[0].mxu0
        %v3218 = vadd.f32 %v2993, %v3217
        %v3219 = vpop.f32.mrb[0].mxu0
        %v3220 = vpop.f32.mrb[0].mxu0
        %v3221 = vadd.f32 %v2993, %v3220
        %v3222 = vpop.f32.mrb[0].mxu0
        %3223 = vmatprep.mubr.bf16.mxu0 %v2920
        %3224 = vmatmul.mubr.bf16.gmra.mrb[0].mxu0 %v2792
        %v3225 = vpop.f32.mrb[0].mxu0
        %v3226 = vadd.f32 %v2993, %v3225
        %v3227 = vpop.f32.mrb[0].mxu0
        %v3228 = vpop.f32.mrb[0].mxu0
        %v3229 = vadd.f32 %v2993, %v3228
        %v3230 = vpop.f32.mrb[0].mxu0
        %3231 = vmatprep.mubr.bf16.mxu0 %v2923
        %3232 = vmatmul.mubr.bf16.gmra.mrb[0].mxu0 %v2795
        %v3233 = vpop.f32.mrb[0].mxu0
        %v3234 = vadd.f32 %v2993, %v3233
        %v3235 = vpop.f32.mrb[0].mxu0
        %v3236 = vpop.f32.mrb[0].mxu0
        %v3237 = vadd.f32 %v2993, %v3236
        %v3238 = vpop.f32.mrb[0].mxu0
        %3239 = vmatprep.mubr.bf16.mxu0 %v2926
        %3240 = vmatmul.mubr.bf16.gmra.mrb[0].mxu0 %v2798
        %v3241 = vpop.f32.mrb[0].mxu0
        %v3242 = vadd.f32 %v2993, %v3241
        %v3243 = vpop.f32.mrb[0].mxu0
        %v3244 = vpop.f32.mrb[0].mxu0
        %v3245 = vadd.f32 %v2993, %v3244
        %v3246 = vpop.f32.mrb[0].mxu0
        %3247 = vmatprep.mubr.bf16.mxu0 %v2929
        %3248 = vmatmul.mubr.bf16.gmra.mrb[0].mxu0 %v2801
        %v3249 = vpop.f32.mrb[0].mxu0
        %v3250 = vadd.f32 %v2993, %v3249
        %v3251 = vpop.f32.mrb[0].mxu0
        %v3252 = vpop.f32.mrb[0].mxu0
        %v3253 = vadd.f32 %v2993, %v3252
        %v3254 = vpop.f32.mrb[0].mxu0
        %3255 = vmatprep.mubr.bf16.mxu0 %v2932
        %3256 = vmatmul.mubr.bf16.gmra.mrb[0].mxu0 %v2804
        %v3257 = vpop.f32.mrb[0].mxu0
        %v3258 = vadd.f32 %v2993, %v3257
        %v3259 = vpop.f32.mrb[0].mxu0
        %v3260 = vpop.f32.mrb[0].mxu0
        %v3261 = vadd.f32 %v2993, %v3260
        %v3262 = vpop.f32.mrb[0].mxu0
        %3263 = vmatprep.mubr.bf16.mxu0 %v2935
        %3264 = vmatmul.mubr.bf16.gmra.mrb[0].mxu0 %v2807
        %v3265 = vpop.f32.mrb[0].mxu0
        %v3266 = vadd.f32 %v2993, %v3265
        %v3267 = vpop.f32.mrb[0].mxu0
        %v3268 = vpop.f32.mrb[0].mxu0
        %v3269 = vadd.f32 %v2993, %v3268
        %v3270 = vpop.f32.mrb[0].mxu0
        %3271 = vmatprep.mubr.bf16.mxu0 %v2938
        %3272 = vmatmul.mubr.bf16.gmra.mrb[0].mxu0 %v2810
        %v3273 = vpop.f32.mrb[0].mxu0
        %v3274 = vadd.f32 %v2993, %v3273
        %v3275 = vpop.f32.mrb[0].mxu0
        %v3276 = vpop.f32.mrb[0].mxu0
        %v3277 = vadd.f32 %v2993, %v3276
        %v3278 = vpop.f32.mrb[0].mxu0
        %3279 = vmatprep.mubr.bf16.mxu0 %v2941
        %3280 = vmatmul.mubr.bf16.gmra.mrb[0].mxu0 %v2813
        %v3281 = vpop.f32.mrb[0].mxu0
        %v3282 = vadd.f32 %v2993, %v3281
        %v3283 = vpop.f32.mrb[0].mxu0
        %v3284 = vpop.f32.mrb[0].mxu0
        %v3285 = vadd.f32 %v2993, %v3284
        %v3286 = vpop.f32.mrb[0].mxu0
        %3287 = vmatprep.mubr.bf16.mxu0 %v2944
        %3288 = vmatmul.mubr.bf16.gmra.mrb[0].mxu0 %v2816
        %v3289 = vpop.f32.mrb[0].mxu0
        %v3290 = vadd.f32 %v2993, %v3289
        %v3291 = vpop.f32.mrb[0].mxu0
        %v3292 = vpop.f32.mrb[0].mxu0
        %v3293 = vadd.f32 %v2993, %v3292
        %v3294 = vpop.f32.mrb[0].mxu0
        %3295 = vmatprep.mubr.bf16.mxu0 %v2947
        %3296 = vmatmul.mubr.bf16.gmra.mrb[0].mxu0 %v2819
        %v3297 = vpop.f32.mrb[0].mxu0
        %v3298 = vadd.f32 %v2993, %v3297
        %v3299 = vpop.f32.mrb[0].mxu0
        %v3300 = vpop.f32.mrb[0].mxu0
        %v3301 = vadd.f32 %v2993, %v3300
        %v3302 = vpop.f32.mrb[0].mxu0
        %3303 = vmatprep.mubr.bf16.mxu0 %v2950
        %3304 = vmatmul.mubr.bf16.gmra.mrb[0].mxu0 %v2822
        %v3305 = vpop.f32.mrb[0].mxu0
        %v3306 = vadd.f32 %v2993, %v3305
        %v3307 = vpop.f32.mrb[0].mxu0
        %v3308 = vpop.f32.mrb[0].mxu0
        %v3309 = vadd.f32 %v2993, %v3308
        %v3310 = vpop.f32.mrb[0].mxu0
        %3311 = vdwg.mxu0
        %3312 = vmatprep.subr.bf16.mxu0 0
        %3313 = vmatpush1.bf16.msra.mxu0 %v3083
        %3314 = vmatprep.subr.bf16.mxu0 0
        %3315 = vmatpush1.bf16.msra.mxu0 %v3084
        %3316 = vmatprep.subr.bf16.mxu0 0
        %3317 = vmatpush1.bf16.msra.mxu0 0
        %3318 = vmatprep.subr.bf16.mxu0 0
        %3319 = vmatpush1.bf16.msra.mxu0 0
        %3320 = vmatprep.subr.bf16.mxu0 0
        %3321 = vmatpush1.bf16.msra.mxu0 0
        %3322 = vmatprep.subr.bf16.mxu0 0
        %3323 = vmatpush1.bf16.msra.mxu0 0
        %3324 = vmatprep.subr.bf16.mxu0 0
        %3325 = vmatpush1.bf16.msra.mxu0 0
        %3326 = vmatprep.subr.bf16.mxu0 0
        %3327 = vmatpush1.bf16.msra.mxu0 0
        %3328 = vmatprep.subr.bf16.mxu0 0
        %3329 = vmatpush1.bf16.msra.mxu0 0
        %3330 = vmatprep.subr.bf16.mxu0 0
        %3331 = vmatpush1.bf16.msra.mxu0 0
        %3332 = vmatprep.subr.bf16.mxu0 0
        %3333 = vmatpush1.bf16.msra.mxu0 0
        %3334 = vmatprep.subr.bf16.mxu0 0
        %3335 = vmatpush1.bf16.msra.mxu0 0
        %3336 = vmatprep.subr.bf16.mxu0 0
        %3337 = vmatpush1.bf16.msra.mxu0 0
        %3338 = vmatprep.subr.bf16.mxu0 0
        %3339 = vmatpush1.bf16.msra.mxu0 0
        %3340 = vmatprep.subr.bf16.mxu0 0
        %3341 = vmatpush1.bf16.msra.mxu0 0
        %3342 = vmatprep.subr.bf16.mxu0 0
        %3343 = vmatpush1.bf16.msra.mxu0 0
        %3344 = vmatprep.mubr.bf16.mxu0 0
        %3345 = vmatmul.mubr.bf16.gmra.mrb[0].mxu0 %v3104
        %v3346 = vpop.f32.mrb[0].mxu0
        %v3347 = vadd.f32 %v3186, %v3346
        %v3348 = vpop.f32.mrb[0].mxu0
        %v3349 = vpop.f32.mrb[0].mxu0
        %v3350 = vadd.f32 %v3189, %v3349
        %v3351 = vpop.f32.mrb[0].mxu0
        %3352 = vmatprep.mubr.bf16.mxu0 0
        %3353 = vmatmul.mubr.bf16.gmra.mrb[0].mxu0 %v3107
        %v3354 = vpop.f32.mrb[0].mxu0
        %v3355 = vadd.f32 %v3194, %v3354
        %v3356 = vpop.f32.mrb[0].mxu0
        %v3357 = vpop.f32.mrb[0].mxu0
        %v3358 = vadd.f32 %v3197, %v3357
        %v3359 = vpop.f32.mrb[0].mxu0
        %3360 = vmatprep.mubr.bf16.mxu0 0
        %3361 = vmatmul.mubr.bf16.gmra.mrb[0].mxu0 %v3110
        %v3362 = vpop.f32.mrb[0].mxu0
        %v3363 = vadd.f32 %v3202, %v3362
        %v3364 = vpop.f32.mrb[0].mxu0
        %v3365 = vpop.f32.mrb[0].mxu0
        %v3366 = vadd.f32 %v3205, %v3365
        %v3367 = vpop.f32.mrb[0].mxu0
        %3368 = vmatprep.mubr.bf16.mxu0 0
        %3369 = vmatmul.mubr.bf16.gmra.mrb[0].mxu0 %v3113
        %v3370 = vpop.f32.mrb[0].mxu0
        %v3371 = vadd.f32 %v3210, %v3370
        %v3372 = vpop.f32.mrb[0].mxu0
        %v3373 = vpop.f32.mrb[0].mxu0
        %v3374 = vadd.f32 %v3213, %v3373
        %v3375 = vpop.f32.mrb[0].mxu0
        %3376 = vmatprep.mubr.bf16.mxu0 0
        %3377 = vmatmul.mubr.bf16.gmra.mrb[0].mxu0 %v3116
        %v3378 = vpop.f32.mrb[0].mxu0
        %v3379 = vadd.f32 %v3218, %v3378
        %v3380 = vpop.f32.mrb[0].mxu0
        %v3381 = vpop.f32.mrb[0].mxu0
        %v3382 = vadd.f32 %v3221, %v3381
        %v3383 = vpop.f32.mrb[0].mxu0
        %3384 = vmatprep.mubr.bf16.mxu0 0
        %3385 = vmatmul.mubr.bf16.gmra.mrb[0].mxu0 %v3119
        %v3386 = vpop.f32.mrb[0].mxu0
        %v3387 = vadd.f32 %v3226, %v3386
        %v3388 = vpop.f32.mrb[0].mxu0
        %v3389 = vpop.f32.mrb[0].mxu0
        %v3390 = vadd.f32 %v3229, %v3389
        %v3391 = vpop.f32.mrb[0].mxu0
        %3392 = vmatprep.mubr.bf16.mxu0 0
        %3393 = vmatmul.mubr.bf16.gmra.mrb[0].mxu0 %v3122
        %v3394 = vpop.f32.mrb[0].mxu0
        %v3395 = vadd.f32 %v3234, %v3394
        %v3396 = vpop.f32.mrb[0].mxu0
        %v3397 = vpop.f32.mrb[0].mxu0
        %v3398 = vadd.f32 %v3237, %v3397
        %v3399 = vpop.f32.mrb[0].mxu0
        %3400 = vmatprep.mubr.bf16.mxu0 0
        %3401 = vmatmul.mubr.bf16.gmra.mrb[0].mxu0 %v3125
        %v3402 = vpop.f32.mrb[0].mxu0
        %v3403 = vadd.f32 %v3242, %v3402
        %v3404 = vpop.f32.mrb[0].mxu0
        %v3405 = vpop.f32.mrb[0].mxu0
        %v3406 = vadd.f32 %v3245, %v3405
        %v3407 = vpop.f32.mrb[0].mxu0
        %3408 = vmatprep.mubr.bf16.mxu0 0
        %3409 = vmatmul.mubr.bf16.gmra.mrb[0].mxu0 %v3128
        %v3410 = vpop.f32.mrb[0].mxu0
        %v3411 = vadd.f32 %v3250, %v3410
        %v3412 = vpop.f32.mrb[0].mxu0
        %v3413 = vpop.f32.mrb[0].mxu0
        %v3414 = vadd.f32 %v3253, %v3413
        %v3415 = vpop.f32.mrb[0].mxu0
        %3416 = vmatprep.mubr.bf16.mxu0 0
        %3417 = vmatmul.mubr.bf16.gmra.mrb[0].mxu0 %v3131
        %v3418 = vpop.f32.mrb[0].mxu0
        %v3419 = vadd.f32 %v3258, %v3418
        %v3420 = vpop.f32.mrb[0].mxu0
        %v3421 = vpop.f32.mrb[0].mxu0
        %v3422 = vadd.f32 %v3261, %v3421
        %v3423 = vpop.f32.mrb[0].mxu0
        %3424 = vmatprep.mubr.bf16.mxu0 0
        %3425 = vmatmul.mubr.bf16.gmra.mrb[0].mxu0 %v3134
        %v3426 = vpop.f32.mrb[0].mxu0
        %v3427 = vadd.f32 %v3266, %v3426
        %v3428 = vpop.f32.mrb[0].mxu0
        %v3429 = vpop.f32.mrb[0].mxu0
        %v3430 = vadd.f32 %v3269, %v3429
        %v3431 = vpop.f32.mrb[0].mxu0
        %3432 = vmatprep.mubr.bf16.mxu0 0
        %3433 = vmatmul.mubr.bf16.gmra.mrb[0].mxu0 %v3137
        %v3434 = vpop.f32.mrb[0].mxu0
        %v3435 = vadd.f32 %v3274, %v3434
        %v3436 = vpop.f32.mrb[0].mxu0
        %v3437 = vpop.f32.mrb[0].mxu0
        %v3438 = vadd.f32 %v3277, %v3437
        %v3439 = vpop.f32.mrb[0].mxu0
        %3440 = vmatprep.mubr.bf16.mxu0 0
        %3441 = vmatmul.mubr.bf16.gmra.mrb[0].mxu0 %v3140
        %v3442 = vpop.f32.mrb[0].mxu0
        %v3443 = vadd.f32 %v3282, %v3442
        %v3444 = vpop.f32.mrb[0].mxu0
        %v3445 = vpop.f32.mrb[0].mxu0
        %v3446 = vadd.f32 %v3285, %v3445
        %v3447 = vpop.f32.mrb[0].mxu0
        %3448 = vmatprep.mubr.bf16.mxu0 0
        %3449 = vmatmul.mubr.bf16.gmra.mrb[0].mxu0 %v3143
        %v3450 = vpop.f32.mrb[0].mxu0
        %v3451 = vadd.f32 %v3290, %v3450
        %v3452 = vpop.f32.mrb[0].mxu0
        %v3453 = vpop.f32.mrb[0].mxu0
        %v3454 = vadd.f32 %v3293, %v3453
        %v3455 = vpop.f32.mrb[0].mxu0
        %3456 = vmatprep.mubr.bf16.mxu0 0
        %3457 = vmatmul.mubr.bf16.gmra.mrb[0].mxu0 %v3146
        %v3458 = vpop.f32.mrb[0].mxu0
        %v3459 = vadd.f32 %v3298, %v3458
        %v3460 = vpop.f32.mrb[0].mxu0
        %v3461 = vpop.f32.mrb[0].mxu0
        %v3462 = vadd.f32 %v3301, %v3461
        %v3463 = vpop.f32.mrb[0].mxu0
        %3464 = vmatprep.mubr.bf16.mxu0 0
        %3465 = vmatmul.mubr.bf16.gmra.mrb[0].mxu0 %v3149
        %v3466 = vpop.f32.mrb[0].mxu0
        %v3467 = vadd.f32 %v3306, %v3466
        %v3468 = vpop.f32.mrb[0].mxu0
        %v3469 = vpop.f32.mrb[0].mxu0
        %v3470 = vadd.f32 %v3309, %v3469
        %v3471 = vpop.f32.mrb[0].mxu0
        %3472 = vdwg.mxu0
        %vm3473 = vcmp.ge.f32.partialorder %v3347, 0.0
        %vm3474 = vcmp.ge.f32.partialorder %v3350, 0.0
        %vm3475 = vcmp.ge.f32.partialorder %v3355, 0.0
        %vm3476 = vcmp.ge.f32.partialorder %v3358, 0.0
        %vm3477 = vcmp.ge.f32.partialorder %v3363, 0.0
        %vm3478 = vcmp.ge.f32.partialorder %v3366, 0.0
        %vm3479 = vcmp.ge.f32.partialorder %v3371, 0.0
        %vm3480 = vcmp.ge.f32.partialorder %v3374, 0.0
        %vm3481 = vcmp.ge.f32.partialorder %v3379, 0.0
        %vm3482 = vcmp.ge.f32.partialorder %v3382, 0.0
        %vm3483 = vcmp.ge.f32.partialorder %v3387, 0.0
        %vm3484 = vcmp.ge.f32.partialorder %v3390, 0.0
        %vm3485 = vcmp.ge.f32.partialorder %v3395, 0.0
        %vm3486 = vcmp.ge.f32.partialorder %v3398, 0.0
        %vm3487 = vcmp.ge.f32.partialorder %v3403, 0.0
        %vm3488 = vcmp.ge.f32.partialorder %v3406, 0.0
        %vm3489 = vcmp.ge.f32.partialorder %v3411, 0.0
        %vm3490 = vcmp.ge.f32.partialorder %v3414, 0.0
        %vm3491 = vcmp.ge.f32.partialorder %v3419, 0.0
        %vm3492 = vcmp.ge.f32.partialorder %v3422, 0.0
        %vm3493 = vcmp.ge.f32.partialorder %v3427, 0.0
        %vm3494 = vcmp.ge.f32.partialorder %v3430, 0.0
        %vm3495 = vcmp.ge.f32.partialorder %v3435, 0.0
        %vm3496 = vcmp.ge.f32.partialorder %v3438, 0.0
        %vm3497 = vcmp.ge.f32.partialorder %v3443, 0.0
        %vm3498 = vcmp.ge.f32.partialorder %v3446, 0.0
        %vm3499 = vcmp.ge.f32.partialorder %v3451, 0.0
        %vm3500 = vcmp.ge.f32.partialorder %v3454, 0.0
        %vm3501 = vcmp.ge.f32.partialorder %v3459, 0.0
        %vm3502 = vcmp.ge.f32.partialorder %v3462, 0.0
        %vm3503 = vcmp.ge.f32.partialorder %v3467, 0.0
        %vm3504 = vcmp.ge.f32.partialorder %v3470, 0.0
        %v3505 = vstv %s603
        %v3506 = vmul.f32 %v3505, %v3347
        %v3507 = vmul.f32 %v3505, %v3350
        %v3508 = vmul.f32 %v3505, %v3355
        %v3509 = vmul.f32 %v3505, %v3358
        %v3510 = vmul.f32 %v3505, %v3363
        %v3511 = vmul.f32 %v3505, %v3366
        %v3512 = vmul.f32 %v3505, %v3371
        %v3513 = vmul.f32 %v3505, %v3374
        %v3514 = vmul.f32 %v3505, %v3379
        %v3515 = vmul.f32 %v3505, %v3382
        %v3516 = vmul.f32 %v3505, %v3387
        %v3517 = vmul.f32 %v3505, %v3390
        %v3518 = vmul.f32 %v3505, %v3395
        %v3519 = vmul.f32 %v3505, %v3398
        %v3520 = vmul.f32 %v3505, %v3403
        %v3521 = vmul.f32 %v3505, %v3406
        %v3522 = vmul.f32 %v3505, %v3411
        %v3523 = vmul.f32 %v3505, %v3414
        %v3524 = vmul.f32 %v3505, %v3419
        %v3525 = vmul.f32 %v3505, %v3422
        %v3526 = vmul.f32 %v3505, %v3427
        %v3527 = vmul.f32 %v3505, %v3430
        %v3528 = vmul.f32 %v3505, %v3435
        %v3529 = vmul.f32 %v3505, %v3438
        %v3530 = vmul.f32 %v3505, %v3443
        %v3531 = vmul.f32 %v3505, %v3446
        %v3532 = vmul.f32 %v3505, %v3451
        %v3533 = vmul.f32 %v3505, %v3454
        %v3534 = vmul.f32 %v3505, %v3459
        %v3535 = vmul.f32 %v3505, %v3462
        %v3536 = vmul.f32 %v3505, %v3467
        %v3537 = vmul.f32 %v3505, %v3470
        %v3538 = vsel %vm3473, %v3347, %v3506
        %v3539 = vsel %vm3474, %v3350, %v3507
        %v3540 = vsel %vm3475, %v3355, %v3508
        %v3541 = vsel %vm3476, %v3358, %v3509
        %v3542 = vsel %vm3477, %v3363, %v3510
        %v3543 = vsel %vm3478, %v3366, %v3511
        %v3544 = vsel %vm3479, %v3371, %v3512
        %v3545 = vsel %vm3480, %v3374, %v3513
        %v3546 = vsel %vm3481, %v3379, %v3514
        %v3547 = vsel %vm3482, %v3382, %v3515
        %v3548 = vsel %vm3483, %v3387, %v3516
        %v3549 = vsel %vm3484, %v3390, %v3517
        %v3550 = vsel %vm3485, %v3395, %v3518
        %v3551 = vsel %vm3486, %v3398, %v3519
        %v3552 = vsel %vm3487, %v3403, %v3520
        %v3553 = vsel %vm3488, %v3406, %v3521
        %v3554 = vsel %vm3489, %v3411, %v3522
        %v3555 = vsel %vm3490, %v3414, %v3523
        %v3556 = vsel %vm3491, %v3419, %v3524
        %v3557 = vsel %vm3492, %v3422, %v3525
        %v3558 = vsel %vm3493, %v3427, %v3526
        %v3559 = vsel %vm3494, %v3430, %v3527
        %v3560 = vsel %vm3495, %v3435, %v3528
        %v3561 = vsel %vm3496, %v3438, %v3529
        %v3562 = vsel %vm3497, %v3443, %v3530
        %v3563 = vsel %vm3498, %v3446, %v3531
        %v3564 = vsel %vm3499, %v3451, %v3532
        %v3565 = vsel %vm3500, %v3454, %v3533
        %v3566 = vsel %vm3501, %v3459, %v3534
        %v3567 = vsel %vm3502, %v3462, %v3535
        %v3568 = vsel %vm3503, %v3467, %v3536
        %v3569 = vsel %vm3504, %v3470, %v3537
        %v3570 = vpack.c.bf16 %v3539, %v3538
        %v3571 = vpack.c.bf16 %v3541, %v3540
        %v3572 = vpack.c.bf16 %v3543, %v3542
        %v3573 = vpack.c.bf16 %v3545, %v3544
        %v3574 = vpack.c.bf16 %v3547, %v3546
        %v3575 = vpack.c.bf16 %v3549, %v3548
        %v3576 = vpack.c.bf16 %v3551, %v3550
        %v3577 = vpack.c.bf16 %v3553, %v3552
        %v3578 = vpack.c.bf16 %v3555, %v3554
        %v3579 = vpack.c.bf16 %v3557, %v3556
        %v3580 = vpack.c.bf16 %v3559, %v3558
        %v3581 = vpack.c.bf16 %v3561, %v3560
        %v3582 = vpack.c.bf16 %v3563, %v3562
        %v3583 = vpack.c.bf16 %v3565, %v3564
        %v3584 = vpack.c.bf16 %v3567, %v3566
        %v3585 = vpack.c.bf16 %v3569, %v3568
        %v3586 = vld [vmem:[#allocation13] sm:$0xf]
        %v3587 = vld [vmem:[#allocation13 + $0x4] sm:$0xf]
        %v3588 = vld [vmem:[#allocation13 + $0x8] sm:$0xf]
        %v3589 = vld [vmem:[#allocation13 + $0xc] sm:$0xf]
        %v3594 = vunpack.c.l.b16 %v3586
        %v3595 = vunpack.c.l.b16 %v3587
        %v3596 = vunpack.c.l.b16 %v3588
        %v3597 = vunpack.c.l.b16 %v3589
        %v3598 = vpack.c.b16 %v3595, %v3594
        %v3599 = vpack.c.b16 %v3597, %v3596
        %v3603 = vsel %vm1088, %v3570, 0
        %v3606 = vsel %vm1088, %v3571, 0
        %v3609 = vsel %vm1088, %v3572, 0
        %v3612 = vsel %vm1088, %v3573, 0
        %v3615 = vsel %vm1088, %v3574, 0
        %v3618 = vsel %vm1088, %v3575, 0
        %v3621 = vsel %vm1088, %v3576, 0
        %v3624 = vsel %vm1088, %v3577, 0
        %v3627 = vsel %vm1088, %v3578, 0
        %v3630 = vsel %vm1088, %v3579, 0
        %v3633 = vsel %vm1088, %v3580, 0
        %v3636 = vsel %vm1088, %v3581, 0
        %v3639 = vsel %vm1088, %v3582, 0
        %v3642 = vsel %vm1088, %v3583, 0
        %v3645 = vsel %vm1088, %v3584, 0
        %v3648 = vsel %vm1088, %v3585, 0
        %3650 = vmatprep.subr.bf16.mxu0 0
        %3651 = vmatpush1.bf16.msra.mxu0 %v3598
        %3652 = vmatprep.subr.bf16.mxu0 0
        %3653 = vmatpush1.bf16.msra.mxu0 %v3599
        %3654 = vmatprep.subr.bf16.mxu0 0
        %3655 = vmatpush1.bf16.msra.mxu0 0
        %3656 = vmatprep.subr.bf16.mxu0 0
        %3657 = vmatpush1.bf16.msra.mxu0 0
        %3658 = vmatprep.subr.bf16.mxu0 0
        %3659 = vmatpush1.bf16.msra.mxu0 0
        %3660 = vmatprep.subr.bf16.mxu0 0
        %3661 = vmatpush1.bf16.msra.mxu0 0
        %3662 = vmatprep.subr.bf16.mxu0 0
        %3663 = vmatpush1.bf16.msra.mxu0 0
        %3664 = vmatprep.subr.bf16.mxu0 0
        %3665 = vmatpush1.bf16.msra.mxu0 0
        %3666 = vmatprep.subr.bf16.mxu0 0
        %3667 = vmatpush1.bf16.msra.mxu0 0
        %3668 = vmatprep.subr.bf16.mxu0 0
        %3669 = vmatpush1.bf16.msra.mxu0 0
        %3670 = vmatprep.subr.bf16.mxu0 0
        %3671 = vmatpush1.bf16.msra.mxu0 0
        %3672 = vmatprep.subr.bf16.mxu0 0
        %3673 = vmatpush1.bf16.msra.mxu0 0
        %3674 = vmatprep.subr.bf16.mxu0 0
        %3675 = vmatpush1.bf16.msra.mxu0 0
        %3676 = vmatprep.subr.bf16.mxu0 0
        %3677 = vmatpush1.bf16.msra.mxu0 0
        %3678 = vmatprep.subr.bf16.mxu0 0
        %3679 = vmatpush1.bf16.msra.mxu0 0
        %3680 = vmatprep.subr.bf16.mxu0 0
        %3681 = vmatpush1.bf16.msra.mxu0 0
        %3682 = vmatprep.mubr.bf16.mxu0 0
        %3683 = vmatmul.mubr.bf16.gmra.mrb[0].mxu0 %v3603
        %v3684 = vpop.f32.mrb[0].mxu0
        %v3685 = vadd.f32 0.0, %v3684
        %v3686 = vpop.f32.mrb[0].mxu0
        %v3687 = vpop.f32.mrb[0].mxu0
        %v3688 = vadd.f32 0.0, %v3687
        %v3689 = vpop.f32.mrb[0].mxu0
        %3690 = vmatprep.mubr.bf16.mxu0 0
        %3691 = vmatmul.mubr.bf16.gmra.mrb[0].mxu0 %v3606
        %v3692 = vpop.f32.mrb[0].mxu0
        %v3693 = vadd.f32 0.0, %v3692
        %v3694 = vpop.f32.mrb[0].mxu0
        %v3695 = vpop.f32.mrb[0].mxu0
        %v3696 = vadd.f32 0.0, %v3695
        %v3697 = vpop.f32.mrb[0].mxu0
        %3698 = vmatprep.mubr.bf16.mxu0 0
        %3699 = vmatmul.mubr.bf16.gmra.mrb[0].mxu0 %v3609
        %v3700 = vpop.f32.mrb[0].mxu0
        %v3701 = vadd.f32 0.0, %v3700
        %v3702 = vpop.f32.mrb[0].mxu0
        %v3703 = vpop.f32.mrb[0].mxu0
        %v3704 = vadd.f32 0.0, %v3703
        %v3705 = vpop.f32.mrb[0].mxu0
        %3706 = vmatprep.mubr.bf16.mxu0 0
        %3707 = vmatmul.mubr.bf16.gmra.mrb[0].mxu0 %v3612
        %v3708 = vpop.f32.mrb[0].mxu0
        %v3709 = vadd.f32 0.0, %v3708
        %v3710 = vpop.f32.mrb[0].mxu0
        %v3711 = vpop.f32.mrb[0].mxu0
        %v3712 = vadd.f32 0.0, %v3711
        %v3713 = vpop.f32.mrb[0].mxu0
        %3714 = vmatprep.mubr.bf16.mxu0 0
        %3715 = vmatmul.mubr.bf16.gmra.mrb[0].mxu0 %v3615
        %v3716 = vpop.f32.mrb[0].mxu0
        %v3717 = vadd.f32 0.0, %v3716
        %v3718 = vpop.f32.mrb[0].mxu0
        %v3719 = vpop.f32.mrb[0].mxu0
        %v3720 = vadd.f32 0.0, %v3719
        %v3721 = vpop.f32.mrb[0].mxu0
        %3722 = vmatprep.mubr.bf16.mxu0 0
        %3723 = vmatmul.mubr.bf16.gmra.mrb[0].mxu0 %v3618
        %v3724 = vpop.f32.mrb[0].mxu0
        %v3725 = vadd.f32 0.0, %v3724
        %v3726 = vpop.f32.mrb[0].mxu0
        %v3727 = vpop.f32.mrb[0].mxu0
        %v3728 = vadd.f32 0.0, %v3727
        %v3729 = vpop.f32.mrb[0].mxu0
        %3730 = vmatprep.mubr.bf16.mxu0 0
        %3731 = vmatmul.mubr.bf16.gmra.mrb[0].mxu0 %v3621
        %v3732 = vpop.f32.mrb[0].mxu0
        %v3733 = vadd.f32 0.0, %v3732
        %v3734 = vpop.f32.mrb[0].mxu0
        %v3735 = vpop.f32.mrb[0].mxu0
        %v3736 = vadd.f32 0.0, %v3735
        %v3737 = vpop.f32.mrb[0].mxu0
        %3738 = vmatprep.mubr.bf16.mxu0 0
        %3739 = vmatmul.mubr.bf16.gmra.mrb[0].mxu0 %v3624
        %v3740 = vpop.f32.mrb[0].mxu0
        %v3741 = vadd.f32 0.0, %v3740
        %v3742 = vpop.f32.mrb[0].mxu0
        %v3743 = vpop.f32.mrb[0].mxu0
        %v3744 = vadd.f32 0.0, %v3743
        %v3745 = vpop.f32.mrb[0].mxu0
        %3746 = vmatprep.mubr.bf16.mxu0 0
        %3747 = vmatmul.mubr.bf16.gmra.mrb[0].mxu0 %v3627
        %v3748 = vpop.f32.mrb[0].mxu0
        %v3749 = vadd.f32 0.0, %v3748
        %v3750 = vpop.f32.mrb[0].mxu0
        %v3751 = vpop.f32.mrb[0].mxu0
        %v3752 = vadd.f32 0.0, %v3751
        %v3753 = vpop.f32.mrb[0].mxu0
        %3754 = vmatprep.mubr.bf16.mxu0 0
        %3755 = vmatmul.mubr.bf16.gmra.mrb[0].mxu0 %v3630
        %v3756 = vpop.f32.mrb[0].mxu0
        %v3757 = vadd.f32 0.0, %v3756
        %v3758 = vpop.f32.mrb[0].mxu0
        %v3759 = vpop.f32.mrb[0].mxu0
        %v3760 = vadd.f32 0.0, %v3759
        %v3761 = vpop.f32.mrb[0].mxu0
        %3762 = vmatprep.mubr.bf16.mxu0 0
        %3763 = vmatmul.mubr.bf16.gmra.mrb[0].mxu0 %v3633
        %v3764 = vpop.f32.mrb[0].mxu0
        %v3765 = vadd.f32 0.0, %v3764
        %v3766 = vpop.f32.mrb[0].mxu0
        %v3767 = vpop.f32.mrb[0].mxu0
        %v3768 = vadd.f32 0.0, %v3767
        %v3769 = vpop.f32.mrb[0].mxu0
        %3770 = vmatprep.mubr.bf16.mxu0 0
        %3771 = vmatmul.mubr.bf16.gmra.mrb[0].mxu0 %v3636
        %v3772 = vpop.f32.mrb[0].mxu0
        %v3773 = vadd.f32 0.0, %v3772
        %v3774 = vpop.f32.mrb[0].mxu0
        %v3775 = vpop.f32.mrb[0].mxu0
        %v3776 = vadd.f32 0.0, %v3775
        %v3777 = vpop.f32.mrb[0].mxu0
        %3778 = vmatprep.mubr.bf16.mxu0 0
        %3779 = vmatmul.mubr.bf16.gmra.mrb[0].mxu0 %v3639
        %v3780 = vpop.f32.mrb[0].mxu0
        %v3781 = vadd.f32 0.0, %v3780
        %v3782 = vpop.f32.mrb[0].mxu0
        %v3783 = vpop.f32.mrb[0].mxu0
        %v3784 = vadd.f32 0.0, %v3783
        %v3785 = vpop.f32.mrb[0].mxu0
        %3786 = vmatprep.mubr.bf16.mxu0 0
        %3787 = vmatmul.mubr.bf16.gmra.mrb[0].mxu0 %v3642
        %v3788 = vpop.f32.mrb[0].mxu0
        %v3789 = vadd.f32 0.0, %v3788
        %v3790 = vpop.f32.mrb[0].mxu0
        %v3791 = vpop.f32.mrb[0].mxu0
        %v3792 = vadd.f32 0.0, %v3791
        %v3793 = vpop.f32.mrb[0].mxu0
        %3794 = vmatprep.mubr.bf16.mxu0 0
        %3795 = vmatmul.mubr.bf16.gmra.mrb[0].mxu0 %v3645
        %v3796 = vpop.f32.mrb[0].mxu0
        %v3797 = vadd.f32 0.0, %v3796
        %v3798 = vpop.f32.mrb[0].mxu0
        %v3799 = vpop.f32.mrb[0].mxu0
        %v3800 = vadd.f32 0.0, %v3799
        %v3801 = vpop.f32.mrb[0].mxu0
        %3802 = vmatprep.mubr.bf16.mxu0 0
        %3803 = vmatmul.mubr.bf16.gmra.mrb[0].mxu0 %v3648
        %v3804 = vpop.f32.mrb[0].mxu0
        %v3805 = vadd.f32 0.0, %v3804
        %v3806 = vpop.f32.mrb[0].mxu0
        %v3807 = vpop.f32.mrb[0].mxu0
        %v3808 = vadd.f32 0.0, %v3807
        %v3809 = vpop.f32.mrb[0].mxu0
        %3810 = vdwg.mxu0
        %3843 = vrot.lane.b32.xlu0 %v3685, 64
        %v3844 = vpop.permute.xlu0 %3843
        %3845 = vrot.lane.b32.xlu0 %v3688, 64
        %v3846 = vpop.permute.xlu0 %3845
        %3847 = vrot.lane.b32.xlu0 %v3693, 64
        %v3848 = vpop.permute.xlu0 %3847
        %3849 = vrot.lane.b32.xlu0 %v3696, 64
        %v3850 = vpop.permute.xlu0 %3849
        %3851 = vrot.lane.b32.xlu0 %v3701, 64
        %v3852 = vpop.permute.xlu0 %3851
        %3853 = vrot.lane.b32.xlu0 %v3704, 64
        %v3854 = vpop.permute.xlu0 %3853
        %3855 = vrot.lane.b32.xlu0 %v3709, 64
        %v3856 = vpop.permute.xlu0 %3855
        %3857 = vrot.lane.b32.xlu0 %v3712, 64
        %v3858 = vpop.permute.xlu0 %3857
        %3859 = vrot.lane.b32.xlu0 %v3717, 64
        %v3860 = vpop.permute.xlu0 %3859
        %3861 = vrot.lane.b32.xlu0 %v3720, 64
        %v3862 = vpop.permute.xlu0 %3861
        %3863 = vrot.lane.b32.xlu0 %v3725, 64
        %v3864 = vpop.permute.xlu0 %3863
        %3865 = vrot.lane.b32.xlu0 %v3728, 64
        %v3866 = vpop.permute.xlu0 %3865
        %3867 = vrot.lane.b32.xlu0 %v3733, 64
        %v3868 = vpop.permute.xlu0 %3867
        %3869 = vrot.lane.b32.xlu0 %v3736, 64
        %v3870 = vpop.permute.xlu0 %3869
        %3871 = vrot.lane.b32.xlu0 %v3741, 64
        %v3872 = vpop.permute.xlu0 %3871
        %3873 = vrot.lane.b32.xlu0 %v3744, 64
        %v3874 = vpop.permute.xlu0 %3873
        %3875 = vrot.lane.b32.xlu0 %v3749, 64
        %v3876 = vpop.permute.xlu0 %3875
        %3877 = vrot.lane.b32.xlu0 %v3752, 64
        %v3878 = vpop.permute.xlu0 %3877
        %3879 = vrot.lane.b32.xlu0 %v3757, 64
        %v3880 = vpop.permute.xlu0 %3879
        %3881 = vrot.lane.b32.xlu0 %v3760, 64
        %v3882 = vpop.permute.xlu0 %3881
        %3883 = vrot.lane.b32.xlu0 %v3765, 64
        %v3884 = vpop.permute.xlu0 %3883
        %3885 = vrot.lane.b32.xlu0 %v3768, 64
        %v3886 = vpop.permute.xlu0 %3885
        %3887 = vrot.lane.b32.xlu0 %v3773, 64
        %v3888 = vpop.permute.xlu0 %3887
        %3889 = vrot.lane.b32.xlu0 %v3776, 64
        %v3890 = vpop.permute.xlu0 %3889
        %3891 = vrot.lane.b32.xlu0 %v3781, 64
        %v3892 = vpop.permute.xlu0 %3891
        %3893 = vrot.lane.b32.xlu0 %v3784, 64
        %v3894 = vpop.permute.xlu0 %3893
        %3895 = vrot.lane.b32.xlu0 %v3789, 64
        %v3896 = vpop.permute.xlu0 %3895
        %3897 = vrot.lane.b32.xlu0 %v3792, 64
        %v3898 = vpop.permute.xlu0 %3897
        %3899 = vrot.lane.b32.xlu0 %v3797, 64
        %v3900 = vpop.permute.xlu0 %3899
        %3901 = vrot.lane.b32.xlu0 %v3800, 64
        %v3902 = vpop.permute.xlu0 %3901
        %3903 = vrot.lane.b32.xlu0 %v3805, 64
        %v3904 = vpop.permute.xlu0 %3903
        %3905 = vrot.lane.b32.xlu0 %v3808, 64
        %v3906 = vpop.permute.xlu0 %3905
        %v3939 = vadd.f32 %v1172, %v3844
        %v3940 = vadd.f32 %v1175, %v3846
        %v3941 = vadd.f32 %v1180, %v3848
        %v3942 = vadd.f32 %v1183, %v3850
        %v3943 = vadd.f32 %v1188, %v3852
        %v3944 = vadd.f32 %v1191, %v3854
        %v3945 = vadd.f32 %v1196, %v3856
        %v3946 = vadd.f32 %v1199, %v3858
        %v3947 = vadd.f32 %v1204, %v3860
        %v3948 = vadd.f32 %v1207, %v3862
        %v3949 = vadd.f32 %v1212, %v3864
        %v3950 = vadd.f32 %v1215, %v3866
        %v3951 = vadd.f32 %v1220, %v3868
        %v3952 = vadd.f32 %v1223, %v3870
        %v3953 = vadd.f32 %v1228, %v3872
        %v3954 = vadd.f32 %v1231, %v3874
        %v3955 = vadd.f32 %v1236, %v3876
        %v3956 = vadd.f32 %v1239, %v3878
        %v3957 = vadd.f32 %v1244, %v3880
        %v3958 = vadd.f32 %v1247, %v3882
        %v3959 = vadd.f32 %v1252, %v3884
        %v3960 = vadd.f32 %v1255, %v3886
        %v3961 = vadd.f32 %v1260, %v3888
        %v3962 = vadd.f32 %v1263, %v3890
        %v3963 = vadd.f32 %v1268, %v3892
        %v3964 = vadd.f32 %v1271, %v3894
        %v3965 = vadd.f32 %v1276, %v3896
        %v3966 = vadd.f32 %v1279, %v3898
        %v3967 = vadd.f32 %v1284, %v3900
        %v3968 = vadd.f32 %v1287, %v3902
        %v3969 = vadd.f32 %v1292, %v3904
        %v3970 = vadd.f32 %v1295, %v3906
        %v3971 = vld [vmem:[#allocation14] sm:$0x1]
        %v3973 = vlaneseq
        %v3974 = vshrl.u32 %v3973, 7
        %v3975 = vsub.s32 0, %v3974
        %v3976 = vrot.slane %v3971, %v3975
        %3977 = vrot.lane.b32.xlu0 %v3976, 64
        %v3978 = vpop.permute.xlu0 %3977
        %v3980 = vadd.f32 %v3939, %v3978
        %v3981 = vadd.f32 %v3940, %v3978
        %v3982 = vadd.f32 %v3941, %v3978
        %v3983 = vadd.f32 %v3942, %v3978
        %v3984 = vadd.f32 %v3943, %v3978
        %v3985 = vadd.f32 %v3944, %v3978
        %v3986 = vadd.f32 %v3945, %v3978
        %v3987 = vadd.f32 %v3946, %v3978
        %v3988 = vadd.f32 %v3947, %v3978
        %v3989 = vadd.f32 %v3948, %v3978
        %v3990 = vadd.f32 %v3949, %v3978
        %v3991 = vadd.f32 %v3950, %v3978
        %v3992 = vadd.f32 %v3951, %v3978
        %v3993 = vadd.f32 %v3952, %v3978
        %v3994 = vadd.f32 %v3953, %v3978
        %v3995 = vadd.f32 %v3954, %v3978
        %v3996 = vadd.f32 %v3955, %v3978
        %v3997 = vadd.f32 %v3956, %v3978
        %v3998 = vadd.f32 %v3957, %v3978
        %v3999 = vadd.f32 %v3958, %v3978
        %v4000 = vadd.f32 %v3959, %v3978
        %v4001 = vadd.f32 %v3960, %v3978
        %v4002 = vadd.f32 %v3961, %v3978
        %v4003 = vadd.f32 %v3962, %v3978
        %v4004 = vadd.f32 %v3963, %v3978
        %v4005 = vadd.f32 %v3964, %v3978
        %v4006 = vadd.f32 %v3965, %v3978
        %v4007 = vadd.f32 %v3966, %v3978
        %v4008 = vadd.f32 %v3967, %v3978
        %v4009 = vadd.f32 %v3968, %v3978
        %v4010 = vadd.f32 %v3969, %v3978
        %v4011 = vadd.f32 %v3970, %v3978
        %vm4012 = vcmp.ge.f32.partialorder %v3980, 0.0
        %vm4013 = vcmp.ge.f32.partialorder %v3981, 0.0
        %vm4014 = vcmp.ge.f32.partialorder %v3982, 0.0
        %vm4015 = vcmp.ge.f32.partialorder %v3983, 0.0
        %vm4016 = vcmp.ge.f32.partialorder %v3984, 0.0
        %vm4017 = vcmp.ge.f32.partialorder %v3985, 0.0
        %vm4018 = vcmp.ge.f32.partialorder %v3986, 0.0
        %vm4019 = vcmp.ge.f32.partialorder %v3987, 0.0
        %vm4020 = vcmp.ge.f32.partialorder %v3988, 0.0
        %vm4021 = vcmp.ge.f32.partialorder %v3989, 0.0
        %vm4022 = vcmp.ge.f32.partialorder %v3990, 0.0
        %vm4023 = vcmp.ge.f32.partialorder %v3991, 0.0
        %vm4024 = vcmp.ge.f32.partialorder %v3992, 0.0
        %vm4025 = vcmp.ge.f32.partialorder %v3993, 0.0
        %vm4026 = vcmp.ge.f32.partialorder %v3994, 0.0
        %vm4027 = vcmp.ge.f32.partialorder %v3995, 0.0
        %vm4028 = vcmp.ge.f32.partialorder %v3996, 0.0
        %vm4029 = vcmp.ge.f32.partialorder %v3997, 0.0
        %vm4030 = vcmp.ge.f32.partialorder %v3998, 0.0
        %vm4031 = vcmp.ge.f32.partialorder %v3999, 0.0
        %vm4032 = vcmp.ge.f32.partialorder %v4000, 0.0
        %vm4033 = vcmp.ge.f32.partialorder %v4001, 0.0
        %vm4034 = vcmp.ge.f32.partialorder %v4002, 0.0
        %vm4035 = vcmp.ge.f32.partialorder %v4003, 0.0
        %vm4036 = vcmp.ge.f32.partialorder %v4004, 0.0
        %vm4037 = vcmp.ge.f32.partialorder %v4005, 0.0
        %vm4038 = vcmp.ge.f32.partialorder %v4006, 0.0
        %vm4039 = vcmp.ge.f32.partialorder %v4007, 0.0
        %vm4040 = vcmp.ge.f32.partialorder %v4008, 0.0
        %vm4041 = vcmp.ge.f32.partialorder %v4009, 0.0
        %vm4042 = vcmp.ge.f32.partialorder %v4010, 0.0
        %vm4043 = vcmp.ge.f32.partialorder %v4011, 0.0
        %v4044 = vstv %s604
        %v4045 = vmul.f32 %v4044, %v3980
        %v4046 = vmul.f32 %v4044, %v3981
        %v4047 = vmul.f32 %v4044, %v3982
        %v4048 = vmul.f32 %v4044, %v3983
        %v4049 = vmul.f32 %v4044, %v3984
        %v4050 = vmul.f32 %v4044, %v3985
        %v4051 = vmul.f32 %v4044, %v3986
        %v4052 = vmul.f32 %v4044, %v3987
        %v4053 = vmul.f32 %v4044, %v3988
        %v4054 = vmul.f32 %v4044, %v3989
        %v4055 = vmul.f32 %v4044, %v3990
        %v4056 = vmul.f32 %v4044, %v3991
        %v4057 = vmul.f32 %v4044, %v3992
        %v4058 = vmul.f32 %v4044, %v3993
        %v4059 = vmul.f32 %v4044, %v3994
        %v4060 = vmul.f32 %v4044, %v3995
        %v4061 = vmul.f32 %v4044, %v3996
        %v4062 = vmul.f32 %v4044, %v3997
        %v4063 = vmul.f32 %v4044, %v3998
        %v4064 = vmul.f32 %v4044, %v3999
        %v4065 = vmul.f32 %v4044, %v4000
        %v4066 = vmul.f32 %v4044, %v4001
        %v4067 = vmul.f32 %v4044, %v4002
        %v4068 = vmul.f32 %v4044, %v4003
        %v4069 = vmul.f32 %v4044, %v4004
        %v4070 = vmul.f32 %v4044, %v4005
        %v4071 = vmul.f32 %v4044, %v4006
        %v4072 = vmul.f32 %v4044, %v4007
        %v4073 = vmul.f32 %v4044, %v4008
        %v4074 = vmul.f32 %v4044, %v4009
        %v4075 = vmul.f32 %v4044, %v4010
        %v4076 = vmul.f32 %v4044, %v4011
        %v4077 = vsel %vm4012, %v3980, %v4045
        %v4078 = vsel %vm4013, %v3981, %v4046
        %v4079 = vsel %vm4014, %v3982, %v4047
        %v4080 = vsel %vm4015, %v3983, %v4048
        %v4081 = vsel %vm4016, %v3984, %v4049
        %v4082 = vsel %vm4017, %v3985, %v4050
        %v4083 = vsel %vm4018, %v3986, %v4051
        %v4084 = vsel %vm4019, %v3987, %v4052
        %v4085 = vsel %vm4020, %v3988, %v4053
        %v4086 = vsel %vm4021, %v3989, %v4054
        %v4087 = vsel %vm4022, %v3990, %v4055
        %v4088 = vsel %vm4023, %v3991, %v4056
        %v4089 = vsel %vm4024, %v3992, %v4057
        %v4090 = vsel %vm4025, %v3993, %v4058
        %v4091 = vsel %vm4026, %v3994, %v4059
        %v4092 = vsel %vm4027, %v3995, %v4060
        %v4093 = vsel %vm4028, %v3996, %v4061
        %v4094 = vsel %vm4029, %v3997, %v4062
        %v4095 = vsel %vm4030, %v3998, %v4063
        %v4096 = vsel %vm4031, %v3999, %v4064
        %v4097 = vsel %vm4032, %v4000, %v4065
        %v4098 = vsel %vm4033, %v4001, %v4066
        %v4099 = vsel %vm4034, %v4002, %v4067
        %v4100 = vsel %vm4035, %v4003, %v4068
        %v4101 = vsel %vm4036, %v4004, %v4069
        %v4102 = vsel %vm4037, %v4005, %v4070
        %v4103 = vsel %vm4038, %v4006, %v4071
        %v4104 = vsel %vm4039, %v4007, %v4072
        %v4105 = vsel %vm4040, %v4008, %v4073
        %v4106 = vsel %vm4041, %v4009, %v4074
        %v4107 = vsel %vm4042, %v4010, %v4075
        %v4108 = vsel %vm4043, %v4011, %v4076
        %v4109 = vpack.c.bf16 %v4078, %v4077
        %v4110 = vpack.c.bf16 %v4080, %v4079
        %v4111 = vpack.c.bf16 %v4082, %v4081
        %v4112 = vpack.c.bf16 %v4084, %v4083
        %v4113 = vpack.c.bf16 %v4086, %v4085
        %v4114 = vpack.c.bf16 %v4088, %v4087
        %v4115 = vpack.c.bf16 %v4090, %v4089
        %v4116 = vpack.c.bf16 %v4092, %v4091
        %v4117 = vpack.c.bf16 %v4094, %v4093
        %v4118 = vpack.c.bf16 %v4096, %v4095
        %v4119 = vpack.c.bf16 %v4098, %v4097
        %v4120 = vpack.c.bf16 %v4100, %v4099
        %v4121 = vpack.c.bf16 %v4102, %v4101
        %v4122 = vpack.c.bf16 %v4104, %v4103
        %v4123 = vpack.c.bf16 %v4106, %v4105
        %v4124 = vpack.c.bf16 %v4108, %v4107
        %4141 = vrot.lane.b32.xlu0 %v4109, 64
        %v4142 = vpop.permute.xlu0 %4141
        %4143 = vrot.lane.b32.xlu0 %v4110, 64
        %v4144 = vpop.permute.xlu0 %4143
        %4145 = vrot.lane.b32.xlu0 %v4111, 64
        %v4146 = vpop.permute.xlu0 %4145
        %4147 = vrot.lane.b32.xlu0 %v4112, 64
        %v4148 = vpop.permute.xlu0 %4147
        %4149 = vrot.lane.b32.xlu0 %v4113, 64
        %v4150 = vpop.permute.xlu0 %4149
        %4151 = vrot.lane.b32.xlu0 %v4114, 64
        %v4152 = vpop.permute.xlu0 %4151
        %4153 = vrot.lane.b32.xlu0 %v4115, 64
        %v4154 = vpop.permute.xlu0 %4153
        %4155 = vrot.lane.b32.xlu0 %v4116, 64
        %v4156 = vpop.permute.xlu0 %4155
        %4157 = vrot.lane.b32.xlu0 %v4117, 64
        %v4158 = vpop.permute.xlu0 %4157
        %4159 = vrot.lane.b32.xlu0 %v4118, 64
        %v4160 = vpop.permute.xlu0 %4159
        %4161 = vrot.lane.b32.xlu0 %v4119, 64
        %v4162 = vpop.permute.xlu0 %4161
        %4163 = vrot.lane.b32.xlu0 %v4120, 64
        %v4164 = vpop.permute.xlu0 %4163
        %4165 = vrot.lane.b32.xlu0 %v4121, 64
        %v4166 = vpop.permute.xlu0 %4165
        %4167 = vrot.lane.b32.xlu0 %v4122, 64
        %v4168 = vpop.permute.xlu0 %4167
        %4169 = vrot.lane.b32.xlu0 %v4123, 64
        %v4170 = vpop.permute.xlu0 %4169
        %4171 = vrot.lane.b32.xlu0 %v4124, 64
        %v4172 = vpop.permute.xlu0 %4171
        %v4174 = vshrl.u32 %v4142, 16
        %v4176 = vrot.slane %v4174, 7
        %v4177 = vshll.u32 %v4142, 16
        %v4179 = vor.u32 %v4176, %v4177
        %v4181 = vshrl.u32 %v4144, 16
        %v4183 = vrot.slane %v4181, 7
        %v4184 = vshll.u32 %v4144, 16
        %v4186 = vor.u32 %v4183, %v4184
        %v4188 = vshrl.u32 %v4146, 16
        %v4190 = vrot.slane %v4188, 7
        %v4191 = vshll.u32 %v4146, 16
        %v4193 = vor.u32 %v4190, %v4191
        %v4195 = vshrl.u32 %v4148, 16
        %v4197 = vrot.slane %v4195, 7
        %v4198 = vshll.u32 %v4148, 16
        %v4200 = vor.u32 %v4197, %v4198
        %v4202 = vshrl.u32 %v4150, 16
        %v4204 = vrot.slane %v4202, 7
        %v4205 = vshll.u32 %v4150, 16
        %v4207 = vor.u32 %v4204, %v4205
        %v4209 = vshrl.u32 %v4152, 16
        %v4211 = vrot.slane %v4209, 7
        %v4212 = vshll.u32 %v4152, 16
        %v4214 = vor.u32 %v4211, %v4212
        %v4216 = vshrl.u32 %v4154, 16
        %v4218 = vrot.slane %v4216, 7
        %v4219 = vshll.u32 %v4154, 16
        %v4221 = vor.u32 %v4218, %v4219
        %v4223 = vshrl.u32 %v4156, 16
        %v4225 = vrot.slane %v4223, 7
        %v4226 = vshll.u32 %v4156, 16
        %v4228 = vor.u32 %v4225, %v4226
        %v4230 = vshrl.u32 %v4158, 16
        %v4232 = vrot.slane %v4230, 7
        %v4233 = vshll.u32 %v4158, 16
        %v4235 = vor.u32 %v4232, %v4233
        %v4237 = vshrl.u32 %v4160, 16
        %v4239 = vrot.slane %v4237, 7
        %v4240 = vshll.u32 %v4160, 16
        %v4242 = vor.u32 %v4239, %v4240
        %v4244 = vshrl.u32 %v4162, 16
        %v4246 = vrot.slane %v4244, 7
        %v4247 = vshll.u32 %v4162, 16
        %v4249 = vor.u32 %v4246, %v4247
        %v4251 = vshrl.u32 %v4164, 16
        %v4253 = vrot.slane %v4251, 7
        %v4254 = vshll.u32 %v4164, 16
        %v4256 = vor.u32 %v4253, %v4254
        %v4258 = vshrl.u32 %v4166, 16
        %v4260 = vrot.slane %v4258, 7
        %v4261 = vshll.u32 %v4166, 16
        %v4263 = vor.u32 %v4260, %v4261
        %v4265 = vshrl.u32 %v4168, 16
        %v4267 = vrot.slane %v4265, 7
        %v4268 = vshll.u32 %v4168, 16
        %v4270 = vor.u32 %v4267, %v4268
        %v4272 = vshrl.u32 %v4170, 16
        %v4274 = vrot.slane %v4272, 7
        %v4275 = vshll.u32 %v4170, 16
        %v4277 = vor.u32 %v4274, %v4275
        %v4279 = vshrl.u32 %v4172, 16
        %v4281 = vrot.slane %v4279, 7
        %v4282 = vshll.u32 %v4172, 16
        %v4284 = vor.u32 %v4281, %v4282
        %v4317 = vsel %vm2192, 0, %v4179
        %v4318 = vsel %vm2192, 0, %v4186
        %v4319 = vsel %vm2192, 0, %v4193
        %v4320 = vsel %vm2192, 0, %v4200
        %v4321 = vsel %vm2192, 0, %v4207
        %v4322 = vsel %vm2192, 0, %v4214
        %v4323 = vsel %vm2192, 0, %v4221
        %v4324 = vsel %vm2192, 0, %v4228
        %v4325 = vsel %vm2192, 0, %v4235
        %v4326 = vsel %vm2192, 0, %v4242
        %v4327 = vsel %vm2192, 0, %v4249
        %v4328 = vsel %vm2192, 0, %v4256
        %v4329 = vsel %vm2192, 0, %v4263
        %v4330 = vsel %vm2192, 0, %v4270
        %v4331 = vsel %vm2192, 0, %v4277
        %v4332 = vsel %vm2192, 0, %v4284
        %v4333 = vsel %vm2192, %v4176, 0
        %v4334 = vsel %vm2192, %v4183, 0
        %v4335 = vsel %vm2192, %v4190, 0
        %v4336 = vsel %vm2192, %v4197, 0
        %v4337 = vsel %vm2192, %v4204, 0
        %v4338 = vsel %vm2192, %v4211, 0
        %v4339 = vsel %vm2192, %v4218, 0
        %v4340 = vsel %vm2192, %v4225, 0
        %v4341 = vsel %vm2192, %v4232, 0
        %v4342 = vsel %vm2192, %v4239, 0
        %v4343 = vsel %vm2192, %v4246, 0
        %v4344 = vsel %vm2192, %v4253, 0
        %v4345 = vsel %vm2192, %v4260, 0
        %v4346 = vsel %vm2192, %v4267, 0
        %v4347 = vsel %vm2192, %v4274, 0
        %v4348 = vsel %vm2192, %v4281, 0
        %v4350 = vshrl.u32 %v4317, 16
        %v4352 = vshll.u32 %v4317, 16
        %v4354 = vrot.slane %v4352, 1
        %v4355 = vor.u32 %v4350, %v4354
        %v4357 = vshll.u32 %v4333, 16
        %v4359 = vrot.slane %v4357, 1
        %v4360 = vsel %vm2227, %v4355, %v4359
        %v4362 = vshrl.u32 %v4318, 16
        %v4364 = vshll.u32 %v4318, 16
        %v4366 = vrot.slane %v4364, 1
        %v4367 = vor.u32 %v4362, %v4366
        %v4369 = vshll.u32 %v4334, 16
        %v4371 = vrot.slane %v4369, 1
        %v4372 = vsel %vm2227, %v4367, %v4371
        %v4374 = vshrl.u32 %v4319, 16
        %v4376 = vshll.u32 %v4319, 16
        %v4378 = vrot.slane %v4376, 1
        %v4379 = vor.u32 %v4374, %v4378
        %v4381 = vshll.u32 %v4335, 16
        %v4383 = vrot.slane %v4381, 1
        %v4384 = vsel %vm2227, %v4379, %v4383
        %v4386 = vshrl.u32 %v4320, 16
        %v4388 = vshll.u32 %v4320, 16
        %v4390 = vrot.slane %v4388, 1
        %v4391 = vor.u32 %v4386, %v4390
        %v4393 = vshll.u32 %v4336, 16
        %v4395 = vrot.slane %v4393, 1
        %v4396 = vsel %vm2227, %v4391, %v4395
        %v4398 = vshrl.u32 %v4321, 16
        %v4400 = vshll.u32 %v4321, 16
        %v4402 = vrot.slane %v4400, 1
        %v4403 = vor.u32 %v4398, %v4402
        %v4405 = vshll.u32 %v4337, 16
        %v4407 = vrot.slane %v4405, 1
        %v4408 = vsel %vm2227, %v4403, %v4407
        %v4410 = vshrl.u32 %v4322, 16
        %v4412 = vshll.u32 %v4322, 16
        %v4414 = vrot.slane %v4412, 1
        %v4415 = vor.u32 %v4410, %v4414
        %v4417 = vshll.u32 %v4338, 16
        %v4419 = vrot.slane %v4417, 1
        %v4420 = vsel %vm2227, %v4415, %v4419
        %v4422 = vshrl.u32 %v4323, 16
        %v4424 = vshll.u32 %v4323, 16
        %v4426 = vrot.slane %v4424, 1
        %v4427 = vor.u32 %v4422, %v4426
        %v4429 = vshll.u32 %v4339, 16
        %v4431 = vrot.slane %v4429, 1
        %v4432 = vsel %vm2227, %v4427, %v4431
        %v4434 = vshrl.u32 %v4324, 16
        %v4436 = vshll.u32 %v4324, 16
        %v4438 = vrot.slane %v4436, 1
        %v4439 = vor.u32 %v4434, %v4438
        %v4441 = vshll.u32 %v4340, 16
        %v4443 = vrot.slane %v4441, 1
        %v4444 = vsel %vm2227, %v4439, %v4443
        %v4446 = vshrl.u32 %v4325, 16
        %v4448 = vshll.u32 %v4325, 16
        %v4450 = vrot.slane %v4448, 1
        %v4451 = vor.u32 %v4446, %v4450
        %v4453 = vshll.u32 %v4341, 16
        %v4455 = vrot.slane %v4453, 1
        %v4456 = vsel %vm2227, %v4451, %v4455
        %v4458 = vshrl.u32 %v4326, 16
        %v4460 = vshll.u32 %v4326, 16
        %v4462 = vrot.slane %v4460, 1
        %v4463 = vor.u32 %v4458, %v4462
        %v4465 = vshll.u32 %v4342, 16
        %v4467 = vrot.slane %v4465, 1
        %v4468 = vsel %vm2227, %v4463, %v4467
        %v4470 = vshrl.u32 %v4327, 16
        %v4472 = vshll.u32 %v4327, 16
        %v4474 = vrot.slane %v4472, 1
        %v4475 = vor.u32 %v4470, %v4474
        %v4477 = vshll.u32 %v4343, 16
        %v4479 = vrot.slane %v4477, 1
        %v4480 = vsel %vm2227, %v4475, %v4479
        %v4482 = vshrl.u32 %v4328, 16
        %v4484 = vshll.u32 %v4328, 16
        %v4486 = vrot.slane %v4484, 1
        %v4487 = vor.u32 %v4482, %v4486
        %v4489 = vshll.u32 %v4344, 16
        %v4491 = vrot.slane %v4489, 1
        %v4492 = vsel %vm2227, %v4487, %v4491
        %v4494 = vshrl.u32 %v4329, 16
        %v4496 = vshll.u32 %v4329, 16
        %v4498 = vrot.slane %v4496, 1
        %v4499 = vor.u32 %v4494, %v4498
        %v4501 = vshll.u32 %v4345, 16
        %v4503 = vrot.slane %v4501, 1
        %v4504 = vsel %vm2227, %v4499, %v4503
        %v4506 = vshrl.u32 %v4330, 16
        %v4508 = vshll.u32 %v4330, 16
        %v4510 = vrot.slane %v4508, 1
        %v4511 = vor.u32 %v4506, %v4510
        %v4513 = vshll.u32 %v4346, 16
        %v4515 = vrot.slane %v4513, 1
        %v4516 = vsel %vm2227, %v4511, %v4515
        %v4518 = vshrl.u32 %v4331, 16
        %v4520 = vshll.u32 %v4331, 16
        %v4522 = vrot.slane %v4520, 1
        %v4523 = vor.u32 %v4518, %v4522
        %v4525 = vshll.u32 %v4347, 16
        %v4527 = vrot.slane %v4525, 1
        %v4528 = vsel %vm2227, %v4523, %v4527
        %v4559 = vrot.slane %v4317, 1
        %v4560 = vrot.slane %v4333, 1
        %v4561 = vsel %vm2452, %v4559, %v4560
        %v4562 = vrot.slane %v4318, 1
        %v4563 = vrot.slane %v4334, 1
        %v4564 = vsel %vm2452, %v4562, %v4563
        %v4565 = vrot.slane %v4319, 1
        %v4566 = vrot.slane %v4335, 1
        %v4567 = vsel %vm2452, %v4565, %v4566
        %v4568 = vrot.slane %v4320, 1
        %v4569 = vrot.slane %v4336, 1
        %v4570 = vsel %vm2452, %v4568, %v4569
        %v4571 = vrot.slane %v4321, 1
        %v4572 = vrot.slane %v4337, 1
        %v4573 = vsel %vm2452, %v4571, %v4572
        %v4574 = vrot.slane %v4322, 1
        %v4575 = vrot.slane %v4338, 1
        %v4576 = vsel %vm2452, %v4574, %v4575
        %v4577 = vrot.slane %v4323, 1
        %v4578 = vrot.slane %v4339, 1
        %v4579 = vsel %vm2452, %v4577, %v4578
        %v4580 = vrot.slane %v4324, 1
        %v4581 = vrot.slane %v4340, 1
        %v4582 = vsel %vm2452, %v4580, %v4581
        %v4583 = vrot.slane %v4325, 1
        %v4584 = vrot.slane %v4341, 1
        %v4585 = vsel %vm2452, %v4583, %v4584
        %v4586 = vrot.slane %v4326, 1
        %v4587 = vrot.slane %v4342, 1
        %v4588 = vsel %vm2452, %v4586, %v4587
        %v4589 = vrot.slane %v4327, 1
        %v4590 = vrot.slane %v4343, 1
        %v4591 = vsel %vm2452, %v4589, %v4590
        %v4592 = vrot.slane %v4328, 1
        %v4593 = vrot.slane %v4344, 1
        %v4594 = vsel %vm2452, %v4592, %v4593
        %v4595 = vrot.slane %v4329, 1
        %v4596 = vrot.slane %v4345, 1
        %v4597 = vsel %vm2452, %v4595, %v4596
        %v4598 = vrot.slane %v4330, 1
        %v4599 = vrot.slane %v4346, 1
        %v4600 = vsel %vm2452, %v4598, %v4599
        %v4601 = vrot.slane %v4331, 1
        %v4602 = vrot.slane %v4347, 1
        %v4603 = vsel %vm2452, %v4601, %v4602
        %v4605 = vshrl.u32 %v4332, 16
        %v4607 = vshll.u32 %v4332, 16
        %v4609 = vrot.slane %v4607, 1
        %v4610 = vor.u32 %v4605, %v4609
        %v4612 = vshll.u32 %v4348, 16
        %v4614 = vrot.slane %v4612, 1
        %v4615 = vsel %vm2227, %v4610, %v4614
        %v4618 = vrot.slane %v4332, 1
        %v4619 = vrot.slane %v4348, 1
        %v4620 = vsel %vm2452, %v4618, %v4619
        %4621 = vrot.lane.b32.xlu0 %v4360, 32
        %v4622 = vpop.permute.xlu0 %4621
        %4623 = vrot.lane.b32.xlu0 %v4372, 32
        %v4624 = vpop.permute.xlu0 %4623
        %4625 = vrot.lane.b32.xlu0 %v4384, 32
        %v4626 = vpop.permute.xlu0 %4625
        %4627 = vrot.lane.b32.xlu0 %v4396, 32
        %v4628 = vpop.permute.xlu0 %4627
        %4629 = vrot.lane.b32.xlu0 %v4408, 32
        %v4630 = vpop.permute.xlu0 %4629
        %4631 = vrot.lane.b32.xlu0 %v4420, 32
        %v4632 = vpop.permute.xlu0 %4631
        %4633 = vrot.lane.b32.xlu0 %v4432, 32
        %v4634 = vpop.permute.xlu0 %4633
        %4635 = vrot.lane.b32.xlu0 %v4444, 32
        %v4636 = vpop.permute.xlu0 %4635
        %4637 = vrot.lane.b32.xlu0 %v4456, 32
        %v4638 = vpop.permute.xlu0 %4637
        %4639 = vrot.lane.b32.xlu0 %v4468, 32
        %v4640 = vpop.permute.xlu0 %4639
        %4641 = vrot.lane.b32.xlu0 %v4480, 32
        %v4642 = vpop.permute.xlu0 %4641
        %4643 = vrot.lane.b32.xlu0 %v4492, 32
        %v4644 = vpop.permute.xlu0 %4643
        %4645 = vrot.lane.b32.xlu0 %v4504, 32
        %v4646 = vpop.permute.xlu0 %4645
        %4647 = vrot.lane.b32.xlu0 %v4516, 32
        %v4648 = vpop.permute.xlu0 %4647
        %4649 = vrot.lane.b32.xlu0 %v4528, 32
        %v4650 = vpop.permute.xlu0 %4649
        %4651 = vrot.lane.b32.xlu0 %v4561, 64
        %v4652 = vpop.permute.xlu0 %4651
        %4653 = vrot.lane.b32.xlu0 %v4564, 64
        %v4654 = vpop.permute.xlu0 %4653
        %4655 = vrot.lane.b32.xlu0 %v4567, 64
        %v4656 = vpop.permute.xlu0 %4655
        %4657 = vrot.lane.b32.xlu0 %v4570, 64
        %v4658 = vpop.permute.xlu0 %4657
        %4659 = vrot.lane.b32.xlu0 %v4573, 64
        %v4660 = vpop.permute.xlu0 %4659
        %4661 = vrot.lane.b32.xlu0 %v4576, 64
        %v4662 = vpop.permute.xlu0 %4661
        %4663 = vrot.lane.b32.xlu0 %v4579, 64
        %v4664 = vpop.permute.xlu0 %4663
        %4665 = vrot.lane.b32.xlu0 %v4582, 64
        %v4666 = vpop.permute.xlu0 %4665
        %4667 = vrot.lane.b32.xlu0 %v4585, 64
        %v4668 = vpop.permute.xlu0 %4667
        %4669 = vrot.lane.b32.xlu0 %v4588, 64
        %v4670 = vpop.permute.xlu0 %4669
        %4671 = vrot.lane.b32.xlu0 %v4591, 64
        %v4672 = vpop.permute.xlu0 %4671
        %4673 = vrot.lane.b32.xlu0 %v4594, 64
        %v4674 = vpop.permute.xlu0 %4673
        %4675 = vrot.lane.b32.xlu0 %v4597, 64
        %v4676 = vpop.permute.xlu0 %4675
        %4677 = vrot.lane.b32.xlu0 %v4600, 64
        %v4678 = vpop.permute.xlu0 %4677
        %4679 = vrot.lane.b32.xlu0 %v4603, 64
        %v4680 = vpop.permute.xlu0 %4679
        %4681 = vrot.lane.b32.xlu0 %v4317, 96
        %v4682 = vpop.permute.xlu0 %4681
        %4683 = vrot.lane.b32.xlu0 %v4318, 96
        %v4684 = vpop.permute.xlu0 %4683
        %4685 = vrot.lane.b32.xlu0 %v4319, 96
        %v4686 = vpop.permute.xlu0 %4685
        %4687 = vrot.lane.b32.xlu0 %v4320, 96
        %v4688 = vpop.permute.xlu0 %4687
        %4689 = vrot.lane.b32.xlu0 %v4321, 96
        %v4690 = vpop.permute.xlu0 %4689
        %4691 = vrot.lane.b32.xlu0 %v4322, 96
        %v4692 = vpop.permute.xlu0 %4691
        %4693 = vrot.lane.b32.xlu0 %v4323, 96
        %v4694 = vpop.permute.xlu0 %4693
        %4695 = vrot.lane.b32.xlu0 %v4324, 96
        %v4696 = vpop.permute.xlu0 %4695
        %4697 = vrot.lane.b32.xlu0 %v4325, 96
        %v4698 = vpop.permute.xlu0 %4697
        %4699 = vrot.lane.b32.xlu0 %v4326, 96
        %v4700 = vpop.permute.xlu0 %4699
        %4701 = vrot.lane.b32.xlu0 %v4327, 96
        %v4702 = vpop.permute.xlu0 %4701
        %4703 = vrot.lane.b32.xlu0 %v4328, 96
        %v4704 = vpop.permute.xlu0 %4703
        %4705 = vrot.lane.b32.xlu0 %v4329, 96
        %v4706 = vpop.permute.xlu0 %4705
        %4707 = vrot.lane.b32.xlu0 %v4330, 96
        %v4708 = vpop.permute.xlu0 %4707
        %4709 = vrot.lane.b32.xlu0 %v4331, 96
        %v4710 = vpop.permute.xlu0 %4709
        %4711 = vrot.lane.b32.xlu0 %v4332, 96
        %v4712 = vpop.permute.xlu0 %4711
        %4713 = vrot.lane.b32.xlu0 %v4561, 32
        %v4714 = vpop.permute.xlu0 %4713
        %4715 = vrot.lane.b32.xlu0 %v4564, 32
        %v4716 = vpop.permute.xlu0 %4715
        %4717 = vrot.lane.b32.xlu0 %v4567, 32
        %v4718 = vpop.permute.xlu0 %4717
        %4719 = vrot.lane.b32.xlu0 %v4570, 32
        %v4720 = vpop.permute.xlu0 %4719
        %4721 = vrot.lane.b32.xlu0 %v4573, 32
        %v4722 = vpop.permute.xlu0 %4721
        %4723 = vrot.lane.b32.xlu0 %v4576, 32
        %v4724 = vpop.permute.xlu0 %4723
        %4725 = vrot.lane.b32.xlu0 %v4579, 32
        %v4726 = vpop.permute.xlu0 %4725
        %4727 = vrot.lane.b32.xlu0 %v4582, 32
        %v4728 = vpop.permute.xlu0 %4727
        %4729 = vrot.lane.b32.xlu0 %v4585, 32
        %v4730 = vpop.permute.xlu0 %4729
        %4731 = vrot.lane.b32.xlu0 %v4588, 32
        %v4732 = vpop.permute.xlu0 %4731
        %4733 = vrot.lane.b32.xlu0 %v4591, 32
        %v4734 = vpop.permute.xlu0 %4733
        %4735 = vrot.lane.b32.xlu0 %v4594, 32
        %v4736 = vpop.permute.xlu0 %4735
        %4737 = vrot.lane.b32.xlu0 %v4597, 32
        %v4738 = vpop.permute.xlu0 %4737
        %4739 = vrot.lane.b32.xlu0 %v4600, 32
        %v4740 = vpop.permute.xlu0 %4739
        %4741 = vrot.lane.b32.xlu0 %v4603, 32
        %v4742 = vpop.permute.xlu0 %4741
        %4743 = vrot.lane.b32.xlu0 %v4620, 32
        %v4744 = vpop.permute.xlu0 %4743
        %4745 = vrot.lane.b32.xlu0 %v4318, 64
        %v4746 = vpop.permute.xlu0 %4745
        %4747 = vrot.lane.b32.xlu0 %v4319, 64
        %v4748 = vpop.permute.xlu0 %4747
        %4749 = vrot.lane.b32.xlu0 %v4320, 64
        %v4750 = vpop.permute.xlu0 %4749
        %4751 = vrot.lane.b32.xlu0 %v4321, 64
        %v4752 = vpop.permute.xlu0 %4751
        %4753 = vrot.lane.b32.xlu0 %v4322, 64
        %v4754 = vpop.permute.xlu0 %4753
        %4755 = vrot.lane.b32.xlu0 %v4323, 64
        %v4756 = vpop.permute.xlu0 %4755
        %4757 = vrot.lane.b32.xlu0 %v4324, 64
        %v4758 = vpop.permute.xlu0 %4757
        %4759 = vrot.lane.b32.xlu0 %v4325, 64
        %v4760 = vpop.permute.xlu0 %4759
        %4761 = vrot.lane.b32.xlu0 %v4326, 64
        %v4762 = vpop.permute.xlu0 %4761
        %4763 = vrot.lane.b32.xlu0 %v4327, 64
        %v4764 = vpop.permute.xlu0 %4763
        %4765 = vrot.lane.b32.xlu0 %v4328, 64
        %v4766 = vpop.permute.xlu0 %4765
        %4767 = vrot.lane.b32.xlu0 %v4329, 64
        %v4768 = vpop.permute.xlu0 %4767
        %4769 = vrot.lane.b32.xlu0 %v4330, 64
        %v4770 = vpop.permute.xlu0 %4769
        %4771 = vrot.lane.b32.xlu0 %v4331, 64
        %v4772 = vpop.permute.xlu0 %4771
        %4773 = vrot.lane.b32.xlu0 %v4332, 64
        %v4774 = vpop.permute.xlu0 %4773
        %4775 = vrot.lane.b32.xlu0 %v4372, 96
        %v4776 = vpop.permute.xlu0 %4775
        %4777 = vrot.lane.b32.xlu0 %v4384, 96
        %v4778 = vpop.permute.xlu0 %4777
        %4779 = vrot.lane.b32.xlu0 %v4396, 96
        %v4780 = vpop.permute.xlu0 %4779
        %4781 = vrot.lane.b32.xlu0 %v4408, 96
        %v4782 = vpop.permute.xlu0 %4781
        %4783 = vrot.lane.b32.xlu0 %v4420, 96
        %v4784 = vpop.permute.xlu0 %4783
        %4785 = vrot.lane.b32.xlu0 %v4432, 96
        %v4786 = vpop.permute.xlu0 %4785
        %4787 = vrot.lane.b32.xlu0 %v4444, 96
        %v4788 = vpop.permute.xlu0 %4787
        %4789 = vrot.lane.b32.xlu0 %v4456, 96
        %v4790 = vpop.permute.xlu0 %4789
        %4791 = vrot.lane.b32.xlu0 %v4468, 96
        %v4792 = vpop.permute.xlu0 %4791
        %4793 = vrot.lane.b32.xlu0 %v4480, 96
        %v4794 = vpop.permute.xlu0 %4793
        %4795 = vrot.lane.b32.xlu0 %v4492, 96
        %v4796 = vpop.permute.xlu0 %4795
        %4797 = vrot.lane.b32.xlu0 %v4504, 96
        %v4798 = vpop.permute.xlu0 %4797
        %4799 = vrot.lane.b32.xlu0 %v4516, 96
        %v4800 = vpop.permute.xlu0 %4799
        %4801 = vrot.lane.b32.xlu0 %v4528, 96
        %v4802 = vpop.permute.xlu0 %4801
        %4803 = vrot.lane.b32.xlu0 %v4615, 96
        %v4804 = vpop.permute.xlu0 %4803
        %v4806 = vsel %vm1088, %v4317, %v4622
        %v4808 = vsel %vm1088, %v4318, %v4624
        %v4810 = vsel %vm1088, %v4319, %v4626
        %v4812 = vsel %vm1088, %v4320, %v4628
        %v4814 = vsel %vm1088, %v4321, %v4630
        %v4816 = vsel %vm1088, %v4322, %v4632
        %v4818 = vsel %vm1088, %v4323, %v4634
        %v4820 = vsel %vm1088, %v4324, %v4636
        %v4822 = vsel %vm1088, %v4325, %v4638
        %v4824 = vsel %vm1088, %v4326, %v4640
        %v4826 = vsel %vm1088, %v4327, %v4642
        %v4828 = vsel %vm1088, %v4328, %v4644
        %v4830 = vsel %vm1088, %v4329, %v4646
        %v4832 = vsel %vm1088, %v4330, %v4648
        %v4834 = vsel %vm1088, %v4331, %v4650
        %v4836 = vsel %vm2742, %v4806, %v4652
        %v4838 = vsel %vm2742, %v4808, %v4654
        %v4840 = vsel %vm2742, %v4810, %v4656
        %v4842 = vsel %vm2742, %v4812, %v4658
        %v4844 = vsel %vm2742, %v4814, %v4660
        %v4846 = vsel %vm2742, %v4816, %v4662
        %v4848 = vsel %vm2742, %v4818, %v4664
        %v4850 = vsel %vm2742, %v4820, %v4666
        %v4852 = vsel %vm2742, %v4822, %v4668
        %v4854 = vsel %vm2742, %v4824, %v4670
        %v4856 = vsel %vm2742, %v4826, %v4672
        %v4858 = vsel %vm2742, %v4828, %v4674
        %v4860 = vsel %vm2742, %v4830, %v4676
        %v4862 = vsel %vm2742, %v4832, %v4678
        %v4864 = vsel %vm2742, %v4834, %v4680
        %v4866 = vsel %vm2775, %v2744, %v4682
        %v4869 = vsel %vm2775, %v4836, %v4684
        %v4872 = vsel %vm2775, %v4838, %v4686
        %v4875 = vsel %vm2775, %v4840, %v4688
        %v4878 = vsel %vm2775, %v4842, %v4690
        %v4881 = vsel %vm2775, %v4844, %v4692
        %v4884 = vsel %vm2775, %v4846, %v4694
        %v4887 = vsel %vm2775, %v4848, %v4696
        %v4890 = vsel %vm2775, %v4850, %v4698
        %v4893 = vsel %vm2775, %v4852, %v4700
        %v4896 = vsel %vm2775, %v4854, %v4702
        %v4899 = vsel %vm2775, %v4856, %v4704
        %v4902 = vsel %vm2775, %v4858, %v4706
        %v4905 = vsel %vm2775, %v4860, %v4708
        %v4908 = vsel %vm2775, %v4862, %v4710
        %v4911 = vsel %vm2775, %v4864, %v4712
        %v4915 = vsel %vm1088, %v4360, %v4714
        %v4918 = vsel %vm1088, %v4372, %v4716
        %v4921 = vsel %vm1088, %v4384, %v4718
        %v4924 = vsel %vm1088, %v4396, %v4720
        %v4927 = vsel %vm1088, %v4408, %v4722
        %v4930 = vsel %vm1088, %v4420, %v4724
        %v4933 = vsel %vm1088, %v4432, %v4726
        %v4936 = vsel %vm1088, %v4444, %v4728
        %v4939 = vsel %vm1088, %v4456, %v4730
        %v4942 = vsel %vm1088, %v4468, %v4732
        %v4945 = vsel %vm1088, %v4480, %v4734
        %v4948 = vsel %vm1088, %v4492, %v4736
        %v4951 = vsel %vm1088, %v4504, %v4738
        %v4954 = vsel %vm1088, %v4516, %v4740
        %v4957 = vsel %vm1088, %v4528, %v4742
        %v4960 = vsel %vm1088, %v4615, %v4744
        %v4962 = vsel %vm2742, %v4915, %v4746
        %v4964 = vsel %vm2742, %v4918, %v4748
        %v4966 = vsel %vm2742, %v4921, %v4750
        %v4968 = vsel %vm2742, %v4924, %v4752
        %v4970 = vsel %vm2742, %v4927, %v4754
        %v4972 = vsel %vm2742, %v4930, %v4756
        %v4974 = vsel %vm2742, %v4933, %v4758
        %v4976 = vsel %vm2742, %v4936, %v4760
        %v4978 = vsel %vm2742, %v4939, %v4762
        %v4980 = vsel %vm2742, %v4942, %v4764
        %v4982 = vsel %vm2742, %v4945, %v4766
        %v4984 = vsel %vm2742, %v4948, %v4768
        %v4986 = vsel %vm2742, %v4951, %v4770
        %v4988 = vsel %vm2742, %v4954, %v4772
        %v4990 = vsel %vm2742, %v4957, %v4774
        %v4991 = vsel %vm2742, %v4960, %v2677
        %v4993 = vsel %vm2775, %v4962, %v4776
        %v4996 = vsel %vm2775, %v4964, %v4778
        %v4999 = vsel %vm2775, %v4966, %v4780
        %v5002 = vsel %vm2775, %v4968, %v4782
        %v5005 = vsel %vm2775, %v4970, %v4784
        %v5008 = vsel %vm2775, %v4972, %v4786
        %v5011 = vsel %vm2775, %v4974, %v4788
        %v5014 = vsel %vm2775, %v4976, %v4790
        %v5017 = vsel %vm2775, %v4978, %v4792
        %v5020 = vsel %vm2775, %v4980, %v4794
        %v5023 = vsel %vm2775, %v4982, %v4796
        %v5026 = vsel %vm2775, %v4984, %v4798
        %v5029 = vsel %vm2775, %v4986, %v4800
        %v5032 = vsel %vm2775, %v4988, %v4802
        %v5035 = vsel %vm2775, %v4990, %v4804
        %v5037 = vsel %vm2775, %v4991, %v2709
        %v5039 = vld [vmem:[%s11] sm:$0xff]
        %v5040 = vld [vmem:[%s11 + $0x8] sm:$0xff]
        %v5041 = vld [vmem:[%s11 + $0x10] sm:$0xff]
        %v5042 = vld [vmem:[%s11 + $0x18] sm:$0xff]
        %v5043 = vld [vmem:[%s11 + $0x20] sm:$0xff]
        %v5044 = vld [vmem:[%s11 + $0x28] sm:$0xff]
        %v5045 = vld [vmem:[%s11 + $0x30] sm:$0xff]
        %v5046 = vld [vmem:[%s11 + $0x38] sm:$0xff]
        %v5047 = vld [vmem:[%s11 + $0x40] sm:$0xff]
        %v5048 = vld [vmem:[%s11 + $0x48] sm:$0xff]
        %v5049 = vld [vmem:[%s11 + $0x50] sm:$0xff]
        %v5050 = vld [vmem:[%s11 + $0x58] sm:$0xff]
        %v5051 = vld [vmem:[%s11 + $0x60] sm:$0xff]
        %v5052 = vld [vmem:[%s11 + $0x68] sm:$0xff]
        %v5053 = vld [vmem:[%s11 + $0x70] sm:$0xff]
        %v5054 = vld [vmem:[%s11 + $0x78] sm:$0xff]
        %v5055 = vld [vmem:[%s11 + $0x80] sm:$0xff]
        %v5056 = vld [vmem:[%s11 + $0x88] sm:$0xff]
        %v5057 = vld [vmem:[%s11 + $0x90] sm:$0xff]
        %v5058 = vld [vmem:[%s11 + $0x98] sm:$0xff]
        %v5059 = vld [vmem:[%s11 + $0xa0] sm:$0xff]
        %v5060 = vld [vmem:[%s11 + $0xa8] sm:$0xff]
        %v5061 = vld [vmem:[%s11 + $0xb0] sm:$0xff]
        %v5062 = vld [vmem:[%s11 + $0xb8] sm:$0xff]
        %v5063 = vld [vmem:[%s11 + $0xc0] sm:$0xff]
        %v5064 = vld [vmem:[%s11 + $0xc8] sm:$0xff]
        %v5065 = vld [vmem:[%s11 + $0xd0] sm:$0xff]
        %v5066 = vld [vmem:[%s11 + $0xd8] sm:$0xff]
        %v5067 = vld [vmem:[%s11 + $0xe0] sm:$0xff]
        %v5068 = vld [vmem:[%s11 + $0xe8] sm:$0xff]
        %v5069 = vld [vmem:[%s11 + $0xf0] sm:$0xff]
        %v5070 = vld [vmem:[%s11 + $0xf8] sm:$0xff]
        %v5071 = vld [vmem:[%s11 + $0x100] sm:$0xff]
        %v5072 = vld [vmem:[%s11 + $0x108] sm:$0xff]
        %v5073 = vld [vmem:[%s11 + $0x110] sm:$0xff]
        %v5074 = vld [vmem:[%s11 + $0x118] sm:$0xff]
        %v5075 = vld [vmem:[%s11 + $0x120] sm:$0xff]
        %v5076 = vld [vmem:[%s11 + $0x128] sm:$0xff]
        %v5077 = vld [vmem:[%s11 + $0x130] sm:$0xff]
        %v5078 = vld [vmem:[%s11 + $0x138] sm:$0xff]
        %v5079 = vld [vmem:[%s11 + $0x140] sm:$0xff]
        %v5080 = vld [vmem:[%s11 + $0x148] sm:$0xff]
        %v5081 = vld [vmem:[%s11 + $0x150] sm:$0xff]
        %v5082 = vld [vmem:[%s11 + $0x158] sm:$0xff]
        %v5083 = vld [vmem:[%s11 + $0x160] sm:$0xff]
        %v5084 = vld [vmem:[%s11 + $0x168] sm:$0xff]
        %v5085 = vld [vmem:[%s11 + $0x170] sm:$0xff]
        %v5086 = vld [vmem:[%s11 + $0x178] sm:$0xff]
        %v5087 = vld [vmem:[%s11 + $0x180] sm:$0xff]
        %v5088 = vld [vmem:[%s11 + $0x188] sm:$0xff]
        %v5089 = vld [vmem:[%s11 + $0x190] sm:$0xff]
        %v5090 = vld [vmem:[%s11 + $0x198] sm:$0xff]
        %v5091 = vld [vmem:[%s11 + $0x1a0] sm:$0xff]
        %v5092 = vld [vmem:[%s11 + $0x1a8] sm:$0xff]
        %v5093 = vld [vmem:[%s11 + $0x1b0] sm:$0xff]
        %v5094 = vld [vmem:[%s11 + $0x1b8] sm:$0xff]
        %v5095 = vld [vmem:[%s11 + $0x1c0] sm:$0xff]
        %v5096 = vld [vmem:[%s11 + $0x1c8] sm:$0xff]
        %v5097 = vld [vmem:[%s11 + $0x1d0] sm:$0xff]
        %v5098 = vld [vmem:[%s11 + $0x1d8] sm:$0xff]
        %v5099 = vld [vmem:[%s11 + $0x1e0] sm:$0xff]
        %v5100 = vld [vmem:[%s11 + $0x1e8] sm:$0xff]
        %v5101 = vld [vmem:[%s11 + $0x1f0] sm:$0xff]
        %v5102 = vld [vmem:[%s11 + $0x1f8] sm:$0xff]
        %v5103 = vld [vmem:[%s11 + $0x200] sm:$0xff]
        %v5104 = vld [vmem:[%s11 + $0x208] sm:$0xff]
        %v5105 = vld [vmem:[%s11 + $0x210] sm:$0xff]
        %v5106 = vld [vmem:[%s11 + $0x218] sm:$0xff]
        %v5107 = vld [vmem:[%s11 + $0x220] sm:$0xff]
        %v5108 = vld [vmem:[%s11 + $0x228] sm:$0xff]
        %v5109 = vld [vmem:[%s11 + $0x230] sm:$0xff]
        %v5110 = vld [vmem:[%s11 + $0x238] sm:$0xff]
        %v5111 = vld [vmem:[#allocation16] sm:$0xf]
        %v5113 = vlaneseq
        %v5114 = vshrl.u32 %v5113, 7
        %v5115 = vsub.s32 0, %v5114
        %v5116 = vrot.slane %v5111, %v5115
        %v5117 = vlaneseq
        %v5118 = vshrl.u32 %v5117, 7
        %v5119 = vsub.s32 1, %v5118
        %v5120 = vrot.slane %v5111, %v5119
        %v5121 = vlaneseq
        %v5122 = vshrl.u32 %v5121, 7
        %v5123 = vsub.s32 2, %v5122
        %v5124 = vrot.slane %v5111, %v5123
        %v5125 = vlaneseq
        %v5126 = vshrl.u32 %v5125, 7
        %v5127 = vsub.s32 3, %v5126
        %v5128 = vrot.slane %v5111, %v5127
        %v5205 = vunpack.c.l.b16 %v5039
        %v5206 = vunpack.c.h.b16 %v5039
        %v5207 = vunpack.c.l.b16 %v5040
        %v5208 = vunpack.c.h.b16 %v5040
        %v5209 = vunpack.c.l.b16 %v5041
        %v5210 = vunpack.c.h.b16 %v5041
        %v5211 = vunpack.c.l.b16 %v5042
        %v5212 = vunpack.c.h.b16 %v5042
        %v5213 = vunpack.c.l.b16 %v5043
        %v5214 = vunpack.c.h.b16 %v5043
        %v5215 = vunpack.c.l.b16 %v5044
        %v5216 = vunpack.c.h.b16 %v5044
        %v5217 = vunpack.c.l.b16 %v5045
        %v5218 = vunpack.c.h.b16 %v5045
        %v5219 = vunpack.c.l.b16 %v5046
        %v5220 = vunpack.c.h.b16 %v5046
        %v5221 = vunpack.c.l.b16 %v5047
        %v5222 = vunpack.c.h.b16 %v5047
        %v5223 = vunpack.c.l.b16 %v5048
        %v5224 = vunpack.c.h.b16 %v5048
        %v5225 = vunpack.c.l.b16 %v5049
        %v5226 = vunpack.c.h.b16 %v5049
        %v5227 = vunpack.c.l.b16 %v5050
        %v5228 = vunpack.c.h.b16 %v5050
        %v5229 = vunpack.c.l.b16 %v5051
        %v5230 = vunpack.c.h.b16 %v5051
        %v5231 = vunpack.c.l.b16 %v5052
        %v5232 = vunpack.c.h.b16 %v5052
        %v5233 = vunpack.c.l.b16 %v5053
        %v5234 = vunpack.c.h.b16 %v5053
        %v5235 = vunpack.c.l.b16 %v5054
        %v5236 = vunpack.c.h.b16 %v5054
        %v5237 = vunpack.c.l.b16 %v5055
        %v5238 = vunpack.c.h.b16 %v5055
        %v5239 = vunpack.c.l.b16 %v5056
        %v5240 = vunpack.c.h.b16 %v5056
        %v5241 = vunpack.c.l.b16 %v5057
        %v5242 = vunpack.c.h.b16 %v5057
        %v5243 = vunpack.c.l.b16 %v5058
        %v5244 = vunpack.c.h.b16 %v5058
        %v5245 = vunpack.c.l.b16 %v5059
        %v5246 = vunpack.c.h.b16 %v5059
        %v5247 = vunpack.c.l.b16 %v5060
        %v5248 = vunpack.c.h.b16 %v5060
        %v5249 = vunpack.c.l.b16 %v5061
        %v5250 = vunpack.c.h.b16 %v5061
        %v5251 = vunpack.c.l.b16 %v5062
        %v5252 = vunpack.c.h.b16 %v5062
        %v5253 = vunpack.c.l.b16 %v5063
        %v5254 = vunpack.c.h.b16 %v5063
        %v5255 = vunpack.c.l.b16 %v5064
        %v5256 = vunpack.c.h.b16 %v5064
        %v5257 = vunpack.c.l.b16 %v5065
        %v5258 = vunpack.c.h.b16 %v5065
        %v5259 = vunpack.c.l.b16 %v5066
        %v5260 = vunpack.c.h.b16 %v5066
        %v5261 = vunpack.c.l.b16 %v5067
        %v5262 = vunpack.c.h.b16 %v5067
        %v5263 = vunpack.c.l.b16 %v5068
        %v5264 = vunpack.c.h.b16 %v5068
        %v5265 = vunpack.c.l.b16 %v5069
        %v5266 = vunpack.c.h.b16 %v5069
        %v5267 = vunpack.c.l.b16 %v5070
        %v5268 = vunpack.c.h.b16 %v5070
        %v5269 = vunpack.c.l.b16 %v5071
        %v5270 = vunpack.c.h.b16 %v5071
        %v5271 = vunpack.c.l.b16 %v5072
        %v5272 = vunpack.c.h.b16 %v5072
        %v5273 = vunpack.c.l.b16 %v5073
        %v5274 = vunpack.c.h.b16 %v5073
        %v5275 = vunpack.c.l.b16 %v5074
        %v5276 = vunpack.c.h.b16 %v5074
        %v5277 = vunpack.c.l.b16 %v5075
        %v5278 = vunpack.c.h.b16 %v5075
        %v5279 = vunpack.c.l.b16 %v5076
        %v5280 = vunpack.c.h.b16 %v5076
        %v5281 = vunpack.c.l.b16 %v5077
        %v5282 = vunpack.c.h.b16 %v5077
        %v5283 = vunpack.c.l.b16 %v5078
        %v5284 = vunpack.c.h.b16 %v5078
        %v5285 = vunpack.c.l.b16 %v5079
        %v5286 = vunpack.c.h.b16 %v5079
        %v5287 = vunpack.c.l.b16 %v5080
        %v5288 = vunpack.c.h.b16 %v5080
        %v5289 = vunpack.c.l.b16 %v5081
        %v5290 = vunpack.c.h.b16 %v5081
        %v5291 = vunpack.c.l.b16 %v5082
        %v5292 = vunpack.c.h.b16 %v5082
        %v5293 = vunpack.c.l.b16 %v5083
        %v5294 = vunpack.c.h.b16 %v5083
        %v5295 = vunpack.c.l.b16 %v5084
        %v5296 = vunpack.c.h.b16 %v5084
        %v5297 = vunpack.c.l.b16 %v5085
        %v5298 = vunpack.c.h.b16 %v5085
        %v5299 = vunpack.c.l.b16 %v5086
        %v5300 = vunpack.c.h.b16 %v5086
        %v5301 = vunpack.c.l.b16 %v5087
        %v5302 = vunpack.c.h.b16 %v5087
        %v5303 = vunpack.c.l.b16 %v5088
        %v5304 = vunpack.c.h.b16 %v5088
        %v5305 = vunpack.c.l.b16 %v5089
        %v5306 = vunpack.c.h.b16 %v5089
        %v5307 = vunpack.c.l.b16 %v5090
        %v5308 = vunpack.c.h.b16 %v5090
        %v5309 = vunpack.c.l.b16 %v5091
        %v5310 = vunpack.c.h.b16 %v5091
        %v5311 = vunpack.c.l.b16 %v5092
        %v5312 = vunpack.c.h.b16 %v5092
        %v5313 = vunpack.c.l.b16 %v5093
        %v5314 = vunpack.c.h.b16 %v5093
        %v5315 = vunpack.c.l.b16 %v5094
        %v5316 = vunpack.c.h.b16 %v5094
        %v5317 = vunpack.c.l.b16 %v5095
        %v5318 = vunpack.c.h.b16 %v5095
        %v5319 = vunpack.c.l.b16 %v5096
        %v5320 = vunpack.c.h.b16 %v5096
        %v5321 = vunpack.c.l.b16 %v5097
        %v5322 = vunpack.c.h.b16 %v5097
        %v5323 = vunpack.c.l.b16 %v5098
        %v5324 = vunpack.c.h.b16 %v5098
        %v5325 = vunpack.c.l.b16 %v5099
        %v5326 = vunpack.c.h.b16 %v5099
        %v5327 = vunpack.c.l.b16 %v5100
        %v5328 = vunpack.c.h.b16 %v5100
        %v5329 = vunpack.c.l.b16 %v5101
        %v5330 = vunpack.c.h.b16 %v5101
        %v5331 = vunpack.c.l.b16 %v5102
        %v5332 = vunpack.c.h.b16 %v5102
        %v5333 = vunpack.c.l.b16 %v5103
        %v5334 = vunpack.c.h.b16 %v5103
        %v5335 = vunpack.c.l.b16 %v5104
        %v5336 = vunpack.c.h.b16 %v5104
        %v5337 = vunpack.c.l.b16 %v5105
        %v5338 = vunpack.c.h.b16 %v5105
        %v5339 = vunpack.c.l.b16 %v5106
        %v5340 = vunpack.c.h.b16 %v5106
        %v5341 = vunpack.c.l.b16 %v5107
        %v5342 = vunpack.c.h.b16 %v5107
        %v5343 = vunpack.c.l.b16 %v5108
        %v5344 = vunpack.c.h.b16 %v5108
        %v5345 = vunpack.c.l.b16 %v5109
        %v5346 = vunpack.c.h.b16 %v5109
        %v5347 = vunpack.c.l.b16 %v5110
        %v5348 = vunpack.c.h.b16 %v5110
        %v5349 = vpack.c.b16 %v5209, %v5205
        %v5350 = vpack.c.b16 %v5210, %v5206
        %v5351 = vpack.c.b16 %v5211, %v5207
        %v5352 = vpack.c.b16 %v5212, %v5208
        %v5353 = vpack.c.b16 %v5217, %v5213
        %v5354 = vpack.c.b16 %v5218, %v5214
        %v5355 = vpack.c.b16 %v5219, %v5215
        %v5356 = vpack.c.b16 %v5220, %v5216
        %v5357 = vpack.c.b16 %v5225, %v5221
        %v5358 = vpack.c.b16 %v5226, %v5222
        %v5359 = vpack.c.b16 %v5227, %v5223
        %v5360 = vpack.c.b16 %v5228, %v5224
        %v5361 = vpack.c.b16 %v5233, %v5229
        %v5362 = vpack.c.b16 %v5234, %v5230
        %v5363 = vpack.c.b16 %v5235, %v5231
        %v5364 = vpack.c.b16 %v5236, %v5232
        %v5365 = vpack.c.b16 %v5241, %v5237
        %v5366 = vpack.c.b16 %v5242, %v5238
        %v5367 = vpack.c.b16 %v5243, %v5239
        %v5368 = vpack.c.b16 %v5244, %v5240
        %v5369 = vpack.c.b16 %v5249, %v5245
        %v5370 = vpack.c.b16 %v5250, %v5246
        %v5371 = vpack.c.b16 %v5251, %v5247
        %v5372 = vpack.c.b16 %v5252, %v5248
        %v5373 = vpack.c.b16 %v5257, %v5253
        %v5374 = vpack.c.b16 %v5258, %v5254
        %v5375 = vpack.c.b16 %v5259, %v5255
        %v5376 = vpack.c.b16 %v5260, %v5256
        %v5377 = vpack.c.b16 %v5265, %v5261
        %v5378 = vpack.c.b16 %v5266, %v5262
        %v5379 = vpack.c.b16 %v5267, %v5263
        %v5380 = vpack.c.b16 %v5268, %v5264
        %v5381 = vpack.c.b16 %v5273, %v5269
        %v5382 = vpack.c.b16 %v5274, %v5270
        %v5383 = vpack.c.b16 %v5275, %v5271
        %v5384 = vpack.c.b16 %v5276, %v5272
        %v5385 = vpack.c.b16 %v5281, %v5277
        %v5386 = vpack.c.b16 %v5282, %v5278
        %v5387 = vpack.c.b16 %v5283, %v5279
        %v5388 = vpack.c.b16 %v5284, %v5280
        %v5389 = vpack.c.b16 %v5289, %v5285
        %v5390 = vpack.c.b16 %v5290, %v5286
        %v5391 = vpack.c.b16 %v5291, %v5287
        %v5392 = vpack.c.b16 %v5292, %v5288
        %v5393 = vpack.c.b16 %v5297, %v5293
        %v5394 = vpack.c.b16 %v5298, %v5294
        %v5395 = vpack.c.b16 %v5299, %v5295
        %v5396 = vpack.c.b16 %v5300, %v5296
        %v5397 = vpack.c.b16 %v5305, %v5301
        %v5398 = vpack.c.b16 %v5306, %v5302
        %v5399 = vpack.c.b16 %v5307, %v5303
        %v5400 = vpack.c.b16 %v5308, %v5304
        %v5401 = vpack.c.b16 %v5313, %v5309
        %v5402 = vpack.c.b16 %v5314, %v5310
        %v5403 = vpack.c.b16 %v5315, %v5311
        %v5404 = vpack.c.b16 %v5316, %v5312
        %v5405 = vpack.c.b16 %v5321, %v5317
        %v5406 = vpack.c.b16 %v5322, %v5318
        %v5407 = vpack.c.b16 %v5323, %v5319
        %v5408 = vpack.c.b16 %v5324, %v5320
        %v5409 = vpack.c.b16 %v5329, %v5325
        %v5410 = vpack.c.b16 %v5330, %v5326
        %v5411 = vpack.c.b16 %v5331, %v5327
        %v5412 = vpack.c.b16 %v5332, %v5328
        %v5413 = vpack.c.b16 %v5337, %v5333
        %v5414 = vpack.c.b16 %v5338, %v5334
        %v5415 = vpack.c.b16 %v5339, %v5335
        %v5416 = vpack.c.b16 %v5340, %v5336
        %v5417 = vpack.c.b16 %v5345, %v5341
        %v5418 = vpack.c.b16 %v5346, %v5342
        %v5419 = vpack.c.b16 %v5347, %v5343
        %v5420 = vpack.c.b16 %v5348, %v5344
        %v5494 = vsel %vm1088, %v4564, 0
        %v5497 = vsel %vm1088, %v4567, 0
        %v5500 = vsel %vm1088, %v4570, 0
        %v5503 = vsel %vm1088, %v4573, 0
        %v5506 = vsel %vm1088, %v4576, 0
        %v5509 = vsel %vm1088, %v4579, 0
        %v5512 = vsel %vm1088, %v4582, 0
        %v5515 = vsel %vm1088, %v4585, 0
        %v5518 = vsel %vm1088, %v4588, 0
        %v5521 = vsel %vm1088, %v4591, 0
        %v5524 = vsel %vm1088, %v4594, 0
        %v5527 = vsel %vm1088, %v4597, 0
        %v5530 = vsel %vm1088, %v4600, 0
        %v5533 = vsel %vm1088, %v4603, 0
        %v5536 = vsel %vm1088, %v4620, 0
        %5538 = vmatprep.subr.bf16.mxu0 %v5350
        %5539 = vmatpush1.bf16.msra.mxu0 %v5349
        %5540 = vmatprep.subr.bf16.mxu0 %v5354
        %5541 = vmatpush1.bf16.msra.mxu0 %v5353
        %5542 = vmatprep.subr.bf16.mxu0 %v5358
        %5543 = vmatpush1.bf16.msra.mxu0 %v5357
        %5544 = vmatprep.subr.bf16.mxu0 %v5362
        %5545 = vmatpush1.bf16.msra.mxu0 %v5361
        %5546 = vmatprep.subr.bf16.mxu0 %v5366
        %5547 = vmatpush1.bf16.msra.mxu0 %v5365
        %5548 = vmatprep.subr.bf16.mxu0 %v5370
        %5549 = vmatpush1.bf16.msra.mxu0 %v5369
        %5550 = vmatprep.subr.bf16.mxu0 %v5374
        %5551 = vmatpush1.bf16.msra.mxu0 %v5373
        %5552 = vmatprep.subr.bf16.mxu0 %v5378
        %5553 = vmatpush1.bf16.msra.mxu0 %v5377
        %5554 = vmatprep.subr.bf16.mxu0 %v5382
        %5555 = vmatpush1.bf16.msra.mxu0 %v5381
        %5556 = vmatprep.subr.bf16.mxu0 %v5386
        %5557 = vmatpush1.bf16.msra.mxu0 %v5385
        %5558 = vmatprep.subr.bf16.mxu0 %v5390
        %5559 = vmatpush1.bf16.msra.mxu0 %v5389
        %5560 = vmatprep.subr.bf16.mxu0 %v5394
        %5561 = vmatpush1.bf16.msra.mxu0 %v5393
        %5562 = vmatprep.subr.bf16.mxu0 %v5398
        %5563 = vmatpush1.bf16.msra.mxu0 %v5397
        %5564 = vmatprep.subr.bf16.mxu0 %v5402
        %5565 = vmatpush1.bf16.msra.mxu0 %v5401
        %5566 = vmatprep.subr.bf16.mxu0 %v5406
        %5567 = vmatpush1.bf16.msra.mxu0 %v5405
        %5568 = vmatprep.subr.bf16.mxu0 %v5410
        %5569 = vmatpush1.bf16.msra.mxu0 %v5409
        %5570 = vmatprep.mubr.bf16.mxu0 %v4993
        %5571 = vmatmul.mubr.bf16.gmra.mrb[0].mxu0 %v4866
        %v5572 = vpop.f32.mrb[0].mxu0
        %v5573 = vadd.f32 %v5116, %v5572
        %v5574 = vpop.f32.mrb[0].mxu0
        %v5575 = vadd.f32 %v5120, %v5574
        %v5576 = vpop.f32.mrb[0].mxu0
        %v5577 = vadd.f32 %v5116, %v5576
        %v5578 = vpop.f32.mrb[0].mxu0
        %v5579 = vadd.f32 %v5120, %v5578
        %5580 = vmatprep.mubr.bf16.mxu0 %v4996
        %5581 = vmatmul.mubr.bf16.gmra.mrb[0].mxu0 %v4869
        %v5582 = vpop.f32.mrb[0].mxu0
        %v5583 = vadd.f32 %v5116, %v5582
        %v5584 = vpop.f32.mrb[0].mxu0
        %v5585 = vadd.f32 %v5120, %v5584
        %v5586 = vpop.f32.mrb[0].mxu0
        %v5587 = vadd.f32 %v5116, %v5586
        %v5588 = vpop.f32.mrb[0].mxu0
        %v5589 = vadd.f32 %v5120, %v5588
        %5590 = vmatprep.mubr.bf16.mxu0 %v4999
        %5591 = vmatmul.mubr.bf16.gmra.mrb[0].mxu0 %v4872
        %v5592 = vpop.f32.mrb[0].mxu0
        %v5593 = vadd.f32 %v5116, %v5592
        %v5594 = vpop.f32.mrb[0].mxu0
        %v5595 = vadd.f32 %v5120, %v5594
        %v5596 = vpop.f32.mrb[0].mxu0
        %v5597 = vadd.f32 %v5116, %v5596
        %v5598 = vpop.f32.mrb[0].mxu0
        %v5599 = vadd.f32 %v5120, %v5598
        %5600 = vmatprep.mubr.bf16.mxu0 %v5002
        %5601 = vmatmul.mubr.bf16.gmra.mrb[0].mxu0 %v4875
        %v5602 = vpop.f32.mrb[0].mxu0
        %v5603 = vadd.f32 %v5116, %v5602
        %v5604 = vpop.f32.mrb[0].mxu0
        %v5605 = vadd.f32 %v5120, %v5604
        %v5606 = vpop.f32.mrb[0].mxu0
        %v5607 = vadd.f32 %v5116, %v5606
        %v5608 = vpop.f32.mrb[0].mxu0
        %v5609 = vadd.f32 %v5120, %v5608
        %5610 = vmatprep.mubr.bf16.mxu0 %v5005
        %5611 = vmatmul.mubr.bf16.gmra.mrb[0].mxu0 %v4878
        %v5612 = vpop.f32.mrb[0].mxu0
        %v5613 = vadd.f32 %v5116, %v5612
        %v5614 = vpop.f32.mrb[0].mxu0
        %v5615 = vadd.f32 %v5120, %v5614
        %v5616 = vpop.f32.mrb[0].mxu0
        %v5617 = vadd.f32 %v5116, %v5616
        %v5618 = vpop.f32.mrb[0].mxu0
        %v5619 = vadd.f32 %v5120, %v5618
        %5620 = vmatprep.mubr.bf16.mxu0 %v5008
        %5621 = vmatmul.mubr.bf16.gmra.mrb[0].mxu0 %v4881
        %v5622 = vpop.f32.mrb[0].mxu0
        %v5623 = vadd.f32 %v5116, %v5622
        %v5624 = vpop.f32.mrb[0].mxu0
        %v5625 = vadd.f32 %v5120, %v5624
        %v5626 = vpop.f32.mrb[0].mxu0
        %v5627 = vadd.f32 %v5116, %v5626
        %v5628 = vpop.f32.mrb[0].mxu0
        %v5629 = vadd.f32 %v5120, %v5628
        %5630 = vmatprep.mubr.bf16.mxu0 %v5011
        %5631 = vmatmul.mubr.bf16.gmra.mrb[0].mxu0 %v4884
        %v5632 = vpop.f32.mrb[0].mxu0
        %v5633 = vadd.f32 %v5116, %v5632
        %v5634 = vpop.f32.mrb[0].mxu0
        %v5635 = vadd.f32 %v5120, %v5634
        %v5636 = vpop.f32.mrb[0].mxu0
        %v5637 = vadd.f32 %v5116, %v5636
        %v5638 = vpop.f32.mrb[0].mxu0
        %v5639 = vadd.f32 %v5120, %v5638
        %5640 = vmatprep.mubr.bf16.mxu0 %v5014
        %5641 = vmatmul.mubr.bf16.gmra.mrb[0].mxu0 %v4887
        %v5642 = vpop.f32.mrb[0].mxu0
        %v5643 = vadd.f32 %v5116, %v5642
        %v5644 = vpop.f32.mrb[0].mxu0
        %v5645 = vadd.f32 %v5120, %v5644
        %v5646 = vpop.f32.mrb[0].mxu0
        %v5647 = vadd.f32 %v5116, %v5646
        %v5648 = vpop.f32.mrb[0].mxu0
        %v5649 = vadd.f32 %v5120, %v5648
        %5650 = vmatprep.mubr.bf16.mxu0 %v5017
        %5651 = vmatmul.mubr.bf16.gmra.mrb[0].mxu0 %v4890
        %v5652 = vpop.f32.mrb[0].mxu0
        %v5653 = vadd.f32 %v5116, %v5652
        %v5654 = vpop.f32.mrb[0].mxu0
        %v5655 = vadd.f32 %v5120, %v5654
        %v5656 = vpop.f32.mrb[0].mxu0
        %v5657 = vadd.f32 %v5116, %v5656
        %v5658 = vpop.f32.mrb[0].mxu0
        %v5659 = vadd.f32 %v5120, %v5658
        %5660 = vmatprep.mubr.bf16.mxu0 %v5020
        %5661 = vmatmul.mubr.bf16.gmra.mrb[0].mxu0 %v4893
        %v5662 = vpop.f32.mrb[0].mxu0
        %v5663 = vadd.f32 %v5116, %v5662
        %v5664 = vpop.f32.mrb[0].mxu0
        %v5665 = vadd.f32 %v5120, %v5664
        %v5666 = vpop.f32.mrb[0].mxu0
        %v5667 = vadd.f32 %v5116, %v5666
        %v5668 = vpop.f32.mrb[0].mxu0
        %v5669 = vadd.f32 %v5120, %v5668
        %5670 = vmatprep.mubr.bf16.mxu0 %v5023
        %5671 = vmatmul.mubr.bf16.gmra.mrb[0].mxu0 %v4896
        %v5672 = vpop.f32.mrb[0].mxu0
        %v5673 = vadd.f32 %v5116, %v5672
        %v5674 = vpop.f32.mrb[0].mxu0
        %v5675 = vadd.f32 %v5120, %v5674
        %v5676 = vpop.f32.mrb[0].mxu0
        %v5677 = vadd.f32 %v5116, %v5676
        %v5678 = vpop.f32.mrb[0].mxu0
        %v5679 = vadd.f32 %v5120, %v5678
        %5680 = vmatprep.mubr.bf16.mxu0 %v5026
        %5681 = vmatmul.mubr.bf16.gmra.mrb[0].mxu0 %v4899
        %v5682 = vpop.f32.mrb[0].mxu0
        %v5683 = vadd.f32 %v5116, %v5682
        %v5684 = vpop.f32.mrb[0].mxu0
        %v5685 = vadd.f32 %v5120, %v5684
        %v5686 = vpop.f32.mrb[0].mxu0
        %v5687 = vadd.f32 %v5116, %v5686
        %v5688 = vpop.f32.mrb[0].mxu0
        %v5689 = vadd.f32 %v5120, %v5688
        %5690 = vmatprep.mubr.bf16.mxu0 %v5029
        %5691 = vmatmul.mubr.bf16.gmra.mrb[0].mxu0 %v4902
        %v5692 = vpop.f32.mrb[0].mxu0
        %v5693 = vadd.f32 %v5116, %v5692
        %v5694 = vpop.f32.mrb[0].mxu0
        %v5695 = vadd.f32 %v5120, %v5694
        %v5696 = vpop.f32.mrb[0].mxu0
        %v5697 = vadd.f32 %v5116, %v5696
        %v5698 = vpop.f32.mrb[0].mxu0
        %v5699 = vadd.f32 %v5120, %v5698
        %5700 = vmatprep.mubr.bf16.mxu0 %v5032
        %5701 = vmatmul.mubr.bf16.gmra.mrb[0].mxu0 %v4905
        %v5702 = vpop.f32.mrb[0].mxu0
        %v5703 = vadd.f32 %v5116, %v5702
        %v5704 = vpop.f32.mrb[0].mxu0
        %v5705 = vadd.f32 %v5120, %v5704
        %v5706 = vpop.f32.mrb[0].mxu0
        %v5707 = vadd.f32 %v5116, %v5706
        %v5708 = vpop.f32.mrb[0].mxu0
        %v5709 = vadd.f32 %v5120, %v5708
        %5710 = vmatprep.mubr.bf16.mxu0 %v5035
        %5711 = vmatmul.mubr.bf16.gmra.mrb[0].mxu0 %v4908
        %v5712 = vpop.f32.mrb[0].mxu0
        %v5713 = vadd.f32 %v5116, %v5712
        %v5714 = vpop.f32.mrb[0].mxu0
        %v5715 = vadd.f32 %v5120, %v5714
        %v5716 = vpop.f32.mrb[0].mxu0
        %v5717 = vadd.f32 %v5116, %v5716
        %v5718 = vpop.f32.mrb[0].mxu0
        %v5719 = vadd.f32 %v5120, %v5718
        %5720 = vmatprep.mubr.bf16.mxu0 %v5037
        %5721 = vmatmul.mubr.bf16.gmra.mrb[0].mxu0 %v4911
        %v5722 = vpop.f32.mrb[0].mxu0
        %v5723 = vadd.f32 %v5116, %v5722
        %v5724 = vpop.f32.mrb[0].mxu0
        %v5725 = vadd.f32 %v5120, %v5724
        %v5726 = vpop.f32.mrb[0].mxu0
        %v5727 = vadd.f32 %v5116, %v5726
        %v5728 = vpop.f32.mrb[0].mxu0
        %v5729 = vadd.f32 %v5120, %v5728
        %5730 = vdwg.mxu0
        %5731 = vmatprep.subr.bf16.mxu0 %v5414
        %5732 = vmatpush1.bf16.msra.mxu0 %v5413
        %5733 = vmatprep.subr.bf16.mxu0 %v5418
        %5734 = vmatpush1.bf16.msra.mxu0 %v5417
        %5735 = vmatprep.subr.bf16.mxu0 0
        %5736 = vmatpush1.bf16.msra.mxu0 0
        %5737 = vmatprep.subr.bf16.mxu0 0
        %5738 = vmatpush1.bf16.msra.mxu0 0
        %5739 = vmatprep.subr.bf16.mxu0 0
        %5740 = vmatpush1.bf16.msra.mxu0 0
        %5741 = vmatprep.subr.bf16.mxu0 0
        %5742 = vmatpush1.bf16.msra.mxu0 0
        %5743 = vmatprep.subr.bf16.mxu0 0
        %5744 = vmatpush1.bf16.msra.mxu0 0
        %5745 = vmatprep.subr.bf16.mxu0 0
        %5746 = vmatpush1.bf16.msra.mxu0 0
        %5747 = vmatprep.subr.bf16.mxu0 0
        %5748 = vmatpush1.bf16.msra.mxu0 0
        %5749 = vmatprep.subr.bf16.mxu0 0
        %5750 = vmatpush1.bf16.msra.mxu0 0
        %5751 = vmatprep.subr.bf16.mxu0 0
        %5752 = vmatpush1.bf16.msra.mxu0 0
        %5753 = vmatprep.subr.bf16.mxu0 0
        %5754 = vmatpush1.bf16.msra.mxu0 0
        %5755 = vmatprep.subr.bf16.mxu0 0
        %5756 = vmatpush1.bf16.msra.mxu0 0
        %5757 = vmatprep.subr.bf16.mxu0 0
        %5758 = vmatpush1.bf16.msra.mxu0 0
        %5759 = vmatprep.subr.bf16.mxu0 0
        %5760 = vmatpush1.bf16.msra.mxu0 0
        %5761 = vmatprep.subr.bf16.mxu0 0
        %5762 = vmatpush1.bf16.msra.mxu0 0
        %5763 = vmatprep.mubr.bf16.mxu0 0
        %5764 = vmatmul.mubr.bf16.gmra.mrb[0].mxu0 %v5494
        %v5765 = vpop.f32.mrb[0].mxu0
        %v5766 = vadd.f32 %v5573, %v5765
        %v5767 = vpop.f32.mrb[0].mxu0
        %v5768 = vadd.f32 %v5575, %v5767
        %v5769 = vpop.f32.mrb[0].mxu0
        %v5770 = vadd.f32 %v5577, %v5769
        %v5771 = vpop.f32.mrb[0].mxu0
        %v5772 = vadd.f32 %v5579, %v5771
        %5773 = vmatprep.mubr.bf16.mxu0 0
        %5774 = vmatmul.mubr.bf16.gmra.mrb[0].mxu0 %v5497
        %v5775 = vpop.f32.mrb[0].mxu0
        %v5776 = vadd.f32 %v5583, %v5775
        %v5777 = vpop.f32.mrb[0].mxu0
        %v5778 = vadd.f32 %v5585, %v5777
        %v5779 = vpop.f32.mrb[0].mxu0
        %v5780 = vadd.f32 %v5587, %v5779
        %v5781 = vpop.f32.mrb[0].mxu0
        %v5782 = vadd.f32 %v5589, %v5781
        %5783 = vmatprep.mubr.bf16.mxu0 0
        %5784 = vmatmul.mubr.bf16.gmra.mrb[0].mxu0 %v5500
        %v5785 = vpop.f32.mrb[0].mxu0
        %v5786 = vadd.f32 %v5593, %v5785
        %v5787 = vpop.f32.mrb[0].mxu0
        %v5788 = vadd.f32 %v5595, %v5787
        %v5789 = vpop.f32.mrb[0].mxu0
        %v5790 = vadd.f32 %v5597, %v5789
        %v5791 = vpop.f32.mrb[0].mxu0
        %v5792 = vadd.f32 %v5599, %v5791
        %5793 = vmatprep.mubr.bf16.mxu0 0
        %5794 = vmatmul.mubr.bf16.gmra.mrb[0].mxu0 %v5503
        %v5795 = vpop.f32.mrb[0].mxu0
        %v5796 = vadd.f32 %v5603, %v5795
        %v5797 = vpop.f32.mrb[0].mxu0
        %v5798 = vadd.f32 %v5605, %v5797
        %v5799 = vpop.f32.mrb[0].mxu0
        %v5800 = vadd.f32 %v5607, %v5799
        %v5801 = vpop.f32.mrb[0].mxu0
        %v5802 = vadd.f32 %v5609, %v5801
        %5803 = vmatprep.mubr.bf16.mxu0 0
        %5804 = vmatmul.mubr.bf16.gmra.mrb[0].mxu0 %v5506
        %v5805 = vpop.f32.mrb[0].mxu0
        %v5806 = vadd.f32 %v5613, %v5805
        %v5807 = vpop.f32.mrb[0].mxu0
        %v5808 = vadd.f32 %v5615, %v5807
        %v5809 = vpop.f32.mrb[0].mxu0
        %v5810 = vadd.f32 %v5617, %v5809
        %v5811 = vpop.f32.mrb[0].mxu0
        %v5812 = vadd.f32 %v5619, %v5811
        %5813 = vmatprep.mubr.bf16.mxu0 0
        %5814 = vmatmul.mubr.bf16.gmra.mrb[0].mxu0 %v5509
        %v5815 = vpop.f32.mrb[0].mxu0
        %v5816 = vadd.f32 %v5623, %v5815
        %v5817 = vpop.f32.mrb[0].mxu0
        %v5818 = vadd.f32 %v5625, %v5817
        %v5819 = vpop.f32.mrb[0].mxu0
        %v5820 = vadd.f32 %v5627, %v5819
        %v5821 = vpop.f32.mrb[0].mxu0
        %v5822 = vadd.f32 %v5629, %v5821
        %5823 = vmatprep.mubr.bf16.mxu0 0
        %5824 = vmatmul.mubr.bf16.gmra.mrb[0].mxu0 %v5512
        %v5825 = vpop.f32.mrb[0].mxu0
        %v5826 = vadd.f32 %v5633, %v5825
        %v5827 = vpop.f32.mrb[0].mxu0
        %v5828 = vadd.f32 %v5635, %v5827
        %v5829 = vpop.f32.mrb[0].mxu0
        %v5830 = vadd.f32 %v5637, %v5829
        %v5831 = vpop.f32.mrb[0].mxu0
        %v5832 = vadd.f32 %v5639, %v5831
        %5833 = vmatprep.mubr.bf16.mxu0 0
        %5834 = vmatmul.mubr.bf16.gmra.mrb[0].mxu0 %v5515
        %v5835 = vpop.f32.mrb[0].mxu0
        %v5836 = vadd.f32 %v5643, %v5835
        %v5837 = vpop.f32.mrb[0].mxu0
        %v5838 = vadd.f32 %v5645, %v5837
        %v5839 = vpop.f32.mrb[0].mxu0
        %v5840 = vadd.f32 %v5647, %v5839
        %v5841 = vpop.f32.mrb[0].mxu0
        %v5842 = vadd.f32 %v5649, %v5841
        %5843 = vmatprep.mubr.bf16.mxu0 0
        %5844 = vmatmul.mubr.bf16.gmra.mrb[0].mxu0 %v5518
        %v5845 = vpop.f32.mrb[0].mxu0
        %v5846 = vadd.f32 %v5653, %v5845
        %v5847 = vpop.f32.mrb[0].mxu0
        %v5848 = vadd.f32 %v5655, %v5847
        %v5849 = vpop.f32.mrb[0].mxu0
        %v5850 = vadd.f32 %v5657, %v5849
        %v5851 = vpop.f32.mrb[0].mxu0
        %v5852 = vadd.f32 %v5659, %v5851
        %5853 = vmatprep.mubr.bf16.mxu0 0
        %5854 = vmatmul.mubr.bf16.gmra.mrb[0].mxu0 %v5521
        %v5855 = vpop.f32.mrb[0].mxu0
        %v5856 = vadd.f32 %v5663, %v5855
        %v5857 = vpop.f32.mrb[0].mxu0
        %v5858 = vadd.f32 %v5665, %v5857
        %v5859 = vpop.f32.mrb[0].mxu0
        %v5860 = vadd.f32 %v5667, %v5859
        %v5861 = vpop.f32.mrb[0].mxu0
        %v5862 = vadd.f32 %v5669, %v5861
        %5863 = vmatprep.mubr.bf16.mxu0 0
        %5864 = vmatmul.mubr.bf16.gmra.mrb[0].mxu0 %v5524
        %v5865 = vpop.f32.mrb[0].mxu0
        %v5866 = vadd.f32 %v5673, %v5865
        %v5867 = vpop.f32.mrb[0].mxu0
        %v5868 = vadd.f32 %v5675, %v5867
        %v5869 = vpop.f32.mrb[0].mxu0
        %v5870 = vadd.f32 %v5677, %v5869
        %v5871 = vpop.f32.mrb[0].mxu0
        %v5872 = vadd.f32 %v5679, %v5871
        %5873 = vmatprep.mubr.bf16.mxu0 0
        %5874 = vmatmul.mubr.bf16.gmra.mrb[0].mxu0 %v5527
        %v5875 = vpop.f32.mrb[0].mxu0
        %v5876 = vadd.f32 %v5683, %v5875
        %v5877 = vpop.f32.mrb[0].mxu0
        %v5878 = vadd.f32 %v5685, %v5877
        %v5879 = vpop.f32.mrb[0].mxu0
        %v5880 = vadd.f32 %v5687, %v5879
        %v5881 = vpop.f32.mrb[0].mxu0
        %v5882 = vadd.f32 %v5689, %v5881
        %5883 = vmatprep.mubr.bf16.mxu0 0
        %5884 = vmatmul.mubr.bf16.gmra.mrb[0].mxu0 %v5530
        %v5885 = vpop.f32.mrb[0].mxu0
        %v5886 = vadd.f32 %v5693, %v5885
        %v5887 = vpop.f32.mrb[0].mxu0
        %v5888 = vadd.f32 %v5695, %v5887
        %v5889 = vpop.f32.mrb[0].mxu0
        %v5890 = vadd.f32 %v5697, %v5889
        %v5891 = vpop.f32.mrb[0].mxu0
        %v5892 = vadd.f32 %v5699, %v5891
        %5893 = vmatprep.mubr.bf16.mxu0 0
        %5894 = vmatmul.mubr.bf16.gmra.mrb[0].mxu0 %v5533
        %v5895 = vpop.f32.mrb[0].mxu0
        %v5896 = vadd.f32 %v5703, %v5895
        %v5897 = vpop.f32.mrb[0].mxu0
        %v5898 = vadd.f32 %v5705, %v5897
        %v5899 = vpop.f32.mrb[0].mxu0
        %v5900 = vadd.f32 %v5707, %v5899
        %v5901 = vpop.f32.mrb[0].mxu0
        %v5902 = vadd.f32 %v5709, %v5901
        %5903 = vmatprep.mubr.bf16.mxu0 0
        %5904 = vmatmul.mubr.bf16.gmra.mrb[0].mxu0 %v5536
        %v5905 = vpop.f32.mrb[0].mxu0
        %v5906 = vadd.f32 %v5713, %v5905
        %v5907 = vpop.f32.mrb[0].mxu0
        %v5908 = vadd.f32 %v5715, %v5907
        %v5909 = vpop.f32.mrb[0].mxu0
        %v5910 = vadd.f32 %v5717, %v5909
        %v5911 = vpop.f32.mrb[0].mxu0
        %v5912 = vadd.f32 %v5719, %v5911
        %5913 = vmatprep.mubr.bf16.mxu0 0
        %5914 = vmatmul.mubr.bf16.gmra.mrb[0].mxu0 %v3149
        %v5915 = vpop.f32.mrb[0].mxu0
        %v5916 = vadd.f32 %v5723, %v5915
        %v5917 = vpop.f32.mrb[0].mxu0
        %v5918 = vadd.f32 %v5725, %v5917
        %v5919 = vpop.f32.mrb[0].mxu0
        %v5920 = vadd.f32 %v5727, %v5919
        %v5921 = vpop.f32.mrb[0].mxu0
        %v5922 = vadd.f32 %v5729, %v5921
        %5923 = vdwg.mxu0
        %5924 = vmatprep.subr.bf16.mxu0 %v5352
        %5925 = vmatpush1.bf16.msra.mxu0 %v5351
        %5926 = vmatprep.subr.bf16.mxu0 %v5356
        %5927 = vmatpush1.bf16.msra.mxu0 %v5355
        %5928 = vmatprep.subr.bf16.mxu0 %v5360
        %5929 = vmatpush1.bf16.msra.mxu0 %v5359
        %5930 = vmatprep.subr.bf16.mxu0 %v5364
        %5931 = vmatpush1.bf16.msra.mxu0 %v5363
        %5932 = vmatprep.subr.bf16.mxu0 %v5368
        %5933 = vmatpush1.bf16.msra.mxu0 %v5367
        %5934 = vmatprep.subr.bf16.mxu0 %v5372
        %5935 = vmatpush1.bf16.msra.mxu0 %v5371
        %5936 = vmatprep.subr.bf16.mxu0 %v5376
        %5937 = vmatpush1.bf16.msra.mxu0 %v5375
        %5938 = vmatprep.subr.bf16.mxu0 %v5380
        %5939 = vmatpush1.bf16.msra.mxu0 %v5379
        %5940 = vmatprep.subr.bf16.mxu0 %v5384
        %5941 = vmatpush1.bf16.msra.mxu0 %v5383
        %5942 = vmatprep.subr.bf16.mxu0 %v5388
        %5943 = vmatpush1.bf16.msra.mxu0 %v5387
        %5944 = vmatprep.subr.bf16.mxu0 %v5392
        %5945 = vmatpush1.bf16.msra.mxu0 %v5391
        %5946 = vmatprep.subr.bf16.mxu0 %v5396
        %5947 = vmatpush1.bf16.msra.mxu0 %v5395
        %5948 = vmatprep.subr.bf16.mxu0 %v5400
        %5949 = vmatpush1.bf16.msra.mxu0 %v5399
        %5950 = vmatprep.subr.bf16.mxu0 %v5404
        %5951 = vmatpush1.bf16.msra.mxu0 %v5403
        %5952 = vmatprep.subr.bf16.mxu0 %v5408
        %5953 = vmatpush1.bf16.msra.mxu0 %v5407
        %5954 = vmatprep.subr.bf16.mxu0 %v5412
        %5955 = vmatpush1.bf16.msra.mxu0 %v5411
        %5956 = vmatprep.mubr.bf16.mxu0 %v4993
        %5957 = vmatmul.mubr.bf16.gmra.mrb[0].mxu0 %v4866
        %v5958 = vpop.f32.mrb[0].mxu0
        %v5959 = vadd.f32 %v5124, %v5958
        %v5960 = vpop.f32.mrb[0].mxu0
        %v5961 = vadd.f32 %v5128, %v5960
        %v5962 = vpop.f32.mrb[0].mxu0
        %v5963 = vadd.f32 %v5124, %v5962
        %v5964 = vpop.f32.mrb[0].mxu0
        %v5965 = vadd.f32 %v5128, %v5964
        %5966 = vmatprep.mubr.bf16.mxu0 %v4996
        %5967 = vmatmul.mubr.bf16.gmra.mrb[0].mxu0 %v4869
        %v5968 = vpop.f32.mrb[0].mxu0
        %v5969 = vadd.f32 %v5124, %v5968
        %v5970 = vpop.f32.mrb[0].mxu0
        %v5971 = vadd.f32 %v5128, %v5970
        %v5972 = vpop.f32.mrb[0].mxu0
        %v5973 = vadd.f32 %v5124, %v5972
        %v5974 = vpop.f32.mrb[0].mxu0
        %v5975 = vadd.f32 %v5128, %v5974
        %5976 = vmatprep.mubr.bf16.mxu0 %v4999
        %5977 = vmatmul.mubr.bf16.gmra.mrb[0].mxu0 %v4872
        %v5978 = vpop.f32.mrb[0].mxu0
        %v5979 = vadd.f32 %v5124, %v5978
        %v5980 = vpop.f32.mrb[0].mxu0
        %v5981 = vadd.f32 %v5128, %v5980
        %v5982 = vpop.f32.mrb[0].mxu0
        %v5983 = vadd.f32 %v5124, %v5982
        %v5984 = vpop.f32.mrb[0].mxu0
        %v5985 = vadd.f32 %v5128, %v5984
        %5986 = vmatprep.mubr.bf16.mxu0 %v5002
        %5987 = vmatmul.mubr.bf16.gmra.mrb[0].mxu0 %v4875
        %v5988 = vpop.f32.mrb[0].mxu0
        %v5989 = vadd.f32 %v5124, %v5988
        %v5990 = vpop.f32.mrb[0].mxu0
        %v5991 = vadd.f32 %v5128, %v5990
        %v5992 = vpop.f32.mrb[0].mxu0
        %v5993 = vadd.f32 %v5124, %v5992
        %v5994 = vpop.f32.mrb[0].mxu0
        %v5995 = vadd.f32 %v5128, %v5994
        %5996 = vmatprep.mubr.bf16.mxu0 %v5005
        %5997 = vmatmul.mubr.bf16.gmra.mrb[0].mxu0 %v4878
        %v5998 = vpop.f32.mrb[0].mxu0
        %v5999 = vadd.f32 %v5124, %v5998
        %v6000 = vpop.f32.mrb[0].mxu0
        %v6001 = vadd.f32 %v5128, %v6000
        %v6002 = vpop.f32.mrb[0].mxu0
        %v6003 = vadd.f32 %v5124, %v6002
        %v6004 = vpop.f32.mrb[0].mxu0
        %v6005 = vadd.f32 %v5128, %v6004
        %6006 = vmatprep.mubr.bf16.mxu0 %v5008
        %6007 = vmatmul.mubr.bf16.gmra.mrb[0].mxu0 %v4881
        %v6008 = vpop.f32.mrb[0].mxu0
        %v6009 = vadd.f32 %v5124, %v6008
        %v6010 = vpop.f32.mrb[0].mxu0
        %v6011 = vadd.f32 %v5128, %v6010
        %v6012 = vpop.f32.mrb[0].mxu0
        %v6013 = vadd.f32 %v5124, %v6012
        %v6014 = vpop.f32.mrb[0].mxu0
        %v6015 = vadd.f32 %v5128, %v6014
        %6016 = vmatprep.mubr.bf16.mxu0 %v5011
        %6017 = vmatmul.mubr.bf16.gmra.mrb[0].mxu0 %v4884
        %v6018 = vpop.f32.mrb[0].mxu0
        %v6019 = vadd.f32 %v5124, %v6018
        %v6020 = vpop.f32.mrb[0].mxu0
        %v6021 = vadd.f32 %v5128, %v6020
        %v6022 = vpop.f32.mrb[0].mxu0
        %v6023 = vadd.f32 %v5124, %v6022
        %v6024 = vpop.f32.mrb[0].mxu0
        %v6025 = vadd.f32 %v5128, %v6024
        %6026 = vmatprep.mubr.bf16.mxu0 %v5014
        %6027 = vmatmul.mubr.bf16.gmra.mrb[0].mxu0 %v4887
        %v6028 = vpop.f32.mrb[0].mxu0
        %v6029 = vadd.f32 %v5124, %v6028
        %v6030 = vpop.f32.mrb[0].mxu0
        %v6031 = vadd.f32 %v5128, %v6030
        %v6032 = vpop.f32.mrb[0].mxu0
        %v6033 = vadd.f32 %v5124, %v6032
        %v6034 = vpop.f32.mrb[0].mxu0
        %v6035 = vadd.f32 %v5128, %v6034
        %6036 = vmatprep.mubr.bf16.mxu0 %v5017
        %6037 = vmatmul.mubr.bf16.gmra.mrb[0].mxu0 %v4890
        %v6038 = vpop.f32.mrb[0].mxu0
        %v6039 = vadd.f32 %v5124, %v6038
        %v6040 = vpop.f32.mrb[0].mxu0
        %v6041 = vadd.f32 %v5128, %v6040
        %v6042 = vpop.f32.mrb[0].mxu0
        %v6043 = vadd.f32 %v5124, %v6042
        %v6044 = vpop.f32.mrb[0].mxu0
        %v6045 = vadd.f32 %v5128, %v6044
        %6046 = vmatprep.mubr.bf16.mxu0 %v5020
        %6047 = vmatmul.mubr.bf16.gmra.mrb[0].mxu0 %v4893
        %v6048 = vpop.f32.mrb[0].mxu0
        %v6049 = vadd.f32 %v5124, %v6048
        %v6050 = vpop.f32.mrb[0].mxu0
        %v6051 = vadd.f32 %v5128, %v6050
        %v6052 = vpop.f32.mrb[0].mxu0
        %v6053 = vadd.f32 %v5124, %v6052
        %v6054 = vpop.f32.mrb[0].mxu0
        %v6055 = vadd.f32 %v5128, %v6054
        %6056 = vmatprep.mubr.bf16.mxu0 %v5023
        %6057 = vmatmul.mubr.bf16.gmra.mrb[0].mxu0 %v4896
        %v6058 = vpop.f32.mrb[0].mxu0
        %v6059 = vadd.f32 %v5124, %v6058
        %v6060 = vpop.f32.mrb[0].mxu0
        %v6061 = vadd.f32 %v5128, %v6060
        %v6062 = vpop.f32.mrb[0].mxu0
        %v6063 = vadd.f32 %v5124, %v6062
        %v6064 = vpop.f32.mrb[0].mxu0
        %v6065 = vadd.f32 %v5128, %v6064
        %6066 = vmatprep.mubr.bf16.mxu0 %v5026
        %6067 = vmatmul.mubr.bf16.gmra.mrb[0].mxu0 %v4899
        %v6068 = vpop.f32.mrb[0].mxu0
        %v6069 = vadd.f32 %v5124, %v6068
        %v6070 = vpop.f32.mrb[0].mxu0
        %v6071 = vadd.f32 %v5128, %v6070
        %v6072 = vpop.f32.mrb[0].mxu0
        %v6073 = vadd.f32 %v5124, %v6072
        %v6074 = vpop.f32.mrb[0].mxu0
        %v6075 = vadd.f32 %v5128, %v6074
        %6076 = vmatprep.mubr.bf16.mxu0 %v5029
        %6077 = vmatmul.mubr.bf16.gmra.mrb[0].mxu0 %v4902
        %v6078 = vpop.f32.mrb[0].mxu0
        %v6079 = vadd.f32 %v5124, %v6078
        %v6080 = vpop.f32.mrb[0].mxu0
        %v6081 = vadd.f32 %v5128, %v6080
        %v6082 = vpop.f32.mrb[0].mxu0
        %v6083 = vadd.f32 %v5124, %v6082
        %v6084 = vpop.f32.mrb[0].mxu0
        %v6085 = vadd.f32 %v5128, %v6084
        %6086 = vmatprep.mubr.bf16.mxu0 %v5032
        %6087 = vmatmul.mubr.bf16.gmra.mrb[0].mxu0 %v4905
        %v6088 = vpop.f32.mrb[0].mxu0
        %v6089 = vadd.f32 %v5124, %v6088
        %v6090 = vpop.f32.mrb[0].mxu0
        %v6091 = vadd.f32 %v5128, %v6090
        %v6092 = vpop.f32.mrb[0].mxu0
        %v6093 = vadd.f32 %v5124, %v6092
        %v6094 = vpop.f32.mrb[0].mxu0
        %v6095 = vadd.f32 %v5128, %v6094
        %6096 = vmatprep.mubr.bf16.mxu0 %v5035
        %6097 = vmatmul.mubr.bf16.gmra.mrb[0].mxu0 %v4908
        %v6098 = vpop.f32.mrb[0].mxu0
        %v6099 = vadd.f32 %v5124, %v6098
        %v6100 = vpop.f32.mrb[0].mxu0
        %v6101 = vadd.f32 %v5128, %v6100
        %v6102 = vpop.f32.mrb[0].mxu0
        %v6103 = vadd.f32 %v5124, %v6102
        %v6104 = vpop.f32.mrb[0].mxu0
        %v6105 = vadd.f32 %v5128, %v6104
        %6106 = vmatprep.mubr.bf16.mxu0 %v5037
        %6107 = vmatmul.mubr.bf16.gmra.mrb[0].mxu0 %v4911
        %v6108 = vpop.f32.mrb[0].mxu0
        %v6109 = vadd.f32 %v5124, %v6108
        %v6110 = vpop.f32.mrb[0].mxu0
        %v6111 = vadd.f32 %v5128, %v6110
        %v6112 = vpop.f32.mrb[0].mxu0
        %v6113 = vadd.f32 %v5124, %v6112
        %v6114 = vpop.f32.mrb[0].mxu0
        %v6115 = vadd.f32 %v5128, %v6114
        %6116 = vdwg.mxu0
        %6117 = vmatprep.subr.bf16.mxu0 %v5416
        %6118 = vmatpush1.bf16.msra.mxu0 %v5415
        %6119 = vmatprep.subr.bf16.mxu0 %v5420
        %6120 = vmatpush1.bf16.msra.mxu0 %v5419
        %6121 = vmatprep.subr.bf16.mxu0 0
        %6122 = vmatpush1.bf16.msra.mxu0 0
        %6123 = vmatprep.subr.bf16.mxu0 0
        %6124 = vmatpush1.bf16.msra.mxu0 0
        %6125 = vmatprep.subr.bf16.mxu0 0
        %6126 = vmatpush1.bf16.msra.mxu0 0
        %6127 = vmatprep.subr.bf16.mxu0 0
        %6128 = vmatpush1.bf16.msra.mxu0 0
        %6129 = vmatprep.subr.bf16.mxu0 0
        %6130 = vmatpush1.bf16.msra.mxu0 0
        %6131 = vmatprep.subr.bf16.mxu0 0
        %6132 = vmatpush1.bf16.msra.mxu0 0
        %6133 = vmatprep.subr.bf16.mxu0 0
        %6134 = vmatpush1.bf16.msra.mxu0 0
        %6135 = vmatprep.subr.bf16.mxu0 0
        %6136 = vmatpush1.bf16.msra.mxu0 0
        %6137 = vmatprep.subr.bf16.mxu0 0
        %6138 = vmatpush1.bf16.msra.mxu0 0
        %6139 = vmatprep.subr.bf16.mxu0 0
        %6140 = vmatpush1.bf16.msra.mxu0 0
        %6141 = vmatprep.subr.bf16.mxu0 0
        %6142 = vmatpush1.bf16.msra.mxu0 0
        %6143 = vmatprep.subr.bf16.mxu0 0
        %6144 = vmatpush1.bf16.msra.mxu0 0
        %6145 = vmatprep.subr.bf16.mxu0 0
        %6146 = vmatpush1.bf16.msra.mxu0 0
        %6147 = vmatprep.subr.bf16.mxu0 0
        %6148 = vmatpush1.bf16.msra.mxu0 0
        %6149 = vmatprep.mubr.bf16.mxu0 0
        %6150 = vmatmul.mubr.bf16.gmra.mrb[0].mxu0 %v5494
        %v6151 = vpop.f32.mrb[0].mxu0
        %v6152 = vadd.f32 %v5959, %v6151
        %v6153 = vpop.f32.mrb[0].mxu0
        %v6154 = vadd.f32 %v5961, %v6153
        %v6155 = vpop.f32.mrb[0].mxu0
        %v6156 = vadd.f32 %v5963, %v6155
        %v6157 = vpop.f32.mrb[0].mxu0
        %v6158 = vadd.f32 %v5965, %v6157
        %6159 = vmatprep.mubr.bf16.mxu0 0
        %6160 = vmatmul.mubr.bf16.gmra.mrb[0].mxu0 %v5497
        %v6161 = vpop.f32.mrb[0].mxu0
        %v6162 = vadd.f32 %v5969, %v6161
        %v6163 = vpop.f32.mrb[0].mxu0
        %v6164 = vadd.f32 %v5971, %v6163
        %v6165 = vpop.f32.mrb[0].mxu0
        %v6166 = vadd.f32 %v5973, %v6165
        %v6167 = vpop.f32.mrb[0].mxu0
        %v6168 = vadd.f32 %v5975, %v6167
        %6169 = vmatprep.mubr.bf16.mxu0 0
        %6170 = vmatmul.mubr.bf16.gmra.mrb[0].mxu0 %v5500
        %v6171 = vpop.f32.mrb[0].mxu0
        %v6172 = vadd.f32 %v5979, %v6171
        %v6173 = vpop.f32.mrb[0].mxu0
        %v6174 = vadd.f32 %v5981, %v6173
        %v6175 = vpop.f32.mrb[0].mxu0
        %v6176 = vadd.f32 %v5983, %v6175
        %v6177 = vpop.f32.mrb[0].mxu0
        %v6178 = vadd.f32 %v5985, %v6177
        %6179 = vmatprep.mubr.bf16.mxu0 0
        %6180 = vmatmul.mubr.bf16.gmra.mrb[0].mxu0 %v5503
        %v6181 = vpop.f32.mrb[0].mxu0
        %v6182 = vadd.f32 %v5989, %v6181
        %v6183 = vpop.f32.mrb[0].mxu0
        %v6184 = vadd.f32 %v5991, %v6183
        %v6185 = vpop.f32.mrb[0].mxu0
        %v6186 = vadd.f32 %v5993, %v6185
        %v6187 = vpop.f32.mrb[0].mxu0
        %v6188 = vadd.f32 %v5995, %v6187
        %6189 = vmatprep.mubr.bf16.mxu0 0
        %6190 = vmatmul.mubr.bf16.gmra.mrb[0].mxu0 %v5506
        %v6191 = vpop.f32.mrb[0].mxu0
        %v6192 = vadd.f32 %v5999, %v6191
        %v6193 = vpop.f32.mrb[0].mxu0
        %v6194 = vadd.f32 %v6001, %v6193
        %v6195 = vpop.f32.mrb[0].mxu0
        %v6196 = vadd.f32 %v6003, %v6195
        %v6197 = vpop.f32.mrb[0].mxu0
        %v6198 = vadd.f32 %v6005, %v6197
        %6199 = vmatprep.mubr.bf16.mxu0 0
        %6200 = vmatmul.mubr.bf16.gmra.mrb[0].mxu0 %v5509
        %v6201 = vpop.f32.mrb[0].mxu0
        %v6202 = vadd.f32 %v6009, %v6201
        %v6203 = vpop.f32.mrb[0].mxu0
        %v6204 = vadd.f32 %v6011, %v6203
        %v6205 = vpop.f32.mrb[0].mxu0
        %v6206 = vadd.f32 %v6013, %v6205
        %v6207 = vpop.f32.mrb[0].mxu0
        %v6208 = vadd.f32 %v6015, %v6207
        %6209 = vmatprep.mubr.bf16.mxu0 0
        %6210 = vmatmul.mubr.bf16.gmra.mrb[0].mxu0 %v5512
        %v6211 = vpop.f32.mrb[0].mxu0
        %v6212 = vadd.f32 %v6019, %v6211
        %v6213 = vpop.f32.mrb[0].mxu0
        %v6214 = vadd.f32 %v6021, %v6213
        %v6215 = vpop.f32.mrb[0].mxu0
        %v6216 = vadd.f32 %v6023, %v6215
        %v6217 = vpop.f32.mrb[0].mxu0
        %v6218 = vadd.f32 %v6025, %v6217
        %6219 = vmatprep.mubr.bf16.mxu0 0
        %6220 = vmatmul.mubr.bf16.gmra.mrb[0].mxu0 %v5515
        %v6221 = vpop.f32.mrb[0].mxu0
        %v6222 = vadd.f32 %v6029, %v6221
        %v6223 = vpop.f32.mrb[0].mxu0
        %v6224 = vadd.f32 %v6031, %v6223
        %v6225 = vpop.f32.mrb[0].mxu0
        %v6226 = vadd.f32 %v6033, %v6225
        %v6227 = vpop.f32.mrb[0].mxu0
        %v6228 = vadd.f32 %v6035, %v6227
        %6229 = vmatprep.mubr.bf16.mxu0 0
        %6230 = vmatmul.mubr.bf16.gmra.mrb[0].mxu0 %v5518
        %v6231 = vpop.f32.mrb[0].mxu0
        %v6232 = vadd.f32 %v6039, %v6231
        %v6233 = vpop.f32.mrb[0].mxu0
        %v6234 = vadd.f32 %v6041, %v6233
        %v6235 = vpop.f32.mrb[0].mxu0
        %v6236 = vadd.f32 %v6043, %v6235
        %v6237 = vpop.f32.mrb[0].mxu0
        %v6238 = vadd.f32 %v6045, %v6237
        %6239 = vmatprep.mubr.bf16.mxu0 0
        %6240 = vmatmul.mubr.bf16.gmra.mrb[0].mxu0 %v5521
        %v6241 = vpop.f32.mrb[0].mxu0
        %v6242 = vadd.f32 %v6049, %v6241
        %v6243 = vpop.f32.mrb[0].mxu0
        %v6244 = vadd.f32 %v6051, %v6243
        %v6245 = vpop.f32.mrb[0].mxu0
        %v6246 = vadd.f32 %v6053, %v6245
        %v6247 = vpop.f32.mrb[0].mxu0
        %v6248 = vadd.f32 %v6055, %v6247
        %6249 = vmatprep.mubr.bf16.mxu0 0
        %6250 = vmatmul.mubr.bf16.gmra.mrb[0].mxu0 %v5524
        %v6251 = vpop.f32.mrb[0].mxu0
        %v6252 = vadd.f32 %v6059, %v6251
        %v6253 = vpop.f32.mrb[0].mxu0
        %v6254 = vadd.f32 %v6061, %v6253
        %v6255 = vpop.f32.mrb[0].mxu0
        %v6256 = vadd.f32 %v6063, %v6255
        %v6257 = vpop.f32.mrb[0].mxu0
        %v6258 = vadd.f32 %v6065, %v6257
        %6259 = vmatprep.mubr.bf16.mxu0 0
        %6260 = vmatmul.mubr.bf16.gmra.mrb[0].mxu0 %v5527
        %v6261 = vpop.f32.mrb[0].mxu0
        %v6262 = vadd.f32 %v6069, %v6261
        %v6263 = vpop.f32.mrb[0].mxu0
        %v6264 = vadd.f32 %v6071, %v6263
        %v6265 = vpop.f32.mrb[0].mxu0
        %v6266 = vadd.f32 %v6073, %v6265
        %v6267 = vpop.f32.mrb[0].mxu0
        %v6268 = vadd.f32 %v6075, %v6267
        %6269 = vmatprep.mubr.bf16.mxu0 0
        %6270 = vmatmul.mubr.bf16.gmra.mrb[0].mxu0 %v5530
        %v6271 = vpop.f32.mrb[0].mxu0
        %v6272 = vadd.f32 %v6079, %v6271
        %v6273 = vpop.f32.mrb[0].mxu0
        %v6274 = vadd.f32 %v6081, %v6273
        %v6275 = vpop.f32.mrb[0].mxu0
        %v6276 = vadd.f32 %v6083, %v6275
        %v6277 = vpop.f32.mrb[0].mxu0
        %v6278 = vadd.f32 %v6085, %v6277
        %6279 = vmatprep.mubr.bf16.mxu0 0
        %6280 = vmatmul.mubr.bf16.gmra.mrb[0].mxu0 %v5533
        %v6281 = vpop.f32.mrb[0].mxu0
        %v6282 = vadd.f32 %v6089, %v6281
        %v6283 = vpop.f32.mrb[0].mxu0
        %v6284 = vadd.f32 %v6091, %v6283
        %v6285 = vpop.f32.mrb[0].mxu0
        %v6286 = vadd.f32 %v6093, %v6285
        %v6287 = vpop.f32.mrb[0].mxu0
        %v6288 = vadd.f32 %v6095, %v6287
        %6289 = vmatprep.mubr.bf16.mxu0 0
        %6290 = vmatmul.mubr.bf16.gmra.mrb[0].mxu0 %v5536
        %v6291 = vpop.f32.mrb[0].mxu0
        %v6292 = vadd.f32 %v6099, %v6291
        %v6293 = vpop.f32.mrb[0].mxu0
        %v6294 = vadd.f32 %v6101, %v6293
        %v6295 = vpop.f32.mrb[0].mxu0
        %v6296 = vadd.f32 %v6103, %v6295
        %v6297 = vpop.f32.mrb[0].mxu0
        %v6298 = vadd.f32 %v6105, %v6297
        %6299 = vmatprep.mubr.bf16.mxu0 0
        %6300 = vmatmul.mubr.bf16.gmra.mrb[0].mxu0 %v3149
        %v6301 = vpop.f32.mrb[0].mxu0
        %v6302 = vadd.f32 %v6109, %v6301
        %v6303 = vpop.f32.mrb[0].mxu0
        %v6304 = vadd.f32 %v6111, %v6303
        %v6305 = vpop.f32.mrb[0].mxu0
        %v6306 = vadd.f32 %v6113, %v6305
        %v6307 = vpop.f32.mrb[0].mxu0
        %v6308 = vadd.f32 %v6115, %v6307
        %6309 = vdwg.mxu0
        %vm6310 = vcmp.ge.f32.partialorder %v5766, 0.0
        %vm6311 = vcmp.ge.f32.partialorder %v5768, 0.0
        %vm6312 = vcmp.ge.f32.partialorder %v6152, 0.0
        %vm6313 = vcmp.ge.f32.partialorder %v6154, 0.0
        %vm6314 = vcmp.ge.f32.partialorder %v5770, 0.0
        %vm6315 = vcmp.ge.f32.partialorder %v5772, 0.0
        %vm6316 = vcmp.ge.f32.partialorder %v6156, 0.0
        %vm6317 = vcmp.ge.f32.partialorder %v6158, 0.0
        %vm6318 = vcmp.ge.f32.partialorder %v5776, 0.0
        %vm6319 = vcmp.ge.f32.partialorder %v5778, 0.0
        %vm6320 = vcmp.ge.f32.partialorder %v6162, 0.0
        %vm6321 = vcmp.ge.f32.partialorder %v6164, 0.0
        %vm6322 = vcmp.ge.f32.partialorder %v5780, 0.0
        %vm6323 = vcmp.ge.f32.partialorder %v5782, 0.0
        %vm6324 = vcmp.ge.f32.partialorder %v6166, 0.0
        %vm6325 = vcmp.ge.f32.partialorder %v6168, 0.0
        %vm6326 = vcmp.ge.f32.partialorder %v5786, 0.0
        %vm6327 = vcmp.ge.f32.partialorder %v5788, 0.0
        %vm6328 = vcmp.ge.f32.partialorder %v6172, 0.0
        %vm6329 = vcmp.ge.f32.partialorder %v6174, 0.0
        %vm6330 = vcmp.ge.f32.partialorder %v5790, 0.0
        %vm6331 = vcmp.ge.f32.partialorder %v5792, 0.0
        %vm6332 = vcmp.ge.f32.partialorder %v6176, 0.0
        %vm6333 = vcmp.ge.f32.partialorder %v6178, 0.0
        %vm6334 = vcmp.ge.f32.partialorder %v5796, 0.0
        %vm6335 = vcmp.ge.f32.partialorder %v5798, 0.0
        %vm6336 = vcmp.ge.f32.partialorder %v6182, 0.0
        %vm6337 = vcmp.ge.f32.partialorder %v6184, 0.0
        %vm6338 = vcmp.ge.f32.partialorder %v5800, 0.0
        %vm6339 = vcmp.ge.f32.partialorder %v5802, 0.0
        %vm6340 = vcmp.ge.f32.partialorder %v6186, 0.0
        %vm6341 = vcmp.ge.f32.partialorder %v6188, 0.0
        %vm6342 = vcmp.ge.f32.partialorder %v5806, 0.0
        %vm6343 = vcmp.ge.f32.partialorder %v5808, 0.0
        %vm6344 = vcmp.ge.f32.partialorder %v6192, 0.0
        %vm6345 = vcmp.ge.f32.partialorder %v6194, 0.0
        %vm6346 = vcmp.ge.f32.partialorder %v5810, 0.0
        %vm6347 = vcmp.ge.f32.partialorder %v5812, 0.0
        %vm6348 = vcmp.ge.f32.partialorder %v6196, 0.0
        %vm6349 = vcmp.ge.f32.partialorder %v6198, 0.0
        %vm6350 = vcmp.ge.f32.partialorder %v5816, 0.0
        %vm6351 = vcmp.ge.f32.partialorder %v5818, 0.0
        %vm6352 = vcmp.ge.f32.partialorder %v6202, 0.0
        %vm6353 = vcmp.ge.f32.partialorder %v6204, 0.0
        %vm6354 = vcmp.ge.f32.partialorder %v5820, 0.0
        %vm6355 = vcmp.ge.f32.partialorder %v5822, 0.0
        %vm6356 = vcmp.ge.f32.partialorder %v6206, 0.0
        %vm6357 = vcmp.ge.f32.partialorder %v6208, 0.0
        %vm6358 = vcmp.ge.f32.partialorder %v5826, 0.0
        %vm6359 = vcmp.ge.f32.partialorder %v5828, 0.0
        %vm6360 = vcmp.ge.f32.partialorder %v6212, 0.0
        %vm6361 = vcmp.ge.f32.partialorder %v6214, 0.0
        %vm6362 = vcmp.ge.f32.partialorder %v5830, 0.0
        %vm6363 = vcmp.ge.f32.partialorder %v5832, 0.0
        %vm6364 = vcmp.ge.f32.partialorder %v6216, 0.0
        %vm6365 = vcmp.ge.f32.partialorder %v6218, 0.0
        %vm6366 = vcmp.ge.f32.partialorder %v5836, 0.0
        %vm6367 = vcmp.ge.f32.partialorder %v5838, 0.0
        %vm6368 = vcmp.ge.f32.partialorder %v6222, 0.0
        %vm6369 = vcmp.ge.f32.partialorder %v6224, 0.0
        %vm6370 = vcmp.ge.f32.partialorder %v5840, 0.0
        %vm6371 = vcmp.ge.f32.partialorder %v5842, 0.0
        %vm6372 = vcmp.ge.f32.partialorder %v6226, 0.0
        %vm6373 = vcmp.ge.f32.partialorder %v6228, 0.0
        %vm6374 = vcmp.ge.f32.partialorder %v5846, 0.0
        %vm6375 = vcmp.ge.f32.partialorder %v5848, 0.0
        %vm6376 = vcmp.ge.f32.partialorder %v6232, 0.0
        %vm6377 = vcmp.ge.f32.partialorder %v6234, 0.0
        %vm6378 = vcmp.ge.f32.partialorder %v5850, 0.0
        %vm6379 = vcmp.ge.f32.partialorder %v5852, 0.0
        %vm6380 = vcmp.ge.f32.partialorder %v6236, 0.0
        %vm6381 = vcmp.ge.f32.partialorder %v6238, 0.0
        %vm6382 = vcmp.ge.f32.partialorder %v5856, 0.0
        %vm6383 = vcmp.ge.f32.partialorder %v5858, 0.0
        %vm6384 = vcmp.ge.f32.partialorder %v6242, 0.0
        %vm6385 = vcmp.ge.f32.partialorder %v6244, 0.0
        %vm6386 = vcmp.ge.f32.partialorder %v5860, 0.0
        %vm6387 = vcmp.ge.f32.partialorder %v5862, 0.0
        %vm6388 = vcmp.ge.f32.partialorder %v6246, 0.0
        %vm6389 = vcmp.ge.f32.partialorder %v6248, 0.0
        %vm6390 = vcmp.ge.f32.partialorder %v5866, 0.0
        %vm6391 = vcmp.ge.f32.partialorder %v5868, 0.0
        %vm6392 = vcmp.ge.f32.partialorder %v6252, 0.0
        %vm6393 = vcmp.ge.f32.partialorder %v6254, 0.0
        %vm6394 = vcmp.ge.f32.partialorder %v5870, 0.0
        %vm6395 = vcmp.ge.f32.partialorder %v5872, 0.0
        %vm6396 = vcmp.ge.f32.partialorder %v6256, 0.0
        %vm6397 = vcmp.ge.f32.partialorder %v6258, 0.0
        %vm6398 = vcmp.ge.f32.partialorder %v5876, 0.0
        %vm6399 = vcmp.ge.f32.partialorder %v5878, 0.0
        %vm6400 = vcmp.ge.f32.partialorder %v6262, 0.0
        %vm6401 = vcmp.ge.f32.partialorder %v6264, 0.0
        %vm6402 = vcmp.ge.f32.partialorder %v5880, 0.0
        %vm6403 = vcmp.ge.f32.partialorder %v5882, 0.0
        %vm6404 = vcmp.ge.f32.partialorder %v6266, 0.0
        %vm6405 = vcmp.ge.f32.partialorder %v6268, 0.0
        %vm6406 = vcmp.ge.f32.partialorder %v5886, 0.0
        %vm6407 = vcmp.ge.f32.partialorder %v5888, 0.0
        %vm6408 = vcmp.ge.f32.partialorder %v6272, 0.0
        %vm6409 = vcmp.ge.f32.partialorder %v6274, 0.0
        %vm6410 = vcmp.ge.f32.partialorder %v5890, 0.0
        %vm6411 = vcmp.ge.f32.partialorder %v5892, 0.0
        %vm6412 = vcmp.ge.f32.partialorder %v6276, 0.0
        %vm6413 = vcmp.ge.f32.partialorder %v6278, 0.0
        %vm6414 = vcmp.ge.f32.partialorder %v5896, 0.0
        %vm6415 = vcmp.ge.f32.partialorder %v5898, 0.0
        %vm6416 = vcmp.ge.f32.partialorder %v6282, 0.0
        %vm6417 = vcmp.ge.f32.partialorder %v6284, 0.0
        %vm6418 = vcmp.ge.f32.partialorder %v5900, 0.0
        %vm6419 = vcmp.ge.f32.partialorder %v5902, 0.0
        %vm6420 = vcmp.ge.f32.partialorder %v6286, 0.0
        %vm6421 = vcmp.ge.f32.partialorder %v6288, 0.0
        %vm6422 = vcmp.ge.f32.partialorder %v5906, 0.0
        %vm6423 = vcmp.ge.f32.partialorder %v5908, 0.0
        %vm6424 = vcmp.ge.f32.partialorder %v6292, 0.0
        %vm6425 = vcmp.ge.f32.partialorder %v6294, 0.0
        %vm6426 = vcmp.ge.f32.partialorder %v5910, 0.0
        %vm6427 = vcmp.ge.f32.partialorder %v5912, 0.0
        %vm6428 = vcmp.ge.f32.partialorder %v6296, 0.0
        %vm6429 = vcmp.ge.f32.partialorder %v6298, 0.0
        %vm6430 = vcmp.ge.f32.partialorder %v5916, 0.0
        %vm6431 = vcmp.ge.f32.partialorder %v5918, 0.0
        %vm6432 = vcmp.ge.f32.partialorder %v6302, 0.0
        %vm6433 = vcmp.ge.f32.partialorder %v6304, 0.0
        %vm6434 = vcmp.ge.f32.partialorder %v5920, 0.0
        %vm6435 = vcmp.ge.f32.partialorder %v5922, 0.0
        %vm6436 = vcmp.ge.f32.partialorder %v6306, 0.0
        %vm6437 = vcmp.ge.f32.partialorder %v6308, 0.0
        %v6438 = vstv %s605
        %v6439 = vmul.f32 %v6438, %v5766
        %v6440 = vmul.f32 %v6438, %v5768
        %v6441 = vmul.f32 %v6438, %v6152
        %v6442 = vmul.f32 %v6438, %v6154
        %v6443 = vmul.f32 %v6438, %v5770
        %v6444 = vmul.f32 %v6438, %v5772
        %v6445 = vmul.f32 %v6438, %v6156
        %v6446 = vmul.f32 %v6438, %v6158
        %v6447 = vmul.f32 %v6438, %v5776
        %v6448 = vmul.f32 %v6438, %v5778
        %v6449 = vmul.f32 %v6438, %v6162
        %v6450 = vmul.f32 %v6438, %v6164
        %v6451 = vmul.f32 %v6438, %v5780
        %v6452 = vmul.f32 %v6438, %v5782
        %v6453 = vmul.f32 %v6438, %v6166
        %v6454 = vmul.f32 %v6438, %v6168
        %v6455 = vmul.f32 %v6438, %v5786
        %v6456 = vmul.f32 %v6438, %v5788
        %v6457 = vmul.f32 %v6438, %v6172
        %v6458 = vmul.f32 %v6438, %v6174
        %v6459 = vmul.f32 %v6438, %v5790
        %v6460 = vmul.f32 %v6438, %v5792
        %v6461 = vmul.f32 %v6438, %v6176
        %v6462 = vmul.f32 %v6438, %v6178
        %v6463 = vmul.f32 %v6438, %v5796
        %v6464 = vmul.f32 %v6438, %v5798
        %v6465 = vmul.f32 %v6438, %v6182
        %v6466 = vmul.f32 %v6438, %v6184
        %v6467 = vmul.f32 %v6438, %v5800
        %v6468 = vmul.f32 %v6438, %v5802
        %v6469 = vmul.f32 %v6438, %v6186
        %v6470 = vmul.f32 %v6438, %v6188
        %v6471 = vmul.f32 %v6438, %v5806
        %v6472 = vmul.f32 %v6438, %v5808
        %v6473 = vmul.f32 %v6438, %v6192
        %v6474 = vmul.f32 %v6438, %v6194
        %v6475 = vmul.f32 %v6438, %v5810
        %v6476 = vmul.f32 %v6438, %v5812
        %v6477 = vmul.f32 %v6438, %v6196
        %v6478 = vmul.f32 %v6438, %v6198
        %v6479 = vmul.f32 %v6438, %v5816
        %v6480 = vmul.f32 %v6438, %v5818
        %v6481 = vmul.f32 %v6438, %v6202
        %v6482 = vmul.f32 %v6438, %v6204
        %v6483 = vmul.f32 %v6438, %v5820
        %v6484 = vmul.f32 %v6438, %v5822
        %v6485 = vmul.f32 %v6438, %v6206
        %v6486 = vmul.f32 %v6438, %v6208
        %v6487 = vmul.f32 %v6438, %v5826
        %v6488 = vmul.f32 %v6438, %v5828
        %v6489 = vmul.f32 %v6438, %v6212
        %v6490 = vmul.f32 %v6438, %v6214
        %v6491 = vmul.f32 %v6438, %v5830
        %v6492 = vmul.f32 %v6438, %v5832
        %v6493 = vmul.f32 %v6438, %v6216
        %v6494 = vmul.f32 %v6438, %v6218
        %v6495 = vmul.f32 %v6438, %v5836
        %v6496 = vmul.f32 %v6438, %v5838
        %v6497 = vmul.f32 %v6438, %v6222
        %v6498 = vmul.f32 %v6438, %v6224
        %v6499 = vmul.f32 %v6438, %v5840
        %v6500 = vmul.f32 %v6438, %v5842
        %v6501 = vmul.f32 %v6438, %v6226
        %v6502 = vmul.f32 %v6438, %v6228
        %v6503 = vmul.f32 %v6438, %v5846
        %v6504 = vmul.f32 %v6438, %v5848
        %v6505 = vmul.f32 %v6438, %v6232
        %v6506 = vmul.f32 %v6438, %v6234
        %v6507 = vmul.f32 %v6438, %v5850
        %v6508 = vmul.f32 %v6438, %v5852
        %v6509 = vmul.f32 %v6438, %v6236
        %v6510 = vmul.f32 %v6438, %v6238
        %v6511 = vmul.f32 %v6438, %v5856
        %v6512 = vmul.f32 %v6438, %v5858
        %v6513 = vmul.f32 %v6438, %v6242
        %v6514 = vmul.f32 %v6438, %v6244
        %v6515 = vmul.f32 %v6438, %v5860
        %v6516 = vmul.f32 %v6438, %v5862
        %v6517 = vmul.f32 %v6438, %v6246
        %v6518 = vmul.f32 %v6438, %v6248
        %v6519 = vmul.f32 %v6438, %v5866
        %v6520 = vmul.f32 %v6438, %v5868
        %v6521 = vmul.f32 %v6438, %v6252
        %v6522 = vmul.f32 %v6438, %v6254
        %v6523 = vmul.f32 %v6438, %v5870
        %v6524 = vmul.f32 %v6438, %v5872
        %v6525 = vmul.f32 %v6438, %v6256
        %v6526 = vmul.f32 %v6438, %v6258
        %v6527 = vmul.f32 %v6438, %v5876
        %v6528 = vmul.f32 %v6438, %v5878
        %v6529 = vmul.f32 %v6438, %v6262
        %v6530 = vmul.f32 %v6438, %v6264
        %v6531 = vmul.f32 %v6438, %v5880
        %v6532 = vmul.f32 %v6438, %v5882
        %v6533 = vmul.f32 %v6438, %v6266
        %v6534 = vmul.f32 %v6438, %v6268
        %v6535 = vmul.f32 %v6438, %v5886
        %v6536 = vmul.f32 %v6438, %v5888
        %v6537 = vmul.f32 %v6438, %v6272
        %v6538 = vmul.f32 %v6438, %v6274
        %v6539 = vmul.f32 %v6438, %v5890
        %v6540 = vmul.f32 %v6438, %v5892
        %v6541 = vmul.f32 %v6438, %v6276
        %v6542 = vmul.f32 %v6438, %v6278
        %v6543 = vmul.f32 %v6438, %v5896
        %v6544 = vmul.f32 %v6438, %v5898
        %v6545 = vmul.f32 %v6438, %v6282
        %v6546 = vmul.f32 %v6438, %v6284
        %v6547 = vmul.f32 %v6438, %v5900
        %v6548 = vmul.f32 %v6438, %v5902
        %v6549 = vmul.f32 %v6438, %v6286
        %v6550 = vmul.f32 %v6438, %v6288
        %v6551 = vmul.f32 %v6438, %v5906
        %v6552 = vmul.f32 %v6438, %v5908
        %v6553 = vmul.f32 %v6438, %v6292
        %v6554 = vmul.f32 %v6438, %v6294
        %v6555 = vmul.f32 %v6438, %v5910
        %v6556 = vmul.f32 %v6438, %v5912
        %v6557 = vmul.f32 %v6438, %v6296
        %v6558 = vmul.f32 %v6438, %v6298
        %v6559 = vmul.f32 %v6438, %v5916
        %v6560 = vmul.f32 %v6438, %v5918
        %v6561 = vmul.f32 %v6438, %v6302
        %v6562 = vmul.f32 %v6438, %v6304
        %v6563 = vmul.f32 %v6438, %v5920
        %v6564 = vmul.f32 %v6438, %v5922
        %v6565 = vmul.f32 %v6438, %v6306
        %v6566 = vmul.f32 %v6438, %v6308
        %v6567 = vsel %vm6310, %v5766, %v6439
        %v6568 = vsel %vm6311, %v5768, %v6440
        %v6569 = vsel %vm6312, %v6152, %v6441
        %v6570 = vsel %vm6313, %v6154, %v6442
        %v6571 = vsel %vm6314, %v5770, %v6443
        %v6572 = vsel %vm6315, %v5772, %v6444
        %v6573 = vsel %vm6316, %v6156, %v6445
        %v6574 = vsel %vm6317, %v6158, %v6446
        %v6575 = vsel %vm6318, %v5776, %v6447
        %v6576 = vsel %vm6319, %v5778, %v6448
        %v6577 = vsel %vm6320, %v6162, %v6449
        %v6578 = vsel %vm6321, %v6164, %v6450
        %v6579 = vsel %vm6322, %v5780, %v6451
        %v6580 = vsel %vm6323, %v5782, %v6452
        %v6581 = vsel %vm6324, %v6166, %v6453
        %v6582 = vsel %vm6325, %v6168, %v6454
        %v6583 = vsel %vm6326, %v5786, %v6455
        %v6584 = vsel %vm6327, %v5788, %v6456
        %v6585 = vsel %vm6328, %v6172, %v6457
        %v6586 = vsel %vm6329, %v6174, %v6458
        %v6587 = vsel %vm6330, %v5790, %v6459
        %v6588 = vsel %vm6331, %v5792, %v6460
        %v6589 = vsel %vm6332, %v6176, %v6461
        %v6590 = vsel %vm6333, %v6178, %v6462
        %v6591 = vsel %vm6334, %v5796, %v6463
        %v6592 = vsel %vm6335, %v5798, %v6464
        %v6593 = vsel %vm6336, %v6182, %v6465
        %v6594 = vsel %vm6337, %v6184, %v6466
        %v6595 = vsel %vm6338, %v5800, %v6467
        %v6596 = vsel %vm6339, %v5802, %v6468
        %v6597 = vsel %vm6340, %v6186, %v6469
        %v6598 = vsel %vm6341, %v6188, %v6470
        %v6599 = vsel %vm6342, %v5806, %v6471
        %v6600 = vsel %vm6343, %v5808, %v6472
        %v6601 = vsel %vm6344, %v6192, %v6473
        %v6602 = vsel %vm6345, %v6194, %v6474
        %v6603 = vsel %vm6346, %v5810, %v6475
        %v6604 = vsel %vm6347, %v5812, %v6476
        %v6605 = vsel %vm6348, %v6196, %v6477
        %v6606 = vsel %vm6349, %v6198, %v6478
        %v6607 = vsel %vm6350, %v5816, %v6479
        %v6608 = vsel %vm6351, %v5818, %v6480
        %v6609 = vsel %vm6352, %v6202, %v6481
        %v6610 = vsel %vm6353, %v6204, %v6482
        %v6611 = vsel %vm6354, %v5820, %v6483
        %v6612 = vsel %vm6355, %v5822, %v6484
        %v6613 = vsel %vm6356, %v6206, %v6485
        %v6614 = vsel %vm6357, %v6208, %v6486
        %v6615 = vsel %vm6358, %v5826, %v6487
        %v6616 = vsel %vm6359, %v5828, %v6488
        %v6617 = vsel %vm6360, %v6212, %v6489
        %v6618 = vsel %vm6361, %v6214, %v6490
        %v6619 = vsel %vm6362, %v5830, %v6491
        %v6620 = vsel %vm6363, %v5832, %v6492
        %v6621 = vsel %vm6364, %v6216, %v6493
        %v6622 = vsel %vm6365, %v6218, %v6494
        %v6623 = vsel %vm6366, %v5836, %v6495
        %v6624 = vsel %vm6367, %v5838, %v6496
        %v6625 = vsel %vm6368, %v6222, %v6497
        %v6626 = vsel %vm6369, %v6224, %v6498
        %v6627 = vsel %vm6370, %v5840, %v6499
        %v6628 = vsel %vm6371, %v5842, %v6500
        %v6629 = vsel %vm6372, %v6226, %v6501
        %v6630 = vsel %vm6373, %v6228, %v6502
        %v6631 = vsel %vm6374, %v5846, %v6503
        %v6632 = vsel %vm6375, %v5848, %v6504
        %v6633 = vsel %vm6376, %v6232, %v6505
        %v6634 = vsel %vm6377, %v6234, %v6506
        %v6635 = vsel %vm6378, %v5850, %v6507
        %v6636 = vsel %vm6379, %v5852, %v6508
        %v6637 = vsel %vm6380, %v6236, %v6509
        %v6638 = vsel %vm6381, %v6238, %v6510
        %v6639 = vsel %vm6382, %v5856, %v6511
        %v6640 = vsel %vm6383, %v5858, %v6512
        %v6641 = vsel %vm6384, %v6242, %v6513
        %v6642 = vsel %vm6385, %v6244, %v6514
        %v6643 = vsel %vm6386, %v5860, %v6515
        %v6644 = vsel %vm6387, %v5862, %v6516
        %v6645 = vsel %vm6388, %v6246, %v6517
        %v6646 = vsel %vm6389, %v6248, %v6518
        %v6647 = vsel %vm6390, %v5866, %v6519
        %v6648 = vsel %vm6391, %v5868, %v6520
        %v6649 = vsel %vm6392, %v6252, %v6521
        %v6650 = vsel %vm6393, %v6254, %v6522
        %v6651 = vsel %vm6394, %v5870, %v6523
        %v6652 = vsel %vm6395, %v5872, %v6524
        %v6653 = vsel %vm6396, %v6256, %v6525
        %v6654 = vsel %vm6397, %v6258, %v6526
        %v6655 = vsel %vm6398, %v5876, %v6527
        %v6656 = vsel %vm6399, %v5878, %v6528
        %v6657 = vsel %vm6400, %v6262, %v6529
        %v6658 = vsel %vm6401, %v6264, %v6530
        %v6659 = vsel %vm6402, %v5880, %v6531
        %v6660 = vsel %vm6403, %v5882, %v6532
        %v6661 = vsel %vm6404, %v6266, %v6533
        %v6662 = vsel %vm6405, %v6268, %v6534
        %v6663 = vsel %vm6406, %v5886, %v6535
        %v6664 = vsel %vm6407, %v5888, %v6536
        %v6665 = vsel %vm6408, %v6272, %v6537
        %v6666 = vsel %vm6409, %v6274, %v6538
        %v6667 = vsel %vm6410, %v5890, %v6539
        %v6668 = vsel %vm6411, %v5892, %v6540
        %v6669 = vsel %vm6412, %v6276, %v6541
        %v6670 = vsel %vm6413, %v6278, %v6542
        %v6671 = vsel %vm6414, %v5896, %v6543
        %v6672 = vsel %vm6415, %v5898, %v6544
        %v6673 = vsel %vm6416, %v6282, %v6545
        %v6674 = vsel %vm6417, %v6284, %v6546
        %v6675 = vsel %vm6418, %v5900, %v6547
        %v6676 = vsel %vm6419, %v5902, %v6548
        %v6677 = vsel %vm6420, %v6286, %v6549
        %v6678 = vsel %vm6421, %v6288, %v6550
        %v6679 = vsel %vm6422, %v5906, %v6551
        %v6680 = vsel %vm6423, %v5908, %v6552
        %v6681 = vsel %vm6424, %v6292, %v6553
        %v6682 = vsel %vm6425, %v6294, %v6554
        %v6683 = vsel %vm6426, %v5910, %v6555
        %v6684 = vsel %vm6427, %v5912, %v6556
        %v6685 = vsel %vm6428, %v6296, %v6557
        %v6686 = vsel %vm6429, %v6298, %v6558
        %v6687 = vsel %vm6430, %v5916, %v6559
        %v6688 = vsel %vm6431, %v5918, %v6560
        %v6689 = vsel %vm6432, %v6302, %v6561
        %v6690 = vsel %vm6433, %v6304, %v6562
        %v6691 = vsel %vm6434, %v5920, %v6563
        %v6692 = vsel %vm6435, %v5922, %v6564
        %v6693 = vsel %vm6436, %v6306, %v6565
        %v6694 = vsel %vm6437, %v6308, %v6566
        %v6695 = vpack.c.bf16 %v6571, %v6567
        %v6696 = vpack.c.bf16 %v6572, %v6568
        %v6697 = vpack.c.bf16 %v6573, %v6569
        %v6698 = vpack.c.bf16 %v6574, %v6570
        %v6699 = vpack.c.bf16 %v6579, %v6575
        %v6700 = vpack.c.bf16 %v6580, %v6576
        %v6701 = vpack.c.bf16 %v6581, %v6577
        %v6702 = vpack.c.bf16 %v6582, %v6578
        %v6703 = vpack.c.bf16 %v6587, %v6583
        %v6704 = vpack.c.bf16 %v6588, %v6584
        %v6705 = vpack.c.bf16 %v6589, %v6585
        %v6706 = vpack.c.bf16 %v6590, %v6586
        %v6707 = vpack.c.bf16 %v6595, %v6591
        %v6708 = vpack.c.bf16 %v6596, %v6592
        %v6709 = vpack.c.bf16 %v6597, %v6593
        %v6710 = vpack.c.bf16 %v6598, %v6594
        %v6711 = vpack.c.bf16 %v6603, %v6599
        %v6712 = vpack.c.bf16 %v6604, %v6600
        %v6713 = vpack.c.bf16 %v6605, %v6601
        %v6714 = vpack.c.bf16 %v6606, %v6602
        %v6715 = vpack.c.bf16 %v6611, %v6607
        %v6716 = vpack.c.bf16 %v6612, %v6608
        %v6717 = vpack.c.bf16 %v6613, %v6609
        %v6718 = vpack.c.bf16 %v6614, %v6610
        %v6719 = vpack.c.bf16 %v6619, %v6615
        %v6720 = vpack.c.bf16 %v6620, %v6616
        %v6721 = vpack.c.bf16 %v6621, %v6617
        %v6722 = vpack.c.bf16 %v6622, %v6618
        %v6723 = vpack.c.bf16 %v6627, %v6623
        %v6724 = vpack.c.bf16 %v6628, %v6624
        %v6725 = vpack.c.bf16 %v6629, %v6625
        %v6726 = vpack.c.bf16 %v6630, %v6626
        %v6727 = vpack.c.bf16 %v6635, %v6631
        %v6728 = vpack.c.bf16 %v6636, %v6632
        %v6729 = vpack.c.bf16 %v6637, %v6633
        %v6730 = vpack.c.bf16 %v6638, %v6634
        %v6731 = vpack.c.bf16 %v6643, %v6639
        %v6732 = vpack.c.bf16 %v6644, %v6640
        %v6733 = vpack.c.bf16 %v6645, %v6641
        %v6734 = vpack.c.bf16 %v6646, %v6642
        %v6735 = vpack.c.bf16 %v6651, %v6647
        %v6736 = vpack.c.bf16 %v6652, %v6648
        %v6737 = vpack.c.bf16 %v6653, %v6649
        %v6738 = vpack.c.bf16 %v6654, %v6650
        %v6739 = vpack.c.bf16 %v6659, %v6655
        %v6740 = vpack.c.bf16 %v6660, %v6656
        %v6741 = vpack.c.bf16 %v6661, %v6657
        %v6742 = vpack.c.bf16 %v6662, %v6658
        %v6743 = vpack.c.bf16 %v6667, %v6663
        %v6744 = vpack.c.bf16 %v6668, %v6664
        %v6745 = vpack.c.bf16 %v6669, %v6665
        %v6746 = vpack.c.bf16 %v6670, %v6666
        %v6747 = vpack.c.bf16 %v6675, %v6671
        %v6748 = vpack.c.bf16 %v6676, %v6672
        %v6749 = vpack.c.bf16 %v6677, %v6673
        %v6750 = vpack.c.bf16 %v6678, %v6674
        %v6751 = vpack.c.bf16 %v6683, %v6679
        %v6752 = vpack.c.bf16 %v6684, %v6680
        %v6753 = vpack.c.bf16 %v6685, %v6681
        %v6754 = vpack.c.bf16 %v6686, %v6682
        %v6755 = vpack.c.bf16 %v6691, %v6687
        %v6756 = vpack.c.bf16 %v6692, %v6688
        %v6757 = vpack.c.bf16 %v6693, %v6689
        %v6758 = vpack.c.bf16 %v6694, %v6690
        %v6775 = vunpack.c.l.b16 %v6695
        %v6776 = vunpack.c.h.b16 %v6695
        %v6777 = vunpack.c.l.b16 %v6699
        %v6778 = vunpack.c.h.b16 %v6699
        %v6779 = vunpack.c.l.b16 %v6703
        %v6780 = vunpack.c.h.b16 %v6703
        %v6781 = vunpack.c.l.b16 %v6707
        %v6782 = vunpack.c.h.b16 %v6707
        %v6783 = vunpack.c.l.b16 %v6711
        %v6784 = vunpack.c.h.b16 %v6711
        %v6785 = vunpack.c.l.b16 %v6715
        %v6786 = vunpack.c.h.b16 %v6715
        %v6787 = vunpack.c.l.b16 %v6719
        %v6788 = vunpack.c.h.b16 %v6719
        %v6789 = vunpack.c.l.b16 %v6723
        %v6790 = vunpack.c.h.b16 %v6723
        %v6791 = vunpack.c.l.b16 %v6727
        %v6792 = vunpack.c.h.b16 %v6727
        %v6793 = vunpack.c.l.b16 %v6731
        %v6794 = vunpack.c.h.b16 %v6731
        %v6795 = vunpack.c.l.b16 %v6735
        %v6796 = vunpack.c.h.b16 %v6735
        %v6797 = vunpack.c.l.b16 %v6739
        %v6798 = vunpack.c.h.b16 %v6739
        %v6799 = vunpack.c.l.b16 %v6743
        %v6800 = vunpack.c.h.b16 %v6743
        %v6801 = vunpack.c.l.b16 %v6747
        %v6802 = vunpack.c.h.b16 %v6747
        %v6803 = vunpack.c.l.b16 %v6751
        %v6804 = vunpack.c.h.b16 %v6751
        %v6805 = vunpack.c.l.b16 %v6755
        %v6806 = vunpack.c.h.b16 %v6755
        %v6807 = vpack.c.b16 %v6775, %v6775
        %v6808 = vpack.c.b16 %v6776, %v6776
        %v6809 = vpack.c.b16 %v6777, %v6777
        %v6810 = vpack.c.b16 %v6778, %v6778
        %v6811 = vpack.c.b16 %v6779, %v6779
        %v6812 = vpack.c.b16 %v6780, %v6780
        %v6813 = vpack.c.b16 %v6781, %v6781
        %v6814 = vpack.c.b16 %v6782, %v6782
        %v6815 = vpack.c.b16 %v6783, %v6783
        %v6816 = vpack.c.b16 %v6784, %v6784
        %v6817 = vpack.c.b16 %v6785, %v6785
        %v6818 = vpack.c.b16 %v6786, %v6786
        %v6819 = vpack.c.b16 %v6787, %v6787
        %v6820 = vpack.c.b16 %v6788, %v6788
        %v6821 = vpack.c.b16 %v6789, %v6789
        %v6822 = vpack.c.b16 %v6790, %v6790
        %v6823 = vpack.c.b16 %v6791, %v6791
        %v6824 = vpack.c.b16 %v6792, %v6792
        %v6825 = vpack.c.b16 %v6793, %v6793
        %v6826 = vpack.c.b16 %v6794, %v6794
        %v6827 = vpack.c.b16 %v6795, %v6795
        %v6828 = vpack.c.b16 %v6796, %v6796
        %v6829 = vpack.c.b16 %v6797, %v6797
        %v6830 = vpack.c.b16 %v6798, %v6798
        %v6831 = vpack.c.b16 %v6799, %v6799
        %v6832 = vpack.c.b16 %v6800, %v6800
        %v6833 = vpack.c.b16 %v6801, %v6801
        %v6834 = vpack.c.b16 %v6802, %v6802
        %v6835 = vpack.c.b16 %v6803, %v6803
        %v6836 = vpack.c.b16 %v6804, %v6804
        %v6837 = vpack.c.b16 %v6805, %v6805
        %v6838 = vpack.c.b16 %v6806, %v6806
        %6871 = vst [vmem:[%s598] sm:$0xf] %v6807
        %6872 = vst [vmem:[%s598 + $0x4] sm:$0xf] %v6808
        %6873 = vst [vmem:[%s598 + $0x20] sm:$0xf] %v6809
        %6874 = vst [vmem:[%s598 + $0x24] sm:$0xf] %v6810
        %6875 = vst [vmem:[%s598 + $0x40] sm:$0xf] %v6811
        %6876 = vst [vmem:[%s598 + $0x44] sm:$0xf] %v6812
        %6877 = vst [vmem:[%s598 + $0x60] sm:$0xf] %v6813
        %6878 = vst [vmem:[%s598 + $0x64] sm:$0xf] %v6814
        %6879 = vst [vmem:[%s598 + $0x80] sm:$0xf] %v6815
        %6880 = vst [vmem:[%s598 + $0x84] sm:$0xf] %v6816
        %6881 = vst [vmem:[%s598 + $0xa0] sm:$0xf] %v6817
        %6882 = vst [vmem:[%s598 + $0xa4] sm:$0xf] %v6818
        %6883 = vst [vmem:[%s598 + $0xc0] sm:$0xf] %v6819
        %6884 = vst [vmem:[%s598 + $0xc4] sm:$0xf] %v6820
        %6885 = vst [vmem:[%s598 + $0xe0] sm:$0xf] %v6821
        %6886 = vst [vmem:[%s598 + $0xe4] sm:$0xf] %v6822
        %6887 = vst [vmem:[%s598 + $0x100] sm:$0xf] %v6823
        %6888 = vst [vmem:[%s598 + $0x104] sm:$0xf] %v6824
        %6889 = vst [vmem:[%s598 + $0x120] sm:$0xf] %v6825
        %6890 = vst [vmem:[%s598 + $0x124] sm:$0xf] %v6826
        %6891 = vst [vmem:[%s598 + $0x140] sm:$0xf] %v6827
        %6892 = vst [vmem:[%s598 + $0x144] sm:$0xf] %v6828
        %6893 = vst [vmem:[%s598 + $0x160] sm:$0xf] %v6829
        %6894 = vst [vmem:[%s598 + $0x164] sm:$0xf] %v6830
        %6895 = vst [vmem:[%s598 + $0x180] sm:$0xf] %v6831
        %6896 = vst [vmem:[%s598 + $0x184] sm:$0xf] %v6832
        %6897 = vst [vmem:[%s598 + $0x1a0] sm:$0xf] %v6833
        %6898 = vst [vmem:[%s598 + $0x1a4] sm:$0xf] %v6834
        %6899 = vst [vmem:[%s598 + $0x1c0] sm:$0xf] %v6835
        %6900 = vst [vmem:[%s598 + $0x1c4] sm:$0xf] %v6836
        %6901 = vst [vmem:[%s598 + $0x1e0] sm:$0xf] %v6837
        %6902 = vst [vmem:[%s598 + $0x1e4] sm:$0xf] %v6838
        %v6919 = vunpack.c.l.b16 %v6696
        %v6920 = vunpack.c.h.b16 %v6696
        %v6921 = vunpack.c.l.b16 %v6700
        %v6922 = vunpack.c.h.b16 %v6700
        %v6923 = vunpack.c.l.b16 %v6704
        %v6924 = vunpack.c.h.b16 %v6704
        %v6925 = vunpack.c.l.b16 %v6708
        %v6926 = vunpack.c.h.b16 %v6708
        %v6927 = vunpack.c.l.b16 %v6712
        %v6928 = vunpack.c.h.b16 %v6712
        %v6929 = vunpack.c.l.b16 %v6716
        %v6930 = vunpack.c.h.b16 %v6716
        %v6931 = vunpack.c.l.b16 %v6720
        %v6932 = vunpack.c.h.b16 %v6720
        %v6933 = vunpack.c.l.b16 %v6724
        %v6934 = vunpack.c.h.b16 %v6724
        %v6935 = vunpack.c.l.b16 %v6728
        %v6936 = vunpack.c.h.b16 %v6728
        %v6937 = vunpack.c.l.b16 %v6732
        %v6938 = vunpack.c.h.b16 %v6732
        %v6939 = vunpack.c.l.b16 %v6736
        %v6940 = vunpack.c.h.b16 %v6736
        %v6941 = vunpack.c.l.b16 %v6740
        %v6942 = vunpack.c.h.b16 %v6740
        %v6943 = vunpack.c.l.b16 %v6744
        %v6944 = vunpack.c.h.b16 %v6744
        %v6945 = vunpack.c.l.b16 %v6748
        %v6946 = vunpack.c.h.b16 %v6748
        %v6947 = vunpack.c.l.b16 %v6752
        %v6948 = vunpack.c.h.b16 %v6752
        %v6949 = vunpack.c.l.b16 %v6756
        %v6950 = vunpack.c.h.b16 %v6756
        %v6951 = vpack.c.b16 %v6919, %v6919
        %v6952 = vpack.c.b16 %v6920, %v6920
        %v6953 = vpack.c.b16 %v6921, %v6921
        %v6954 = vpack.c.b16 %v6922, %v6922
        %v6955 = vpack.c.b16 %v6923, %v6923
        %v6956 = vpack.c.b16 %v6924, %v6924
        %v6957 = vpack.c.b16 %v6925, %v6925
        %v6958 = vpack.c.b16 %v6926, %v6926
        %v6959 = vpack.c.b16 %v6927, %v6927
        %v6960 = vpack.c.b16 %v6928, %v6928
        %v6961 = vpack.c.b16 %v6929, %v6929
        %v6962 = vpack.c.b16 %v6930, %v6930
        %v6963 = vpack.c.b16 %v6931, %v6931
        %v6964 = vpack.c.b16 %v6932, %v6932
        %v6965 = vpack.c.b16 %v6933, %v6933
        %v6966 = vpack.c.b16 %v6934, %v6934
        %v6967 = vpack.c.b16 %v6935, %v6935
        %v6968 = vpack.c.b16 %v6936, %v6936
        %v6969 = vpack.c.b16 %v6937, %v6937
        %v6970 = vpack.c.b16 %v6938, %v6938
        %v6971 = vpack.c.b16 %v6939, %v6939
        %v6972 = vpack.c.b16 %v6940, %v6940
        %v6973 = vpack.c.b16 %v6941, %v6941
        %v6974 = vpack.c.b16 %v6942, %v6942
        %v6975 = vpack.c.b16 %v6943, %v6943
        %v6976 = vpack.c.b16 %v6944, %v6944
        %v6977 = vpack.c.b16 %v6945, %v6945
        %v6978 = vpack.c.b16 %v6946, %v6946
        %v6979 = vpack.c.b16 %v6947, %v6947
        %v6980 = vpack.c.b16 %v6948, %v6948
        %v6981 = vpack.c.b16 %v6949, %v6949
        %v6982 = vpack.c.b16 %v6950, %v6950
        %s7015 = scalar_lea.vmem %s598, 8
        %7016 = vst [vmem:[%s7015] sm:$0xf] %v6951
        %7017 = vst [vmem:[%s7015 + $0x4] sm:$0xf] %v6952
        %7018 = vst [vmem:[%s7015 + $0x20] sm:$0xf] %v6953
        %7019 = vst [vmem:[%s7015 + $0x24] sm:$0xf] %v6954
        %7020 = vst [vmem:[%s7015 + $0x40] sm:$0xf] %v6955
        %7021 = vst [vmem:[%s7015 + $0x44] sm:$0xf] %v6956
        %7022 = vst [vmem:[%s7015 + $0x60] sm:$0xf] %v6957
        %7023 = vst [vmem:[%s7015 + $0x64] sm:$0xf] %v6958
        %7024 = vst [vmem:[%s7015 + $0x80] sm:$0xf] %v6959
        %7025 = vst [vmem:[%s7015 + $0x84] sm:$0xf] %v6960
        %7026 = vst [vmem:[%s7015 + $0xa0] sm:$0xf] %v6961
        %7027 = vst [vmem:[%s7015 + $0xa4] sm:$0xf] %v6962
        %7028 = vst [vmem:[%s7015 + $0xc0] sm:$0xf] %v6963
        %7029 = vst [vmem:[%s7015 + $0xc4] sm:$0xf] %v6964
        %7030 = vst [vmem:[%s7015 + $0xe0] sm:$0xf] %v6965
        %7031 = vst [vmem:[%s7015 + $0xe4] sm:$0xf] %v6966
        %7032 = vst [vmem:[%s7015 + $0x100] sm:$0xf] %v6967
        %7033 = vst [vmem:[%s7015 + $0x104] sm:$0xf] %v6968
        %7034 = vst [vmem:[%s7015 + $0x120] sm:$0xf] %v6969
        %7035 = vst [vmem:[%s7015 + $0x124] sm:$0xf] %v6970
        %7036 = vst [vmem:[%s7015 + $0x140] sm:$0xf] %v6971
        %7037 = vst [vmem:[%s7015 + $0x144] sm:$0xf] %v6972
        %7038 = vst [vmem:[%s7015 + $0x160] sm:$0xf] %v6973
        %7039 = vst [vmem:[%s7015 + $0x164] sm:$0xf] %v6974
        %7040 = vst [vmem:[%s7015 + $0x180] sm:$0xf] %v6975
        %7041 = vst [vmem:[%s7015 + $0x184] sm:$0xf] %v6976
        %7042 = vst [vmem:[%s7015 + $0x1a0] sm:$0xf] %v6977
        %7043 = vst [vmem:[%s7015 + $0x1a4] sm:$0xf] %v6978
        %7044 = vst [vmem:[%s7015 + $0x1c0] sm:$0xf] %v6979
        %7045 = vst [vmem:[%s7015 + $0x1c4] sm:$0xf] %v6980
        %7046 = vst [vmem:[%s7015 + $0x1e0] sm:$0xf] %v6981
        %7047 = vst [vmem:[%s7015 + $0x1e4] sm:$0xf] %v6982
        %v7064 = vunpack.c.l.b16 %v6697
        %v7065 = vunpack.c.h.b16 %v6697
        %v7066 = vunpack.c.l.b16 %v6701
        %v7067 = vunpack.c.h.b16 %v6701
        %v7068 = vunpack.c.l.b16 %v6705
        %v7069 = vunpack.c.h.b16 %v6705
        %v7070 = vunpack.c.l.b16 %v6709
        %v7071 = vunpack.c.h.b16 %v6709
        %v7072 = vunpack.c.l.b16 %v6713
        %v7073 = vunpack.c.h.b16 %v6713
        %v7074 = vunpack.c.l.b16 %v6717
        %v7075 = vunpack.c.h.b16 %v6717
        %v7076 = vunpack.c.l.b16 %v6721
        %v7077 = vunpack.c.h.b16 %v6721
        %v7078 = vunpack.c.l.b16 %v6725
        %v7079 = vunpack.c.h.b16 %v6725
        %v7080 = vunpack.c.l.b16 %v6729
        %v7081 = vunpack.c.h.b16 %v6729
        %v7082 = vunpack.c.l.b16 %v6733
        %v7083 = vunpack.c.h.b16 %v6733
        %v7084 = vunpack.c.l.b16 %v6737
        %v7085 = vunpack.c.h.b16 %v6737
        %v7086 = vunpack.c.l.b16 %v6741
        %v7087 = vunpack.c.h.b16 %v6741
        %v7088 = vunpack.c.l.b16 %v6745
        %v7089 = vunpack.c.h.b16 %v6745
        %v7090 = vunpack.c.l.b16 %v6749
        %v7091 = vunpack.c.h.b16 %v6749
        %v7092 = vunpack.c.l.b16 %v6753
        %v7093 = vunpack.c.h.b16 %v6753
        %v7094 = vunpack.c.l.b16 %v6757
        %v7095 = vunpack.c.h.b16 %v6757
        %v7096 = vpack.c.b16 %v7064, %v7064
        %v7097 = vpack.c.b16 %v7065, %v7065
        %v7098 = vpack.c.b16 %v7066, %v7066
        %v7099 = vpack.c.b16 %v7067, %v7067
        %v7100 = vpack.c.b16 %v7068, %v7068
        %v7101 = vpack.c.b16 %v7069, %v7069
        %v7102 = vpack.c.b16 %v7070, %v7070
        %v7103 = vpack.c.b16 %v7071, %v7071
        %v7104 = vpack.c.b16 %v7072, %v7072
        %v7105 = vpack.c.b16 %v7073, %v7073
        %v7106 = vpack.c.b16 %v7074, %v7074
        %v7107 = vpack.c.b16 %v7075, %v7075
        %v7108 = vpack.c.b16 %v7076, %v7076
        %v7109 = vpack.c.b16 %v7077, %v7077
        %v7110 = vpack.c.b16 %v7078, %v7078
        %v7111 = vpack.c.b16 %v7079, %v7079
        %v7112 = vpack.c.b16 %v7080, %v7080
        %v7113 = vpack.c.b16 %v7081, %v7081
        %v7114 = vpack.c.b16 %v7082, %v7082
        %v7115 = vpack.c.b16 %v7083, %v7083
        %v7116 = vpack.c.b16 %v7084, %v7084
        %v7117 = vpack.c.b16 %v7085, %v7085
        %v7118 = vpack.c.b16 %v7086, %v7086
        %v7119 = vpack.c.b16 %v7087, %v7087
        %v7120 = vpack.c.b16 %v7088, %v7088
        %v7121 = vpack.c.b16 %v7089, %v7089
        %v7122 = vpack.c.b16 %v7090, %v7090
        %v7123 = vpack.c.b16 %v7091, %v7091
        %v7124 = vpack.c.b16 %v7092, %v7092
        %v7125 = vpack.c.b16 %v7093, %v7093
        %v7126 = vpack.c.b16 %v7094, %v7094
        %v7127 = vpack.c.b16 %v7095, %v7095
        %s7160 = scalar_lea.vmem %s598, 16
        %7161 = vst [vmem:[%s7160] sm:$0xf] %v7096
        %7162 = vst [vmem:[%s7160 + $0x4] sm:$0xf] %v7097
        %7163 = vst [vmem:[%s7160 + $0x20] sm:$0xf] %v7098
        %7164 = vst [vmem:[%s7160 + $0x24] sm:$0xf] %v7099
        %7165 = vst [vmem:[%s7160 + $0x40] sm:$0xf] %v7100
        %7166 = vst [vmem:[%s7160 + $0x44] sm:$0xf] %v7101
        %7167 = vst [vmem:[%s7160 + $0x60] sm:$0xf] %v7102
        %7168 = vst [vmem:[%s7160 + $0x64] sm:$0xf] %v7103
        %7169 = vst [vmem:[%s7160 + $0x80] sm:$0xf] %v7104
        %7170 = vst [vmem:[%s7160 + $0x84] sm:$0xf] %v7105
        %7171 = vst [vmem:[%s7160 + $0xa0] sm:$0xf] %v7106
        %7172 = vst [vmem:[%s7160 + $0xa4] sm:$0xf] %v7107
        %7173 = vst [vmem:[%s7160 + $0xc0] sm:$0xf] %v7108
        %7174 = vst [vmem:[%s7160 + $0xc4] sm:$0xf] %v7109
        %7175 = vst [vmem:[%s7160 + $0xe0] sm:$0xf] %v7110
        %7176 = vst [vmem:[%s7160 + $0xe4] sm:$0xf] %v7111
        %7177 = vst [vmem:[%s7160 + $0x100] sm:$0xf] %v7112
        %7178 = vst [vmem:[%s7160 + $0x104] sm:$0xf] %v7113
        %7179 = vst [vmem:[%s7160 + $0x120] sm:$0xf] %v7114
        %7180 = vst [vmem:[%s7160 + $0x124] sm:$0xf] %v7115
        %7181 = vst [vmem:[%s7160 + $0x140] sm:$0xf] %v7116
        %7182 = vst [vmem:[%s7160 + $0x144] sm:$0xf] %v7117
        %7183 = vst [vmem:[%s7160 + $0x160] sm:$0xf] %v7118
        %7184 = vst [vmem:[%s7160 + $0x164] sm:$0xf] %v7119
        %7185 = vst [vmem:[%s7160 + $0x180] sm:$0xf] %v7120
        %7186 = vst [vmem:[%s7160 + $0x184] sm:$0xf] %v7121
        %7187 = vst [vmem:[%s7160 + $0x1a0] sm:$0xf] %v7122
        %7188 = vst [vmem:[%s7160 + $0x1a4] sm:$0xf] %v7123
        %7189 = vst [vmem:[%s7160 + $0x1c0] sm:$0xf] %v7124
        %7190 = vst [vmem:[%s7160 + $0x1c4] sm:$0xf] %v7125
        %7191 = vst [vmem:[%s7160 + $0x1e0] sm:$0xf] %v7126
        %7192 = vst [vmem:[%s7160 + $0x1e4] sm:$0xf] %v7127
        %v7209 = vunpack.c.l.b16 %v6698
        %v7210 = vunpack.c.h.b16 %v6698
        %v7211 = vunpack.c.l.b16 %v6702
        %v7212 = vunpack.c.h.b16 %v6702
        %v7213 = vunpack.c.l.b16 %v6706
        %v7214 = vunpack.c.h.b16 %v6706
        %v7215 = vunpack.c.l.b16 %v6710
        %v7216 = vunpack.c.h.b16 %v6710
        %v7217 = vunpack.c.l.b16 %v6714
        %v7218 = vunpack.c.h.b16 %v6714
        %v7219 = vunpack.c.l.b16 %v6718
        %v7220 = vunpack.c.h.b16 %v6718
        %v7221 = vunpack.c.l.b16 %v6722
        %v7222 = vunpack.c.h.b16 %v6722
        %v7223 = vunpack.c.l.b16 %v6726
        %v7224 = vunpack.c.h.b16 %v6726
        %v7225 = vunpack.c.l.b16 %v6730
        %v7226 = vunpack.c.h.b16 %v6730
        %v7227 = vunpack.c.l.b16 %v6734
        %v7228 = vunpack.c.h.b16 %v6734
        %v7229 = vunpack.c.l.b16 %v6738
        %v7230 = vunpack.c.h.b16 %v6738
        %v7231 = vunpack.c.l.b16 %v6742
        %v7232 = vunpack.c.h.b16 %v6742
        %v7233 = vunpack.c.l.b16 %v6746
        %v7234 = vunpack.c.h.b16 %v6746
        %v7235 = vunpack.c.l.b16 %v6750
        %v7236 = vunpack.c.h.b16 %v6750
        %v7237 = vunpack.c.l.b16 %v6754
        %v7238 = vunpack.c.h.b16 %v6754
        %v7239 = vunpack.c.l.b16 %v6758
        %v7240 = vunpack.c.h.b16 %v6758
        %v7241 = vpack.c.b16 %v7209, %v7209
        %v7242 = vpack.c.b16 %v7210, %v7210
        %v7243 = vpack.c.b16 %v7211, %v7211
        %v7244 = vpack.c.b16 %v7212, %v7212
        %v7245 = vpack.c.b16 %v7213, %v7213
        %v7246 = vpack.c.b16 %v7214, %v7214
        %v7247 = vpack.c.b16 %v7215, %v7215
        %v7248 = vpack.c.b16 %v7216, %v7216
        %v7249 = vpack.c.b16 %v7217, %v7217
        %v7250 = vpack.c.b16 %v7218, %v7218
        %v7251 = vpack.c.b16 %v7219, %v7219
        %v7252 = vpack.c.b16 %v7220, %v7220
        %v7253 = vpack.c.b16 %v7221, %v7221
        %v7254 = vpack.c.b16 %v7222, %v7222
        %v7255 = vpack.c.b16 %v7223, %v7223
        %v7256 = vpack.c.b16 %v7224, %v7224
        %v7257 = vpack.c.b16 %v7225, %v7225
        %v7258 = vpack.c.b16 %v7226, %v7226
        %v7259 = vpack.c.b16 %v7227, %v7227
        %v7260 = vpack.c.b16 %v7228, %v7228
        %v7261 = vpack.c.b16 %v7229, %v7229
        %v7262 = vpack.c.b16 %v7230, %v7230
        %v7263 = vpack.c.b16 %v7231, %v7231
        %v7264 = vpack.c.b16 %v7232, %v7232
        %v7265 = vpack.c.b16 %v7233, %v7233
        %v7266 = vpack.c.b16 %v7234, %v7234
        %v7267 = vpack.c.b16 %v7235, %v7235
        %v7268 = vpack.c.b16 %v7236, %v7236
        %v7269 = vpack.c.b16 %v7237, %v7237
        %v7270 = vpack.c.b16 %v7238, %v7238
        %v7271 = vpack.c.b16 %v7239, %v7239
        %v7272 = vpack.c.b16 %v7240, %v7240
        %s7305 = scalar_lea.vmem %s598, 24
        %7306 = vst [vmem:[%s7305] sm:$0xf] %v7241
        %7307 = vst [vmem:[%s7305 + $0x4] sm:$0xf] %v7242
        %7308 = vst [vmem:[%s7305 + $0x20] sm:$0xf] %v7243
        %7309 = vst [vmem:[%s7305 + $0x24] sm:$0xf] %v7244
        %7310 = vst [vmem:[%s7305 + $0x40] sm:$0xf] %v7245
        %7311 = vst [vmem:[%s7305 + $0x44] sm:$0xf] %v7246
        %7312 = vst [vmem:[%s7305 + $0x60] sm:$0xf] %v7247
        %7313 = vst [vmem:[%s7305 + $0x64] sm:$0xf] %v7248
        %7314 = vst [vmem:[%s7305 + $0x80] sm:$0xf] %v7249
        %7315 = vst [vmem:[%s7305 + $0x84] sm:$0xf] %v7250
        %7316 = vst [vmem:[%s7305 + $0xa0] sm:$0xf] %v7251
        %7317 = vst [vmem:[%s7305 + $0xa4] sm:$0xf] %v7252
        %7318 = vst [vmem:[%s7305 + $0xc0] sm:$0xf] %v7253
        %7319 = vst [vmem:[%s7305 + $0xc4] sm:$0xf] %v7254
        %7320 = vst [vmem:[%s7305 + $0xe0] sm:$0xf] %v7255
        %7321 = vst [vmem:[%s7305 + $0xe4] sm:$0xf] %v7256
        %7322 = vst [vmem:[%s7305 + $0x100] sm:$0xf] %v7257
        %7323 = vst [vmem:[%s7305 + $0x104] sm:$0xf] %v7258
        %7324 = vst [vmem:[%s7305 + $0x120] sm:$0xf] %v7259
        %7325 = vst [vmem:[%s7305 + $0x124] sm:$0xf] %v7260
        %7326 = vst [vmem:[%s7305 + $0x140] sm:$0xf] %v7261
        %7327 = vst [vmem:[%s7305 + $0x144] sm:$0xf] %v7262
        %7328 = vst [vmem:[%s7305 + $0x160] sm:$0xf] %v7263
        %7329 = vst [vmem:[%s7305 + $0x164] sm:$0xf] %v7264
        %7330 = vst [vmem:[%s7305 + $0x180] sm:$0xf] %v7265
        %7331 = vst [vmem:[%s7305 + $0x184] sm:$0xf] %v7266
        %7332 = vst [vmem:[%s7305 + $0x1a0] sm:$0xf] %v7267
        %7333 = vst [vmem:[%s7305 + $0x1a4] sm:$0xf] %v7268
        %7334 = vst [vmem:[%s7305 + $0x1c0] sm:$0xf] %v7269
        %7335 = vst [vmem:[%s7305 + $0x1c4] sm:$0xf] %v7270
        %7336 = vst [vmem:[%s7305 + $0x1e0] sm:$0xf] %v7271
        %7337 = vst [vmem:[%s7305 + $0x1e4] sm:$0xf] %v7272
        %p7338 = scmp.lt.s32.totalorder %s31, 1
        %s7339 = scalar_select %p7338, %s31, 1
        %s7340 = smul.addr %s7339, 128
        %s7341 = smul.addr %s7340, 4
        %s7342 = scalar_lea.vmem %s14, %s7341
        // Predicated region
        $region117: #{simple_lr2hr_forward.2} parent=75 // pred_check
          %p7343 = pneg %p348
        $region118: #{simple_lr2hr_forward.2} parent=75 // pred_check_branch
          %7345 = sbr.rel (%p7343) target = $region120
        $region119: #{simple_lr2hr_forward.2} parent=75 // pred_region
          _
        $region120: #{simple_lr2hr_forward.2} parent=75 // pred_fallthru
          _
      $region76: #{simple_lr2hr_forward.2} parent=5 // pred_fallthru
        _
      %p7346 = scmp.le.s32.totalorder 2, %s26
      // Predicated region
      $region121: #{simple_lr2hr_forward.2} parent=5 // pred_check
        %p7347 = pneg %p7346
      $region122: #{simple_lr2hr_forward.2} parent=5 // pred_check_branch
        %7349 = sbr.rel (%p7347) target = $region124
      $region123: #{simple_lr2hr_forward.2} parent=5 // pred_region
        %s7350 = ssub.s32 %s26, 2
        // Predicated region
        $region125: #{simple_lr2hr_forward.2} parent=123 // pred_check
          %p7351 = pneg %p354
        $region126: #{simple_lr2hr_forward.2} parent=123 // pred_check_branch
          %7353 = sbr.rel (%p7351) target = $region128
        $region127: #{simple_lr2hr_forward.2} parent=123 // pred_region
          %p7354 = scmp.lt.s32.totalorder %s32, 1
          %s7355 = scalar_select %p7354, %s32, 1
          %s7356 = smul.addr %s7355, 128
          %s7357 = smul.addr %s7356, 4
          %s7358 = scalar_lea.vmem %s14, %s7357
        $region128: #{simple_lr2hr_forward.2} parent=123 // pred_fallthru
          _
      $region124: #{simple_lr2hr_forward.2} parent=5 // pred_fallthru
        _
    $region6: #{simple_lr2hr_forward.2} parent=1 // loop_footer
      %s30 = sadd.s32 1, %s26
    $region7: #{simple_lr2hr_forward.2} parent=1 // loop_footer_branch
      %25 = sbr.rel target = $region3
    $region8: #{simple_lr2hr_forward.2} parent=1 // loop_exit
      _
    %7359 = vsyncpa [#allocation3], 1
    %s7360 = scalar_lea.sflag [#allocation3], 1
    %7361 = vsyncpa %s7360, 1
    %7362 = vsyncpa [#allocation6], 1
    %7363 = vsyncpa [#allocation9], 1
    %7364 = vsyncpa [#allocation12], 1
    %7365 = vsyncpa [#allocation15], 1
    %7366 = vsyncpa [#allocation4], 1
    %s7367 = scalar_lea.sflag [#allocation4], 1
    %7368 = vsyncpa %s7367, 1

</llo_original>
